<compile_context>
chip_gen: v5e
topology: v5e:2x2
jax: 0.10.0
libtpu: 0.0.40
codegen_flags: <defaults>
</compile_context>

<pallas_src>
import functools

import jax
import jax.numpy as jnp
from jax import lax
from jax.experimental import pallas as pl
from jax.experimental.pallas import tpu as pltpu

_LN_EPS = 1e-6          # LayerNorm2d eps in the reference module
_BN_EPS = 1e-5          # torch.nn.BatchNorm2d default
_VMEM_LIMIT = 32 * 1024 * 1024   # working sets here are << this and fit v7x's 64 MiB


# ----------------------------- in-kernel helpers ----------------------------

def _gelu(x):
    # tanh approximation (EUP tanh); see TODO(synk) above re exact erf.
    c = jnp.float32(0.7978845608028654)  # sqrt(2/pi)
    return 0.5 * x * (1.0 + jnp.tanh(c * (x + 0.044715 * x * x * x)))


def _layernorm(y, gamma, beta, eps):
    """LayerNorm over the channel (last) axis with single-pass statistics."""
    inv_n = 1.0 / y.shape[-1]
    s = jnp.sum(y, axis=-1, keepdims=True)
    ss = jnp.sum(y * y, axis=-1, keepdims=True)
    mean = s * inv_n
    var = jnp.maximum(ss * inv_n - mean * mean, 0.0)
    return (y - mean) * lax.rsqrt(var + eps) * gamma + beta


def _conv9_acc(xs_ref, w_ref, Ho, Wo):
    """3x3/stride-2/pad-1 conv of one image as 9 shift-tap MXU matmuls.

    xs_ref : (4, Hh, Wh, C) f32  space-to-depth phases of the padded input
    w_ref  : (9, C, Cout)   bf16 tap-major conv weights
    returns (Ho*Wo, Cout) f32 accumulator.
    """
    C = w_ref.shape[1]
    Cout = w_ref.shape[2]
    M = Ho * Wo
    acc = jnp.zeros((M, Cout), jnp.float32)
    for py in range(2):
        for px in range(2):
            phase = xs_ref[2 * py + px]                      # (Hh, Wh, C), f32
            for di in range(py, 3, 2):
                for dj in range(px, 3, 2):
                    tap = phase[di // 2:di // 2 + Ho, dj // 2:dj // 2 + Wo, :]
                    tap = tap.reshape(M, C).astype(jnp.bfloat16)
                    acc = acc + jnp.dot(tap, w_ref[3 * di + dj],
                                        preferred_element_type=jnp.float32)
    return acc


# --------------------------- fused conv-layer kernel -------------------------

def _conv_ln_kernel(xs_ref, w_ref, aff_ref, o_ref, *, Ho, Wo, second, eps):
    """Fused Conv2d(3x3, s2, p1) (+bias) + LayerNorm2d + (GELU | LayerNorm2d).

    One grid step handles one image.
      xs_ref : (4, Hh, Wh, C) f32
      w_ref  : (9, C, Cout) bf16
      aff_ref: (5, Cout) f32   rows = [bias, ln1_g, ln1_b, ln2_g, ln2_b]
      o_ref  : (1, Ho*Wo, Cout) f32
    """
    acc = _conv9_acc(xs_ref, w_ref, Ho, Wo)
    aff = aff_ref[...]                                       # (5, Cout)
    y = acc + aff[0:1]                                       # conv bias (zeros if bias=False)
    y = _layernorm(y, aff[1:2], aff[2:3], eps)               # LayerNorm2d
    if second == "gelu":
        y = _gelu(y)                                         # stem act_layer
    else:
        # DownsampleLayer/stem LN immediately followed by the stage norm
        # (blocks are identity) -> second LN fused in-VMEM, no HBM round-trip.
        y = _layernorm(y, aff[3:4], aff[4:5], eps)
    o_ref[0] = y.astype(o_ref.dtype)


def _space_to_depth_pad(x):
    """(B,H,W,C) -> (B*4, H//2+1, W//2+1, C).

    Row 4*b + 2*py + px holds padded_x[b, 2*h2+py, 2*w2+px, :]; every 3x3/s2
    conv tap then becomes a contiguous window of one phase plane.
    """
    B, H, W, C = x.shape
    xp = jnp.pad(x, ((0, 0), (1, 1), (1, 1), (0, 0)))
    Hh, Wh = (H + 2) // 2, (W + 2) // 2
    xs = xp.reshape(B, Hh, 2, Wh, 2, C).transpose(0, 2, 4, 1, 3, 5)
    return xs.reshape(B * 4, Hh, Wh, C)


def conv3x3_s2_fused(x, w9, aff, *, gelu=False):
    """x: (B,H,W,C) f32 -> (B,H//2,W//2,Cout) f32, one pallas_call."""
    B, H, W, C = x.shape
    assert H % 2 == 0 and W % 2 == 0, "3x3/s2/p1 lowering assumes even spatial dims"
    Cout = w9.shape[2]
    Ho, Wo = H // 2, W // 2
    Hh, Wh = Ho + 1, Wo + 1
    M = Ho * Wo
    xs = _space_to_depth_pad(x)

    kernel = functools.partial(_conv_ln_kernel, Ho=Ho, Wo=Wo,
                               second="gelu" if gelu else "ln", eps=_LN_EPS)
    cost = pl.CostEstimate(
        flops=2 * B * M * 9 * C * Cout,
        transcendentals=(B * M * Cout if gelu else 0) + 2 * B * M,
        bytes_accessed=int(xs.size) * 4 + int(w9.size) * 2
                       + int(aff.size) * 4 + B * M * Cout * 4)

    out = pl.pallas_call(
        kernel,
        out_shape=jax.ShapeDtypeStruct((B, M, Cout), jnp.float32),
        grid=(B,),
        in_specs=[
            pl.BlockSpec((4, Hh, Wh, C), lambda b: (b, 0, 0, 0)),
            pl.BlockSpec((9, C, Cout), lambda b: (0, 0, 0)),
            pl.BlockSpec((5, Cout), lambda b: (0, 0)),
        ],
        out_specs=pl.BlockSpec((1, M, Cout), lambda b: (b, 0, 0)),
        compiler_params=pltpu.CompilerParams(
            dimension_semantics=("parallel",),      # batch shards across v7x TCs
            vmem_limit_bytes=_VMEM_LIMIT),
        cost_estimate=cost,
    )(xs, w9, aff)
    return out.reshape(B, Ho, Wo, Cout)


# ------------------- fused last-downsample + classifier tail -----------------

def _last_stage_head_kernel(xs_ref, w_ref, aff_ref, w1_ref, shift_ref, w2_ref,
                            b2_ref, o_ref, *, Ho, Wo, eps):
    """down.3 conv + LN + stage-norm + conv_head(1x1, BN folded) + GELU
    + AdaptiveAvgPool2d(1) + Flatten + head Linear — one image per grid step.
      xs_ref   : (4, Hh, Wh, C) f32
      w_ref    : (9, C, Cout) bf16
      aff_ref  : (5, Cout) f32
      w1_ref   : (Cout, F) bf16       1x1 conv_head weight (BN folded)
      shift_ref: (1, F) f32           folded BN shift
      w2_ref   : (F, n_cls) f32       head weight (pre-transposed)
      b2_ref   : (1, n_cls) f32
      o_ref    : (1, 1, n_cls) f32
    """
    acc = _conv9_acc(xs_ref, w_ref, Ho, Wo)                  # (M, Cout) f32
    aff = aff_ref[...]
    y = acc + aff[0:1]                                       # bias = 0 (bias=False)
    y = _layernorm(y, aff[1:2], aff[2:3], eps)               # down-LN
    y = _layernorm(y, aff[3:4], aff[4:5], eps)               # stage-3 norm
    # conv_head 1x1 (no bias) with eval-mode BatchNorm folded, then GELU.
    z = jnp.dot(y.astype(jnp.bfloat16), w1_ref[...],
                preferred_element_type=jnp.float32) + shift_ref[...]
    z = _gelu(z)
    pooled = jnp.mean(z, axis=0, keepdims=True)              # global average pool -> (1, F)
    logits = jnp.dot(pooled, w2_ref[...],
                     preferred_element_type=jnp.float32) + b2_ref[...]
    o_ref[0] = logits.astype(o_ref.dtype)


def last_stage_head_fused(x, w9, aff, w1, shift, w2, b2):
    """x: (B,H,W,C) f32 -> (B, n_cls) logits, one pallas_call."""
    B, H, W, C = x.shape
    assert H % 2 == 0 and W % 2 == 0
    Cout = w9.shape[2]
    Ho, Wo = H // 2, W // 2
    Hh, Wh = Ho + 1, Wo + 1
    M = Ho * Wo
    F = w1.shape[1]
    n_cls = w2.shape[1]
    xs = _space_to_depth_pad(x)

    kernel = functools.partial(_last_stage_head_kernel, Ho=Ho, Wo=Wo, eps=_LN_EPS)
    cost = pl.CostEstimate(
        flops=2 * B * (M * 9 * C * Cout + M * Cout * F + F * n_cls),
        transcendentals=B * (M * F + 4 * M),
        bytes_accessed=int(xs.size) * 4 + int(w9.size) * 2 + int(aff.size) * 4
                       + int(w1.size) * 2 + int(shift.size) * 4
                       + int(w2.size) * 4 + int(b2.size) * 4 + B * n_cls * 4)

    out = pl.pallas_call(
        kernel,
        out_shape=jax.ShapeDtypeStruct((B, 1, n_cls), jnp.float32),
        grid=(B,),
        in_specs=[
            pl.BlockSpec((4, Hh, Wh, C), lambda b: (b, 0, 0, 0)),
            pl.BlockSpec((9, C, Cout), lambda b: (0, 0, 0)),
            pl.BlockSpec((5, Cout), lambda b: (0, 0)),
            pl.BlockSpec((Cout, F), lambda b: (0, 0)),
            pl.BlockSpec((1, F), lambda b: (0, 0)),
            pl.BlockSpec((F, n_cls), lambda b: (0, 0)),
            pl.BlockSpec((1, n_cls), lambda b: (0, 0)),
        ],
        out_specs=pl.BlockSpec((1, 1, n_cls), lambda b: (b, 0, 0)),
        compiler_params=pltpu.CompilerParams(
            dimension_semantics=("parallel",),
            vmem_limit_bytes=_VMEM_LIMIT),
        cost_estimate=cost,
    )(xs, w9, aff, w1, shift, w2, b2)
    return out.reshape(B, n_cls)


# --------------------------------- forward ----------------------------------

def meta_arch_forward(prep, x_nchw):
    x = jnp.transpose(x_nchw, (0, 2, 3, 1)).astype(jnp.float32)  # NCHW -> NHWC

    # Stem conv1 + LayerNorm2d + GELU (fused)
    x = conv3x3_s2_fused(x, prep["stem1.w9"], prep["stem1.aff"], gelu=True)
    # Stem conv2 + stem LN + stage-0 norm (blocks are identity) (fused)
    x = conv3x3_s2_fused(x, prep["stem2.w9"], prep["stem2.aff"])
    # Stages 1..2: downsample conv (no bias) + down-LN + stage norm (fused)
    for i in range(1, 3):
        x = conv3x3_s2_fused(x, prep[f"down.{i}.w9"], prep[f"down.{i}.aff"])
    # stage_end_norm = Identity (norm_every_stage=True)

    # Stage 3 downsample + conv_head(1x1 + folded BN) + GELU + global avg pool
    # + head Linear — single fused kernel.
    return last_stage_head_fused(x, prep["down.3.w9"], prep["down.3.aff"],
                                 prep["conv_head.w1"], prep["conv_head.shift"],
                                 prep["head.w2"], prep["head.b2"])


# ---------------------------- parameter handling -----------------------------

def init_params(key, in_channels=3, dims=(8, 16, 32, 64), num_classes=10,
                extra_transform_ratio=1.5, stem_ratio=0.5):
    """PyTorch-layout parameters (trunc_normal conv/linear weights, default norms)."""
    keys = iter(jax.random.split(key, 32))

    def tn(shape):  # trunc_normal_(std=0.02), truncated at +-2 std
        return jax.random.truncated_normal(next(keys), -2.0, 2.0, shape, jnp.float32) * 0.02

    p = {}
    mid = int(dims[0] * stem_ratio)
    p["stem.conv1.w"] = tn((mid, in_channels, 3, 3))
    p["stem.conv1.b"] = jnp.zeros((mid,), jnp.float32)
    p["stem.ln1.g"] = jnp.ones((mid,), jnp.float32)
    p["stem.ln1.b"] = jnp.zeros((mid,), jnp.float32)
    p["stem.conv2.w"] = tn((dims[0], mid, 3, 3))
    p["stem.conv2.b"] = jnp.zeros((dims[0],), jnp.float32)
    p["stem.ln2.g"] = jnp.ones((dims[0],), jnp.float32)
    p["stem.ln2.b"] = jnp.zeros((dims[0],), jnp.float32)
    for i in range(1, 4):
        p[f"down.{i}.w"] = tn((dims[i], dims[i - 1], 3, 3))
        p[f"down.{i}.ln.g"] = jnp.ones((dims[i],), jnp.float32)
        p[f"down.{i}.ln.b"] = jnp.zeros((dims[i],), jnp.float32)
    for i in range(4):
        p[f"stage_norm.{i}.g"] = jnp.ones((dims[i],), jnp.float32)
        p[f"stage_norm.{i}.b"] = jnp.zeros((dims[i],), jnp.float32)
    feat = int(dims[-1] * extra_transform_ratio)
    p["conv_head.w"] = tn((feat, dims[-1], 1, 1))
    p["conv_head.bn.g"] = jnp.ones((feat,), jnp.float32)
    p["conv_head.bn.b"] = jnp.zeros((feat,), jnp.float32)
    p["conv_head.bn.mean"] = jnp.zeros((feat,), jnp.float32)
    p["conv_head.bn.var"] = jnp.ones((feat,), jnp.float32)
    p["head.w"] = tn((num_classes, feat))
    p["head.b"] = jnp.zeros((num_classes,), jnp.float32)
    return p


def prepare_inference_params(p):
    """One-time (outside jit) weight folding for the fused kernels.

    OIHW conv weights -> tap-major (9, Cin, Cout) bf16; per-layer affine
    vectors packed into a (5, Cout) slab [bias, ln1_g, ln1_b, ln2_g, ln2_b];
    conv_head BatchNorm (eval stats) folded into the 1x1 weight; head.w
    pre-transposed.
    """
    def w9(w_oihw):
        cout, cin = w_oihw.shape[0], w_oihw.shape[1]
        return jnp.transpose(w_oihw, (2, 3, 1, 0)).reshape(9, cin, cout).astype(jnp.bfloat16)

    def affine(cout, bias, g1, b1, g2=None, b2=None):
        bias = jnp.zeros((cout,), jnp.float32) if bias is None else bias
        g2 = jnp.ones((cout,), jnp.float32) if g2 is None else g2
        b2 = jnp.zeros((cout,), jnp.float32) if b2 is None else b2
        return jnp.stack([bias, g1, b1, g2, b2]).astype(jnp.float32)

    prep = {}
    mid = p["stem.conv1.w"].shape[0]
    d0 = p["stem.conv2.w"].shape[0]
    prep["stem1.w9"] = w9(p["stem.conv1.w"])
    prep["stem1.aff"] = affine(mid, p["stem.conv1.b"], p["stem.ln1.g"], p["stem.ln1.b"])
    prep["stem2.w9"] = w9(p["stem.conv2.w"])
    prep["stem2.aff"] = affine(d0, p["stem.conv2.b"], p["stem.ln2.g"], p["stem.ln2.b"],
                               p["stage_norm.0.g"], p["stage_norm.0.b"])
    for i in range(1, 4):
        cout = p[f"down.{i}.w"].shape[0]
        prep[f"down.{i}.w9"] = w9(p[f"down.{i}.w"])
        prep[f"down.{i}.aff"] = affine(cout, None,
                                       p[f"down.{i}.ln.g"], p[f"down.{i}.ln.b"],
                                       p[f"stage_norm.{i}.g"], p[f"stage_norm.{i}.b"])
    # conv_head: fold eval-mode BatchNorm into the 1x1 conv weight / shift.
    feat, c_last = p["conv_head.w"].shape[0], p["conv_head.w"].shape[1]
    wmat = p["conv_head.w"].reshape(feat, c_last).T                       # (C, F)
    scale = p["conv_head.bn.g"] * lax.rsqrt(p["conv_head.bn.var"] + _BN_EPS)
    prep["conv_head.w1"] = (wmat * scale[None, :]).astype(jnp.bfloat16)   # (C, F)
    prep["conv_head.shift"] = (p["conv_head.bn.b"]
                               - p["conv_head.bn.mean"] * scale).reshape(1, feat)
    prep["head.w2"] = p["head.w"].T.astype(jnp.float32)                   # (F, n_cls)
    prep["head.b2"] = p["head.b"].reshape(1, -1).astype(jnp.float32)
    return prep


# ----------------------------------- main ------------------------------------

if __name__ == "__main__":
    key = jax.random.PRNGKey(0)
    k_params, k_x = jax.random.split(key)
    # Small shapes consistent with the module: img_size=32, in_channels=3,
    # dims=(8,16,32,64), num_classes=10 (features = 64*1.5 = 96).
    params = init_params(k_params, in_channels=3, dims=(8, 16, 32, 64), num_classes=10)
    prep = prepare_inference_params(params)          # weight folding outside jit
    x = jax.random.normal(k_x, (2, 3, 32, 32), jnp.float32)

    forward = jax.jit(meta_arch_forward)
    logits = jax.block_until_ready(forward(prep, x))
    assert logits.shape == (2, 10), logits.shape
    assert bool(jnp.all(jnp.isfinite(logits)))
    print("KERNEL_OK")
</pallas_src>

<mosaic_0001>
module attributes {stable_mosaic.version = 11 : i64} {
  func.func @_conv_ln_kernel(%arg0: i32, %arg1: memref<4x17x17x3xf32, #tpu.memory_space<vmem>>, %arg2: memref<9x3x4xbf16, #tpu.memory_space<vmem>>, %arg3: memref<5x4xf32, #tpu.memory_space<vmem>>, %arg4: memref<1x256x4xf32, #tpu.memory_space<vmem>>) attributes {dimension_semantics = [#tpu.dimension_semantics<parallel>], iteration_bounds = array<i64: 2>, scalar_prefetch = 0 : i64, scratch_operands = 0 : i64, tpu.core_type = #tpu.core_type<tc>, window_params = [{transform_indices = @transform_0, window_bounds = array<i64: 4, 17, 17, 3>}, {pipeline_mode = #tpu.pipeline_mode<synchronous>, transform_indices = @transform_1, window_bounds = array<i64: 9, 3, 4>}, {pipeline_mode = #tpu.pipeline_mode<synchronous>, transform_indices = @transform_2, window_bounds = array<i64: 5, 4>}, {transform_indices = @transform_3, window_bounds = array<i64: 1, 256, 4>}]} {
    %cst = arith.constant 0.000000e+00 : f32
    %0 = vector.broadcast %cst : f32 to vector<256x4xf32>
    %c0 = arith.constant 0 : index
    %c0_0 = arith.constant 0 : index
    %c0_1 = arith.constant 0 : index
    %c0_2 = arith.constant 0 : index
    %1 = vector.load %arg1[%c0, %c0_0, %c0_1, %c0_2] : memref<4x17x17x3xf32, #tpu.memory_space<vmem>>, vector<1x17x17x3xf32>
    %2 = vector.shape_cast %1 : vector<1x17x17x3xf32> to vector<17x17x3xf32>
    %3 = vector.extract_strided_slice %2 {offsets = [0, 0, 0], sizes = [16, 16, 3], strides = [1, 1, 1]} : vector<17x17x3xf32> to vector<16x16x3xf32>
    %4 = vector.shape_cast %3 : vector<16x16x3xf32> to vector<256x3xf32>
    %5 = arith.truncf %4 : vector<256x3xf32> to vector<256x3xbf16>
    %c0_3 = arith.constant 0 : index
    %c0_4 = arith.constant 0 : index
    %c0_5 = arith.constant 0 : index
    %6 = vector.load %arg2[%c0_3, %c0_4, %c0_5] : memref<9x3x4xbf16, #tpu.memory_space<vmem>>, vector<1x3x4xbf16>
    %7 = vector.shape_cast %6 : vector<1x3x4xbf16> to vector<3x4xbf16>
    %cst_6 = arith.constant dense<0.000000e+00> : vector<256x4xf32>
    %8 = tpu.matmul %5, %7, %cst_6 {dimension_numbers = #tpu.dot_dimension_numbers<[1], [0], [0], [1], [0, 0, 1, 1], [], []>} : vector<256x3xbf16>, vector<3x4xbf16>, vector<256x4xf32> -> vector<256x4xf32>
    %9 = arith.addf %0, %8 : vector<256x4xf32>
    %10 = vector.extract_strided_slice %2 {offsets = [0, 1, 0], sizes = [16, 16, 3], strides = [1, 1, 1]} : vector<17x17x3xf32> to vector<16x16x3xf32>
    %11 = vector.shape_cast %10 : vector<16x16x3xf32> to vector<256x3xf32>
    %12 = arith.truncf %11 : vector<256x3xf32> to vector<256x3xbf16>
    %c2 = arith.constant 2 : index
    %c0_7 = arith.constant 0 : index
    %c0_8 = arith.constant 0 : index
    %13 = vector.load %arg2[%c2, %c0_7, %c0_8] : memref<9x3x4xbf16, #tpu.memory_space<vmem>>, vector<1x3x4xbf16>
    %14 = vector.shape_cast %13 : vector<1x3x4xbf16> to vector<3x4xbf16>
    %cst_9 = arith.constant dense<0.000000e+00> : vector<256x4xf32>
    %15 = tpu.matmul %12, %14, %cst_9 {dimension_numbers = #tpu.dot_dimension_numbers<[1], [0], [0], [1], [0, 0, 1, 1], [], []>} : vector<256x3xbf16>, vector<3x4xbf16>, vector<256x4xf32> -> vector<256x4xf32>
    %16 = arith.addf %9, %15 : vector<256x4xf32>
    %17 = vector.extract_strided_slice %2 {offsets = [1, 0, 0], sizes = [16, 16, 3], strides = [1, 1, 1]} : vector<17x17x3xf32> to vector<16x16x3xf32>
    %18 = vector.shape_cast %17 : vector<16x16x3xf32> to vector<256x3xf32>
    %19 = arith.truncf %18 : vector<256x3xf32> to vector<256x3xbf16>
    %c6 = arith.constant 6 : index
    %c0_10 = arith.constant 0 : index
    %c0_11 = arith.constant 0 : index
    %20 = vector.load %arg2[%c6, %c0_10, %c0_11] : memref<9x3x4xbf16, #tpu.memory_space<vmem>>, vector<1x3x4xbf16>
    %21 = vector.shape_cast %20 : vector<1x3x4xbf16> to vector<3x4xbf16>
    %cst_12 = arith.constant dense<0.000000e+00> : vector<256x4xf32>
    %22 = tpu.matmul %19, %21, %cst_12 {dimension_numbers = #tpu.dot_dimension_numbers<[1], [0], [0], [1], [0, 0, 1, 1], [], []>} : vector<256x3xbf16>, vector<3x4xbf16>, vector<256x4xf32> -> vector<256x4xf32>
    %23 = arith.addf %16, %22 : vector<256x4xf32>
    %24 = vector.extract_strided_slice %2 {offsets = [1, 1, 0], sizes = [16, 16, 3], strides = [1, 1, 1]} : vector<17x17x3xf32> to vector<16x16x3xf32>
    %25 = vector.shape_cast %24 : vector<16x16x3xf32> to vector<256x3xf32>
    %26 = arith.truncf %25 : vector<256x3xf32> to vector<256x3xbf16>
    %c8 = arith.constant 8 : index
    %c0_13 = arith.constant 0 : index
    %c0_14 = arith.constant 0 : index
    %27 = vector.load %arg2[%c8, %c0_13, %c0_14] : memref<9x3x4xbf16, #tpu.memory_space<vmem>>, vector<1x3x4xbf16>
    %28 = vector.shape_cast %27 : vector<1x3x4xbf16> to vector<3x4xbf16>
    %cst_15 = arith.constant dense<0.000000e+00> : vector<256x4xf32>
    %29 = tpu.matmul %26, %28, %cst_15 {dimension_numbers = #tpu.dot_dimension_numbers<[1], [0], [0], [1], [0, 0, 1, 1], [], []>} : vector<256x3xbf16>, vector<3x4xbf16>, vector<256x4xf32> -> vector<256x4xf32>
    %30 = arith.addf %23, %29 : vector<256x4xf32>
    %c1 = arith.constant 1 : index
    %c0_16 = arith.constant 0 : index
    %c0_17 = arith.constant 0 : index
    %c0_18 = arith.constant 0 : index
    %31 = vector.load %arg1[%c1, %c0_16, %c0_17, %c0_18] : memref<4x17x17x3xf32, #tpu.memory_space<vmem>>, vector<1x17x17x3xf32>
    %32 = vector.shape_cast %31 : vector<1x17x17x3xf32> to vector<17x17x3xf32>
    %33 = vector.extract_strided_slice %32 {offsets = [0, 0, 0], sizes = [16, 16, 3], strides = [1, 1, 1]} : vector<17x17x3xf32> to vector<16x16x3xf32>
    %34 = vector.shape_cast %33 : vector<16x16x3xf32> to vector<256x3xf32>
    %35 = arith.truncf %34 : vector<256x3xf32> to vector<256x3xbf16>
    %c1_19 = arith.constant 1 : index
    %c0_20 = arith.constant 0 : index
    %c0_21 = arith.constant 0 : index
    %36 = vector.load %arg2[%c1_19, %c0_20, %c0_21] : memref<9x3x4xbf16, #tpu.memory_space<vmem>>, vector<1x3x4xbf16>
    %37 = vector.shape_cast %36 : vector<1x3x4xbf16> to vector<3x4xbf16>
    %cst_22 = arith.constant dense<0.000000e+00> : vector<256x4xf32>
    %38 = tpu.matmul %35, %37, %cst_22 {dimension_numbers = #tpu.dot_dimension_numbers<[1], [0], [0], [1], [0, 0, 1, 1], [], []>} : vector<256x3xbf16>, vector<3x4xbf16>, vector<256x4xf32> -> vector<256x4xf32>
    %39 = arith.addf %30, %38 : vector<256x4xf32>
    %40 = vector.extract_strided_slice %32 {offsets = [1, 0, 0], sizes = [16, 16, 3], strides = [1, 1, 1]} : vector<17x17x3xf32> to vector<16x16x3xf32>
    %41 = vector.shape_cast %40 : vector<16x16x3xf32> to vector<256x3xf32>
    %42 = arith.truncf %41 : vector<256x3xf32> to vector<256x3xbf16>
    %c7 = arith.constant 7 : index
    %c0_23 = arith.constant 0 : index
    %c0_24 = arith.constant 0 : index
    %43 = vector.load %arg2[%c7, %c0_23, %c0_24] : memref<9x3x4xbf16, #tpu.memory_space<vmem>>, vector<1x3x4xbf16>
    %44 = vector.shape_cast %43 : vector<1x3x4xbf16> to vector<3x4xbf16>
    %cst_25 = arith.constant dense<0.000000e+00> : vector<256x4xf32>
    %45 = tpu.matmul %42, %44, %cst_25 {dimension_numbers = #tpu.dot_dimension_numbers<[1], [0], [0], [1], [0, 0, 1, 1], [], []>} : vector<256x3xbf16>, vector<3x4xbf16>, vector<256x4xf32> -> vector<256x4xf32>
    %46 = arith.addf %39, %45 : vector<256x4xf32>
    %c2_26 = arith.constant 2 : index
    %c0_27 = arith.constant 0 : index
    %c0_28 = arith.constant 0 : index
    %c0_29 = arith.constant 0 : index
    %47 = vector.load %arg1[%c2_26, %c0_27, %c0_28, %c0_29] : memref<4x17x17x3xf32, #tpu.memory_space<vmem>>, vector<1x17x17x3xf32>
    %48 = vector.shape_cast %47 : vector<1x17x17x3xf32> to vector<17x17x3xf32>
    %49 = vector.extract_strided_slice %48 {offsets = [0, 0, 0], sizes = [16, 16, 3], strides = [1, 1, 1]} : vector<17x17x3xf32> to vector<16x16x3xf32>
    %50 = vector.shape_cast %49 : vector<16x16x3xf32> to vector<256x3xf32>
    %51 = arith.truncf %50 : vector<256x3xf32> to vector<256x3xbf16>
    %c3 = arith.constant 3 : index
    %c0_30 = arith.constant 0 : index
    %c0_31 = arith.constant 0 : index
    %52 = vector.load %arg2[%c3, %c0_30, %c0_31] : memref<9x3x4xbf16, #tpu.memory_space<vmem>>, vector<1x3x4xbf16>
    %53 = vector.shape_cast %52 : vector<1x3x4xbf16> to vector<3x4xbf16>
    %cst_32 = arith.constant dense<0.000000e+00> : vector<256x4xf32>
    %54 = tpu.matmul %51, %53, %cst_32 {dimension_numbers = #tpu.dot_dimension_numbers<[1], [0], [0], [1], [0, 0, 1, 1], [], []>} : vector<256x3xbf16>, vector<3x4xbf16>, vector<256x4xf32> -> vector<256x4xf32>
    %55 = arith.addf %46, %54 : vector<256x4xf32>
    %56 = vector.extract_strided_slice %48 {offsets = [0, 1, 0], sizes = [16, 16, 3], strides = [1, 1, 1]} : vector<17x17x3xf32> to vector<16x16x3xf32>
    %57 = vector.shape_cast %56 : vector<16x16x3xf32> to vector<256x3xf32>
    %58 = arith.truncf %57 : vector<256x3xf32> to vector<256x3xbf16>
    %c5 = arith.constant 5 : index
    %c0_33 = arith.constant 0 : index
    %c0_34 = arith.constant 0 : index
    %59 = vector.load %arg2[%c5, %c0_33, %c0_34] : memref<9x3x4xbf16, #tpu.memory_space<vmem>>, vector<1x3x4xbf16>
    %60 = vector.shape_cast %59 : vector<1x3x4xbf16> to vector<3x4xbf16>
    %cst_35 = arith.constant dense<0.000000e+00> : vector<256x4xf32>
    %61 = tpu.matmul %58, %60, %cst_35 {dimension_numbers = #tpu.dot_dimension_numbers<[1], [0], [0], [1], [0, 0, 1, 1], [], []>} : vector<256x3xbf16>, vector<3x4xbf16>, vector<256x4xf32> -> vector<256x4xf32>
    %62 = arith.addf %55, %61 : vector<256x4xf32>
    %c3_36 = arith.constant 3 : index
    %c0_37 = arith.constant 0 : index
    %c0_38 = arith.constant 0 : index
    %c0_39 = arith.constant 0 : index
    %63 = vector.load %arg1[%c3_36, %c0_37, %c0_38, %c0_39] : memref<4x17x17x3xf32, #tpu.memory_space<vmem>>, vector<1x17x17x3xf32>
    %64 = vector.shape_cast %63 : vector<1x17x17x3xf32> to vector<17x17x3xf32>
    %65 = vector.extract_strided_slice %64 {offsets = [0, 0, 0], sizes = [16, 16, 3], strides = [1, 1, 1]} : vector<17x17x3xf32> to vector<16x16x3xf32>
    %66 = vector.shape_cast %65 : vector<16x16x3xf32> to vector<256x3xf32>
    %67 = arith.truncf %66 : vector<256x3xf32> to vector<256x3xbf16>
    %c4 = arith.constant 4 : index
    %c0_40 = arith.constant 0 : index
    %c0_41 = arith.constant 0 : index
    %68 = vector.load %arg2[%c4, %c0_40, %c0_41] : memref<9x3x4xbf16, #tpu.memory_space<vmem>>, vector<1x3x4xbf16>
    %69 = vector.shape_cast %68 : vector<1x3x4xbf16> to vector<3x4xbf16>
    %cst_42 = arith.constant dense<0.000000e+00> : vector<256x4xf32>
    %70 = tpu.matmul %67, %69, %cst_42 {dimension_numbers = #tpu.dot_dimension_numbers<[1], [0], [0], [1], [0, 0, 1, 1], [], []>} : vector<256x3xbf16>, vector<3x4xbf16>, vector<256x4xf32> -> vector<256x4xf32>
    %71 = arith.addf %62, %70 : vector<256x4xf32>
    %c0_43 = arith.constant 0 : index
    %c0_44 = arith.constant 0 : index
    %72 = vector.load %arg3[%c0_43, %c0_44] : memref<5x4xf32, #tpu.memory_space<vmem>>, vector<5x4xf32>
    %73 = vector.extract_strided_slice %72 {offsets = [0, 0], sizes = [1, 4], strides = [1, 1]} : vector<5x4xf32> to vector<1x4xf32>
    %74 = vector.broadcast %73 : vector<1x4xf32> to vector<256x4xf32>
    %75 = arith.addf %71, %74 : vector<256x4xf32>
    %76 = vector.extract_strided_slice %72 {offsets = [1, 0], sizes = [1, 4], strides = [1, 1]} : vector<5x4xf32> to vector<1x4xf32>
    %77 = vector.extract_strided_slice %72 {offsets = [2, 0], sizes = [1, 4], strides = [1, 1]} : vector<5x4xf32> to vector<1x4xf32>
    %cst_45 = arith.constant dense<0.000000e+00> : vector<256xf32>
    %78 = vector.multi_reduction <add>, %75, %cst_45 [1] : vector<256x4xf32> to vector<256xf32>
    %79 = vector.shape_cast %78 : vector<256xf32> to vector<256x1xf32>
    %80 = arith.mulf %75, %75 : vector<256x4xf32>
    %cst_46 = arith.constant dense<0.000000e+00> : vector<256xf32>
    %81 = vector.multi_reduction <add>, %80, %cst_46 [1] : vector<256x4xf32> to vector<256xf32>
    %82 = vector.shape_cast %81 : vector<256xf32> to vector<256x1xf32>
    %cst_47 = arith.constant 2.500000e-01 : f32
    %83 = vector.broadcast %cst_47 : f32 to vector<256x1xf32>
    %84 = arith.mulf %79, %83 : vector<256x1xf32>
    %cst_48 = arith.constant 2.500000e-01 : f32
    %85 = vector.broadcast %cst_48 : f32 to vector<256x1xf32>
    %86 = arith.mulf %82, %85 : vector<256x1xf32>
    %87 = arith.mulf %84, %84 : vector<256x1xf32>
    %88 = arith.subf %86, %87 : vector<256x1xf32>
    %cst_49 = arith.constant 0.000000e+00 : f32
    %89 = vector.broadcast %cst_49 : f32 to vector<256x1xf32>
    %90 = arith.maximumf %88, %89 : vector<256x1xf32>
    %91 = vector.broadcast %84 : vector<256x1xf32> to vector<256x4xf32>
    %92 = arith.subf %75, %91 : vector<256x4xf32>
    %cst_50 = arith.constant 9.99999997E-7 : f32
    %93 = vector.broadcast %cst_50 : f32 to vector<256x1xf32>
    %94 = arith.addf %90, %93 : vector<256x1xf32>
    %95 = math.rsqrt %94 : vector<256x1xf32>
    %96 = vector.broadcast %95 : vector<256x1xf32> to vector<256x4xf32>
    %97 = arith.mulf %92, %96 : vector<256x4xf32>
    %98 = vector.broadcast %76 : vector<1x4xf32> to vector<256x4xf32>
    %99 = arith.mulf %97, %98 : vector<256x4xf32>
    %100 = vector.broadcast %77 : vector<1x4xf32> to vector<256x4xf32>
    %101 = arith.addf %99, %100 : vector<256x4xf32>
    %cst_51 = arith.constant 5.000000e-01 : f32
    %102 = vector.broadcast %cst_51 : f32 to vector<256x4xf32>
    %103 = arith.mulf %102, %101 : vector<256x4xf32>
    %cst_52 = arith.constant 4.471500e-02 : f32
    %104 = vector.broadcast %cst_52 : f32 to vector<256x4xf32>
    %105 = arith.mulf %104, %101 : vector<256x4xf32>
    %106 = arith.mulf %105, %101 : vector<256x4xf32>
    %107 = arith.mulf %106, %101 : vector<256x4xf32>
    %108 = arith.addf %101, %107 : vector<256x4xf32>
    %cst_53 = arith.constant 0.797884583 : f32
    %109 = vector.broadcast %cst_53 : f32 to vector<256x4xf32>
    %110 = arith.mulf %109, %108 : vector<256x4xf32>
    %111 = math.tanh %110 : vector<256x4xf32>
    %cst_54 = arith.constant 1.000000e+00 : f32
    %112 = vector.broadcast %cst_54 : f32 to vector<256x4xf32>
    %113 = arith.addf %112, %111 : vector<256x4xf32>
    %114 = arith.mulf %103, %113 : vector<256x4xf32>
    %c0_55 = arith.constant 0 : index
    %c0_56 = arith.constant 0 : index
    %c0_57 = arith.constant 0 : index
    %115 = vector.load %arg4[%c0_55, %c0_56, %c0_57] : memref<1x256x4xf32, #tpu.memory_space<vmem>>, vector<1x256x4xf32>
    %116 = vector.shape_cast %115 : vector<1x256x4xf32> to vector<256x4xf32>
    %117 = vector.shape_cast %114 : vector<256x4xf32> to vector<1x256x4xf32>
    tpu.vector_store %arg4[%c0_55, %c0_56, %c0_57], %117 {strides = array<i32>} : memref<1x256x4xf32, #tpu.memory_space<vmem>>, vector<1x256x4xf32>,
    return
  }
  func.func @transform_0(%arg0: i32) -> (i32, i32, i32, i32) {
    %c0_i32 = arith.constant 0 : i32
    %c0_i32_0 = arith.constant 0 : i32
    %c0_i32_1 = arith.constant 0 : i32
    %c0_i32_2 = arith.constant 0 : i32
    return %arg0, %c0_i32, %c0_i32_0, %c0_i32_1 : i32, i32, i32, i32
  }
  func.func @transform_1(%arg0: i32) -> (i32, i32, i32) {
    %c0_i32 = arith.constant 0 : i32
    %c0_i32_0 = arith.constant 0 : i32
    %c0_i32_1 = arith.constant 0 : i32
    %c0_i32_2 = arith.constant 0 : i32
    return %c0_i32, %c0_i32_0, %c0_i32_1 : i32, i32, i32
  }
  func.func @transform_2(%arg0: i32) -> (i32, i32) {
    %c0_i32 = arith.constant 0 : i32
    %c0_i32_0 = arith.constant 0 : i32
    %c0_i32_1 = arith.constant 0 : i32
    return %c0_i32, %c0_i32_0 : i32, i32
  }
  func.func @transform_3(%arg0: i32) -> (i32, i32, i32) {
    %c0_i32 = arith.constant 0 : i32
    %c0_i32_0 = arith.constant 0 : i32
    %c0_i32_1 = arith.constant 0 : i32
    return %arg0, %c0_i32, %c0_i32_0 : i32, i32, i32
  }
}

module attributes {stable_mosaic.version = 11 : i64} {
  func.func @_conv_ln_kernel(%arg0: i32, %arg1: memref<4x9x9x4xf32, #tpu.memory_space<vmem>>, %arg2: memref<9x4x8xbf16, #tpu.memory_space<vmem>>, %arg3: memref<5x8xf32, #tpu.memory_space<vmem>>, %arg4: memref<1x64x8xf32, #tpu.memory_space<vmem>>) attributes {dimension_semantics = [#tpu.dimension_semantics<parallel>], iteration_bounds = array<i64: 2>, scalar_prefetch = 0 : i64, scratch_operands = 0 : i64, tpu.core_type = #tpu.core_type<tc>, window_params = [{transform_indices = @transform_0, window_bounds = array<i64: 4, 9, 9, 4>}, {pipeline_mode = #tpu.pipeline_mode<synchronous>, transform_indices = @transform_1, window_bounds = array<i64: 9, 4, 8>}, {pipeline_mode = #tpu.pipeline_mode<synchronous>, transform_indices = @transform_2, window_bounds = array<i64: 5, 8>}, {transform_indices = @transform_3, window_bounds = array<i64: 1, 64, 8>}]} {
    %cst = arith.constant 0.000000e+00 : f32
    %0 = vector.broadcast %cst : f32 to vector<64x8xf32>
    %c0 = arith.constant 0 : index
    %c0_0 = arith.constant 0 : index
    %c0_1 = arith.constant 0 : index
    %c0_2 = arith.constant 0 : index
    %1 = vector.load %arg1[%c0, %c0_0, %c0_1, %c0_2] : memref<4x9x9x4xf32, #tpu.memory_space<vmem>>, vector<1x9x9x4xf32>
    %2 = vector.shape_cast %1 : vector<1x9x9x4xf32> to vector<9x9x4xf32>
    %3 = vector.extract_strided_slice %2 {offsets = [0, 0, 0], sizes = [8, 8, 4], strides = [1, 1, 1]} : vector<9x9x4xf32> to vector<8x8x4xf32>
    %4 = vector.shape_cast %3 : vector<8x8x4xf32> to vector<64x4xf32>
    %5 = arith.truncf %4 : vector<64x4xf32> to vector<64x4xbf16>
    %c0_3 = arith.constant 0 : index
    %c0_4 = arith.constant 0 : index
    %c0_5 = arith.constant 0 : index
    %6 = vector.load %arg2[%c0_3, %c0_4, %c0_5] : memref<9x4x8xbf16, #tpu.memory_space<vmem>>, vector<1x4x8xbf16>
    %7 = vector.shape_cast %6 : vector<1x4x8xbf16> to vector<4x8xbf16>
    %cst_6 = arith.constant dense<0.000000e+00> : vector<64x8xf32>
    %8 = tpu.matmul %5, %7, %cst_6 {dimension_numbers = #tpu.dot_dimension_numbers<[1], [0], [0], [1], [0, 0, 1, 1], [], []>} : vector<64x4xbf16>, vector<4x8xbf16>, vector<64x8xf32> -> vector<64x8xf32>
    %9 = arith.addf %0, %8 : vector<64x8xf32>
    %10 = vector.extract_strided_slice %2 {offsets = [0, 1, 0], sizes = [8, 8, 4], strides = [1, 1, 1]} : vector<9x9x4xf32> to vector<8x8x4xf32>
    %11 = vector.shape_cast %10 : vector<8x8x4xf32> to vector<64x4xf32>
    %12 = arith.truncf %11 : vector<64x4xf32> to vector<64x4xbf16>
    %c2 = arith.constant 2 : index
    %c0_7 = arith.constant 0 : index
    %c0_8 = arith.constant 0 : index
    %13 = vector.load %arg2[%c2, %c0_7, %c0_8] : memref<9x4x8xbf16, #tpu.memory_space<vmem>>, vector<1x4x8xbf16>
    %14 = vector.shape_cast %13 : vector<1x4x8xbf16> to vector<4x8xbf16>
    %cst_9 = arith.constant dense<0.000000e+00> : vector<64x8xf32>
    %15 = tpu.matmul %12, %14, %cst_9 {dimension_numbers = #tpu.dot_dimension_numbers<[1], [0], [0], [1], [0, 0, 1, 1], [], []>} : vector<64x4xbf16>, vector<4x8xbf16>, vector<64x8xf32> -> vector<64x8xf32>
    %16 = arith.addf %9, %15 : vector<64x8xf32>
    %17 = vector.extract_strided_slice %2 {offsets = [1, 0, 0], sizes = [8, 8, 4], strides = [1, 1, 1]} : vector<9x9x4xf32> to vector<8x8x4xf32>
    %18 = vector.shape_cast %17 : vector<8x8x4xf32> to vector<64x4xf32>
    %19 = arith.truncf %18 : vector<64x4xf32> to vector<64x4xbf16>
    %c6 = arith.constant 6 : index
    %c0_10 = arith.constant 0 : index
    %c0_11 = arith.constant 0 : index
    %20 = vector.load %arg2[%c6, %c0_10, %c0_11] : memref<9x4x8xbf16, #tpu.memory_space<vmem>>, vector<1x4x8xbf16>
    %21 = vector.shape_cast %20 : vector<1x4x8xbf16> to vector<4x8xbf16>
    %cst_12 = arith.constant dense<0.000000e+00> : vector<64x8xf32>
    %22 = tpu.matmul %19, %21, %cst_12 {dimension_numbers = #tpu.dot_dimension_numbers<[1], [0], [0], [1], [0, 0, 1, 1], [], []>} : vector<64x4xbf16>, vector<4x8xbf16>, vector<64x8xf32> -> vector<64x8xf32>
    %23 = arith.addf %16, %22 : vector<64x8xf32>
    %24 = vector.extract_strided_slice %2 {offsets = [1, 1, 0], sizes = [8, 8, 4], strides = [1, 1, 1]} : vector<9x9x4xf32> to vector<8x8x4xf32>
    %25 = vector.shape_cast %24 : vector<8x8x4xf32> to vector<64x4xf32>
    %26 = arith.truncf %25 : vector<64x4xf32> to vector<64x4xbf16>
    %c8 = arith.constant 8 : index
    %c0_13 = arith.constant 0 : index
    %c0_14 = arith.constant 0 : index
    %27 = vector.load %arg2[%c8, %c0_13, %c0_14] : memref<9x4x8xbf16, #tpu.memory_space<vmem>>, vector<1x4x8xbf16>
    %28 = vector.shape_cast %27 : vector<1x4x8xbf16> to vector<4x8xbf16>
    %cst_15 = arith.constant dense<0.000000e+00> : vector<64x8xf32>
    %29 = tpu.matmul %26, %28, %cst_15 {dimension_numbers = #tpu.dot_dimension_numbers<[1], [0], [0], [1], [0, 0, 1, 1], [], []>} : vector<64x4xbf16>, vector<4x8xbf16>, vector<64x8xf32> -> vector<64x8xf32>
    %30 = arith.addf %23, %29 : vector<64x8xf32>
    %c1 = arith.constant 1 : index
    %c0_16 = arith.constant 0 : index
    %c0_17 = arith.constant 0 : index
    %c0_18 = arith.constant 0 : index
    %31 = vector.load %arg1[%c1, %c0_16, %c0_17, %c0_18] : memref<4x9x9x4xf32, #tpu.memory_space<vmem>>, vector<1x9x9x4xf32>
    %32 = vector.shape_cast %31 : vector<1x9x9x4xf32> to vector<9x9x4xf32>
    %33 = vector.extract_strided_slice %32 {offsets = [0, 0, 0], sizes = [8, 8, 4], strides = [1, 1, 1]} : vector<9x9x4xf32> to vector<8x8x4xf32>
    %34 = vector.shape_cast %33 : vector<8x8x4xf32> to vector<64x4xf32>
    %35 = arith.truncf %34 : vector<64x4xf32> to vector<64x4xbf16>
    %c1_19 = arith.constant 1 : index
    %c0_20 = arith.constant 0 : index
    %c0_21 = arith.constant 0 : index
    %36 = vector.load %arg2[%c1_19, %c0_20, %c0_21] : memref<9x4x8xbf16, #tpu.memory_space<vmem>>, vector<1x4x8xbf16>
    %37 = vector.shape_cast %36 : vector<1x4x8xbf16> to vector<4x8xbf16>
    %cst_22 = arith.constant dense<0.000000e+00> : vector<64x8xf32>
    %38 = tpu.matmul %35, %37, %cst_22 {dimension_numbers = #tpu.dot_dimension_numbers<[1], [0], [0], [1], [0, 0, 1, 1], [], []>} : vector<64x4xbf16>, vector<4x8xbf16>, vector<64x8xf32> -> vector<64x8xf32>
    %39 = arith.addf %30, %38 : vector<64x8xf32>
    %40 = vector.extract_strided_slice %32 {offsets = [1, 0, 0], sizes = [8, 8, 4], strides = [1, 1, 1]} : vector<9x9x4xf32> to vector<8x8x4xf32>
    %41 = vector.shape_cast %40 : vector<8x8x4xf32> to vector<64x4xf32>
    %42 = arith.truncf %41 : vector<64x4xf32> to vector<64x4xbf16>
    %c7 = arith.constant 7 : index
    %c0_23 = arith.constant 0 : index
    %c0_24 = arith.constant 0 : index
    %43 = vector.load %arg2[%c7, %c0_23, %c0_24] : memref<9x4x8xbf16, #tpu.memory_space<vmem>>, vector<1x4x8xbf16>
    %44 = vector.shape_cast %43 : vector<1x4x8xbf16> to vector<4x8xbf16>
    %cst_25 = arith.constant dense<0.000000e+00> : vector<64x8xf32>
    %45 = tpu.matmul %42, %44, %cst_25 {dimension_numbers = #tpu.dot_dimension_numbers<[1], [0], [0], [1], [0, 0, 1, 1], [], []>} : vector<64x4xbf16>, vector<4x8xbf16>, vector<64x8xf32> -> vector<64x8xf32>
    %46 = arith.addf %39, %45 : vector<64x8xf32>
    %c2_26 = arith.constant 2 : index
    %c0_27 = arith.constant 0 : index
    %c0_28 = arith.constant 0 : index
    %c0_29 = arith.constant 0 : index
    %47 = vector.load %arg1[%c2_26, %c0_27, %c0_28, %c0_29] : memref<4x9x9x4xf32, #tpu.memory_space<vmem>>, vector<1x9x9x4xf32>
    %48 = vector.shape_cast %47 : vector<1x9x9x4xf32> to vector<9x9x4xf32>
    %49 = vector.extract_strided_slice %48 {offsets = [0, 0, 0], sizes = [8, 8, 4], strides = [1, 1, 1]} : vector<9x9x4xf32> to vector<8x8x4xf32>
    %50 = vector.shape_cast %49 : vector<8x8x4xf32> to vector<64x4xf32>
    %51 = arith.truncf %50 : vector<64x4xf32> to vector<64x4xbf16>
    %c3 = arith.constant 3 : index
    %c0_30 = arith.constant 0 : index
    %c0_31 = arith.constant 0 : index
    %52 = vector.load %arg2[%c3, %c0_30, %c0_31] : memref<9x4x8xbf16, #tpu.memory_space<vmem>>, vector<1x4x8xbf16>
    %53 = vector.shape_cast %52 : vector<1x4x8xbf16> to vector<4x8xbf16>
    %cst_32 = arith.constant dense<0.000000e+00> : vector<64x8xf32>
    %54 = tpu.matmul %51, %53, %cst_32 {dimension_numbers = #tpu.dot_dimension_numbers<[1], [0], [0], [1], [0, 0, 1, 1], [], []>} : vector<64x4xbf16>, vector<4x8xbf16>, vector<64x8xf32> -> vector<64x8xf32>
    %55 = arith.addf %46, %54 : vector<64x8xf32>
    %56 = vector.extract_strided_slice %48 {offsets = [0, 1, 0], sizes = [8, 8, 4], strides = [1, 1, 1]} : vector<9x9x4xf32> to vector<8x8x4xf32>
    %57 = vector.shape_cast %56 : vector<8x8x4xf32> to vector<64x4xf32>
    %58 = arith.truncf %57 : vector<64x4xf32> to vector<64x4xbf16>
    %c5 = arith.constant 5 : index
    %c0_33 = arith.constant 0 : index
    %c0_34 = arith.constant 0 : index
    %59 = vector.load %arg2[%c5, %c0_33, %c0_34] : memref<9x4x8xbf16, #tpu.memory_space<vmem>>, vector<1x4x8xbf16>
    %60 = vector.shape_cast %59 : vector<1x4x8xbf16> to vector<4x8xbf16>
    %cst_35 = arith.constant dense<0.000000e+00> : vector<64x8xf32>
    %61 = tpu.matmul %58, %60, %cst_35 {dimension_numbers = #tpu.dot_dimension_numbers<[1], [0], [0], [1], [0, 0, 1, 1], [], []>} : vector<64x4xbf16>, vector<4x8xbf16>, vector<64x8xf32> -> vector<64x8xf32>
    %62 = arith.addf %55, %61 : vector<64x8xf32>
    %c3_36 = arith.constant 3 : index
    %c0_37 = arith.constant 0 : index
    %c0_38 = arith.constant 0 : index
    %c0_39 = arith.constant 0 : index
    %63 = vector.load %arg1[%c3_36, %c0_37, %c0_38, %c0_39] : memref<4x9x9x4xf32, #tpu.memory_space<vmem>>, vector<1x9x9x4xf32>
    %64 = vector.shape_cast %63 : vector<1x9x9x4xf32> to vector<9x9x4xf32>
    %65 = vector.extract_strided_slice %64 {offsets = [0, 0, 0], sizes = [8, 8, 4], strides = [1, 1, 1]} : vector<9x9x4xf32> to vector<8x8x4xf32>
    %66 = vector.shape_cast %65 : vector<8x8x4xf32> to vector<64x4xf32>
    %67 = arith.truncf %66 : vector<64x4xf32> to vector<64x4xbf16>
    %c4 = arith.constant 4 : index
    %c0_40 = arith.constant 0 : index
    %c0_41 = arith.constant 0 : index
    %68 = vector.load %arg2[%c4, %c0_40, %c0_41] : memref<9x4x8xbf16, #tpu.memory_space<vmem>>, vector<1x4x8xbf16>
    %69 = vector.shape_cast %68 : vector<1x4x8xbf16> to vector<4x8xbf16>
    %cst_42 = arith.constant dense<0.000000e+00> : vector<64x8xf32>
    %70 = tpu.matmul %67, %69, %cst_42 {dimension_numbers = #tpu.dot_dimension_numbers<[1], [0], [0], [1], [0, 0, 1, 1], [], []>} : vector<64x4xbf16>, vector<4x8xbf16>, vector<64x8xf32> -> vector<64x8xf32>
    %71 = arith.addf %62, %70 : vector<64x8xf32>
    %c0_43 = arith.constant 0 : index
    %c0_44 = arith.constant 0 : index
    %72 = vector.load %arg3[%c0_43, %c0_44] : memref<5x8xf32, #tpu.memory_space<vmem>>, vector<5x8xf32>
    %73 = vector.extract_strided_slice %72 {offsets = [0, 0], sizes = [1, 8], strides = [1, 1]} : vector<5x8xf32> to vector<1x8xf32>
    %74 = vector.broadcast %73 : vector<1x8xf32> to vector<64x8xf32>
    %75 = arith.addf %71, %74 : vector<64x8xf32>
    %76 = vector.extract_strided_slice %72 {offsets = [1, 0], sizes = [1, 8], strides = [1, 1]} : vector<5x8xf32> to vector<1x8xf32>
    %77 = vector.extract_strided_slice %72 {offsets = [2, 0], sizes = [1, 8], strides = [1, 1]} : vector<5x8xf32> to vector<1x8xf32>
    %cst_45 = arith.constant dense<0.000000e+00> : vector<64xf32>
    %78 = vector.multi_reduction <add>, %75, %cst_45 [1] : vector<64x8xf32> to vector<64xf32>
    %79 = vector.shape_cast %78 : vector<64xf32> to vector<64x1xf32>
    %80 = arith.mulf %75, %75 : vector<64x8xf32>
    %cst_46 = arith.constant dense<0.000000e+00> : vector<64xf32>
    %81 = vector.multi_reduction <add>, %80, %cst_46 [1] : vector<64x8xf32> to vector<64xf32>
    %82 = vector.shape_cast %81 : vector<64xf32> to vector<64x1xf32>
    %cst_47 = arith.constant 1.250000e-01 : f32
    %83 = vector.broadcast %cst_47 : f32 to vector<64x1xf32>
    %84 = arith.mulf %79, %83 : vector<64x1xf32>
    %cst_48 = arith.constant 1.250000e-01 : f32
    %85 = vector.broadcast %cst_48 : f32 to vector<64x1xf32>
    %86 = arith.mulf %82, %85 : vector<64x1xf32>
    %87 = arith.mulf %84, %84 : vector<64x1xf32>
    %88 = arith.subf %86, %87 : vector<64x1xf32>
    %cst_49 = arith.constant 0.000000e+00 : f32
    %89 = vector.broadcast %cst_49 : f32 to vector<64x1xf32>
    %90 = arith.maximumf %88, %89 : vector<64x1xf32>
    %91 = vector.broadcast %84 : vector<64x1xf32> to vector<64x8xf32>
    %92 = arith.subf %75, %91 : vector<64x8xf32>
    %cst_50 = arith.constant 9.99999997E-7 : f32
    %93 = vector.broadcast %cst_50 : f32 to vector<64x1xf32>
    %94 = arith.addf %90, %93 : vector<64x1xf32>
    %95 = math.rsqrt %94 : vector<64x1xf32>
    %96 = vector.broadcast %95 : vector<64x1xf32> to vector<64x8xf32>
    %97 = arith.mulf %92, %96 : vector<64x8xf32>
    %98 = vector.broadcast %76 : vector<1x8xf32> to vector<64x8xf32>
    %99 = arith.mulf %97, %98 : vector<64x8xf32>
    %100 = vector.broadcast %77 : vector<1x8xf32> to vector<64x8xf32>
    %101 = arith.addf %99, %100 : vector<64x8xf32>
    %102 = vector.extract_strided_slice %72 {offsets = [3, 0], sizes = [1, 8], strides = [1, 1]} : vector<5x8xf32> to vector<1x8xf32>
    %103 = vector.extract_strided_slice %72 {offsets = [4, 0], sizes = [1, 8], strides = [1, 1]} : vector<5x8xf32> to vector<1x8xf32>
    %cst_51 = arith.constant dense<0.000000e+00> : vector<64xf32>
    %104 = vector.multi_reduction <add>, %101, %cst_51 [1] : vector<64x8xf32> to vector<64xf32>
    %105 = vector.shape_cast %104 : vector<64xf32> to vector<64x1xf32>
    %106 = arith.mulf %101, %101 : vector<64x8xf32>
    %cst_52 = arith.constant dense<0.000000e+00> : vector<64xf32>
    %107 = vector.multi_reduction <add>, %106, %cst_52 [1] : vector<64x8xf32> to vector<64xf32>
    %108 = vector.shape_cast %107 : vector<64xf32> to vector<64x1xf32>
    %cst_53 = arith.constant 1.250000e-01 : f32
    %109 = vector.broadcast %cst_53 : f32 to vector<64x1xf32>
    %110 = arith.mulf %105, %109 : vector<64x1xf32>
    %cst_54 = arith.constant 1.250000e-01 : f32
    %111 = vector.broadcast %cst_54 : f32 to vector<64x1xf32>
    %112 = arith.mulf %108, %111 : vector<64x1xf32>
    %113 = arith.mulf %110, %110 : vector<64x1xf32>
    %114 = arith.subf %112, %113 : vector<64x1xf32>
    %cst_55 = arith.constant 0.000000e+00 : f32
    %115 = vector.broadcast %cst_55 : f32 to vector<64x1xf32>
    %116 = arith.maximumf %114, %115 : vector<64x1xf32>
    %117 = vector.broadcast %110 : vector<64x1xf32> to vector<64x8xf32>
    %118 = arith.subf %101, %117 : vector<64x8xf32>
    %cst_56 = arith.constant 9.99999997E-7 : f32
    %119 = vector.broadcast %cst_56 : f32 to vector<64x1xf32>
    %120 = arith.addf %116, %119 : vector<64x1xf32>
    %121 = math.rsqrt %120 : vector<64x1xf32>
    %122 = vector.broadcast %121 : vector<64x1xf32> to vector<64x8xf32>
    %123 = arith.mulf %118, %122 : vector<64x8xf32>
    %124 = vector.broadcast %102 : vector<1x8xf32> to vector<64x8xf32>
    %125 = arith.mulf %123, %124 : vector<64x8xf32>
    %126 = vector.broadcast %103 : vector<1x8xf32> to vector<64x8xf32>
    %127 = arith.addf %125, %126 : vector<64x8xf32>
    %c0_57 = arith.constant 0 : index
    %c0_58 = arith.constant 0 : index
    %c0_59 = arith.constant 0 : index
    %128 = vector.load %arg4[%c0_57, %c0_58, %c0_59] : memref<1x64x8xf32, #tpu.memory_space<vmem>>, vector<1x64x8xf32>
    %129 = vector.shape_cast %128 : vector<1x64x8xf32> to vector<64x8xf32>
    %130 = vector.shape_cast %127 : vector<64x8xf32> to vector<1x64x8xf32>
    tpu.vector_store %arg4[%c0_57, %c0_58, %c0_59], %130 {strides = array<i32>} : memref<1x64x8xf32, #tpu.memory_space<vmem>>, vector<1x64x8xf32>,
    return
  }
  func.func @transform_0(%arg0: i32) -> (i32, i32, i32, i32) {
    %c0_i32 = arith.constant 0 : i32
    %c0_i32_0 = arith.constant 0 : i32
    %c0_i32_1 = arith.constant 0 : i32
    %c0_i32_2 = arith.constant 0 : i32
    return %arg0, %c0_i32, %c0_i32_0, %c0_i32_1 : i32, i32, i32, i32
  }
  func.func @transform_1(%arg0: i32) -> (i32, i32, i32) {
    %c0_i32 = arith.constant 0 : i32
    %c0_i32_0 = arith.constant 0 : i32
    %c0_i32_1 = arith.constant 0 : i32
    %c0_i32_2 = arith.constant 0 : i32
    return %c0_i32, %c0_i32_0, %c0_i32_1 : i32, i32, i32
  }
  func.func @transform_2(%arg0: i32) -> (i32, i32) {
    %c0_i32 = arith.constant 0 : i32
    %c0_i32_0 = arith.constant 0 : i32
    %c0_i32_1 = arith.constant 0 : i32
    return %c0_i32, %c0_i32_0 : i32, i32
  }
  func.func @transform_3(%arg0: i32) -> (i32, i32, i32) {
    %c0_i32 = arith.constant 0 : i32
    %c0_i32_0 = arith.constant 0 : i32
    %c0_i32_1 = arith.constant 0 : i32
    return %arg0, %c0_i32, %c0_i32_0 : i32, i32, i32
  }
}

module attributes {stable_mosaic.version = 11 : i64} {
  func.func @_conv_ln_kernel(%arg0: i32, %arg1: memref<4x5x5x8xf32, #tpu.memory_space<vmem>>, %arg2: memref<9x8x16xbf16, #tpu.memory_space<vmem>>, %arg3: memref<5x16xf32, #tpu.memory_space<vmem>>, %arg4: memref<1x16x16xf32, #tpu.memory_space<vmem>>) attributes {dimension_semantics = [#tpu.dimension_semantics<parallel>], iteration_bounds = array<i64: 2>, scalar_prefetch = 0 : i64, scratch_operands = 0 : i64, tpu.core_type = #tpu.core_type<tc>, window_params = [{transform_indices = @transform_0, window_bounds = array<i64: 4, 5, 5, 8>}, {pipeline_mode = #tpu.pipeline_mode<synchronous>, transform_indices = @transform_1, window_bounds = array<i64: 9, 8, 16>}, {pipeline_mode = #tpu.pipeline_mode<synchronous>, transform_indices = @transform_2, window_bounds = array<i64: 5, 16>}, {transform_indices = @transform_3, window_bounds = array<i64: 1, 16, 16>}]} {
    %cst = arith.constant 0.000000e+00 : f32
    %0 = vector.broadcast %cst : f32 to vector<16x16xf32>
    %c0 = arith.constant 0 : index
    %c0_0 = arith.constant 0 : index
    %c0_1 = arith.constant 0 : index
    %c0_2 = arith.constant 0 : index
    %1 = vector.load %arg1[%c0, %c0_0, %c0_1, %c0_2] : memref<4x5x5x8xf32, #tpu.memory_space<vmem>>, vector<1x5x5x8xf32>
    %2 = vector.shape_cast %1 : vector<1x5x5x8xf32> to vector<5x5x8xf32>
    %3 = vector.extract_strided_slice %2 {offsets = [0, 0, 0], sizes = [4, 4, 8], strides = [1, 1, 1]} : vector<5x5x8xf32> to vector<4x4x8xf32>
    %4 = vector.shape_cast %3 : vector<4x4x8xf32> to vector<16x8xf32>
    %5 = arith.truncf %4 : vector<16x8xf32> to vector<16x8xbf16>
    %c0_3 = arith.constant 0 : index
    %c0_4 = arith.constant 0 : index
    %c0_5 = arith.constant 0 : index
    %6 = vector.load %arg2[%c0_3, %c0_4, %c0_5] : memref<9x8x16xbf16, #tpu.memory_space<vmem>>, vector<1x8x16xbf16>
    %7 = vector.shape_cast %6 : vector<1x8x16xbf16> to vector<8x16xbf16>
    %cst_6 = arith.constant dense<0.000000e+00> : vector<16x16xf32>
    %8 = tpu.matmul %5, %7, %cst_6 {dimension_numbers = #tpu.dot_dimension_numbers<[1], [0], [0], [1], [0, 0, 1, 1], [], []>} : vector<16x8xbf16>, vector<8x16xbf16>, vector<16x16xf32> -> vector<16x16xf32>
    %9 = arith.addf %0, %8 : vector<16x16xf32>
    %10 = vector.extract_strided_slice %2 {offsets = [0, 1, 0], sizes = [4, 4, 8], strides = [1, 1, 1]} : vector<5x5x8xf32> to vector<4x4x8xf32>
    %11 = vector.shape_cast %10 : vector<4x4x8xf32> to vector<16x8xf32>
    %12 = arith.truncf %11 : vector<16x8xf32> to vector<16x8xbf16>
    %c2 = arith.constant 2 : index
    %c0_7 = arith.constant 0 : index
    %c0_8 = arith.constant 0 : index
    %13 = vector.load %arg2[%c2, %c0_7, %c0_8] : memref<9x8x16xbf16, #tpu.memory_space<vmem>>, vector<1x8x16xbf16>
    %14 = vector.shape_cast %13 : vector<1x8x16xbf16> to vector<8x16xbf16>
    %cst_9 = arith.constant dense<0.000000e+00> : vector<16x16xf32>
    %15 = tpu.matmul %12, %14, %cst_9 {dimension_numbers = #tpu.dot_dimension_numbers<[1], [0], [0], [1], [0, 0, 1, 1], [], []>} : vector<16x8xbf16>, vector<8x16xbf16>, vector<16x16xf32> -> vector<16x16xf32>
    %16 = arith.addf %9, %15 : vector<16x16xf32>
    %17 = vector.extract_strided_slice %2 {offsets = [1, 0, 0], sizes = [4, 4, 8], strides = [1, 1, 1]} : vector<5x5x8xf32> to vector<4x4x8xf32>
    %18 = vector.shape_cast %17 : vector<4x4x8xf32> to vector<16x8xf32>
    %19 = arith.truncf %18 : vector<16x8xf32> to vector<16x8xbf16>
    %c6 = arith.constant 6 : index
    %c0_10 = arith.constant 0 : index
    %c0_11 = arith.constant 0 : index
    %20 = vector.load %arg2[%c6, %c0_10, %c0_11] : memref<9x8x16xbf16, #tpu.memory_space<vmem>>, vector<1x8x16xbf16>
    %21 = vector.shape_cast %20 : vector<1x8x16xbf16> to vector<8x16xbf16>
    %cst_12 = arith.constant dense<0.000000e+00> : vector<16x16xf32>
    %22 = tpu.matmul %19, %21, %cst_12 {dimension_numbers = #tpu.dot_dimension_numbers<[1], [0], [0], [1], [0, 0, 1, 1], [], []>} : vector<16x8xbf16>, vector<8x16xbf16>, vector<16x16xf32> -> vector<16x16xf32>
    %23 = arith.addf %16, %22 : vector<16x16xf32>
    %24 = vector.extract_strided_slice %2 {offsets = [1, 1, 0], sizes = [4, 4, 8], strides = [1, 1, 1]} : vector<5x5x8xf32> to vector<4x4x8xf32>
    %25 = vector.shape_cast %24 : vector<4x4x8xf32> to vector<16x8xf32>
    %26 = arith.truncf %25 : vector<16x8xf32> to vector<16x8xbf16>
    %c8 = arith.constant 8 : index
    %c0_13 = arith.constant 0 : index
    %c0_14 = arith.constant 0 : index
    %27 = vector.load %arg2[%c8, %c0_13, %c0_14] : memref<9x8x16xbf16, #tpu.memory_space<vmem>>, vector<1x8x16xbf16>
    %28 = vector.shape_cast %27 : vector<1x8x16xbf16> to vector<8x16xbf16>
    %cst_15 = arith.constant dense<0.000000e+00> : vector<16x16xf32>
    %29 = tpu.matmul %26, %28, %cst_15 {dimension_numbers = #tpu.dot_dimension_numbers<[1], [0], [0], [1], [0, 0, 1, 1], [], []>} : vector<16x8xbf16>, vector<8x16xbf16>, vector<16x16xf32> -> vector<16x16xf32>
    %30 = arith.addf %23, %29 : vector<16x16xf32>
    %c1 = arith.constant 1 : index
    %c0_16 = arith.constant 0 : index
    %c0_17 = arith.constant 0 : index
    %c0_18 = arith.constant 0 : index
    %31 = vector.load %arg1[%c1, %c0_16, %c0_17, %c0_18] : memref<4x5x5x8xf32, #tpu.memory_space<vmem>>, vector<1x5x5x8xf32>
    %32 = vector.shape_cast %31 : vector<1x5x5x8xf32> to vector<5x5x8xf32>
    %33 = vector.extract_strided_slice %32 {offsets = [0, 0, 0], sizes = [4, 4, 8], strides = [1, 1, 1]} : vector<5x5x8xf32> to vector<4x4x8xf32>
    %34 = vector.shape_cast %33 : vector<4x4x8xf32> to vector<16x8xf32>
    %35 = arith.truncf %34 : vector<16x8xf32> to vector<16x8xbf16>
    %c1_19 = arith.constant 1 : index
    %c0_20 = arith.constant 0 : index
    %c0_21 = arith.constant 0 : index
    %36 = vector.load %arg2[%c1_19, %c0_20, %c0_21] : memref<9x8x16xbf16, #tpu.memory_space<vmem>>, vector<1x8x16xbf16>
    %37 = vector.shape_cast %36 : vector<1x8x16xbf16> to vector<8x16xbf16>
    %cst_22 = arith.constant dense<0.000000e+00> : vector<16x16xf32>
    %38 = tpu.matmul %35, %37, %cst_22 {dimension_numbers = #tpu.dot_dimension_numbers<[1], [0], [0], [1], [0, 0, 1, 1], [], []>} : vector<16x8xbf16>, vector<8x16xbf16>, vector<16x16xf32> -> vector<16x16xf32>
    %39 = arith.addf %30, %38 : vector<16x16xf32>
    %40 = vector.extract_strided_slice %32 {offsets = [1, 0, 0], sizes = [4, 4, 8], strides = [1, 1, 1]} : vector<5x5x8xf32> to vector<4x4x8xf32>
    %41 = vector.shape_cast %40 : vector<4x4x8xf32> to vector<16x8xf32>
    %42 = arith.truncf %41 : vector<16x8xf32> to vector<16x8xbf16>
    %c7 = arith.constant 7 : index
    %c0_23 = arith.constant 0 : index
    %c0_24 = arith.constant 0 : index
    %43 = vector.load %arg2[%c7, %c0_23, %c0_24] : memref<9x8x16xbf16, #tpu.memory_space<vmem>>, vector<1x8x16xbf16>
    %44 = vector.shape_cast %43 : vector<1x8x16xbf16> to vector<8x16xbf16>
    %cst_25 = arith.constant dense<0.000000e+00> : vector<16x16xf32>
    %45 = tpu.matmul %42, %44, %cst_25 {dimension_numbers = #tpu.dot_dimension_numbers<[1], [0], [0], [1], [0, 0, 1, 1], [], []>} : vector<16x8xbf16>, vector<8x16xbf16>, vector<16x16xf32> -> vector<16x16xf32>
    %46 = arith.addf %39, %45 : vector<16x16xf32>
    %c2_26 = arith.constant 2 : index
    %c0_27 = arith.constant 0 : index
    %c0_28 = arith.constant 0 : index
    %c0_29 = arith.constant 0 : index
    %47 = vector.load %arg1[%c2_26, %c0_27, %c0_28, %c0_29] : memref<4x5x5x8xf32, #tpu.memory_space<vmem>>, vector<1x5x5x8xf32>
    %48 = vector.shape_cast %47 : vector<1x5x5x8xf32> to vector<5x5x8xf32>
    %49 = vector.extract_strided_slice %48 {offsets = [0, 0, 0], sizes = [4, 4, 8], strides = [1, 1, 1]} : vector<5x5x8xf32> to vector<4x4x8xf32>
    %50 = vector.shape_cast %49 : vector<4x4x8xf32> to vector<16x8xf32>
    %51 = arith.truncf %50 : vector<16x8xf32> to vector<16x8xbf16>
    %c3 = arith.constant 3 : index
    %c0_30 = arith.constant 0 : index
    %c0_31 = arith.constant 0 : index
    %52 = vector.load %arg2[%c3, %c0_30, %c0_31] : memref<9x8x16xbf16, #tpu.memory_space<vmem>>, vector<1x8x16xbf16>
    %53 = vector.shape_cast %52 : vector<1x8x16xbf16> to vector<8x16xbf16>
    %cst_32 = arith.constant dense<0.000000e+00> : vector<16x16xf32>
    %54 = tpu.matmul %51, %53, %cst_32 {dimension_numbers = #tpu.dot_dimension_numbers<[1], [0], [0], [1], [0, 0, 1, 1], [], []>} : vector<16x8xbf16>, vector<8x16xbf16>, vector<16x16xf32> -> vector<16x16xf32>
    %55 = arith.addf %46, %54 : vector<16x16xf32>
    %56 = vector.extract_strided_slice %48 {offsets = [0, 1, 0], sizes = [4, 4, 8], strides = [1, 1, 1]} : vector<5x5x8xf32> to vector<4x4x8xf32>
    %57 = vector.shape_cast %56 : vector<4x4x8xf32> to vector<16x8xf32>
    %58 = arith.truncf %57 : vector<16x8xf32> to vector<16x8xbf16>
    %c5 = arith.constant 5 : index
    %c0_33 = arith.constant 0 : index
    %c0_34 = arith.constant 0 : index
    %59 = vector.load %arg2[%c5, %c0_33, %c0_34] : memref<9x8x16xbf16, #tpu.memory_space<vmem>>, vector<1x8x16xbf16>
    %60 = vector.shape_cast %59 : vector<1x8x16xbf16> to vector<8x16xbf16>
    %cst_35 = arith.constant dense<0.000000e+00> : vector<16x16xf32>
    %61 = tpu.matmul %58, %60, %cst_35 {dimension_numbers = #tpu.dot_dimension_numbers<[1], [0], [0], [1], [0, 0, 1, 1], [], []>} : vector<16x8xbf16>, vector<8x16xbf16>, vector<16x16xf32> -> vector<16x16xf32>
    %62 = arith.addf %55, %61 : vector<16x16xf32>
    %c3_36 = arith.constant 3 : index
    %c0_37 = arith.constant 0 : index
    %c0_38 = arith.constant 0 : index
    %c0_39 = arith.constant 0 : index
    %63 = vector.load %arg1[%c3_36, %c0_37, %c0_38, %c0_39] : memref<4x5x5x8xf32, #tpu.memory_space<vmem>>, vector<1x5x5x8xf32>
    %64 = vector.shape_cast %63 : vector<1x5x5x8xf32> to vector<5x5x8xf32>
    %65 = vector.extract_strided_slice %64 {offsets = [0, 0, 0], sizes = [4, 4, 8], strides = [1, 1, 1]} : vector<5x5x8xf32> to vector<4x4x8xf32>
    %66 = vector.shape_cast %65 : vector<4x4x8xf32> to vector<16x8xf32>
    %67 = arith.truncf %66 : vector<16x8xf32> to vector<16x8xbf16>
    %c4 = arith.constant 4 : index
    %c0_40 = arith.constant 0 : index
    %c0_41 = arith.constant 0 : index
    %68 = vector.load %arg2[%c4, %c0_40, %c0_41] : memref<9x8x16xbf16, #tpu.memory_space<vmem>>, vector<1x8x16xbf16>
    %69 = vector.shape_cast %68 : vector<1x8x16xbf16> to vector<8x16xbf16>
    %cst_42 = arith.constant dense<0.000000e+00> : vector<16x16xf32>
    %70 = tpu.matmul %67, %69, %cst_42 {dimension_numbers = #tpu.dot_dimension_numbers<[1], [0], [0], [1], [0, 0, 1, 1], [], []>} : vector<16x8xbf16>, vector<8x16xbf16>, vector<16x16xf32> -> vector<16x16xf32>
    %71 = arith.addf %62, %70 : vector<16x16xf32>
    %c0_43 = arith.constant 0 : index
    %c0_44 = arith.constant 0 : index
    %72 = vector.load %arg3[%c0_43, %c0_44] : memref<5x16xf32, #tpu.memory_space<vmem>>, vector<5x16xf32>
    %73 = vector.extract_strided_slice %72 {offsets = [0, 0], sizes = [1, 16], strides = [1, 1]} : vector<5x16xf32> to vector<1x16xf32>
    %74 = vector.broadcast %73 : vector<1x16xf32> to vector<16x16xf32>
    %75 = arith.addf %71, %74 : vector<16x16xf32>
    %76 = vector.extract_strided_slice %72 {offsets = [1, 0], sizes = [1, 16], strides = [1, 1]} : vector<5x16xf32> to vector<1x16xf32>
    %77 = vector.extract_strided_slice %72 {offsets = [2, 0], sizes = [1, 16], strides = [1, 1]} : vector<5x16xf32> to vector<1x16xf32>
    %cst_45 = arith.constant dense<0.000000e+00> : vector<16xf32>
    %78 = vector.multi_reduction <add>, %75, %cst_45 [1] : vector<16x16xf32> to vector<16xf32>
    %79 = vector.shape_cast %78 : vector<16xf32> to vector<16x1xf32>
    %80 = arith.mulf %75, %75 : vector<16x16xf32>
    %cst_46 = arith.constant dense<0.000000e+00> : vector<16xf32>
    %81 = vector.multi_reduction <add>, %80, %cst_46 [1] : vector<16x16xf32> to vector<16xf32>
    %82 = vector.shape_cast %81 : vector<16xf32> to vector<16x1xf32>
    %cst_47 = arith.constant 6.250000e-02 : f32
    %83 = vector.broadcast %cst_47 : f32 to vector<16x1xf32>
    %84 = arith.mulf %79, %83 : vector<16x1xf32>
    %cst_48 = arith.constant 6.250000e-02 : f32
    %85 = vector.broadcast %cst_48 : f32 to vector<16x1xf32>
    %86 = arith.mulf %82, %85 : vector<16x1xf32>
    %87 = arith.mulf %84, %84 : vector<16x1xf32>
    %88 = arith.subf %86, %87 : vector<16x1xf32>
    %cst_49 = arith.constant 0.000000e+00 : f32
    %89 = vector.broadcast %cst_49 : f32 to vector<16x1xf32>
    %90 = arith.maximumf %88, %89 : vector<16x1xf32>
    %91 = vector.broadcast %84 : vector<16x1xf32> to vector<16x16xf32>
    %92 = arith.subf %75, %91 : vector<16x16xf32>
    %cst_50 = arith.constant 9.99999997E-7 : f32
    %93 = vector.broadcast %cst_50 : f32 to vector<16x1xf32>
    %94 = arith.addf %90, %93 : vector<16x1xf32>
    %95 = math.rsqrt %94 : vector<16x1xf32>
    %96 = vector.broadcast %95 : vector<16x1xf32> to vector<16x16xf32>
    %97 = arith.mulf %92, %96 : vector<16x16xf32>
    %98 = vector.broadcast %76 : vector<1x16xf32> to vector<16x16xf32>
    %99 = arith.mulf %97, %98 : vector<16x16xf32>
    %100 = vector.broadcast %77 : vector<1x16xf32> to vector<16x16xf32>
    %101 = arith.addf %99, %100 : vector<16x16xf32>
    %102 = vector.extract_strided_slice %72 {offsets = [3, 0], sizes = [1, 16], strides = [1, 1]} : vector<5x16xf32> to vector<1x16xf32>
    %103 = vector.extract_strided_slice %72 {offsets = [4, 0], sizes = [1, 16], strides = [1, 1]} : vector<5x16xf32> to vector<1x16xf32>
    %cst_51 = arith.constant dense<0.000000e+00> : vector<16xf32>
    %104 = vector.multi_reduction <add>, %101, %cst_51 [1] : vector<16x16xf32> to vector<16xf32>
    %105 = vector.shape_cast %104 : vector<16xf32> to vector<16x1xf32>
    %106 = arith.mulf %101, %101 : vector<16x16xf32>
    %cst_52 = arith.constant dense<0.000000e+00> : vector<16xf32>
    %107 = vector.multi_reduction <add>, %106, %cst_52 [1] : vector<16x16xf32> to vector<16xf32>
    %108 = vector.shape_cast %107 : vector<16xf32> to vector<16x1xf32>
    %cst_53 = arith.constant 6.250000e-02 : f32
    %109 = vector.broadcast %cst_53 : f32 to vector<16x1xf32>
    %110 = arith.mulf %105, %109 : vector<16x1xf32>
    %cst_54 = arith.constant 6.250000e-02 : f32
    %111 = vector.broadcast %cst_54 : f32 to vector<16x1xf32>
    %112 = arith.mulf %108, %111 : vector<16x1xf32>
    %113 = arith.mulf %110, %110 : vector<16x1xf32>
    %114 = arith.subf %112, %113 : vector<16x1xf32>
    %cst_55 = arith.constant 0.000000e+00 : f32
    %115 = vector.broadcast %cst_55 : f32 to vector<16x1xf32>
    %116 = arith.maximumf %114, %115 : vector<16x1xf32>
    %117 = vector.broadcast %110 : vector<16x1xf32> to vector<16x16xf32>
    %118 = arith.subf %101, %117 : vector<16x16xf32>
    %cst_56 = arith.constant 9.99999997E-7 : f32
    %119 = vector.broadcast %cst_56 : f32 to vector<16x1xf32>
    %120 = arith.addf %116, %119 : vector<16x1xf32>
    %121 = math.rsqrt %120 : vector<16x1xf32>
    %122 = vector.broadcast %121 : vector<16x1xf32> to vector<16x16xf32>
    %123 = arith.mulf %118, %122 : vector<16x16xf32>
    %124 = vector.broadcast %102 : vector<1x16xf32> to vector<16x16xf32>
    %125 = arith.mulf %123, %124 : vector<16x16xf32>
    %126 = vector.broadcast %103 : vector<1x16xf32> to vector<16x16xf32>
    %127 = arith.addf %125, %126 : vector<16x16xf32>
    %c0_57 = arith.constant 0 : index
    %c0_58 = arith.constant 0 : index
    %c0_59 = arith.constant 0 : index
    %128 = vector.load %arg4[%c0_57, %c0_58, %c0_59] : memref<1x16x16xf32, #tpu.memory_space<vmem>>, vector<1x16x16xf32>
    %129 = vector.shape_cast %128 : vector<1x16x16xf32> to vector<16x16xf32>
    %130 = vector.shape_cast %127 : vector<16x16xf32> to vector<1x16x16xf32>
    tpu.vector_store %arg4[%c0_57, %c0_58, %c0_59], %130 {strides = array<i32>} : memref<1x16x16xf32, #tpu.memory_space<vmem>>, vector<1x16x16xf32>,
    return
  }
  func.func @transform_0(%arg0: i32) -> (i32, i32, i32, i32) {
    %c0_i32 = arith.constant 0 : i32
    %c0_i32_0 = arith.constant 0 : i32
    %c0_i32_1 = arith.constant 0 : i32
    %c0_i32_2 = arith.constant 0 : i32
    return %arg0, %c0_i32, %c0_i32_0, %c0_i32_1 : i32, i32, i32, i32
  }
  func.func @transform_1(%arg0: i32) -> (i32, i32, i32) {
    %c0_i32 = arith.constant 0 : i32
    %c0_i32_0 = arith.constant 0 : i32
    %c0_i32_1 = arith.constant 0 : i32
    %c0_i32_2 = arith.constant 0 : i32
    return %c0_i32, %c0_i32_0, %c0_i32_1 : i32, i32, i32
  }
  func.func @transform_2(%arg0: i32) -> (i32, i32) {
    %c0_i32 = arith.constant 0 : i32
    %c0_i32_0 = arith.constant 0 : i32
    %c0_i32_1 = arith.constant 0 : i32
    return %c0_i32, %c0_i32_0 : i32, i32
  }
  func.func @transform_3(%arg0: i32) -> (i32, i32, i32) {
    %c0_i32 = arith.constant 0 : i32
    %c0_i32_0 = arith.constant 0 : i32
    %c0_i32_1 = arith.constant 0 : i32
    return %arg0, %c0_i32, %c0_i32_0 : i32, i32, i32
  }
}

module attributes {stable_mosaic.version = 11 : i64} {
  func.func @_conv_ln_kernel(%arg0: i32, %arg1: memref<4x3x3x16xf32, #tpu.memory_space<vmem>>, %arg2: memref<9x16x32xbf16, #tpu.memory_space<vmem>>, %arg3: memref<5x32xf32, #tpu.memory_space<vmem>>, %arg4: memref<1x4x32xf32, #tpu.memory_space<vmem>>) attributes {dimension_semantics = [#tpu.dimension_semantics<parallel>], iteration_bounds = array<i64: 2>, scalar_prefetch = 0 : i64, scratch_operands = 0 : i64, tpu.core_type = #tpu.core_type<tc>, window_params = [{transform_indices = @transform_0, window_bounds = array<i64: 4, 3, 3, 16>}, {pipeline_mode = #tpu.pipeline_mode<synchronous>, transform_indices = @transform_1, window_bounds = array<i64: 9, 16, 32>}, {pipeline_mode = #tpu.pipeline_mode<synchronous>, transform_indices = @transform_2, window_bounds = array<i64: 5, 32>}, {transform_indices = @transform_3, window_bounds = array<i64: 1, 4, 32>}]} {
    %cst = arith.constant 0.000000e+00 : f32
    %0 = vector.broadcast %cst : f32 to vector<4x32xf32>
    %c0 = arith.constant 0 : index
    %c0_0 = arith.constant 0 : index
    %c0_1 = arith.constant 0 : index
    %c0_2 = arith.constant 0 : index
    %1 = vector.load %arg1[%c0, %c0_0, %c0_1, %c0_2] : memref<4x3x3x16xf32, #tpu.memory_space<vmem>>, vector<1x3x3x16xf32>
    %2 = vector.shape_cast %1 : vector<1x3x3x16xf32> to vector<3x3x16xf32>
    %3 = vector.extract_strided_slice %2 {offsets = [0, 0, 0], sizes = [2, 2, 16], strides = [1, 1, 1]} : vector<3x3x16xf32> to vector<2x2x16xf32>
    %4 = vector.shape_cast %3 : vector<2x2x16xf32> to vector<4x16xf32>
    %5 = arith.truncf %4 : vector<4x16xf32> to vector<4x16xbf16>
    %c0_3 = arith.constant 0 : index
    %c0_4 = arith.constant 0 : index
    %c0_5 = arith.constant 0 : index
    %6 = vector.load %arg2[%c0_3, %c0_4, %c0_5] : memref<9x16x32xbf16, #tpu.memory_space<vmem>>, vector<1x16x32xbf16>
    %7 = vector.shape_cast %6 : vector<1x16x32xbf16> to vector<16x32xbf16>
    %cst_6 = arith.constant dense<0.000000e+00> : vector<4x32xf32>
    %8 = tpu.matmul %5, %7, %cst_6 {dimension_numbers = #tpu.dot_dimension_numbers<[1], [0], [0], [1], [0, 0, 1, 1], [], []>} : vector<4x16xbf16>, vector<16x32xbf16>, vector<4x32xf32> -> vector<4x32xf32>
    %9 = arith.addf %0, %8 : vector<4x32xf32>
    %10 = vector.extract_strided_slice %2 {offsets = [0, 1, 0], sizes = [2, 2, 16], strides = [1, 1, 1]} : vector<3x3x16xf32> to vector<2x2x16xf32>
    %11 = vector.shape_cast %10 : vector<2x2x16xf32> to vector<4x16xf32>
    %12 = arith.truncf %11 : vector<4x16xf32> to vector<4x16xbf16>
    %c2 = arith.constant 2 : index
    %c0_7 = arith.constant 0 : index
    %c0_8 = arith.constant 0 : index
    %13 = vector.load %arg2[%c2, %c0_7, %c0_8] : memref<9x16x32xbf16, #tpu.memory_space<vmem>>, vector<1x16x32xbf16>
    %14 = vector.shape_cast %13 : vector<1x16x32xbf16> to vector<16x32xbf16>
    %cst_9 = arith.constant dense<0.000000e+00> : vector<4x32xf32>
    %15 = tpu.matmul %12, %14, %cst_9 {dimension_numbers = #tpu.dot_dimension_numbers<[1], [0], [0], [1], [0, 0, 1, 1], [], []>} : vector<4x16xbf16>, vector<16x32xbf16>, vector<4x32xf32> -> vector<4x32xf32>
    %16 = arith.addf %9, %15 : vector<4x32xf32>
    %17 = vector.extract_strided_slice %2 {offsets = [1, 0, 0], sizes = [2, 2, 16], strides = [1, 1, 1]} : vector<3x3x16xf32> to vector<2x2x16xf32>
    %18 = vector.shape_cast %17 : vector<2x2x16xf32> to vector<4x16xf32>
    %19 = arith.truncf %18 : vector<4x16xf32> to vector<4x16xbf16>
    %c6 = arith.constant 6 : index
    %c0_10 = arith.constant 0 : index
    %c0_11 = arith.constant 0 : index
    %20 = vector.load %arg2[%c6, %c0_10, %c0_11] : memref<9x16x32xbf16, #tpu.memory_space<vmem>>, vector<1x16x32xbf16>
    %21 = vector.shape_cast %20 : vector<1x16x32xbf16> to vector<16x32xbf16>
    %cst_12 = arith.constant dense<0.000000e+00> : vector<4x32xf32>
    %22 = tpu.matmul %19, %21, %cst_12 {dimension_numbers = #tpu.dot_dimension_numbers<[1], [0], [0], [1], [0, 0, 1, 1], [], []>} : vector<4x16xbf16>, vector<16x32xbf16>, vector<4x32xf32> -> vector<4x32xf32>
    %23 = arith.addf %16, %22 : vector<4x32xf32>
    %24 = vector.extract_strided_slice %2 {offsets = [1, 1, 0], sizes = [2, 2, 16], strides = [1, 1, 1]} : vector<3x3x16xf32> to vector<2x2x16xf32>
    %25 = vector.shape_cast %24 : vector<2x2x16xf32> to vector<4x16xf32>
    %26 = arith.truncf %25 : vector<4x16xf32> to vector<4x16xbf16>
    %c8 = arith.constant 8 : index
    %c0_13 = arith.constant 0 : index
    %c0_14 = arith.constant 0 : index
    %27 = vector.load %arg2[%c8, %c0_13, %c0_14] : memref<9x16x32xbf16, #tpu.memory_space<vmem>>, vector<1x16x32xbf16>
    %28 = vector.shape_cast %27 : vector<1x16x32xbf16> to vector<16x32xbf16>
    %cst_15 = arith.constant dense<0.000000e+00> : vector<4x32xf32>
    %29 = tpu.matmul %26, %28, %cst_15 {dimension_numbers = #tpu.dot_dimension_numbers<[1], [0], [0], [1], [0, 0, 1, 1], [], []>} : vector<4x16xbf16>, vector<16x32xbf16>, vector<4x32xf32> -> vector<4x32xf32>
    %30 = arith.addf %23, %29 : vector<4x32xf32>
    %c1 = arith.constant 1 : index
    %c0_16 = arith.constant 0 : index
    %c0_17 = arith.constant 0 : index
    %c0_18 = arith.constant 0 : index
    %31 = vector.load %arg1[%c1, %c0_16, %c0_17, %c0_18] : memref<4x3x3x16xf32, #tpu.memory_space<vmem>>, vector<1x3x3x16xf32>
    %32 = vector.shape_cast %31 : vector<1x3x3x16xf32> to vector<3x3x16xf32>
    %33 = vector.extract_strided_slice %32 {offsets = [0, 0, 0], sizes = [2, 2, 16], strides = [1, 1, 1]} : vector<3x3x16xf32> to vector<2x2x16xf32>
    %34 = vector.shape_cast %33 : vector<2x2x16xf32> to vector<4x16xf32>
    %35 = arith.truncf %34 : vector<4x16xf32> to vector<4x16xbf16>
    %c1_19 = arith.constant 1 : index
    %c0_20 = arith.constant 0 : index
    %c0_21 = arith.constant 0 : index
    %36 = vector.load %arg2[%c1_19, %c0_20, %c0_21] : memref<9x16x32xbf16, #tpu.memory_space<vmem>>, vector<1x16x32xbf16>
    %37 = vector.shape_cast %36 : vector<1x16x32xbf16> to vector<16x32xbf16>
    %cst_22 = arith.constant dense<0.000000e+00> : vector<4x32xf32>
    %38 = tpu.matmul %35, %37, %cst_22 {dimension_numbers = #tpu.dot_dimension_numbers<[1], [0], [0], [1], [0, 0, 1, 1], [], []>} : vector<4x16xbf16>, vector<16x32xbf16>, vector<4x32xf32> -> vector<4x32xf32>
    %39 = arith.addf %30, %38 : vector<4x32xf32>
    %40 = vector.extract_strided_slice %32 {offsets = [1, 0, 0], sizes = [2, 2, 16], strides = [1, 1, 1]} : vector<3x3x16xf32> to vector<2x2x16xf32>
    %41 = vector.shape_cast %40 : vector<2x2x16xf32> to vector<4x16xf32>
    %42 = arith.truncf %41 : vector<4x16xf32> to vector<4x16xbf16>
    %c7 = arith.constant 7 : index
    %c0_23 = arith.constant 0 : index
    %c0_24 = arith.constant 0 : index
    %43 = vector.load %arg2[%c7, %c0_23, %c0_24] : memref<9x16x32xbf16, #tpu.memory_space<vmem>>, vector<1x16x32xbf16>
    %44 = vector.shape_cast %43 : vector<1x16x32xbf16> to vector<16x32xbf16>
    %cst_25 = arith.constant dense<0.000000e+00> : vector<4x32xf32>
    %45 = tpu.matmul %42, %44, %cst_25 {dimension_numbers = #tpu.dot_dimension_numbers<[1], [0], [0], [1], [0, 0, 1, 1], [], []>} : vector<4x16xbf16>, vector<16x32xbf16>, vector<4x32xf32> -> vector<4x32xf32>
    %46 = arith.addf %39, %45 : vector<4x32xf32>
    %c2_26 = arith.constant 2 : index
    %c0_27 = arith.constant 0 : index
    %c0_28 = arith.constant 0 : index
    %c0_29 = arith.constant 0 : index
    %47 = vector.load %arg1[%c2_26, %c0_27, %c0_28, %c0_29] : memref<4x3x3x16xf32, #tpu.memory_space<vmem>>, vector<1x3x3x16xf32>
    %48 = vector.shape_cast %47 : vector<1x3x3x16xf32> to vector<3x3x16xf32>
    %49 = vector.extract_strided_slice %48 {offsets = [0, 0, 0], sizes = [2, 2, 16], strides = [1, 1, 1]} : vector<3x3x16xf32> to vector<2x2x16xf32>
    %50 = vector.shape_cast %49 : vector<2x2x16xf32> to vector<4x16xf32>
    %51 = arith.truncf %50 : vector<4x16xf32> to vector<4x16xbf16>
    %c3 = arith.constant 3 : index
    %c0_30 = arith.constant 0 : index
    %c0_31 = arith.constant 0 : index
    %52 = vector.load %arg2[%c3, %c0_30, %c0_31] : memref<9x16x32xbf16, #tpu.memory_space<vmem>>, vector<1x16x32xbf16>
    %53 = vector.shape_cast %52 : vector<1x16x32xbf16> to vector<16x32xbf16>
    %cst_32 = arith.constant dense<0.000000e+00> : vector<4x32xf32>
    %54 = tpu.matmul %51, %53, %cst_32 {dimension_numbers = #tpu.dot_dimension_numbers<[1], [0], [0], [1], [0, 0, 1, 1], [], []>} : vector<4x16xbf16>, vector<16x32xbf16>, vector<4x32xf32> -> vector<4x32xf32>
    %55 = arith.addf %46, %54 : vector<4x32xf32>
    %56 = vector.extract_strided_slice %48 {offsets = [0, 1, 0], sizes = [2, 2, 16], strides = [1, 1, 1]} : vector<3x3x16xf32> to vector<2x2x16xf32>
    %57 = vector.shape_cast %56 : vector<2x2x16xf32> to vector<4x16xf32>
    %58 = arith.truncf %57 : vector<4x16xf32> to vector<4x16xbf16>
    %c5 = arith.constant 5 : index
    %c0_33 = arith.constant 0 : index
    %c0_34 = arith.constant 0 : index
    %59 = vector.load %arg2[%c5, %c0_33, %c0_34] : memref<9x16x32xbf16, #tpu.memory_space<vmem>>, vector<1x16x32xbf16>
    %60 = vector.shape_cast %59 : vector<1x16x32xbf16> to vector<16x32xbf16>
    %cst_35 = arith.constant dense<0.000000e+00> : vector<4x32xf32>
    %61 = tpu.matmul %58, %60, %cst_35 {dimension_numbers = #tpu.dot_dimension_numbers<[1], [0], [0], [1], [0, 0, 1, 1], [], []>} : vector<4x16xbf16>, vector<16x32xbf16>, vector<4x32xf32> -> vector<4x32xf32>
    %62 = arith.addf %55, %61 : vector<4x32xf32>
    %c3_36 = arith.constant 3 : index
    %c0_37 = arith.constant 0 : index
    %c0_38 = arith.constant 0 : index
    %c0_39 = arith.constant 0 : index
    %63 = vector.load %arg1[%c3_36, %c0_37, %c0_38, %c0_39] : memref<4x3x3x16xf32, #tpu.memory_space<vmem>>, vector<1x3x3x16xf32>
    %64 = vector.shape_cast %63 : vector<1x3x3x16xf32> to vector<3x3x16xf32>
    %65 = vector.extract_strided_slice %64 {offsets = [0, 0, 0], sizes = [2, 2, 16], strides = [1, 1, 1]} : vector<3x3x16xf32> to vector<2x2x16xf32>
    %66 = vector.shape_cast %65 : vector<2x2x16xf32> to vector<4x16xf32>
    %67 = arith.truncf %66 : vector<4x16xf32> to vector<4x16xbf16>
    %c4 = arith.constant 4 : index
    %c0_40 = arith.constant 0 : index
    %c0_41 = arith.constant 0 : index
    %68 = vector.load %arg2[%c4, %c0_40, %c0_41] : memref<9x16x32xbf16, #tpu.memory_space<vmem>>, vector<1x16x32xbf16>
    %69 = vector.shape_cast %68 : vector<1x16x32xbf16> to vector<16x32xbf16>
    %cst_42 = arith.constant dense<0.000000e+00> : vector<4x32xf32>
    %70 = tpu.matmul %67, %69, %cst_42 {dimension_numbers = #tpu.dot_dimension_numbers<[1], [0], [0], [1], [0, 0, 1, 1], [], []>} : vector<4x16xbf16>, vector<16x32xbf16>, vector<4x32xf32> -> vector<4x32xf32>
    %71 = arith.addf %62, %70 : vector<4x32xf32>
    %c0_43 = arith.constant 0 : index
    %c0_44 = arith.constant 0 : index
    %72 = vector.load %arg3[%c0_43, %c0_44] : memref<5x32xf32, #tpu.memory_space<vmem>>, vector<5x32xf32>
    %73 = vector.extract_strided_slice %72 {offsets = [0, 0], sizes = [1, 32], strides = [1, 1]} : vector<5x32xf32> to vector<1x32xf32>
    %74 = vector.broadcast %73 : vector<1x32xf32> to vector<4x32xf32>
    %75 = arith.addf %71, %74 : vector<4x32xf32>
    %76 = vector.extract_strided_slice %72 {offsets = [1, 0], sizes = [1, 32], strides = [1, 1]} : vector<5x32xf32> to vector<1x32xf32>
    %77 = vector.extract_strided_slice %72 {offsets = [2, 0], sizes = [1, 32], strides = [1, 1]} : vector<5x32xf32> to vector<1x32xf32>
    %cst_45 = arith.constant dense<0.000000e+00> : vector<4xf32>
    %78 = vector.multi_reduction <add>, %75, %cst_45 [1] : vector<4x32xf32> to vector<4xf32>
    %79 = vector.shape_cast %78 : vector<4xf32> to vector<4x1xf32>
    %80 = arith.mulf %75, %75 : vector<4x32xf32>
    %cst_46 = arith.constant dense<0.000000e+00> : vector<4xf32>
    %81 = vector.multi_reduction <add>, %80, %cst_46 [1] : vector<4x32xf32> to vector<4xf32>
    %82 = vector.shape_cast %81 : vector<4xf32> to vector<4x1xf32>
    %cst_47 = arith.constant 3.125000e-02 : f32
    %83 = vector.broadcast %cst_47 : f32 to vector<4x1xf32>
    %84 = arith.mulf %79, %83 : vector<4x1xf32>
    %cst_48 = arith.constant 3.125000e-02 : f32
    %85 = vector.broadcast %cst_48 : f32 to vector<4x1xf32>
    %86 = arith.mulf %82, %85 : vector<4x1xf32>
    %87 = arith.mulf %84, %84 : vector<4x1xf32>
    %88 = arith.subf %86, %87 : vector<4x1xf32>
    %cst_49 = arith.constant 0.000000e+00 : f32
    %89 = vector.broadcast %cst_49 : f32 to vector<4x1xf32>
    %90 = arith.maximumf %88, %89 : vector<4x1xf32>
    %91 = vector.broadcast %84 : vector<4x1xf32> to vector<4x32xf32>
    %92 = arith.subf %75, %91 : vector<4x32xf32>
    %cst_50 = arith.constant 9.99999997E-7 : f32
    %93 = vector.broadcast %cst_50 : f32 to vector<4x1xf32>
    %94 = arith.addf %90, %93 : vector<4x1xf32>
    %95 = math.rsqrt %94 : vector<4x1xf32>
    %96 = vector.broadcast %95 : vector<4x1xf32> to vector<4x32xf32>
    %97 = arith.mulf %92, %96 : vector<4x32xf32>
    %98 = vector.broadcast %76 : vector<1x32xf32> to vector<4x32xf32>
    %99 = arith.mulf %97, %98 : vector<4x32xf32>
    %100 = vector.broadcast %77 : vector<1x32xf32> to vector<4x32xf32>
    %101 = arith.addf %99, %100 : vector<4x32xf32>
    %102 = vector.extract_strided_slice %72 {offsets = [3, 0], sizes = [1, 32], strides = [1, 1]} : vector<5x32xf32> to vector<1x32xf32>
    %103 = vector.extract_strided_slice %72 {offsets = [4, 0], sizes = [1, 32], strides = [1, 1]} : vector<5x32xf32> to vector<1x32xf32>
    %cst_51 = arith.constant dense<0.000000e+00> : vector<4xf32>
    %104 = vector.multi_reduction <add>, %101, %cst_51 [1] : vector<4x32xf32> to vector<4xf32>
    %105 = vector.shape_cast %104 : vector<4xf32> to vector<4x1xf32>
    %106 = arith.mulf %101, %101 : vector<4x32xf32>
    %cst_52 = arith.constant dense<0.000000e+00> : vector<4xf32>
    %107 = vector.multi_reduction <add>, %106, %cst_52 [1] : vector<4x32xf32> to vector<4xf32>
    %108 = vector.shape_cast %107 : vector<4xf32> to vector<4x1xf32>
    %cst_53 = arith.constant 3.125000e-02 : f32
    %109 = vector.broadcast %cst_53 : f32 to vector<4x1xf32>
    %110 = arith.mulf %105, %109 : vector<4x1xf32>
    %cst_54 = arith.constant 3.125000e-02 : f32
    %111 = vector.broadcast %cst_54 : f32 to vector<4x1xf32>
    %112 = arith.mulf %108, %111 : vector<4x1xf32>
    %113 = arith.mulf %110, %110 : vector<4x1xf32>
    %114 = arith.subf %112, %113 : vector<4x1xf32>
    %cst_55 = arith.constant 0.000000e+00 : f32
    %115 = vector.broadcast %cst_55 : f32 to vector<4x1xf32>
    %116 = arith.maximumf %114, %115 : vector<4x1xf32>
    %117 = vector.broadcast %110 : vector<4x1xf32> to vector<4x32xf32>
    %118 = arith.subf %101, %117 : vector<4x32xf32>
    %cst_56 = arith.constant 9.99999997E-7 : f32
    %119 = vector.broadcast %cst_56 : f32 to vector<4x1xf32>
    %120 = arith.addf %116, %119 : vector<4x1xf32>
    %121 = math.rsqrt %120 : vector<4x1xf32>
    %122 = vector.broadcast %121 : vector<4x1xf32> to vector<4x32xf32>
    %123 = arith.mulf %118, %122 : vector<4x32xf32>
    %124 = vector.broadcast %102 : vector<1x32xf32> to vector<4x32xf32>
    %125 = arith.mulf %123, %124 : vector<4x32xf32>
    %126 = vector.broadcast %103 : vector<1x32xf32> to vector<4x32xf32>
    %127 = arith.addf %125, %126 : vector<4x32xf32>
    %c0_57 = arith.constant 0 : index
    %c0_58 = arith.constant 0 : index
    %c0_59 = arith.constant 0 : index
    %128 = vector.load %arg4[%c0_57, %c0_58, %c0_59] : memref<1x4x32xf32, #tpu.memory_space<vmem>>, vector<1x4x32xf32>
    %129 = vector.shape_cast %128 : vector<1x4x32xf32> to vector<4x32xf32>
    %130 = vector.shape_cast %127 : vector<4x32xf32> to vector<1x4x32xf32>
    tpu.vector_store %arg4[%c0_57, %c0_58, %c0_59], %130 {strides = array<i32>} : memref<1x4x32xf32, #tpu.memory_space<vmem>>, vector<1x4x32xf32>,
    return
  }
  func.func @transform_0(%arg0: i32) -> (i32, i32, i32, i32) {
    %c0_i32 = arith.constant 0 : i32
    %c0_i32_0 = arith.constant 0 : i32
    %c0_i32_1 = arith.constant 0 : i32
    %c0_i32_2 = arith.constant 0 : i32
    return %arg0, %c0_i32, %c0_i32_0, %c0_i32_1 : i32, i32, i32, i32
  }
  func.func @transform_1(%arg0: i32) -> (i32, i32, i32) {
    %c0_i32 = arith.constant 0 : i32
    %c0_i32_0 = arith.constant 0 : i32
    %c0_i32_1 = arith.constant 0 : i32
    %c0_i32_2 = arith.constant 0 : i32
    return %c0_i32, %c0_i32_0, %c0_i32_1 : i32, i32, i32
  }
  func.func @transform_2(%arg0: i32) -> (i32, i32) {
    %c0_i32 = arith.constant 0 : i32
    %c0_i32_0 = arith.constant 0 : i32
    %c0_i32_1 = arith.constant 0 : i32
    return %c0_i32, %c0_i32_0 : i32, i32
  }
  func.func @transform_3(%arg0: i32) -> (i32, i32, i32) {
    %c0_i32 = arith.constant 0 : i32
    %c0_i32_0 = arith.constant 0 : i32
    %c0_i32_1 = arith.constant 0 : i32
    return %arg0, %c0_i32, %c0_i32_0 : i32, i32, i32
  }
}

module attributes {stable_mosaic.version = 11 : i64} {
  func.func @_last_stage_head_kernel(%arg0: i32, %arg1: memref<4x2x2x32xf32, #tpu.memory_space<vmem>>, %arg2: memref<9x32x64xbf16, #tpu.memory_space<vmem>>, %arg3: memref<5x64xf32, #tpu.memory_space<vmem>>, %arg4: memref<64x96xbf16, #tpu.memory_space<vmem>>, %arg5: memref<1x96xf32, #tpu.memory_space<vmem>>, %arg6: memref<96x10xf32, #tpu.memory_space<vmem>>, %arg7: memref<1x10xf32, #tpu.memory_space<vmem>>, %arg8: memref<1x1x10xf32, #tpu.memory_space<vmem>>) attributes {dimension_semantics = [#tpu.dimension_semantics<parallel>], iteration_bounds = array<i64: 2>, scalar_prefetch = 0 : i64, scratch_operands = 0 : i64, tpu.core_type = #tpu.core_type<tc>, window_params = [{transform_indices = @transform_0, window_bounds = array<i64: 4, 2, 2, 32>}, {pipeline_mode = #tpu.pipeline_mode<synchronous>, transform_indices = @transform_1, window_bounds = array<i64: 9, 32, 64>}, {pipeline_mode = #tpu.pipeline_mode<synchronous>, transform_indices = @transform_2, window_bounds = array<i64: 5, 64>}, {pipeline_mode = #tpu.pipeline_mode<synchronous>, transform_indices = @transform_3, window_bounds = array<i64: 64, 96>}, {pipeline_mode = #tpu.pipeline_mode<synchronous>, transform_indices = @transform_4, window_bounds = array<i64: 1, 96>}, {pipeline_mode = #tpu.pipeline_mode<synchronous>, transform_indices = @transform_5, window_bounds = array<i64: 96, 10>}, {pipeline_mode = #tpu.pipeline_mode<synchronous>, transform_indices = @transform_6, window_bounds = array<i64: 1, 10>}, {transform_indices = @transform_7, window_bounds = array<i64: 1, 1, 10>}]} {
    %cst = arith.constant 0.000000e+00 : f32
    %0 = vector.broadcast %cst : f32 to vector<1x64xf32>
    %c0 = arith.constant 0 : index
    %c0_0 = arith.constant 0 : index
    %c0_1 = arith.constant 0 : index
    %c0_2 = arith.constant 0 : index
    %1 = vector.load %arg1[%c0, %c0_0, %c0_1, %c0_2] : memref<4x2x2x32xf32, #tpu.memory_space<vmem>>, vector<1x2x2x32xf32>
    %2 = vector.shape_cast %1 : vector<1x2x2x32xf32> to vector<2x2x32xf32>
    %3 = vector.extract_strided_slice %2 {offsets = [0, 0, 0], sizes = [1, 1, 32], strides = [1, 1, 1]} : vector<2x2x32xf32> to vector<1x1x32xf32>
    %4 = vector.shape_cast %3 : vector<1x1x32xf32> to vector<1x32xf32>
    %5 = arith.truncf %4 : vector<1x32xf32> to vector<1x32xbf16>
    %c0_3 = arith.constant 0 : index
    %c0_4 = arith.constant 0 : index
    %c0_5 = arith.constant 0 : index
    %6 = vector.load %arg2[%c0_3, %c0_4, %c0_5] : memref<9x32x64xbf16, #tpu.memory_space<vmem>>, vector<1x32x64xbf16>
    %7 = vector.shape_cast %6 : vector<1x32x64xbf16> to vector<32x64xbf16>
    %cst_6 = arith.constant dense<0.000000e+00> : vector<1x64xf32>
    %8 = tpu.matmul %5, %7, %cst_6 {dimension_numbers = #tpu.dot_dimension_numbers<[1], [0], [0], [1], [0, 0, 1, 1], [], []>} : vector<1x32xbf16>, vector<32x64xbf16>, vector<1x64xf32> -> vector<1x64xf32>
    %9 = arith.addf %0, %8 : vector<1x64xf32>
    %10 = vector.extract_strided_slice %2 {offsets = [0, 1, 0], sizes = [1, 1, 32], strides = [1, 1, 1]} : vector<2x2x32xf32> to vector<1x1x32xf32>
    %11 = vector.shape_cast %10 : vector<1x1x32xf32> to vector<1x32xf32>
    %12 = arith.truncf %11 : vector<1x32xf32> to vector<1x32xbf16>
    %c2 = arith.constant 2 : index
    %c0_7 = arith.constant 0 : index
    %c0_8 = arith.constant 0 : index
    %13 = vector.load %arg2[%c2, %c0_7, %c0_8] : memref<9x32x64xbf16, #tpu.memory_space<vmem>>, vector<1x32x64xbf16>
    %14 = vector.shape_cast %13 : vector<1x32x64xbf16> to vector<32x64xbf16>
    %cst_9 = arith.constant dense<0.000000e+00> : vector<1x64xf32>
    %15 = tpu.matmul %12, %14, %cst_9 {dimension_numbers = #tpu.dot_dimension_numbers<[1], [0], [0], [1], [0, 0, 1, 1], [], []>} : vector<1x32xbf16>, vector<32x64xbf16>, vector<1x64xf32> -> vector<1x64xf32>
    %16 = arith.addf %9, %15 : vector<1x64xf32>
    %17 = vector.extract_strided_slice %2 {offsets = [1, 0, 0], sizes = [1, 1, 32], strides = [1, 1, 1]} : vector<2x2x32xf32> to vector<1x1x32xf32>
    %18 = vector.shape_cast %17 : vector<1x1x32xf32> to vector<1x32xf32>
    %19 = arith.truncf %18 : vector<1x32xf32> to vector<1x32xbf16>
    %c6 = arith.constant 6 : index
    %c0_10 = arith.constant 0 : index
    %c0_11 = arith.constant 0 : index
    %20 = vector.load %arg2[%c6, %c0_10, %c0_11] : memref<9x32x64xbf16, #tpu.memory_space<vmem>>, vector<1x32x64xbf16>
    %21 = vector.shape_cast %20 : vector<1x32x64xbf16> to vector<32x64xbf16>
    %cst_12 = arith.constant dense<0.000000e+00> : vector<1x64xf32>
    %22 = tpu.matmul %19, %21, %cst_12 {dimension_numbers = #tpu.dot_dimension_numbers<[1], [0], [0], [1], [0, 0, 1, 1], [], []>} : vector<1x32xbf16>, vector<32x64xbf16>, vector<1x64xf32> -> vector<1x64xf32>
    %23 = arith.addf %16, %22 : vector<1x64xf32>
    %24 = vector.extract_strided_slice %2 {offsets = [1, 1, 0], sizes = [1, 1, 32], strides = [1, 1, 1]} : vector<2x2x32xf32> to vector<1x1x32xf32>
    %25 = vector.shape_cast %24 : vector<1x1x32xf32> to vector<1x32xf32>
    %26 = arith.truncf %25 : vector<1x32xf32> to vector<1x32xbf16>
    %c8 = arith.constant 8 : index
    %c0_13 = arith.constant 0 : index
    %c0_14 = arith.constant 0 : index
    %27 = vector.load %arg2[%c8, %c0_13, %c0_14] : memref<9x32x64xbf16, #tpu.memory_space<vmem>>, vector<1x32x64xbf16>
    %28 = vector.shape_cast %27 : vector<1x32x64xbf16> to vector<32x64xbf16>
    %cst_15 = arith.constant dense<0.000000e+00> : vector<1x64xf32>
    %29 = tpu.matmul %26, %28, %cst_15 {dimension_numbers = #tpu.dot_dimension_numbers<[1], [0], [0], [1], [0, 0, 1, 1], [], []>} : vector<1x32xbf16>, vector<32x64xbf16>, vector<1x64xf32> -> vector<1x64xf32>
    %30 = arith.addf %23, %29 : vector<1x64xf32>
    %c1 = arith.constant 1 : index
    %c0_16 = arith.constant 0 : index
    %c0_17 = arith.constant 0 : index
    %c0_18 = arith.constant 0 : index
    %31 = vector.load %arg1[%c1, %c0_16, %c0_17, %c0_18] : memref<4x2x2x32xf32, #tpu.memory_space<vmem>>, vector<1x2x2x32xf32>
    %32 = vector.shape_cast %31 : vector<1x2x2x32xf32> to vector<2x2x32xf32>
    %33 = vector.extract_strided_slice %32 {offsets = [0, 0, 0], sizes = [1, 1, 32], strides = [1, 1, 1]} : vector<2x2x32xf32> to vector<1x1x32xf32>
    %34 = vector.shape_cast %33 : vector<1x1x32xf32> to vector<1x32xf32>
    %35 = arith.truncf %34 : vector<1x32xf32> to vector<1x32xbf16>
    %c1_19 = arith.constant 1 : index
    %c0_20 = arith.constant 0 : index
    %c0_21 = arith.constant 0 : index
    %36 = vector.load %arg2[%c1_19, %c0_20, %c0_21] : memref<9x32x64xbf16, #tpu.memory_space<vmem>>, vector<1x32x64xbf16>
    %37 = vector.shape_cast %36 : vector<1x32x64xbf16> to vector<32x64xbf16>
    %cst_22 = arith.constant dense<0.000000e+00> : vector<1x64xf32>
    %38 = tpu.matmul %35, %37, %cst_22 {dimension_numbers = #tpu.dot_dimension_numbers<[1], [0], [0], [1], [0, 0, 1, 1], [], []>} : vector<1x32xbf16>, vector<32x64xbf16>, vector<1x64xf32> -> vector<1x64xf32>
    %39 = arith.addf %30, %38 : vector<1x64xf32>
    %40 = vector.extract_strided_slice %32 {offsets = [1, 0, 0], sizes = [1, 1, 32], strides = [1, 1, 1]} : vector<2x2x32xf32> to vector<1x1x32xf32>
    %41 = vector.shape_cast %40 : vector<1x1x32xf32> to vector<1x32xf32>
    %42 = arith.truncf %41 : vector<1x32xf32> to vector<1x32xbf16>
    %c7 = arith.constant 7 : index
    %c0_23 = arith.constant 0 : index
    %c0_24 = arith.constant 0 : index
    %43 = vector.load %arg2[%c7, %c0_23, %c0_24] : memref<9x32x64xbf16, #tpu.memory_space<vmem>>, vector<1x32x64xbf16>
    %44 = vector.shape_cast %43 : vector<1x32x64xbf16> to vector<32x64xbf16>
    %cst_25 = arith.constant dense<0.000000e+00> : vector<1x64xf32>
    %45 = tpu.matmul %42, %44, %cst_25 {dimension_numbers = #tpu.dot_dimension_numbers<[1], [0], [0], [1], [0, 0, 1, 1], [], []>} : vector<1x32xbf16>, vector<32x64xbf16>, vector<1x64xf32> -> vector<1x64xf32>
    %46 = arith.addf %39, %45 : vector<1x64xf32>
    %c2_26 = arith.constant 2 : index
    %c0_27 = arith.constant 0 : index
    %c0_28 = arith.constant 0 : index
    %c0_29 = arith.constant 0 : index
    %47 = vector.load %arg1[%c2_26, %c0_27, %c0_28, %c0_29] : memref<4x2x2x32xf32, #tpu.memory_space<vmem>>, vector<1x2x2x32xf32>
    %48 = vector.shape_cast %47 : vector<1x2x2x32xf32> to vector<2x2x32xf32>
    %49 = vector.extract_strided_slice %48 {offsets = [0, 0, 0], sizes = [1, 1, 32], strides = [1, 1, 1]} : vector<2x2x32xf32> to vector<1x1x32xf32>
    %50 = vector.shape_cast %49 : vector<1x1x32xf32> to vector<1x32xf32>
    %51 = arith.truncf %50 : vector<1x32xf32> to vector<1x32xbf16>
    %c3 = arith.constant 3 : index
    %c0_30 = arith.constant 0 : index
    %c0_31 = arith.constant 0 : index
    %52 = vector.load %arg2[%c3, %c0_30, %c0_31] : memref<9x32x64xbf16, #tpu.memory_space<vmem>>, vector<1x32x64xbf16>
    %53 = vector.shape_cast %52 : vector<1x32x64xbf16> to vector<32x64xbf16>
    %cst_32 = arith.constant dense<0.000000e+00> : vector<1x64xf32>
    %54 = tpu.matmul %51, %53, %cst_32 {dimension_numbers = #tpu.dot_dimension_numbers<[1], [0], [0], [1], [0, 0, 1, 1], [], []>} : vector<1x32xbf16>, vector<32x64xbf16>, vector<1x64xf32> -> vector<1x64xf32>
    %55 = arith.addf %46, %54 : vector<1x64xf32>
    %56 = vector.extract_strided_slice %48 {offsets = [0, 1, 0], sizes = [1, 1, 32], strides = [1, 1, 1]} : vector<2x2x32xf32> to vector<1x1x32xf32>
    %57 = vector.shape_cast %56 : vector<1x1x32xf32> to vector<1x32xf32>
    %58 = arith.truncf %57 : vector<1x32xf32> to vector<1x32xbf16>
    %c5 = arith.constant 5 : index
    %c0_33 = arith.constant 0 : index
    %c0_34 = arith.constant 0 : index
    %59 = vector.load %arg2[%c5, %c0_33, %c0_34] : memref<9x32x64xbf16, #tpu.memory_space<vmem>>, vector<1x32x64xbf16>
    %60 = vector.shape_cast %59 : vector<1x32x64xbf16> to vector<32x64xbf16>
    %cst_35 = arith.constant dense<0.000000e+00> : vector<1x64xf32>
    %61 = tpu.matmul %58, %60, %cst_35 {dimension_numbers = #tpu.dot_dimension_numbers<[1], [0], [0], [1], [0, 0, 1, 1], [], []>} : vector<1x32xbf16>, vector<32x64xbf16>, vector<1x64xf32> -> vector<1x64xf32>
    %62 = arith.addf %55, %61 : vector<1x64xf32>
    %c3_36 = arith.constant 3 : index
    %c0_37 = arith.constant 0 : index
    %c0_38 = arith.constant 0 : index
    %c0_39 = arith.constant 0 : index
    %63 = vector.load %arg1[%c3_36, %c0_37, %c0_38, %c0_39] : memref<4x2x2x32xf32, #tpu.memory_space<vmem>>, vector<1x2x2x32xf32>
    %64 = vector.shape_cast %63 : vector<1x2x2x32xf32> to vector<2x2x32xf32>
    %65 = vector.extract_strided_slice %64 {offsets = [0, 0, 0], sizes = [1, 1, 32], strides = [1, 1, 1]} : vector<2x2x32xf32> to vector<1x1x32xf32>
    %66 = vector.shape_cast %65 : vector<1x1x32xf32> to vector<1x32xf32>
    %67 = arith.truncf %66 : vector<1x32xf32> to vector<1x32xbf16>
    %c4 = arith.constant 4 : index
    %c0_40 = arith.constant 0 : index
    %c0_41 = arith.constant 0 : index
    %68 = vector.load %arg2[%c4, %c0_40, %c0_41] : memref<9x32x64xbf16, #tpu.memory_space<vmem>>, vector<1x32x64xbf16>
    %69 = vector.shape_cast %68 : vector<1x32x64xbf16> to vector<32x64xbf16>
    %cst_42 = arith.constant dense<0.000000e+00> : vector<1x64xf32>
    %70 = tpu.matmul %67, %69, %cst_42 {dimension_numbers = #tpu.dot_dimension_numbers<[1], [0], [0], [1], [0, 0, 1, 1], [], []>} : vector<1x32xbf16>, vector<32x64xbf16>, vector<1x64xf32> -> vector<1x64xf32>
    %71 = arith.addf %62, %70 : vector<1x64xf32>
    %c0_43 = arith.constant 0 : index
    %c0_44 = arith.constant 0 : index
    %72 = vector.load %arg3[%c0_43, %c0_44] : memref<5x64xf32, #tpu.memory_space<vmem>>, vector<5x64xf32>
    %73 = vector.extract_strided_slice %72 {offsets = [0, 0], sizes = [1, 64], strides = [1, 1]} : vector<5x64xf32> to vector<1x64xf32>
    %74 = arith.addf %71, %73 : vector<1x64xf32>
    %75 = vector.extract_strided_slice %72 {offsets = [1, 0], sizes = [1, 64], strides = [1, 1]} : vector<5x64xf32> to vector<1x64xf32>
    %76 = vector.extract_strided_slice %72 {offsets = [2, 0], sizes = [1, 64], strides = [1, 1]} : vector<5x64xf32> to vector<1x64xf32>
    %cst_45 = arith.constant dense<0.000000e+00> : vector<1xf32>
    %77 = vector.multi_reduction <add>, %74, %cst_45 [1] : vector<1x64xf32> to vector<1xf32>
    %78 = vector.shape_cast %77 : vector<1xf32> to vector<1x1xf32>
    %79 = arith.mulf %74, %74 : vector<1x64xf32>
    %cst_46 = arith.constant dense<0.000000e+00> : vector<1xf32>
    %80 = vector.multi_reduction <add>, %79, %cst_46 [1] : vector<1x64xf32> to vector<1xf32>
    %81 = vector.shape_cast %80 : vector<1xf32> to vector<1x1xf32>
    %cst_47 = arith.constant 1.562500e-02 : f32
    %82 = vector.broadcast %cst_47 : f32 to vector<1x1xf32>
    %83 = arith.mulf %78, %82 : vector<1x1xf32>
    %cst_48 = arith.constant 1.562500e-02 : f32
    %84 = vector.broadcast %cst_48 : f32 to vector<1x1xf32>
    %85 = arith.mulf %81, %84 : vector<1x1xf32>
    %86 = arith.mulf %83, %83 : vector<1x1xf32>
    %87 = arith.subf %85, %86 : vector<1x1xf32>
    %cst_49 = arith.constant 0.000000e+00 : f32
    %88 = vector.broadcast %cst_49 : f32 to vector<1x1xf32>
    %89 = arith.maximumf %87, %88 : vector<1x1xf32>
    %90 = vector.broadcast %83 : vector<1x1xf32> to vector<1x64xf32>
    %91 = arith.subf %74, %90 : vector<1x64xf32>
    %cst_50 = arith.constant 9.99999997E-7 : f32
    %92 = vector.broadcast %cst_50 : f32 to vector<1x1xf32>
    %93 = arith.addf %89, %92 : vector<1x1xf32>
    %94 = math.rsqrt %93 : vector<1x1xf32>
    %95 = vector.broadcast %94 : vector<1x1xf32> to vector<1x64xf32>
    %96 = arith.mulf %91, %95 : vector<1x64xf32>
    %97 = arith.mulf %96, %75 : vector<1x64xf32>
    %98 = arith.addf %97, %76 : vector<1x64xf32>
    %99 = vector.extract_strided_slice %72 {offsets = [3, 0], sizes = [1, 64], strides = [1, 1]} : vector<5x64xf32> to vector<1x64xf32>
    %100 = vector.extract_strided_slice %72 {offsets = [4, 0], sizes = [1, 64], strides = [1, 1]} : vector<5x64xf32> to vector<1x64xf32>
    %cst_51 = arith.constant dense<0.000000e+00> : vector<1xf32>
    %101 = vector.multi_reduction <add>, %98, %cst_51 [1] : vector<1x64xf32> to vector<1xf32>
    %102 = vector.shape_cast %101 : vector<1xf32> to vector<1x1xf32>
    %103 = arith.mulf %98, %98 : vector<1x64xf32>
    %cst_52 = arith.constant dense<0.000000e+00> : vector<1xf32>
    %104 = vector.multi_reduction <add>, %103, %cst_52 [1] : vector<1x64xf32> to vector<1xf32>
    %105 = vector.shape_cast %104 : vector<1xf32> to vector<1x1xf32>
    %cst_53 = arith.constant 1.562500e-02 : f32
    %106 = vector.broadcast %cst_53 : f32 to vector<1x1xf32>
    %107 = arith.mulf %102, %106 : vector<1x1xf32>
    %cst_54 = arith.constant 1.562500e-02 : f32
    %108 = vector.broadcast %cst_54 : f32 to vector<1x1xf32>
    %109 = arith.mulf %105, %108 : vector<1x1xf32>
    %110 = arith.mulf %107, %107 : vector<1x1xf32>
    %111 = arith.subf %109, %110 : vector<1x1xf32>
    %cst_55 = arith.constant 0.000000e+00 : f32
    %112 = vector.broadcast %cst_55 : f32 to vector<1x1xf32>
    %113 = arith.maximumf %111, %112 : vector<1x1xf32>
    %114 = vector.broadcast %107 : vector<1x1xf32> to vector<1x64xf32>
    %115 = arith.subf %98, %114 : vector<1x64xf32>
    %cst_56 = arith.constant 9.99999997E-7 : f32
    %116 = vector.broadcast %cst_56 : f32 to vector<1x1xf32>
    %117 = arith.addf %113, %116 : vector<1x1xf32>
    %118 = math.rsqrt %117 : vector<1x1xf32>
    %119 = vector.broadcast %118 : vector<1x1xf32> to vector<1x64xf32>
    %120 = arith.mulf %115, %119 : vector<1x64xf32>
    %121 = arith.mulf %120, %99 : vector<1x64xf32>
    %122 = arith.addf %121, %100 : vector<1x64xf32>
    %123 = arith.truncf %122 : vector<1x64xf32> to vector<1x64xbf16>
    %c0_57 = arith.constant 0 : index
    %c0_58 = arith.constant 0 : index
    %124 = vector.load %arg4[%c0_57, %c0_58] : memref<64x96xbf16, #tpu.memory_space<vmem>>, vector<64x96xbf16>
    %cst_59 = arith.constant dense<0.000000e+00> : vector<1x96xf32>
    %125 = tpu.matmul %123, %124, %cst_59 {dimension_numbers = #tpu.dot_dimension_numbers<[1], [0], [0], [1], [0, 0, 1, 1], [], []>} : vector<1x64xbf16>, vector<64x96xbf16>, vector<1x96xf32> -> vector<1x96xf32>
    %c0_60 = arith.constant 0 : index
    %c0_61 = arith.constant 0 : index
    %126 = vector.load %arg5[%c0_60, %c0_61] : memref<1x96xf32, #tpu.memory_space<vmem>>, vector<1x96xf32>
    %127 = arith.addf %125, %126 : vector<1x96xf32>
    %cst_62 = arith.constant 5.000000e-01 : f32
    %128 = vector.broadcast %cst_62 : f32 to vector<1x96xf32>
    %129 = arith.mulf %128, %127 : vector<1x96xf32>
    %cst_63 = arith.constant 4.471500e-02 : f32
    %130 = vector.broadcast %cst_63 : f32 to vector<1x96xf32>
    %131 = arith.mulf %130, %127 : vector<1x96xf32>
    %132 = arith.mulf %131, %127 : vector<1x96xf32>
    %133 = arith.mulf %132, %127 : vector<1x96xf32>
    %134 = arith.addf %127, %133 : vector<1x96xf32>
    %cst_64 = arith.constant 0.797884583 : f32
    %135 = vector.broadcast %cst_64 : f32 to vector<1x96xf32>
    %136 = arith.mulf %135, %134 : vector<1x96xf32>
    %137 = math.tanh %136 : vector<1x96xf32>
    %cst_65 = arith.constant 1.000000e+00 : f32
    %138 = vector.broadcast %cst_65 : f32 to vector<1x96xf32>
    %139 = arith.addf %138, %137 : vector<1x96xf32>
    %140 = arith.mulf %129, %139 : vector<1x96xf32>
    %cst_66 = arith.constant dense<0.000000e+00> : vector<96xf32>
    %141 = vector.multi_reduction <add>, %140, %cst_66 [0] : vector<1x96xf32> to vector<96xf32>
    %142 = vector.shape_cast %141 : vector<96xf32> to vector<1x96xf32>
    %cst_67 = arith.constant 1.000000e+00 : f32
    %143 = vector.broadcast %cst_67 : f32 to vector<1x96xf32>
    %144 = arith.divf %142, %143 : vector<1x96xf32>
    %c0_68 = arith.constant 0 : index
    %c0_69 = arith.constant 0 : index
    %145 = vector.load %arg6[%c0_68, %c0_69] : memref<96x10xf32, #tpu.memory_space<vmem>>, vector<96x10xf32>
    %cst_70 = arith.constant dense<0.000000e+00> : vector<1x10xf32>
    %146 = tpu.matmul %144, %145, %cst_70 {dimension_numbers = #tpu.dot_dimension_numbers<[1], [0], [0], [1], [0, 0, 1, 1], [], []>} : vector<1x96xf32>, vector<96x10xf32>, vector<1x10xf32> -> vector<1x10xf32>
    %c0_71 = arith.constant 0 : index
    %c0_72 = arith.constant 0 : index
    %147 = vector.load %arg7[%c0_71, %c0_72] : memref<1x10xf32, #tpu.memory_space<vmem>>, vector<1x10xf32>
    %148 = arith.addf %146, %147 : vector<1x10xf32>
    %c0_73 = arith.constant 0 : index
    %c0_74 = arith.constant 0 : index
    %c0_75 = arith.constant 0 : index
    %149 = vector.load %arg8[%c0_73, %c0_74, %c0_75] : memref<1x1x10xf32, #tpu.memory_space<vmem>>, vector<1x1x10xf32>
    %150 = vector.shape_cast %149 : vector<1x1x10xf32> to vector<1x10xf32>
    %151 = vector.shape_cast %148 : vector<1x10xf32> to vector<1x1x10xf32>
    tpu.vector_store %arg8[%c0_73, %c0_74, %c0_75], %151 {strides = array<i32>} : memref<1x1x10xf32, #tpu.memory_space<vmem>>, vector<1x1x10xf32>,
    return
  }
  func.func @transform_0(%arg0: i32) -> (i32, i32, i32, i32) {
    %c0_i32 = arith.constant 0 : i32
    %c0_i32_0 = arith.constant 0 : i32
    %c0_i32_1 = arith.constant 0 : i32
    %c0_i32_2 = arith.constant 0 : i32
    return %arg0, %c0_i32, %c0_i32_0, %c0_i32_1 : i32, i32, i32, i32
  }
  func.func @transform_1(%arg0: i32) -> (i32, i32, i32) {
    %c0_i32 = arith.constant 0 : i32
    %c0_i32_0 = arith.constant 0 : i32
    %c0_i32_1 = arith.constant 0 : i32
    %c0_i32_2 = arith.constant 0 : i32
    return %c0_i32, %c0_i32_0, %c0_i32_1 : i32, i32, i32
  }
  func.func @transform_2(%arg0: i32) -> (i32, i32) {
    %c0_i32 = arith.constant 0 : i32
    %c0_i32_0 = arith.constant 0 : i32
    %c0_i32_1 = arith.constant 0 : i32
    return %c0_i32, %c0_i32_0 : i32, i32
  }
  func.func @transform_3(%arg0: i32) -> (i32, i32) {
    %c0_i32 = arith.constant 0 : i32
    %c0_i32_0 = arith.constant 0 : i32
    %c0_i32_1 = arith.constant 0 : i32
    return %c0_i32, %c0_i32_0 : i32, i32
  }
  func.func @transform_4(%arg0: i32) -> (i32, i32) {
    %c0_i32 = arith.constant 0 : i32
    %c0_i32_0 = arith.constant 0 : i32
    %c0_i32_1 = arith.constant 0 : i32
    return %c0_i32, %c0_i32_0 : i32, i32
  }
  func.func @transform_5(%arg0: i32) -> (i32, i32) {
    %c0_i32 = arith.constant 0 : i32
    %c0_i32_0 = arith.constant 0 : i32
    %c0_i32_1 = arith.constant 0 : i32
    return %c0_i32, %c0_i32_0 : i32, i32
  }
  func.func @transform_6(%arg0: i32) -> (i32, i32) {
    %c0_i32 = arith.constant 0 : i32
    %c0_i32_0 = arith.constant 0 : i32
    %c0_i32_1 = arith.constant 0 : i32
    return %c0_i32, %c0_i32_0 : i32, i32
  }
  func.func @transform_7(%arg0: i32) -> (i32, i32, i32) {
    %c0_i32 = arith.constant 0 : i32
    %c0_i32_0 = arith.constant 0 : i32
    %c0_i32_1 = arith.constant 0 : i32
    return %arg0, %c0_i32, %c0_i32_0 : i32, i32, i32
  }
}

</mosaic_0001>

<llo_original>
// kernel: meta_arch_forward.6
$region0: #{meta_arch_forward.6}
  #allocation0 [shape = 'u32[]', space=smem, size = 0x4, offset = 0x4, fixed_abs, tag = 'smem constant byte address 0x4 - core index']
  #allocation1 [shape = 'u32[72,128]{1,0:T(1,128)}', space=vmem, size = 0x9000, scoped, tag = 'internal scratch']
  %s0 = inlined_call_operand.vmem [shape: f32[8,9,9,4], index: 0, kind: input, shape index: {}]
  %s1 = inlined_call_operand.vmem [shape: bf16[9,4,8], index: 1, kind: input, shape index: {}]
  %s2 = inlined_call_operand.vmem [shape: f32[5,8], index: 2, kind: input, shape index: {}]
  %s3 = inlined_call_operand.vmem [shape: f32[2,64,8], index: 3, kind: output, shape index: {}]
  %s4 = sld [smem:[#allocation0]]
  $region45: #{meta_arch_forward.6} parent=0
    _
  %s6 = ssub.s32 1, %s4
  %s7 = scalar_select 0, %s6, %s4
  loop: start=0, step=1, limit=4
  $region2: #{meta_arch_forward.6} parent=0 // loop_pre_header
    _
  $region3: #{meta_arch_forward.6} parent=0 // loop_header
    %s9 = sphi 0, %s13
    %p10 = scmp.ge.s32.totalorder %s9, 4
    %s19 = sphi 0, %s21
    %s22 = sphi 0, %s19
    %s23 = sphi 0, %s22
    %s39 = sphi 0, %s23
    %s43 = sphi 0, %s43
    %s45 = sphi 0, %s43
    %s46 = sphi 0, %s45
    %s60 = sphi 0, %s46
    %s64 = sphi 0, %s64
    %s66 = sphi 0, %s64
    %s67 = sphi 0, %s66
    %s81 = sphi 0, %s67
    %s87 = sphi 0, %s89
    %s90 = sphi 0, %s87
    %s91 = sphi 0, %s90
    %s107 = sphi 0, %s91
  $region4: #{meta_arch_forward.6} parent=0 // loop_header_branch
    %12 = sbr.rel (%p10) target = $region8
  $region5: #{meta_arch_forward.6} parent=0 // loop_body
    %s14 = ssub.s32 %s9, 1
    %s15 = ssub.s32 %s9, 2
    %s16 = sadd.s32 %s9, 1
    %s17 = ssub.s32 %s9, %s16
    %p18 = scmp.eq.s32.totalorder %s17, 0
    %s20 = sadd.s32 %s19, 1
    %s21 = scalar_select %p18, %s19, %s20
    %p24 = pneg %p18
    %p25 = scmp.eq.s32.totalorder %s9, 1
    %p26 = por %p24, %p25
    %p27 = scmp.ne.s32.totalorder %s19, %s22
    %p28 = scmp.eq.s32.totalorder %s9, 0
    %p29 = por %p27, %p28
    %p30 = scmp.ne.s32.totalorder %s19, %s22
    %p31 = scmp.eq.s32.totalorder %s14, 1
    %p32 = por %p30, %p31
    %p33 = scmp.ne.s32.totalorder %s22, %s23
    %p34 = scmp.eq.s32.totalorder %s14, 0
    %p35 = por %p33, %p34
    %p36 = scmp.ne.s32.totalorder %s22, %s23
    %p37 = scmp.eq.s32.totalorder %s15, 1
    %p38 = por %p36, %p37
    %p40 = scmp.ne.s32.totalorder %s23, %s39
    %p41 = scmp.eq.s32.totalorder %s15, 0
    %p42 = por %p40, %p41
    %s44 = sadd.s32 %s43, 1
    %p47 = scmp.eq.s32.totalorder %s9, 1
    %p48 = scmp.ne.s32.totalorder %s43, %s45
    %p49 = scmp.eq.s32.totalorder %s9, 0
    %p50 = por %p48, %p49
    %p51 = scmp.ne.s32.totalorder %s43, %s45
    %p52 = scmp.eq.s32.totalorder %s14, 1
    %p53 = por %p51, %p52
    %p54 = scmp.ne.s32.totalorder %s45, %s46
    %p55 = scmp.eq.s32.totalorder %s14, 0
    %p56 = por %p54, %p55
    %p57 = scmp.ne.s32.totalorder %s45, %s46
    %p58 = scmp.eq.s32.totalorder %s15, 1
    %p59 = por %p57, %p58
    %p61 = scmp.ne.s32.totalorder %s46, %s60
    %p62 = scmp.eq.s32.totalorder %s15, 0
    %p63 = por %p61, %p62
    %s65 = sadd.s32 %s64, 1
    %p68 = scmp.eq.s32.totalorder %s9, 1
    %p69 = scmp.ne.s32.totalorder %s64, %s66
    %p70 = scmp.eq.s32.totalorder %s9, 0
    %p71 = por %p69, %p70
    %p72 = scmp.ne.s32.totalorder %s64, %s66
    %p73 = scmp.eq.s32.totalorder %s14, 1
    %p74 = por %p72, %p73
    %p75 = scmp.ne.s32.totalorder %s66, %s67
    %p76 = scmp.eq.s32.totalorder %s14, 0
    %p77 = por %p75, %p76
    %p78 = scmp.ne.s32.totalorder %s66, %s67
    %p79 = scmp.eq.s32.totalorder %s15, 1
    %p80 = por %p78, %p79
    %p82 = scmp.ne.s32.totalorder %s67, %s81
    %p83 = scmp.eq.s32.totalorder %s15, 0
    %p84 = por %p82, %p83
    %s85 = ssub.s32 %s9, %s16
    %p86 = scmp.eq.s32.totalorder %s85, 0
    %s88 = sadd.s32 %s87, 1
    %s89 = scalar_select %p86, %s87, %s88
    %p92 = pneg %p86
    %p93 = scmp.eq.s32.totalorder %s9, 1
    %p94 = por %p92, %p93
    %p95 = scmp.ne.s32.totalorder %s87, %s90
    %p96 = scmp.eq.s32.totalorder %s9, 0
    %p97 = por %p95, %p96
    %p98 = scmp.ne.s32.totalorder %s87, %s90
    %p99 = scmp.eq.s32.totalorder %s14, 1
    %p100 = por %p98, %p99
    %p101 = scmp.ne.s32.totalorder %s90, %s91
    %p102 = scmp.eq.s32.totalorder %s14, 0
    %p103 = por %p101, %p102
    %p104 = scmp.ne.s32.totalorder %s90, %s91
    %p105 = scmp.eq.s32.totalorder %s15, 1
    %p106 = por %p104, %p105
    %p108 = scmp.ne.s32.totalorder %s91, %s107
    %p109 = scmp.eq.s32.totalorder %s15, 0
    %p110 = por %p108, %p109
    %p111 = scmp.le.s32.totalorder 1, %s9
    %p112 = scmp.lt.s32.totalorder %s9, 3
    %p113 = pnand %p111, %p112
    %p114 = pneg %p113
    // Predicated region
    $region9: #{meta_arch_forward.6} parent=5 // pred_check
      _
    $region10: #{meta_arch_forward.6} parent=5 // pred_check_branch
      %116 = sbr.rel (%p113) target = $region12
    $region11: #{meta_arch_forward.6} parent=5 // pred_region
      %s117 = ssub.s32 %s9, 1
      // Predicated region
      $region13: #{meta_arch_forward.6} parent=11 // pred_check
        %p118 = pneg %p56
      $region14: #{meta_arch_forward.6} parent=11 // pred_check_branch
        %120 = sbr.rel (%p118) target = $region16
      $region15: #{meta_arch_forward.6} parent=11 // pred_region
        _
      $region16: #{meta_arch_forward.6} parent=11 // pred_fallthru
        _
      // Predicated region
      $region17: #{meta_arch_forward.6} parent=11 // pred_check
        %p121 = pneg %p77
      $region18: #{meta_arch_forward.6} parent=11 // pred_check_branch
        %123 = sbr.rel (%p121) target = $region20
      $region19: #{meta_arch_forward.6} parent=11 // pred_region
        _
      $region20: #{meta_arch_forward.6} parent=11 // pred_fallthru
        _
    $region12: #{meta_arch_forward.6} parent=5 // pred_fallthru
      _
    %p124 = scmp.lt.s32.totalorder %s9, 2
    // Predicated region
    $region21: #{meta_arch_forward.6} parent=5 // pred_check
      %p125 = pneg %p124
    $region22: #{meta_arch_forward.6} parent=5 // pred_check_branch
      %127 = sbr.rel (%p125) target = $region24
    $region23: #{meta_arch_forward.6} parent=5 // pred_region
      // Predicated region
      $region25: #{meta_arch_forward.6} parent=23 // pred_check
        %p128 = pneg %p29
      $region26: #{meta_arch_forward.6} parent=23 // pred_check_branch
        %130 = sbr.rel (%p128) target = $region28
      $region27: #{meta_arch_forward.6} parent=23 // pred_region
        %s131 = smul.u32 4, %s9
        %p132 = scmp.lt.s32.totalorder %s131, 7
        %s133 = scalar_select %p132, %s131, 7
        %s134 = smul.addr %s133, 18
        %s135 = smul.addr %s134, 8
        %s136 = scalar_lea.vmem %s0, %s135
        %s137 = smul.u32 4, %s9
      $region28: #{meta_arch_forward.6} parent=23 // pred_fallthru
        _
    $region24: #{meta_arch_forward.6} parent=5 // pred_fallthru
      _
    %p138 = scmp.le.s32.totalorder 1, %s9
    %p139 = scmp.lt.s32.totalorder %s9, 3
    %p140 = pnand %p138, %p139
    %p141 = pneg %p140
    // Predicated region
    $region29: #{meta_arch_forward.6} parent=5 // pred_check
      _
    $region30: #{meta_arch_forward.6} parent=5 // pred_check_branch
      %143 = sbr.rel (%p140) target = $region32
    $region31: #{meta_arch_forward.6} parent=5 // pred_region
      %s144 = ssub.s32 %s9, 1
      %s145 = smul.u32 4, %s14
      %p146 = scmp.lt.s32.totalorder %s145, 7
      %s147 = scalar_select %p146, %s145, 7
      %s148 = smul.addr %s147, 18
      %s149 = smul.addr %s148, 8
      %s150 = scalar_lea.vmem %s0, %s149
      %p151 = pneg %p35
      %p152 = pneg %p32
      %p153 = pneg %p56
      %p154 = pneg %p53
      %p155 = pneg %p77
      %p156 = pneg %p74
      %p157 = pneg %p103
      %p158 = pneg %p100
      %p159 = scmp.lt.s32.totalorder %s14, 1
      %s160 = scalar_select %p159, %s14, 1
      %s161 = smul.addr %s160, 8
      %s162 = smul.addr %s161, 8
      %s163 = scalar_lea.vmem %s3, %s162
      %s164 = smul.u32 4, %s14
      %p165 = scmp.lt.s32.totalorder %s164, 7
      %s166 = scalar_select %p165, %s164, 7
      %s167 = smul.addr %s166, 18
      %s168 = smul.addr %s167, 8
      %s169 = scalar_lea.vmem %s0, %s168
      %s170 = smul.u32 4, %s14
      %p171 = scmp.lt.s32.totalorder %s14, 1
      %s172 = scalar_select %p171, %s14, 1
      %s173 = smul.addr %s172, 8
      %s174 = smul.addr %s173, 8
      %s175 = scalar_lea.vmem %s3, %s174
      %v177 = vld [vmem:[%s169] sm:$0xff]
      %v178 = vld [vmem:[%s169 + $0x8] sm:$0x1]
      %v179 = vld [vmem:[%s169 + $0x10] sm:$0xff]
      %v180 = vld [vmem:[%s169 + $0x18] sm:$0x1]
      %v181 = vld [vmem:[%s169 + $0x20] sm:$0xff]
      %v182 = vld [vmem:[%s169 + $0x28] sm:$0x1]
      %v183 = vld [vmem:[%s169 + $0x30] sm:$0xff]
      %v184 = vld [vmem:[%s169 + $0x38] sm:$0x1]
      %v185 = vld [vmem:[%s169 + $0x40] sm:$0xff]
      %v186 = vld [vmem:[%s169 + $0x48] sm:$0x1]
      %v187 = vld [vmem:[%s169 + $0x50] sm:$0xff]
      %v188 = vld [vmem:[%s169 + $0x58] sm:$0x1]
      %v189 = vld [vmem:[%s169 + $0x60] sm:$0xff]
      %v190 = vld [vmem:[%s169 + $0x68] sm:$0x1]
      %v191 = vld [vmem:[%s169 + $0x70] sm:$0xff]
      %v192 = vld [vmem:[%s169 + $0x78] sm:$0x1]
      %v193 = vld [vmem:[%s169 + $0x80] sm:$0xff]
      %v194 = vld [vmem:[%s169 + $0x88] sm:$0x1]
      %v195 = vpack.c.bf16 %v179, %v177
      %v196 = vpack.c.bf16 %v183, %v181
      %v197 = vpack.c.bf16 %v187, %v185
      %v198 = vpack.c.bf16 %v191, %v189
      %v199 = vld [vmem:[%s1] sm:$0x3]
      %vm216 = vcmask 1046528
      %v217 = vrot.slane %v177, 1
      %v218 = vrot.slane %v178, 1
      %v219 = vsel %vm216, %v217, %v218
      %v220 = vrot.slane %v179, 1
      %v221 = vrot.slane %v180, 1
      %v222 = vsel %vm216, %v220, %v221
      %v223 = vrot.slane %v181, 1
      %v224 = vrot.slane %v182, 1
      %v225 = vsel %vm216, %v223, %v224
      %v226 = vrot.slane %v183, 1
      %v227 = vrot.slane %v184, 1
      %v228 = vsel %vm216, %v226, %v227
      %v229 = vrot.slane %v185, 1
      %v230 = vrot.slane %v186, 1
      %v231 = vsel %vm216, %v229, %v230
      %v232 = vrot.slane %v187, 1
      %v233 = vrot.slane %v188, 1
      %v234 = vsel %vm216, %v232, %v233
      %v235 = vrot.slane %v189, 1
      %v236 = vrot.slane %v190, 1
      %v237 = vsel %vm216, %v235, %v236
      %v238 = vrot.slane %v191, 1
      %v239 = vrot.slane %v192, 1
      %v240 = vsel %vm216, %v238, %v239
      %v249 = vpack.c.bf16 %v222, %v219
      %v250 = vpack.c.bf16 %v228, %v225
      %v251 = vpack.c.bf16 %v234, %v231
      %v252 = vpack.c.bf16 %v240, %v237
      %s253 = scalar_lea.vmem %s1, 4
      %v254 = vld [vmem:[%s253] sm:$0x3]
      %vm255 = vcmask 31744
      %v257 = vsel %vm255, %v249, 0
      %v260 = vsel %vm255, %v250, 0
      %v263 = vsel %vm255, %v251, 0
      %v266 = vsel %vm255, %v252, 0
      %vm268 = vcmask 1041408
      %v270 = vsel %vm268, %v254, 0
      %272 = vmatpush.bf16.msra.mxu0 0
      %273 = vmatpush.bf16.msra.mxu0 0
      %274 = vmatpush.bf16.msra.mxu0 0
      %275 = vmatpush.bf16.msra.mxu0 0
      %276 = vmatpush.bf16.msra.mxu0 0
      %277 = vmatpush.bf16.msra.mxu0 0
      %278 = vmatpush.bf16.msra.mxu0 0
      %279 = vmatpush.bf16.msra.mxu0 %v270
      %280 = vmatmul.bf16.gmra.mxu0 %v257
      %v281 = vpop.f32.mrf.mxu0
      %v282 = vadd.f32 0.0, %v281
      %v283 = vpop.f32.mrf.mxu0
      %v284 = vadd.f32 0.0, %v283
      %285 = vmatmul.bf16.gmra.mxu0 %v260
      %v286 = vpop.f32.mrf.mxu0
      %v287 = vadd.f32 0.0, %v286
      %v288 = vpop.f32.mrf.mxu0
      %v289 = vadd.f32 0.0, %v288
      %290 = vmatmul.bf16.gmra.mxu0 %v263
      %v291 = vpop.f32.mrf.mxu0
      %v292 = vadd.f32 0.0, %v291
      %v293 = vpop.f32.mrf.mxu0
      %v294 = vadd.f32 0.0, %v293
      %295 = vmatmul.bf16.gmra.mxu0 %v266
      %v296 = vpop.f32.mrf.mxu0
      %v297 = vadd.f32 0.0, %v296
      %v298 = vpop.f32.mrf.mxu0
      %v299 = vadd.f32 0.0, %v298
      %300 = vdwg.mxu0
      %v302 = vsel %vm255, %v195, 0
      %v305 = vsel %vm255, %v196, 0
      %v308 = vsel %vm255, %v197, 0
      %v311 = vsel %vm255, %v198, 0
      %v314 = vsel %vm268, %v199, 0
      %316 = vmatpush.bf16.msra.mxu0 0
      %317 = vmatpush.bf16.msra.mxu0 0
      %318 = vmatpush.bf16.msra.mxu0 0
      %319 = vmatpush.bf16.msra.mxu0 0
      %320 = vmatpush.bf16.msra.mxu0 0
      %321 = vmatpush.bf16.msra.mxu0 0
      %322 = vmatpush.bf16.msra.mxu0 0
      %323 = vmatpush.bf16.msra.mxu0 %v314
      %324 = vmatmul.bf16.gmra.mxu0 %v302
      %v325 = vpop.f32.mrf.mxu0
      %v326 = vadd.f32 %v282, %v325
      %v327 = vpop.f32.mrf.mxu0
      %v328 = vadd.f32 %v284, %v327
      %329 = vmatmul.bf16.gmra.mxu0 %v305
      %v330 = vpop.f32.mrf.mxu0
      %v331 = vadd.f32 %v287, %v330
      %v332 = vpop.f32.mrf.mxu0
      %v333 = vadd.f32 %v289, %v332
      %334 = vmatmul.bf16.gmra.mxu0 %v308
      %v335 = vpop.f32.mrf.mxu0
      %v336 = vadd.f32 %v292, %v335
      %v337 = vpop.f32.mrf.mxu0
      %v338 = vadd.f32 %v294, %v337
      %339 = vmatmul.bf16.gmra.mxu0 %v311
      %v340 = vpop.f32.mrf.mxu0
      %v341 = vadd.f32 %v297, %v340
      %v342 = vpop.f32.mrf.mxu0
      %v343 = vadd.f32 %v299, %v342
      %344 = vdwg.mxu0
      %v345 = vpack.c.bf16 %v181, %v179
      %v346 = vpack.c.bf16 %v185, %v183
      %v347 = vpack.c.bf16 %v189, %v187
      %v348 = vpack.c.bf16 %v193, %v191
      %s349 = scalar_lea.vmem %s1, 12
      %v350 = vld [vmem:[%s349] sm:$0x3]
      %v352 = vsel %vm255, %v345, 0
      %v355 = vsel %vm255, %v346, 0
      %v358 = vsel %vm255, %v347, 0
      %v361 = vsel %vm255, %v348, 0
      %v364 = vsel %vm268, %v350, 0
      %366 = vmatpush.bf16.msra.mxu0 0
      %367 = vmatpush.bf16.msra.mxu0 0
      %368 = vmatpush.bf16.msra.mxu0 0
      %369 = vmatpush.bf16.msra.mxu0 0
      %370 = vmatpush.bf16.msra.mxu0 0
      %371 = vmatpush.bf16.msra.mxu0 0
      %372 = vmatpush.bf16.msra.mxu0 0
      %373 = vmatpush.bf16.msra.mxu0 %v364
      %374 = vmatmul.bf16.gmra.mxu0 %v352
      %v375 = vpop.f32.mrf.mxu0
      %v376 = vadd.f32 0.0, %v375
      %v377 = vpop.f32.mrf.mxu0
      %v378 = vadd.f32 0.0, %v377
      %379 = vmatmul.bf16.gmra.mxu0 %v355
      %v380 = vpop.f32.mrf.mxu0
      %v381 = vadd.f32 0.0, %v380
      %v382 = vpop.f32.mrf.mxu0
      %v383 = vadd.f32 0.0, %v382
      %384 = vmatmul.bf16.gmra.mxu0 %v358
      %v385 = vpop.f32.mrf.mxu0
      %v386 = vadd.f32 0.0, %v385
      %v387 = vpop.f32.mrf.mxu0
      %v388 = vadd.f32 0.0, %v387
      %389 = vmatmul.bf16.gmra.mxu0 %v361
      %v390 = vpop.f32.mrf.mxu0
      %v391 = vadd.f32 0.0, %v390
      %v392 = vpop.f32.mrf.mxu0
      %v393 = vadd.f32 0.0, %v392
      %394 = vdwg.mxu0
      %v395 = vadd.f32 %v326, %v376
      %v396 = vadd.f32 %v328, %v378
      %v397 = vadd.f32 %v331, %v381
      %v398 = vadd.f32 %v333, %v383
      %v399 = vadd.f32 %v336, %v386
      %v400 = vadd.f32 %v338, %v388
      %v401 = vadd.f32 %v341, %v391
      %v402 = vadd.f32 %v343, %v393
      %v405 = vrot.slane %v193, 1
      %v406 = vrot.slane %v194, 1
      %v407 = vsel %vm216, %v405, %v406
      %v409 = vpack.c.bf16 %v225, %v222
      %v410 = vpack.c.bf16 %v231, %v228
      %v411 = vpack.c.bf16 %v237, %v234
      %v412 = vpack.c.bf16 %v407, %v240
      %s413 = scalar_lea.vmem %s1, 16
      %v414 = vld [vmem:[%s413] sm:$0x3]
      %v416 = vsel %vm255, %v409, 0
      %v419 = vsel %vm255, %v410, 0
      %v422 = vsel %vm255, %v411, 0
      %v425 = vsel %vm255, %v412, 0
      %v428 = vsel %vm268, %v414, 0
      %430 = vmatpush.bf16.msra.mxu0 0
      %431 = vmatpush.bf16.msra.mxu0 0
      %432 = vmatpush.bf16.msra.mxu0 0
      %433 = vmatpush.bf16.msra.mxu0 0
      %434 = vmatpush.bf16.msra.mxu0 0
      %435 = vmatpush.bf16.msra.mxu0 0
      %436 = vmatpush.bf16.msra.mxu0 0
      %437 = vmatpush.bf16.msra.mxu0 %v428
      %438 = vmatmul.bf16.gmra.mxu0 %v416
      %v439 = vpop.f32.mrf.mxu0
      %v440 = vadd.f32 0.0, %v439
      %v441 = vpop.f32.mrf.mxu0
      %v442 = vadd.f32 0.0, %v441
      %443 = vmatmul.bf16.gmra.mxu0 %v419
      %v444 = vpop.f32.mrf.mxu0
      %v445 = vadd.f32 0.0, %v444
      %v446 = vpop.f32.mrf.mxu0
      %v447 = vadd.f32 0.0, %v446
      %448 = vmatmul.bf16.gmra.mxu0 %v422
      %v449 = vpop.f32.mrf.mxu0
      %v450 = vadd.f32 0.0, %v449
      %v451 = vpop.f32.mrf.mxu0
      %v452 = vadd.f32 0.0, %v451
      %453 = vmatmul.bf16.gmra.mxu0 %v425
      %v454 = vpop.f32.mrf.mxu0
      %v455 = vadd.f32 0.0, %v454
      %v456 = vpop.f32.mrf.mxu0
      %v457 = vadd.f32 0.0, %v456
      %458 = vdwg.mxu0
      %v459 = vadd.f32 %v395, %v440
      %v460 = vadd.f32 %v396, %v442
      %v461 = vadd.f32 %v397, %v445
      %v462 = vadd.f32 %v398, %v447
      %v463 = vadd.f32 %v399, %v450
      %v464 = vadd.f32 %v400, %v452
      %v465 = vadd.f32 %v401, %v455
      %v466 = vadd.f32 %v402, %v457
      %s467 = scalar_lea.vmem %s169, 144
      %v468 = vld [vmem:[%s467] sm:$0xff]
      %v469 = vld [vmem:[%s467 + $0x10] sm:$0xff]
      %v470 = vld [vmem:[%s467 + $0x20] sm:$0xff]
      %v471 = vld [vmem:[%s467 + $0x30] sm:$0xff]
      %v472 = vld [vmem:[%s467 + $0x40] sm:$0xff]
      %v473 = vld [vmem:[%s467 + $0x50] sm:$0xff]
      %v474 = vld [vmem:[%s467 + $0x60] sm:$0xff]
      %v475 = vld [vmem:[%s467 + $0x70] sm:$0xff]
      %v476 = vld [vmem:[%s467 + $0x80] sm:$0xff]
      %v477 = vpack.c.bf16 %v469, %v468
      %v478 = vpack.c.bf16 %v471, %v470
      %v479 = vpack.c.bf16 %v473, %v472
      %v480 = vpack.c.bf16 %v475, %v474
      %s481 = scalar_lea.vmem %s1, 2
      %v482 = vld [vmem:[%s481] sm:$0x3]
      %v484 = vsel %vm255, %v477, 0
      %v487 = vsel %vm255, %v478, 0
      %v490 = vsel %vm255, %v479, 0
      %v493 = vsel %vm255, %v480, 0
      %v496 = vsel %vm268, %v482, 0
      %498 = vmatpush.bf16.msra.mxu0 0
      %499 = vmatpush.bf16.msra.mxu0 0
      %500 = vmatpush.bf16.msra.mxu0 0
      %501 = vmatpush.bf16.msra.mxu0 0
      %502 = vmatpush.bf16.msra.mxu0 0
      %503 = vmatpush.bf16.msra.mxu0 0
      %504 = vmatpush.bf16.msra.mxu0 0
      %505 = vmatpush.bf16.msra.mxu0 %v496
      %506 = vmatmul.bf16.gmra.mxu0 %v484
      %v507 = vpop.f32.mrf.mxu0
      %v508 = vadd.f32 0.0, %v507
      %v509 = vpop.f32.mrf.mxu0
      %v510 = vadd.f32 0.0, %v509
      %511 = vmatmul.bf16.gmra.mxu0 %v487
      %v512 = vpop.f32.mrf.mxu0
      %v513 = vadd.f32 0.0, %v512
      %v514 = vpop.f32.mrf.mxu0
      %v515 = vadd.f32 0.0, %v514
      %516 = vmatmul.bf16.gmra.mxu0 %v490
      %v517 = vpop.f32.mrf.mxu0
      %v518 = vadd.f32 0.0, %v517
      %v519 = vpop.f32.mrf.mxu0
      %v520 = vadd.f32 0.0, %v519
      %521 = vmatmul.bf16.gmra.mxu0 %v493
      %v522 = vpop.f32.mrf.mxu0
      %v523 = vadd.f32 0.0, %v522
      %v524 = vpop.f32.mrf.mxu0
      %v525 = vadd.f32 0.0, %v524
      %526 = vdwg.mxu0
      %v527 = vadd.f32 %v459, %v508
      %v528 = vadd.f32 %v460, %v510
      %v529 = vadd.f32 %v461, %v513
      %v530 = vadd.f32 %v462, %v515
      %v531 = vadd.f32 %v463, %v518
      %v532 = vadd.f32 %v464, %v520
      %v533 = vadd.f32 %v465, %v523
      %v534 = vadd.f32 %v466, %v525
      %v535 = vpack.c.bf16 %v470, %v469
      %v536 = vpack.c.bf16 %v472, %v471
      %v537 = vpack.c.bf16 %v474, %v473
      %v538 = vpack.c.bf16 %v476, %v475
      %s539 = scalar_lea.vmem %s1, 14
      %v540 = vld [vmem:[%s539] sm:$0x3]
      %v542 = vsel %vm255, %v535, 0
      %v545 = vsel %vm255, %v536, 0
      %v548 = vsel %vm255, %v537, 0
      %v551 = vsel %vm255, %v538, 0
      %v554 = vsel %vm268, %v540, 0
      %556 = vmatpush.bf16.msra.mxu0 0
      %557 = vmatpush.bf16.msra.mxu0 0
      %558 = vmatpush.bf16.msra.mxu0 0
      %559 = vmatpush.bf16.msra.mxu0 0
      %560 = vmatpush.bf16.msra.mxu0 0
      %561 = vmatpush.bf16.msra.mxu0 0
      %562 = vmatpush.bf16.msra.mxu0 0
      %563 = vmatpush.bf16.msra.mxu0 %v554
      %564 = vmatmul.bf16.gmra.mxu0 %v542
      %v565 = vpop.f32.mrf.mxu0
      %v566 = vadd.f32 0.0, %v565
      %v567 = vpop.f32.mrf.mxu0
      %v568 = vadd.f32 0.0, %v567
      %569 = vmatmul.bf16.gmra.mxu0 %v545
      %v570 = vpop.f32.mrf.mxu0
      %v571 = vadd.f32 0.0, %v570
      %v572 = vpop.f32.mrf.mxu0
      %v573 = vadd.f32 0.0, %v572
      %574 = vmatmul.bf16.gmra.mxu0 %v548
      %v575 = vpop.f32.mrf.mxu0
      %v576 = vadd.f32 0.0, %v575
      %v577 = vpop.f32.mrf.mxu0
      %v578 = vadd.f32 0.0, %v577
      %579 = vmatmul.bf16.gmra.mxu0 %v551
      %v580 = vpop.f32.mrf.mxu0
      %v581 = vadd.f32 0.0, %v580
      %v582 = vpop.f32.mrf.mxu0
      %v583 = vadd.f32 0.0, %v582
      %584 = vdwg.mxu0
      %v585 = vadd.f32 %v527, %v566
      %v586 = vadd.f32 %v528, %v568
      %v587 = vadd.f32 %v529, %v571
      %v588 = vadd.f32 %v530, %v573
      %v589 = vadd.f32 %v531, %v576
      %v590 = vadd.f32 %v532, %v578
      %v591 = vadd.f32 %v533, %v581
      %v592 = vadd.f32 %v534, %v583
      %s593 = scalar_lea.vmem %s169, 288
      %v594 = vld [vmem:[%s593] sm:$0xff]
      %v595 = vld [vmem:[%s593 + $0x8] sm:$0x1]
      %v596 = vld [vmem:[%s593 + $0x10] sm:$0xff]
      %v597 = vld [vmem:[%s593 + $0x18] sm:$0x1]
      %v598 = vld [vmem:[%s593 + $0x20] sm:$0xff]
      %v599 = vld [vmem:[%s593 + $0x28] sm:$0x1]
      %v600 = vld [vmem:[%s593 + $0x30] sm:$0xff]
      %v601 = vld [vmem:[%s593 + $0x38] sm:$0x1]
      %v602 = vld [vmem:[%s593 + $0x40] sm:$0xff]
      %v603 = vld [vmem:[%s593 + $0x48] sm:$0x1]
      %v604 = vld [vmem:[%s593 + $0x50] sm:$0xff]
      %v605 = vld [vmem:[%s593 + $0x58] sm:$0x1]
      %v606 = vld [vmem:[%s593 + $0x60] sm:$0xff]
      %v607 = vld [vmem:[%s593 + $0x68] sm:$0x1]
      %v608 = vld [vmem:[%s593 + $0x70] sm:$0xff]
      %v609 = vld [vmem:[%s593 + $0x78] sm:$0x1]
      %v610 = vpack.c.bf16 %v596, %v594
      %v611 = vpack.c.bf16 %v600, %v598
      %v612 = vpack.c.bf16 %v604, %v602
      %v613 = vpack.c.bf16 %v608, %v606
      %s614 = scalar_lea.vmem %s1, 6
      %v615 = vld [vmem:[%s614] sm:$0x3]
      %v617 = vsel %vm255, %v610, 0
      %v620 = vsel %vm255, %v611, 0
      %v623 = vsel %vm255, %v612, 0
      %v626 = vsel %vm255, %v613, 0
      %v629 = vsel %vm268, %v615, 0
      %631 = vmatpush.bf16.msra.mxu0 0
      %632 = vmatpush.bf16.msra.mxu0 0
      %633 = vmatpush.bf16.msra.mxu0 0
      %634 = vmatpush.bf16.msra.mxu0 0
      %635 = vmatpush.bf16.msra.mxu0 0
      %636 = vmatpush.bf16.msra.mxu0 0
      %637 = vmatpush.bf16.msra.mxu0 0
      %638 = vmatpush.bf16.msra.mxu0 %v629
      %639 = vmatmul.bf16.gmra.mxu0 %v617
      %v640 = vpop.f32.mrf.mxu0
      %v641 = vadd.f32 0.0, %v640
      %v642 = vpop.f32.mrf.mxu0
      %v643 = vadd.f32 0.0, %v642
      %644 = vmatmul.bf16.gmra.mxu0 %v620
      %v645 = vpop.f32.mrf.mxu0
      %v646 = vadd.f32 0.0, %v645
      %v647 = vpop.f32.mrf.mxu0
      %v648 = vadd.f32 0.0, %v647
      %649 = vmatmul.bf16.gmra.mxu0 %v623
      %v650 = vpop.f32.mrf.mxu0
      %v651 = vadd.f32 0.0, %v650
      %v652 = vpop.f32.mrf.mxu0
      %v653 = vadd.f32 0.0, %v652
      %654 = vmatmul.bf16.gmra.mxu0 %v626
      %v655 = vpop.f32.mrf.mxu0
      %v656 = vadd.f32 0.0, %v655
      %v657 = vpop.f32.mrf.mxu0
      %v658 = vadd.f32 0.0, %v657
      %659 = vdwg.mxu0
      %v660 = vadd.f32 %v585, %v641
      %v661 = vadd.f32 %v586, %v643
      %v662 = vadd.f32 %v587, %v646
      %v663 = vadd.f32 %v588, %v648
      %v664 = vadd.f32 %v589, %v651
      %v665 = vadd.f32 %v590, %v653
      %v666 = vadd.f32 %v591, %v656
      %v667 = vadd.f32 %v592, %v658
      %v684 = vrot.slane %v594, 1
      %v685 = vrot.slane %v595, 1
      %v686 = vsel %vm216, %v684, %v685
      %v687 = vrot.slane %v596, 1
      %v688 = vrot.slane %v597, 1
      %v689 = vsel %vm216, %v687, %v688
      %v690 = vrot.slane %v598, 1
      %v691 = vrot.slane %v599, 1
      %v692 = vsel %vm216, %v690, %v691
      %v693 = vrot.slane %v600, 1
      %v694 = vrot.slane %v601, 1
      %v695 = vsel %vm216, %v693, %v694
      %v696 = vrot.slane %v602, 1
      %v697 = vrot.slane %v603, 1
      %v698 = vsel %vm216, %v696, %v697
      %v699 = vrot.slane %v604, 1
      %v700 = vrot.slane %v605, 1
      %v701 = vsel %vm216, %v699, %v700
      %v702 = vrot.slane %v606, 1
      %v703 = vrot.slane %v607, 1
      %v704 = vsel %vm216, %v702, %v703
      %v705 = vrot.slane %v608, 1
      %v706 = vrot.slane %v609, 1
      %v707 = vsel %vm216, %v705, %v706
      %v716 = vpack.c.bf16 %v689, %v686
      %v717 = vpack.c.bf16 %v695, %v692
      %v718 = vpack.c.bf16 %v701, %v698
      %v719 = vpack.c.bf16 %v707, %v704
      %s720 = scalar_lea.vmem %s1, 10
      %v721 = vld [vmem:[%s720] sm:$0x3]
      %v723 = vsel %vm255, %v716, 0
      %v726 = vsel %vm255, %v717, 0
      %v729 = vsel %vm255, %v718, 0
      %v732 = vsel %vm255, %v719, 0
      %v735 = vsel %vm268, %v721, 0
      %737 = vmatpush.bf16.msra.mxu0 0
      %738 = vmatpush.bf16.msra.mxu0 0
      %739 = vmatpush.bf16.msra.mxu0 0
      %740 = vmatpush.bf16.msra.mxu0 0
      %741 = vmatpush.bf16.msra.mxu0 0
      %742 = vmatpush.bf16.msra.mxu0 0
      %743 = vmatpush.bf16.msra.mxu0 0
      %744 = vmatpush.bf16.msra.mxu0 %v735
      %745 = vmatmul.bf16.gmra.mxu0 %v723
      %v746 = vpop.f32.mrf.mxu0
      %v747 = vadd.f32 0.0, %v746
      %v748 = vpop.f32.mrf.mxu0
      %v749 = vadd.f32 0.0, %v748
      %750 = vmatmul.bf16.gmra.mxu0 %v726
      %v751 = vpop.f32.mrf.mxu0
      %v752 = vadd.f32 0.0, %v751
      %v753 = vpop.f32.mrf.mxu0
      %v754 = vadd.f32 0.0, %v753
      %755 = vmatmul.bf16.gmra.mxu0 %v729
      %v756 = vpop.f32.mrf.mxu0
      %v757 = vadd.f32 0.0, %v756
      %v758 = vpop.f32.mrf.mxu0
      %v759 = vadd.f32 0.0, %v758
      %760 = vmatmul.bf16.gmra.mxu0 %v732
      %v761 = vpop.f32.mrf.mxu0
      %v762 = vadd.f32 0.0, %v761
      %v763 = vpop.f32.mrf.mxu0
      %v764 = vadd.f32 0.0, %v763
      %765 = vdwg.mxu0
      %v766 = vadd.f32 %v660, %v747
      %v767 = vadd.f32 %v661, %v749
      %v768 = vadd.f32 %v662, %v752
      %v769 = vadd.f32 %v663, %v754
      %v770 = vadd.f32 %v664, %v757
      %v771 = vadd.f32 %v665, %v759
      %v772 = vadd.f32 %v666, %v762
      %v773 = vadd.f32 %v667, %v764
      %s774 = scalar_lea.vmem %s169, 432
      %v775 = vld [vmem:[%s774] sm:$0xff]
      %v776 = vld [vmem:[%s774 + $0x10] sm:$0xff]
      %v777 = vld [vmem:[%s774 + $0x20] sm:$0xff]
      %v778 = vld [vmem:[%s774 + $0x30] sm:$0xff]
      %v779 = vld [vmem:[%s774 + $0x40] sm:$0xff]
      %v780 = vld [vmem:[%s774 + $0x50] sm:$0xff]
      %v781 = vld [vmem:[%s774 + $0x60] sm:$0xff]
      %v782 = vld [vmem:[%s774 + $0x70] sm:$0xff]
      %v783 = vpack.c.bf16 %v776, %v775
      %v784 = vpack.c.bf16 %v778, %v777
      %v785 = vpack.c.bf16 %v780, %v779
      %v786 = vpack.c.bf16 %v782, %v781
      %s787 = scalar_lea.vmem %s1, 8
      %v788 = vld [vmem:[%s787] sm:$0x3]
      %v790 = vsel %vm255, %v783, 0
      %v793 = vsel %vm255, %v784, 0
      %v796 = vsel %vm255, %v785, 0
      %v799 = vsel %vm255, %v786, 0
      %v802 = vsel %vm268, %v788, 0
      %804 = vmatpush.bf16.msra.mxu0 0
      %805 = vmatpush.bf16.msra.mxu0 0
      %806 = vmatpush.bf16.msra.mxu0 0
      %807 = vmatpush.bf16.msra.mxu0 0
      %808 = vmatpush.bf16.msra.mxu0 0
      %809 = vmatpush.bf16.msra.mxu0 0
      %810 = vmatpush.bf16.msra.mxu0 0
      %811 = vmatpush.bf16.msra.mxu0 %v802
      %812 = vmatmul.bf16.gmra.mxu0 %v790
      %v813 = vpop.f32.mrf.mxu0
      %v814 = vadd.f32 0.0, %v813
      %v815 = vpop.f32.mrf.mxu0
      %v816 = vadd.f32 0.0, %v815
      %817 = vmatmul.bf16.gmra.mxu0 %v793
      %v818 = vpop.f32.mrf.mxu0
      %v819 = vadd.f32 0.0, %v818
      %v820 = vpop.f32.mrf.mxu0
      %v821 = vadd.f32 0.0, %v820
      %822 = vmatmul.bf16.gmra.mxu0 %v796
      %v823 = vpop.f32.mrf.mxu0
      %v824 = vadd.f32 0.0, %v823
      %v825 = vpop.f32.mrf.mxu0
      %v826 = vadd.f32 0.0, %v825
      %827 = vmatmul.bf16.gmra.mxu0 %v799
      %v828 = vpop.f32.mrf.mxu0
      %v829 = vadd.f32 0.0, %v828
      %v830 = vpop.f32.mrf.mxu0
      %v831 = vadd.f32 0.0, %v830
      %832 = vdwg.mxu0
      %v833 = vadd.f32 %v766, %v814
      %v834 = vadd.f32 %v767, %v816
      %v835 = vadd.f32 %v768, %v819
      %v836 = vadd.f32 %v769, %v821
      %v837 = vadd.f32 %v770, %v824
      %v838 = vadd.f32 %v771, %v826
      %v839 = vadd.f32 %v772, %v829
      %v840 = vadd.f32 %v773, %v831
      %v841 = vld [vmem:[%s2] sm:$0x1f]
      %v842 = vperm.slane %v841, 0
      %v843 = vadd.f32 %v833, %v842
      %v844 = vadd.f32 %v834, %v842
      %v845 = vadd.f32 %v835, %v842
      %v846 = vadd.f32 %v836, %v842
      %v847 = vadd.f32 %v837, %v842
      %v848 = vadd.f32 %v838, %v842
      %v849 = vadd.f32 %v839, %v842
      %v850 = vadd.f32 %v840, %v842
      %vm851 = vcmask 64512
      %v852 = vsel %vm851, %v843, 0.0
      %853 = vadd.xlane.f32.xlu0 %v852
      %v854 = vpop.xlane.xlu0 %853
      %v855 = vsel %vm851, %v844, 0.0
      %856 = vadd.xlane.f32.xlu0 %v855
      %v857 = vpop.xlane.xlu0 %856
      %v858 = vsel %vm851, %v845, 0.0
      %859 = vadd.xlane.f32.xlu0 %v858
      %v860 = vpop.xlane.xlu0 %859
      %v861 = vsel %vm851, %v846, 0.0
      %862 = vadd.xlane.f32.xlu0 %v861
      %v863 = vpop.xlane.xlu0 %862
      %v864 = vsel %vm851, %v847, 0.0
      %865 = vadd.xlane.f32.xlu0 %v864
      %v866 = vpop.xlane.xlu0 %865
      %v867 = vsel %vm851, %v848, 0.0
      %868 = vadd.xlane.f32.xlu0 %v867
      %v869 = vpop.xlane.xlu0 %868
      %v870 = vsel %vm851, %v849, 0.0
      %871 = vadd.xlane.f32.xlu0 %v870
      %v872 = vpop.xlane.xlu0 %871
      %v873 = vsel %vm851, %v850, 0.0
      %874 = vadd.xlane.f32.xlu0 %v873
      %v875 = vpop.xlane.xlu0 %874
      %v876 = vmul.f32 %v843, %v843
      %v877 = vmul.f32 %v844, %v844
      %v878 = vmul.f32 %v845, %v845
      %v879 = vmul.f32 %v846, %v846
      %v880 = vmul.f32 %v847, %v847
      %v881 = vmul.f32 %v848, %v848
      %v882 = vmul.f32 %v849, %v849
      %v883 = vmul.f32 %v850, %v850
      %v884 = vsel %vm851, %v876, 0.0
      %885 = vadd.xlane.f32.xlu0 %v884
      %v886 = vpop.xlane.xlu0 %885
      %v887 = vsel %vm851, %v877, 0.0
      %888 = vadd.xlane.f32.xlu0 %v887
      %v889 = vpop.xlane.xlu0 %888
      %v890 = vsel %vm851, %v878, 0.0
      %891 = vadd.xlane.f32.xlu0 %v890
      %v892 = vpop.xlane.xlu0 %891
      %v893 = vsel %vm851, %v879, 0.0
      %894 = vadd.xlane.f32.xlu0 %v893
      %v895 = vpop.xlane.xlu0 %894
      %v896 = vsel %vm851, %v880, 0.0
      %897 = vadd.xlane.f32.xlu0 %v896
      %v898 = vpop.xlane.xlu0 %897
      %v899 = vsel %vm851, %v881, 0.0
      %900 = vadd.xlane.f32.xlu0 %v899
      %v901 = vpop.xlane.xlu0 %900
      %v902 = vsel %vm851, %v882, 0.0
      %903 = vadd.xlane.f32.xlu0 %v902
      %v904 = vpop.xlane.xlu0 %903
      %v905 = vsel %vm851, %v883, 0.0
      %906 = vadd.xlane.f32.xlu0 %v905
      %v907 = vpop.xlane.xlu0 %906
      %v908 = vmul.f32 %v854, 0.125
      %v909 = vmul.f32 %v857, 0.125
      %v910 = vmul.f32 %v860, 0.125
      %v911 = vmul.f32 %v863, 0.125
      %v912 = vmul.f32 %v866, 0.125
      %v913 = vmul.f32 %v869, 0.125
      %v914 = vmul.f32 %v872, 0.125
      %v915 = vmul.f32 %v875, 0.125
      %v916 = vmul.f32 %v886, 0.125
      %v917 = vmul.f32 %v889, 0.125
      %v918 = vmul.f32 %v892, 0.125
      %v919 = vmul.f32 %v895, 0.125
      %v920 = vmul.f32 %v898, 0.125
      %v921 = vmul.f32 %v901, 0.125
      %v922 = vmul.f32 %v904, 0.125
      %v923 = vmul.f32 %v907, 0.125
      %v924 = vmul.f32 %v908, %v908
      %v925 = vmul.f32 %v909, %v909
      %v926 = vmul.f32 %v910, %v910
      %v927 = vmul.f32 %v911, %v911
      %v928 = vmul.f32 %v912, %v912
      %v929 = vmul.f32 %v913, %v913
      %v930 = vmul.f32 %v914, %v914
      %v931 = vmul.f32 %v915, %v915
      %v932 = vsub.f32 %v916, %v924
      %v933 = vsub.f32 %v917, %v925
      %v934 = vsub.f32 %v918, %v926
      %v935 = vsub.f32 %v919, %v927
      %v936 = vsub.f32 %v920, %v928
      %v937 = vsub.f32 %v921, %v929
      %v938 = vsub.f32 %v922, %v930
      %v939 = vsub.f32 %v923, %v931
      %v940 = vmax.f32 %v932, 0.0
      %v941 = vmax.f32 %v933, 0.0
      %v942 = vmax.f32 %v934, 0.0
      %v943 = vmax.f32 %v935, 0.0
      %v944 = vmax.f32 %v936, 0.0
      %v945 = vmax.f32 %v937, 0.0
      %v946 = vmax.f32 %v938, 0.0
      %v947 = vmax.f32 %v939, 0.0
      %v948 = vsub.f32 %v843, %v908
      %v949 = vsub.f32 %v844, %v909
      %v950 = vsub.f32 %v845, %v910
      %v951 = vsub.f32 %v846, %v911
      %v952 = vsub.f32 %v847, %v912
      %v953 = vsub.f32 %v848, %v913
      %v954 = vsub.f32 %v849, %v914
      %v955 = vsub.f32 %v850, %v915
      %v956 = vadd.f32 %v940, 1e-06
      %v957 = vadd.f32 %v941, 1e-06
      %v958 = vadd.f32 %v942, 1e-06
      %v959 = vadd.f32 %v943, 1e-06
      %v960 = vadd.f32 %v944, 1e-06
      %v961 = vadd.f32 %v945, 1e-06
      %v962 = vadd.f32 %v946, 1e-06
      %v963 = vadd.f32 %v947, 1e-06
      %v964 = vrsqrt.pop %v956
      %v965 = vmul.f32 %v964, %v956
      %v966 = vmul.f32 %v965, %v964
      %v967 = vmul.f32 0.5, %v966
      %v968 = vsub.f32 1.5, %v967
      %v969 = vmul.f32 %v964, %v968
      %vm970 = vweird.f32 %v956
      %vm971 = vweird.f32 %v964
      %vm972 = vmor %vm970, %vm971
      %v973 = vsel %vm972, %v964, %v969
      %v974 = vrsqrt.pop %v957
      %v975 = vmul.f32 %v974, %v957
      %v976 = vmul.f32 %v975, %v974
      %v977 = vmul.f32 0.5, %v976
      %v978 = vsub.f32 1.5, %v977
      %v979 = vmul.f32 %v974, %v978
      %vm980 = vweird.f32 %v957
      %vm981 = vweird.f32 %v974
      %vm982 = vmor %vm980, %vm981
      %v983 = vsel %vm982, %v974, %v979
      %v984 = vrsqrt.pop %v958
      %v985 = vmul.f32 %v984, %v958
      %v986 = vmul.f32 %v985, %v984
      %v987 = vmul.f32 0.5, %v986
      %v988 = vsub.f32 1.5, %v987
      %v989 = vmul.f32 %v984, %v988
      %vm990 = vweird.f32 %v958
      %vm991 = vweird.f32 %v984
      %vm992 = vmor %vm990, %vm991
      %v993 = vsel %vm992, %v984, %v989
      %v994 = vrsqrt.pop %v959
      %v995 = vmul.f32 %v994, %v959
      %v996 = vmul.f32 %v995, %v994
      %v997 = vmul.f32 0.5, %v996
      %v998 = vsub.f32 1.5, %v997
      %v999 = vmul.f32 %v994, %v998
      %vm1000 = vweird.f32 %v959
      %vm1001 = vweird.f32 %v994
      %vm1002 = vmor %vm1000, %vm1001
      %v1003 = vsel %vm1002, %v994, %v999
      %v1004 = vrsqrt.pop %v960
      %v1005 = vmul.f32 %v1004, %v960
      %v1006 = vmul.f32 %v1005, %v1004
      %v1007 = vmul.f32 0.5, %v1006
      %v1008 = vsub.f32 1.5, %v1007
      %v1009 = vmul.f32 %v1004, %v1008
      %vm1010 = vweird.f32 %v960
      %vm1011 = vweird.f32 %v1004
      %vm1012 = vmor %vm1010, %vm1011
      %v1013 = vsel %vm1012, %v1004, %v1009
      %v1014 = vrsqrt.pop %v961
      %v1015 = vmul.f32 %v1014, %v961
      %v1016 = vmul.f32 %v1015, %v1014
      %v1017 = vmul.f32 0.5, %v1016
      %v1018 = vsub.f32 1.5, %v1017
      %v1019 = vmul.f32 %v1014, %v1018
      %vm1020 = vweird.f32 %v961
      %vm1021 = vweird.f32 %v1014
      %vm1022 = vmor %vm1020, %vm1021
      %v1023 = vsel %vm1022, %v1014, %v1019
      %v1024 = vrsqrt.pop %v962
      %v1025 = vmul.f32 %v1024, %v962
      %v1026 = vmul.f32 %v1025, %v1024
      %v1027 = vmul.f32 0.5, %v1026
      %v1028 = vsub.f32 1.5, %v1027
      %v1029 = vmul.f32 %v1024, %v1028
      %vm1030 = vweird.f32 %v962
      %vm1031 = vweird.f32 %v1024
      %vm1032 = vmor %vm1030, %vm1031
      %v1033 = vsel %vm1032, %v1024, %v1029
      %v1034 = vrsqrt.pop %v963
      %v1035 = vmul.f32 %v1034, %v963
      %v1036 = vmul.f32 %v1035, %v1034
      %v1037 = vmul.f32 0.5, %v1036
      %v1038 = vsub.f32 1.5, %v1037
      %v1039 = vmul.f32 %v1034, %v1038
      %vm1040 = vweird.f32 %v963
      %vm1041 = vweird.f32 %v1034
      %vm1042 = vmor %vm1040, %vm1041
      %v1043 = vsel %vm1042, %v1034, %v1039
      %v1044 = vmul.f32 %v948, %v973
      %v1045 = vmul.f32 %v949, %v983
      %v1046 = vmul.f32 %v950, %v993
      %v1047 = vmul.f32 %v951, %v1003
      %v1048 = vmul.f32 %v952, %v1013
      %v1049 = vmul.f32 %v953, %v1023
      %v1050 = vmul.f32 %v954, %v1033
      %v1051 = vmul.f32 %v955, %v1043
      %v1052 = vperm.slane %v841, 1
      %v1053 = vmul.f32 %v1044, %v1052
      %v1054 = vmul.f32 %v1045, %v1052
      %v1055 = vmul.f32 %v1046, %v1052
      %v1056 = vmul.f32 %v1047, %v1052
      %v1057 = vmul.f32 %v1048, %v1052
      %v1058 = vmul.f32 %v1049, %v1052
      %v1059 = vmul.f32 %v1050, %v1052
      %v1060 = vmul.f32 %v1051, %v1052
      %v1061 = vperm.slane %v841, 2
      %v1062 = vadd.f32 %v1053, %v1061
      %v1063 = vadd.f32 %v1054, %v1061
      %v1064 = vadd.f32 %v1055, %v1061
      %v1065 = vadd.f32 %v1056, %v1061
      %v1066 = vadd.f32 %v1057, %v1061
      %v1067 = vadd.f32 %v1058, %v1061
      %v1068 = vadd.f32 %v1059, %v1061
      %v1069 = vadd.f32 %v1060, %v1061
      %v1070 = vsel %vm851, %v1062, 0.0
      %1071 = vadd.xlane.f32.xlu0 %v1070
      %v1072 = vpop.xlane.xlu0 %1071
      %v1073 = vsel %vm851, %v1063, 0.0
      %1074 = vadd.xlane.f32.xlu0 %v1073
      %v1075 = vpop.xlane.xlu0 %1074
      %v1076 = vsel %vm851, %v1064, 0.0
      %1077 = vadd.xlane.f32.xlu0 %v1076
      %v1078 = vpop.xlane.xlu0 %1077
      %v1079 = vsel %vm851, %v1065, 0.0
      %1080 = vadd.xlane.f32.xlu0 %v1079
      %v1081 = vpop.xlane.xlu0 %1080
      %v1082 = vsel %vm851, %v1066, 0.0
      %1083 = vadd.xlane.f32.xlu0 %v1082
      %v1084 = vpop.xlane.xlu0 %1083
      %v1085 = vsel %vm851, %v1067, 0.0
      %1086 = vadd.xlane.f32.xlu0 %v1085
      %v1087 = vpop.xlane.xlu0 %1086
      %v1088 = vsel %vm851, %v1068, 0.0
      %1089 = vadd.xlane.f32.xlu0 %v1088
      %v1090 = vpop.xlane.xlu0 %1089
      %v1091 = vsel %vm851, %v1069, 0.0
      %1092 = vadd.xlane.f32.xlu0 %v1091
      %v1093 = vpop.xlane.xlu0 %1092
      %v1094 = vmul.f32 %v1062, %v1062
      %v1095 = vmul.f32 %v1063, %v1063
      %v1096 = vmul.f32 %v1064, %v1064
      %v1097 = vmul.f32 %v1065, %v1065
      %v1098 = vmul.f32 %v1066, %v1066
      %v1099 = vmul.f32 %v1067, %v1067
      %v1100 = vmul.f32 %v1068, %v1068
      %v1101 = vmul.f32 %v1069, %v1069
      %v1102 = vsel %vm851, %v1094, 0.0
      %1103 = vadd.xlane.f32.xlu0 %v1102
      %v1104 = vpop.xlane.xlu0 %1103
      %v1105 = vsel %vm851, %v1095, 0.0
      %1106 = vadd.xlane.f32.xlu0 %v1105
      %v1107 = vpop.xlane.xlu0 %1106
      %v1108 = vsel %vm851, %v1096, 0.0
      %1109 = vadd.xlane.f32.xlu0 %v1108
      %v1110 = vpop.xlane.xlu0 %1109
      %v1111 = vsel %vm851, %v1097, 0.0
      %1112 = vadd.xlane.f32.xlu0 %v1111
      %v1113 = vpop.xlane.xlu0 %1112
      %v1114 = vsel %vm851, %v1098, 0.0
      %1115 = vadd.xlane.f32.xlu0 %v1114
      %v1116 = vpop.xlane.xlu0 %1115
      %v1117 = vsel %vm851, %v1099, 0.0
      %1118 = vadd.xlane.f32.xlu0 %v1117
      %v1119 = vpop.xlane.xlu0 %1118
      %v1120 = vsel %vm851, %v1100, 0.0
      %1121 = vadd.xlane.f32.xlu0 %v1120
      %v1122 = vpop.xlane.xlu0 %1121
      %v1123 = vsel %vm851, %v1101, 0.0
      %1124 = vadd.xlane.f32.xlu0 %v1123
      %v1125 = vpop.xlane.xlu0 %1124
      %v1126 = vmul.f32 %v1072, 0.125
      %v1127 = vmul.f32 %v1075, 0.125
      %v1128 = vmul.f32 %v1078, 0.125
      %v1129 = vmul.f32 %v1081, 0.125
      %v1130 = vmul.f32 %v1084, 0.125
      %v1131 = vmul.f32 %v1087, 0.125
      %v1132 = vmul.f32 %v1090, 0.125
      %v1133 = vmul.f32 %v1093, 0.125
      %v1134 = vmul.f32 %v1104, 0.125
      %v1135 = vmul.f32 %v1107, 0.125
      %v1136 = vmul.f32 %v1110, 0.125
      %v1137 = vmul.f32 %v1113, 0.125
      %v1138 = vmul.f32 %v1116, 0.125
      %v1139 = vmul.f32 %v1119, 0.125
      %v1140 = vmul.f32 %v1122, 0.125
      %v1141 = vmul.f32 %v1125, 0.125
      %v1142 = vmul.f32 %v1126, %v1126
      %v1143 = vmul.f32 %v1127, %v1127
      %v1144 = vmul.f32 %v1128, %v1128
      %v1145 = vmul.f32 %v1129, %v1129
      %v1146 = vmul.f32 %v1130, %v1130
      %v1147 = vmul.f32 %v1131, %v1131
      %v1148 = vmul.f32 %v1132, %v1132
      %v1149 = vmul.f32 %v1133, %v1133
      %v1150 = vsub.f32 %v1134, %v1142
      %v1151 = vsub.f32 %v1135, %v1143
      %v1152 = vsub.f32 %v1136, %v1144
      %v1153 = vsub.f32 %v1137, %v1145
      %v1154 = vsub.f32 %v1138, %v1146
      %v1155 = vsub.f32 %v1139, %v1147
      %v1156 = vsub.f32 %v1140, %v1148
      %v1157 = vsub.f32 %v1141, %v1149
      %v1158 = vmax.f32 %v1150, 0.0
      %v1159 = vmax.f32 %v1151, 0.0
      %v1160 = vmax.f32 %v1152, 0.0
      %v1161 = vmax.f32 %v1153, 0.0
      %v1162 = vmax.f32 %v1154, 0.0
      %v1163 = vmax.f32 %v1155, 0.0
      %v1164 = vmax.f32 %v1156, 0.0
      %v1165 = vmax.f32 %v1157, 0.0
      %v1166 = vsub.f32 %v1062, %v1126
      %v1167 = vsub.f32 %v1063, %v1127
      %v1168 = vsub.f32 %v1064, %v1128
      %v1169 = vsub.f32 %v1065, %v1129
      %v1170 = vsub.f32 %v1066, %v1130
      %v1171 = vsub.f32 %v1067, %v1131
      %v1172 = vsub.f32 %v1068, %v1132
      %v1173 = vsub.f32 %v1069, %v1133
      %v1174 = vadd.f32 %v1158, 1e-06
      %v1175 = vadd.f32 %v1159, 1e-06
      %v1176 = vadd.f32 %v1160, 1e-06
      %v1177 = vadd.f32 %v1161, 1e-06
      %v1178 = vadd.f32 %v1162, 1e-06
      %v1179 = vadd.f32 %v1163, 1e-06
      %v1180 = vadd.f32 %v1164, 1e-06
      %v1181 = vadd.f32 %v1165, 1e-06
      %v1182 = vrsqrt.pop %v1174
      %v1183 = vmul.f32 %v1182, %v1174
      %v1184 = vmul.f32 %v1183, %v1182
      %v1185 = vmul.f32 0.5, %v1184
      %v1186 = vsub.f32 1.5, %v1185
      %v1187 = vmul.f32 %v1182, %v1186
      %vm1188 = vweird.f32 %v1174
      %vm1189 = vweird.f32 %v1182
      %vm1190 = vmor %vm1188, %vm1189
      %v1191 = vsel %vm1190, %v1182, %v1187
      %v1192 = vrsqrt.pop %v1175
      %v1193 = vmul.f32 %v1192, %v1175
      %v1194 = vmul.f32 %v1193, %v1192
      %v1195 = vmul.f32 0.5, %v1194
      %v1196 = vsub.f32 1.5, %v1195
      %v1197 = vmul.f32 %v1192, %v1196
      %vm1198 = vweird.f32 %v1175
      %vm1199 = vweird.f32 %v1192
      %vm1200 = vmor %vm1198, %vm1199
      %v1201 = vsel %vm1200, %v1192, %v1197
      %v1202 = vrsqrt.pop %v1176
      %v1203 = vmul.f32 %v1202, %v1176
      %v1204 = vmul.f32 %v1203, %v1202
      %v1205 = vmul.f32 0.5, %v1204
      %v1206 = vsub.f32 1.5, %v1205
      %v1207 = vmul.f32 %v1202, %v1206
      %vm1208 = vweird.f32 %v1176
      %vm1209 = vweird.f32 %v1202
      %vm1210 = vmor %vm1208, %vm1209
      %v1211 = vsel %vm1210, %v1202, %v1207
      %v1212 = vrsqrt.pop %v1177
      %v1213 = vmul.f32 %v1212, %v1177
      %v1214 = vmul.f32 %v1213, %v1212
      %v1215 = vmul.f32 0.5, %v1214
      %v1216 = vsub.f32 1.5, %v1215
      %v1217 = vmul.f32 %v1212, %v1216
      %vm1218 = vweird.f32 %v1177
      %vm1219 = vweird.f32 %v1212
      %vm1220 = vmor %vm1218, %vm1219
      %v1221 = vsel %vm1220, %v1212, %v1217
      %v1222 = vrsqrt.pop %v1178
      %v1223 = vmul.f32 %v1222, %v1178
      %v1224 = vmul.f32 %v1223, %v1222
      %v1225 = vmul.f32 0.5, %v1224
      %v1226 = vsub.f32 1.5, %v1225
      %v1227 = vmul.f32 %v1222, %v1226
      %vm1228 = vweird.f32 %v1178
      %vm1229 = vweird.f32 %v1222
      %vm1230 = vmor %vm1228, %vm1229
      %v1231 = vsel %vm1230, %v1222, %v1227
      %v1232 = vrsqrt.pop %v1179
      %v1233 = vmul.f32 %v1232, %v1179
      %v1234 = vmul.f32 %v1233, %v1232
      %v1235 = vmul.f32 0.5, %v1234
      %v1236 = vsub.f32 1.5, %v1235
      %v1237 = vmul.f32 %v1232, %v1236
      %vm1238 = vweird.f32 %v1179
      %vm1239 = vweird.f32 %v1232
      %vm1240 = vmor %vm1238, %vm1239
      %v1241 = vsel %vm1240, %v1232, %v1237
      %v1242 = vrsqrt.pop %v1180
      %v1243 = vmul.f32 %v1242, %v1180
      %v1244 = vmul.f32 %v1243, %v1242
      %v1245 = vmul.f32 0.5, %v1244
      %v1246 = vsub.f32 1.5, %v1245
      %v1247 = vmul.f32 %v1242, %v1246
      %vm1248 = vweird.f32 %v1180
      %vm1249 = vweird.f32 %v1242
      %vm1250 = vmor %vm1248, %vm1249
      %v1251 = vsel %vm1250, %v1242, %v1247
      %v1252 = vrsqrt.pop %v1181
      %v1253 = vmul.f32 %v1252, %v1181
      %v1254 = vmul.f32 %v1253, %v1252
      %v1255 = vmul.f32 0.5, %v1254
      %v1256 = vsub.f32 1.5, %v1255
      %v1257 = vmul.f32 %v1252, %v1256
      %vm1258 = vweird.f32 %v1181
      %vm1259 = vweird.f32 %v1252
      %vm1260 = vmor %vm1258, %vm1259
      %v1261 = vsel %vm1260, %v1252, %v1257
      %v1262 = vmul.f32 %v1166, %v1191
      %v1263 = vmul.f32 %v1167, %v1201
      %v1264 = vmul.f32 %v1168, %v1211
      %v1265 = vmul.f32 %v1169, %v1221
      %v1266 = vmul.f32 %v1170, %v1231
      %v1267 = vmul.f32 %v1171, %v1241
      %v1268 = vmul.f32 %v1172, %v1251
      %v1269 = vmul.f32 %v1173, %v1261
      %v1270 = vperm.slane %v841, 3
      %v1271 = vmul.f32 %v1262, %v1270
      %v1272 = vmul.f32 %v1263, %v1270
      %v1273 = vmul.f32 %v1264, %v1270
      %v1274 = vmul.f32 %v1265, %v1270
      %v1275 = vmul.f32 %v1266, %v1270
      %v1276 = vmul.f32 %v1267, %v1270
      %v1277 = vmul.f32 %v1268, %v1270
      %v1278 = vmul.f32 %v1269, %v1270
      %v1279 = vperm.slane %v841, 4
      %v1280 = vadd.f32 %v1271, %v1279
      %v1281 = vadd.f32 %v1272, %v1279
      %v1282 = vadd.f32 %v1273, %v1279
      %v1283 = vadd.f32 %v1274, %v1279
      %v1284 = vadd.f32 %v1275, %v1279
      %v1285 = vadd.f32 %v1276, %v1279
      %v1286 = vadd.f32 %v1277, %v1279
      %v1287 = vadd.f32 %v1278, %v1279
      %1288 = vst.msk [vmem:[%s175] sm:$0xff] %vm851, %v1280
      %1289 = vst.msk [vmem:[%s175 + $0x8] sm:$0xff] %vm851, %v1281
      %1290 = vst.msk [vmem:[%s175 + $0x10] sm:$0xff] %vm851, %v1282
      %1291 = vst.msk [vmem:[%s175 + $0x18] sm:$0xff] %vm851, %v1283
      %1292 = vst.msk [vmem:[%s175 + $0x20] sm:$0xff] %vm851, %v1284
      %1293 = vst.msk [vmem:[%s175 + $0x28] sm:$0xff] %vm851, %v1285
      %1294 = vst.msk [vmem:[%s175 + $0x30] sm:$0xff] %vm851, %v1286
      %1295 = vst.msk [vmem:[%s175 + $0x38] sm:$0xff] %vm851, %v1287
      %p1296 = scmp.lt.s32.totalorder %s14, 1
      %s1297 = scalar_select %p1296, %s14, 1
      %s1298 = smul.addr %s1297, 8
      %s1299 = smul.addr %s1298, 8
      %s1300 = scalar_lea.vmem %s3, %s1299
      // Predicated region
      $region33: #{meta_arch_forward.6} parent=31 // pred_check
        %p1301 = pneg %p100
      $region34: #{meta_arch_forward.6} parent=31 // pred_check_branch
        %1303 = sbr.rel (%p1301) target = $region36
      $region35: #{meta_arch_forward.6} parent=31 // pred_region
        _
      $region36: #{meta_arch_forward.6} parent=31 // pred_fallthru
        _
    $region32: #{meta_arch_forward.6} parent=5 // pred_fallthru
      _
    %p1304 = scmp.le.s32.totalorder 2, %s9
    // Predicated region
    $region37: #{meta_arch_forward.6} parent=5 // pred_check
      %p1305 = pneg %p1304
    $region38: #{meta_arch_forward.6} parent=5 // pred_check_branch
      %1307 = sbr.rel (%p1305) target = $region40
    $region39: #{meta_arch_forward.6} parent=5 // pred_region
      %s1308 = ssub.s32 %s9, 2
      // Predicated region
      $region41: #{meta_arch_forward.6} parent=39 // pred_check
        %p1309 = pneg %p106
      $region42: #{meta_arch_forward.6} parent=39 // pred_check_branch
        %1311 = sbr.rel (%p1309) target = $region44
      $region43: #{meta_arch_forward.6} parent=39 // pred_region
        %p1312 = scmp.lt.s32.totalorder %s15, 1
        %s1313 = scalar_select %p1312, %s15, 1
        %s1314 = smul.addr %s1313, 8
        %s1315 = smul.addr %s1314, 8
        %s1316 = scalar_lea.vmem %s3, %s1315
      $region44: #{meta_arch_forward.6} parent=39 // pred_fallthru
        _
    $region40: #{meta_arch_forward.6} parent=5 // pred_fallthru
      _
  $region6: #{meta_arch_forward.6} parent=0 // loop_footer
    %s13 = sadd.s32 1, %s9
  $region7: #{meta_arch_forward.6} parent=0 // loop_footer_branch
    %8 = sbr.rel target = $region3
  $region8: #{meta_arch_forward.6} parent=0 // loop_exit
    _

// kernel: meta_arch_forward.5
$region0: #{meta_arch_forward.5}
  #allocation0 [shape = 'u32[]', space=smem, size = 0x4, offset = 0x4, fixed_abs, tag = 'smem constant byte address 0x4 - core index']
  #allocation1 [shape = 'u32[72,128]{1,0:T(1,128)}', space=vmem, size = 0x9000, scoped, tag = 'internal scratch']
  %s0 = inlined_call_operand.vmem [shape: f32[8,17,17,3], index: 0, kind: input, shape index: {}]
  %s1 = inlined_call_operand.vmem [shape: bf16[9,3,4], index: 1, kind: input, shape index: {}]
  %s2 = inlined_call_operand.vmem [shape: f32[5,4], index: 2, kind: input, shape index: {}]
  %s3 = inlined_call_operand.vmem [shape: f32[2,256,4], index: 3, kind: output, shape index: {}]
  %s4 = sld [smem:[#allocation0]]
  $region45: #{meta_arch_forward.5} parent=0
    _
  %s6 = ssub.s32 1, %s4
  %s7 = scalar_select 0, %s6, %s4
  loop: start=0, step=1, limit=4
  $region2: #{meta_arch_forward.5} parent=0 // loop_pre_header
    _
  $region3: #{meta_arch_forward.5} parent=0 // loop_header
    %s9 = sphi 0, %s13
    %p10 = scmp.ge.s32.totalorder %s9, 4
    %s19 = sphi 0, %s21
    %s22 = sphi 0, %s19
    %s23 = sphi 0, %s22
    %s39 = sphi 0, %s23
    %s43 = sphi 0, %s43
    %s45 = sphi 0, %s43
    %s46 = sphi 0, %s45
    %s60 = sphi 0, %s46
    %s64 = sphi 0, %s64
    %s66 = sphi 0, %s64
    %s67 = sphi 0, %s66
    %s81 = sphi 0, %s67
    %s87 = sphi 0, %s89
    %s90 = sphi 0, %s87
    %s91 = sphi 0, %s90
    %s107 = sphi 0, %s91
  $region4: #{meta_arch_forward.5} parent=0 // loop_header_branch
    %12 = sbr.rel (%p10) target = $region8
  $region5: #{meta_arch_forward.5} parent=0 // loop_body
    %s14 = ssub.s32 %s9, 1
    %s15 = ssub.s32 %s9, 2
    %s16 = sadd.s32 %s9, 1
    %s17 = ssub.s32 %s9, %s16
    %p18 = scmp.eq.s32.totalorder %s17, 0
    %s20 = sadd.s32 %s19, 1
    %s21 = scalar_select %p18, %s19, %s20
    %p24 = pneg %p18
    %p25 = scmp.eq.s32.totalorder %s9, 1
    %p26 = por %p24, %p25
    %p27 = scmp.ne.s32.totalorder %s19, %s22
    %p28 = scmp.eq.s32.totalorder %s9, 0
    %p29 = por %p27, %p28
    %p30 = scmp.ne.s32.totalorder %s19, %s22
    %p31 = scmp.eq.s32.totalorder %s14, 1
    %p32 = por %p30, %p31
    %p33 = scmp.ne.s32.totalorder %s22, %s23
    %p34 = scmp.eq.s32.totalorder %s14, 0
    %p35 = por %p33, %p34
    %p36 = scmp.ne.s32.totalorder %s22, %s23
    %p37 = scmp.eq.s32.totalorder %s15, 1
    %p38 = por %p36, %p37
    %p40 = scmp.ne.s32.totalorder %s23, %s39
    %p41 = scmp.eq.s32.totalorder %s15, 0
    %p42 = por %p40, %p41
    %s44 = sadd.s32 %s43, 1
    %p47 = scmp.eq.s32.totalorder %s9, 1
    %p48 = scmp.ne.s32.totalorder %s43, %s45
    %p49 = scmp.eq.s32.totalorder %s9, 0
    %p50 = por %p48, %p49
    %p51 = scmp.ne.s32.totalorder %s43, %s45
    %p52 = scmp.eq.s32.totalorder %s14, 1
    %p53 = por %p51, %p52
    %p54 = scmp.ne.s32.totalorder %s45, %s46
    %p55 = scmp.eq.s32.totalorder %s14, 0
    %p56 = por %p54, %p55
    %p57 = scmp.ne.s32.totalorder %s45, %s46
    %p58 = scmp.eq.s32.totalorder %s15, 1
    %p59 = por %p57, %p58
    %p61 = scmp.ne.s32.totalorder %s46, %s60
    %p62 = scmp.eq.s32.totalorder %s15, 0
    %p63 = por %p61, %p62
    %s65 = sadd.s32 %s64, 1
    %p68 = scmp.eq.s32.totalorder %s9, 1
    %p69 = scmp.ne.s32.totalorder %s64, %s66
    %p70 = scmp.eq.s32.totalorder %s9, 0
    %p71 = por %p69, %p70
    %p72 = scmp.ne.s32.totalorder %s64, %s66
    %p73 = scmp.eq.s32.totalorder %s14, 1
    %p74 = por %p72, %p73
    %p75 = scmp.ne.s32.totalorder %s66, %s67
    %p76 = scmp.eq.s32.totalorder %s14, 0
    %p77 = por %p75, %p76
    %p78 = scmp.ne.s32.totalorder %s66, %s67
    %p79 = scmp.eq.s32.totalorder %s15, 1
    %p80 = por %p78, %p79
    %p82 = scmp.ne.s32.totalorder %s67, %s81
    %p83 = scmp.eq.s32.totalorder %s15, 0
    %p84 = por %p82, %p83
    %s85 = ssub.s32 %s9, %s16
    %p86 = scmp.eq.s32.totalorder %s85, 0
    %s88 = sadd.s32 %s87, 1
    %s89 = scalar_select %p86, %s87, %s88
    %p92 = pneg %p86
    %p93 = scmp.eq.s32.totalorder %s9, 1
    %p94 = por %p92, %p93
    %p95 = scmp.ne.s32.totalorder %s87, %s90
    %p96 = scmp.eq.s32.totalorder %s9, 0
    %p97 = por %p95, %p96
    %p98 = scmp.ne.s32.totalorder %s87, %s90
    %p99 = scmp.eq.s32.totalorder %s14, 1
    %p100 = por %p98, %p99
    %p101 = scmp.ne.s32.totalorder %s90, %s91
    %p102 = scmp.eq.s32.totalorder %s14, 0
    %p103 = por %p101, %p102
    %p104 = scmp.ne.s32.totalorder %s90, %s91
    %p105 = scmp.eq.s32.totalorder %s15, 1
    %p106 = por %p104, %p105
    %p108 = scmp.ne.s32.totalorder %s91, %s107
    %p109 = scmp.eq.s32.totalorder %s15, 0
    %p110 = por %p108, %p109
    %p111 = scmp.le.s32.totalorder 1, %s9
    %p112 = scmp.lt.s32.totalorder %s9, 3
    %p113 = pnand %p111, %p112
    %p114 = pneg %p113
    // Predicated region
    $region9: #{meta_arch_forward.5} parent=5 // pred_check
      _
    $region10: #{meta_arch_forward.5} parent=5 // pred_check_branch
      %116 = sbr.rel (%p113) target = $region12
    $region11: #{meta_arch_forward.5} parent=5 // pred_region
      %s117 = ssub.s32 %s9, 1
      // Predicated region
      $region13: #{meta_arch_forward.5} parent=11 // pred_check
        %p118 = pneg %p56
      $region14: #{meta_arch_forward.5} parent=11 // pred_check_branch
        %120 = sbr.rel (%p118) target = $region16
      $region15: #{meta_arch_forward.5} parent=11 // pred_region
        _
      $region16: #{meta_arch_forward.5} parent=11 // pred_fallthru
        _
      // Predicated region
      $region17: #{meta_arch_forward.5} parent=11 // pred_check
        %p121 = pneg %p77
      $region18: #{meta_arch_forward.5} parent=11 // pred_check_branch
        %123 = sbr.rel (%p121) target = $region20
      $region19: #{meta_arch_forward.5} parent=11 // pred_region
        _
      $region20: #{meta_arch_forward.5} parent=11 // pred_fallthru
        _
    $region12: #{meta_arch_forward.5} parent=5 // pred_fallthru
      _
    %p124 = scmp.lt.s32.totalorder %s9, 2
    // Predicated region
    $region21: #{meta_arch_forward.5} parent=5 // pred_check
      %p125 = pneg %p124
    $region22: #{meta_arch_forward.5} parent=5 // pred_check_branch
      %127 = sbr.rel (%p125) target = $region24
    $region23: #{meta_arch_forward.5} parent=5 // pred_region
      // Predicated region
      $region25: #{meta_arch_forward.5} parent=23 // pred_check
        %p128 = pneg %p29
      $region26: #{meta_arch_forward.5} parent=23 // pred_check_branch
        %130 = sbr.rel (%p128) target = $region28
      $region27: #{meta_arch_forward.5} parent=23 // pred_region
        %s131 = smul.u32 4, %s9
        %p132 = scmp.lt.s32.totalorder %s131, 7
        %s133 = scalar_select %p132, %s131, 7
        %s134 = smul.addr %s133, 51
        %s135 = smul.addr %s134, 8
        %s136 = scalar_lea.vmem %s0, %s135
        %s137 = smul.u32 4, %s9
      $region28: #{meta_arch_forward.5} parent=23 // pred_fallthru
        _
    $region24: #{meta_arch_forward.5} parent=5 // pred_fallthru
      _
    %p138 = scmp.le.s32.totalorder 1, %s9
    %p139 = scmp.lt.s32.totalorder %s9, 3
    %p140 = pnand %p138, %p139
    %p141 = pneg %p140
    // Predicated region
    $region29: #{meta_arch_forward.5} parent=5 // pred_check
      _
    $region30: #{meta_arch_forward.5} parent=5 // pred_check_branch
      %143 = sbr.rel (%p140) target = $region32
    $region31: #{meta_arch_forward.5} parent=5 // pred_region
      %s144 = ssub.s32 %s9, 1
      %s145 = smul.u32 4, %s14
      %p146 = scmp.lt.s32.totalorder %s145, 7
      %s147 = scalar_select %p146, %s145, 7
      %s148 = smul.addr %s147, 51
      %s149 = smul.addr %s148, 8
      %s150 = scalar_lea.vmem %s0, %s149
      %p151 = pneg %p35
      %p152 = pneg %p32
      %p153 = pneg %p56
      %p154 = pneg %p53
      %p155 = pneg %p77
      %p156 = pneg %p74
      %p157 = pneg %p103
      %p158 = pneg %p100
      %p159 = scmp.lt.s32.totalorder %s14, 1
      %s160 = scalar_select %p159, %s14, 1
      %s161 = smul.addr %s160, 32
      %s162 = smul.addr %s161, 8
      %s163 = scalar_lea.vmem %s3, %s162
      %s164 = smul.u32 4, %s14
      %p165 = scmp.lt.s32.totalorder %s164, 7
      %s166 = scalar_select %p165, %s164, 7
      %s167 = smul.addr %s166, 51
      %s168 = smul.addr %s167, 8
      %s169 = scalar_lea.vmem %s0, %s168
      %s170 = smul.u32 4, %s14
      %p171 = scmp.lt.s32.totalorder %s14, 1
      %s172 = scalar_select %p171, %s14, 1
      %s173 = smul.addr %s172, 32
      %s174 = smul.addr %s173, 8
      %s175 = scalar_lea.vmem %s3, %s174
      %v177 = vld [vmem:[%s169] sm:$0xff]
      %v178 = vld [vmem:[%s169 + $0x8] sm:$0xff]
      %v179 = vld [vmem:[%s169 + $0x10] sm:$0x1]
      %v180 = vld [vmem:[%s169 + $0x18] sm:$0xff]
      %v181 = vld [vmem:[%s169 + $0x20] sm:$0xff]
      %v182 = vld [vmem:[%s169 + $0x28] sm:$0x1]
      %v183 = vld [vmem:[%s169 + $0x30] sm:$0xff]
      %v184 = vld [vmem:[%s169 + $0x38] sm:$0xff]
      %v185 = vld [vmem:[%s169 + $0x40] sm:$0x1]
      %v186 = vld [vmem:[%s169 + $0x48] sm:$0xff]
      %v187 = vld [vmem:[%s169 + $0x50] sm:$0xff]
      %v188 = vld [vmem:[%s169 + $0x58] sm:$0x1]
      %v189 = vld [vmem:[%s169 + $0x60] sm:$0xff]
      %v190 = vld [vmem:[%s169 + $0x68] sm:$0xff]
      %v191 = vld [vmem:[%s169 + $0x70] sm:$0x1]
      %v192 = vld [vmem:[%s169 + $0x78] sm:$0xff]
      %v193 = vld [vmem:[%s169 + $0x80] sm:$0xff]
      %v194 = vld [vmem:[%s169 + $0x88] sm:$0x1]
      %v195 = vld [vmem:[%s169 + $0x90] sm:$0xff]
      %v196 = vld [vmem:[%s169 + $0x98] sm:$0xff]
      %v197 = vld [vmem:[%s169 + $0xa0] sm:$0x1]
      %v198 = vld [vmem:[%s169 + $0xa8] sm:$0xff]
      %v199 = vld [vmem:[%s169 + $0xb0] sm:$0xff]
      %v200 = vld [vmem:[%s169 + $0xb8] sm:$0x1]
      %v201 = vld [vmem:[%s169 + $0xc0] sm:$0xff]
      %v202 = vld [vmem:[%s169 + $0xc8] sm:$0xff]
      %v203 = vld [vmem:[%s169 + $0xd0] sm:$0x1]
      %v204 = vld [vmem:[%s169 + $0xd8] sm:$0xff]
      %v205 = vld [vmem:[%s169 + $0xe0] sm:$0xff]
      %v206 = vld [vmem:[%s169 + $0xe8] sm:$0x1]
      %v207 = vld [vmem:[%s169 + $0xf0] sm:$0xff]
      %v208 = vld [vmem:[%s169 + $0xf8] sm:$0xff]
      %v209 = vld [vmem:[%s169 + $0x100] sm:$0x1]
      %v210 = vld [vmem:[%s169 + $0x108] sm:$0xff]
      %v211 = vld [vmem:[%s169 + $0x110] sm:$0xff]
      %v212 = vld [vmem:[%s169 + $0x118] sm:$0x1]
      %v213 = vld [vmem:[%s169 + $0x120] sm:$0xff]
      %v214 = vld [vmem:[%s169 + $0x128] sm:$0xff]
      %v215 = vld [vmem:[%s169 + $0x130] sm:$0x1]
      %v216 = vld [vmem:[%s169 + $0x138] sm:$0xff]
      %v217 = vld [vmem:[%s169 + $0x140] sm:$0xff]
      %v218 = vld [vmem:[%s169 + $0x148] sm:$0x1]
      %v219 = vld [vmem:[%s169 + $0x150] sm:$0xff]
      %v220 = vld [vmem:[%s169 + $0x158] sm:$0xff]
      %v221 = vld [vmem:[%s169 + $0x160] sm:$0x1]
      %v222 = vld [vmem:[%s169 + $0x168] sm:$0xff]
      %v223 = vld [vmem:[%s169 + $0x170] sm:$0xff]
      %v224 = vld [vmem:[%s169 + $0x178] sm:$0x1]
      %v225 = vld [vmem:[%s169 + $0x180] sm:$0xff]
      %v226 = vld [vmem:[%s169 + $0x188] sm:$0xff]
      %v227 = vld [vmem:[%s169 + $0x190] sm:$0x1]
      %v228 = vpack.c.bf16 %v178, %v177
      %v229 = vpack.c.bf16 %v181, %v180
      %v230 = vpack.c.bf16 %v184, %v183
      %v231 = vpack.c.bf16 %v187, %v186
      %v232 = vpack.c.bf16 %v190, %v189
      %v233 = vpack.c.bf16 %v193, %v192
      %v234 = vpack.c.bf16 %v196, %v195
      %v235 = vpack.c.bf16 %v199, %v198
      %v236 = vpack.c.bf16 %v202, %v201
      %v237 = vpack.c.bf16 %v205, %v204
      %v238 = vpack.c.bf16 %v208, %v207
      %v239 = vpack.c.bf16 %v211, %v210
      %v240 = vpack.c.bf16 %v214, %v213
      %v241 = vpack.c.bf16 %v217, %v216
      %v242 = vpack.c.bf16 %v220, %v219
      %v243 = vpack.c.bf16 %v223, %v222
      %v244 = vld [vmem:[%s1] sm:$0x3]
      %vm293 = vcmask 1046528
      %v294 = vrot.slane %v177, 1
      %v295 = vrot.slane %v178, 1
      %v296 = vsel %vm293, %v294, %v295
      %v297 = vrot.slane %v179, 1
      %v298 = vsel %vm293, %v295, %v297
      %v299 = vrot.slane %v180, 1
      %v300 = vrot.slane %v181, 1
      %v301 = vsel %vm293, %v299, %v300
      %v302 = vrot.slane %v182, 1
      %v303 = vsel %vm293, %v300, %v302
      %v304 = vrot.slane %v183, 1
      %v305 = vrot.slane %v184, 1
      %v306 = vsel %vm293, %v304, %v305
      %v307 = vrot.slane %v185, 1
      %v308 = vsel %vm293, %v305, %v307
      %v309 = vrot.slane %v186, 1
      %v310 = vrot.slane %v187, 1
      %v311 = vsel %vm293, %v309, %v310
      %v312 = vrot.slane %v188, 1
      %v313 = vsel %vm293, %v310, %v312
      %v314 = vrot.slane %v189, 1
      %v315 = vrot.slane %v190, 1
      %v316 = vsel %vm293, %v314, %v315
      %v317 = vrot.slane %v191, 1
      %v318 = vsel %vm293, %v315, %v317
      %v319 = vrot.slane %v192, 1
      %v320 = vrot.slane %v193, 1
      %v321 = vsel %vm293, %v319, %v320
      %v322 = vrot.slane %v194, 1
      %v323 = vsel %vm293, %v320, %v322
      %v324 = vrot.slane %v195, 1
      %v325 = vrot.slane %v196, 1
      %v326 = vsel %vm293, %v324, %v325
      %v327 = vrot.slane %v197, 1
      %v328 = vsel %vm293, %v325, %v327
      %v329 = vrot.slane %v198, 1
      %v330 = vrot.slane %v199, 1
      %v331 = vsel %vm293, %v329, %v330
      %v332 = vrot.slane %v200, 1
      %v333 = vsel %vm293, %v330, %v332
      %v334 = vrot.slane %v201, 1
      %v335 = vrot.slane %v202, 1
      %v336 = vsel %vm293, %v334, %v335
      %v337 = vrot.slane %v203, 1
      %v338 = vsel %vm293, %v335, %v337
      %v339 = vrot.slane %v204, 1
      %v340 = vrot.slane %v205, 1
      %v341 = vsel %vm293, %v339, %v340
      %v342 = vrot.slane %v206, 1
      %v343 = vsel %vm293, %v340, %v342
      %v344 = vrot.slane %v207, 1
      %v345 = vrot.slane %v208, 1
      %v346 = vsel %vm293, %v344, %v345
      %v347 = vrot.slane %v209, 1
      %v348 = vsel %vm293, %v345, %v347
      %v349 = vrot.slane %v210, 1
      %v350 = vrot.slane %v211, 1
      %v351 = vsel %vm293, %v349, %v350
      %v352 = vrot.slane %v212, 1
      %v353 = vsel %vm293, %v350, %v352
      %v354 = vrot.slane %v213, 1
      %v355 = vrot.slane %v214, 1
      %v356 = vsel %vm293, %v354, %v355
      %v357 = vrot.slane %v215, 1
      %v358 = vsel %vm293, %v355, %v357
      %v359 = vrot.slane %v216, 1
      %v360 = vrot.slane %v217, 1
      %v361 = vsel %vm293, %v359, %v360
      %v362 = vrot.slane %v218, 1
      %v363 = vsel %vm293, %v360, %v362
      %v364 = vrot.slane %v219, 1
      %v365 = vrot.slane %v220, 1
      %v366 = vsel %vm293, %v364, %v365
      %v367 = vrot.slane %v221, 1
      %v368 = vsel %vm293, %v365, %v367
      %v369 = vrot.slane %v222, 1
      %v370 = vrot.slane %v223, 1
      %v371 = vsel %vm293, %v369, %v370
      %v372 = vrot.slane %v224, 1
      %v373 = vsel %vm293, %v370, %v372
      %v406 = vpack.c.bf16 %v298, %v296
      %v407 = vpack.c.bf16 %v303, %v301
      %v408 = vpack.c.bf16 %v308, %v306
      %v409 = vpack.c.bf16 %v313, %v311
      %v410 = vpack.c.bf16 %v318, %v316
      %v411 = vpack.c.bf16 %v323, %v321
      %v412 = vpack.c.bf16 %v328, %v326
      %v413 = vpack.c.bf16 %v333, %v331
      %v414 = vpack.c.bf16 %v338, %v336
      %v415 = vpack.c.bf16 %v343, %v341
      %v416 = vpack.c.bf16 %v348, %v346
      %v417 = vpack.c.bf16 %v353, %v351
      %v418 = vpack.c.bf16 %v358, %v356
      %v419 = vpack.c.bf16 %v363, %v361
      %v420 = vpack.c.bf16 %v368, %v366
      %v421 = vpack.c.bf16 %v373, %v371
      %s422 = scalar_lea.vmem %s1, 4
      %v423 = vld [vmem:[%s422] sm:$0x3]
      %vm424 = vcmask 23552
      %v426 = vsel %vm424, %v406, 0
      %v429 = vsel %vm424, %v407, 0
      %v432 = vsel %vm424, %v408, 0
      %v435 = vsel %vm424, %v409, 0
      %v438 = vsel %vm424, %v410, 0
      %v441 = vsel %vm424, %v411, 0
      %v444 = vsel %vm424, %v412, 0
      %v447 = vsel %vm424, %v413, 0
      %v450 = vsel %vm424, %v414, 0
      %v453 = vsel %vm424, %v415, 0
      %v456 = vsel %vm424, %v416, 0
      %v459 = vsel %vm424, %v417, 0
      %v462 = vsel %vm424, %v418, 0
      %v465 = vsel %vm424, %v419, 0
      %v468 = vsel %vm424, %v420, 0
      %v471 = vsel %vm424, %v421, 0
      %vm473 = vcmask 1040384
      %vm474 = vcmask 1041408
      %v475 = vsel %vm473, 4294967295, 65535
      %v476 = vsel %vm474, %v475, 0
      %v478 = vand.u32 %v423, %v476
      %480 = vmatpush.bf16.msra.mxu0 0
      %481 = vmatpush.bf16.msra.mxu0 0
      %482 = vmatpush.bf16.msra.mxu0 0
      %483 = vmatpush.bf16.msra.mxu0 0
      %484 = vmatpush.bf16.msra.mxu0 0
      %485 = vmatpush.bf16.msra.mxu0 0
      %486 = vmatpush.bf16.msra.mxu0 0
      %487 = vmatpush.bf16.msra.mxu0 %v478
      %488 = vmatmul.bf16.gmra.mxu0 %v426
      %v489 = vpop.f32.mrf.mxu0
      %v490 = vadd.f32 0.0, %v489
      %v491 = vpop.f32.mrf.mxu0
      %v492 = vadd.f32 0.0, %v491
      %493 = vmatmul.bf16.gmra.mxu0 %v429
      %v494 = vpop.f32.mrf.mxu0
      %v495 = vadd.f32 0.0, %v494
      %v496 = vpop.f32.mrf.mxu0
      %v497 = vadd.f32 0.0, %v496
      %498 = vmatmul.bf16.gmra.mxu0 %v432
      %v499 = vpop.f32.mrf.mxu0
      %v500 = vadd.f32 0.0, %v499
      %v501 = vpop.f32.mrf.mxu0
      %v502 = vadd.f32 0.0, %v501
      %503 = vmatmul.bf16.gmra.mxu0 %v435
      %v504 = vpop.f32.mrf.mxu0
      %v505 = vadd.f32 0.0, %v504
      %v506 = vpop.f32.mrf.mxu0
      %v507 = vadd.f32 0.0, %v506
      %508 = vmatmul.bf16.gmra.mxu0 %v438
      %v509 = vpop.f32.mrf.mxu0
      %v510 = vadd.f32 0.0, %v509
      %v511 = vpop.f32.mrf.mxu0
      %v512 = vadd.f32 0.0, %v511
      %513 = vmatmul.bf16.gmra.mxu0 %v441
      %v514 = vpop.f32.mrf.mxu0
      %v515 = vadd.f32 0.0, %v514
      %v516 = vpop.f32.mrf.mxu0
      %v517 = vadd.f32 0.0, %v516
      %518 = vmatmul.bf16.gmra.mxu0 %v444
      %v519 = vpop.f32.mrf.mxu0
      %v520 = vadd.f32 0.0, %v519
      %v521 = vpop.f32.mrf.mxu0
      %v522 = vadd.f32 0.0, %v521
      %523 = vmatmul.bf16.gmra.mxu0 %v447
      %v524 = vpop.f32.mrf.mxu0
      %v525 = vadd.f32 0.0, %v524
      %v526 = vpop.f32.mrf.mxu0
      %v527 = vadd.f32 0.0, %v526
      %528 = vmatmul.bf16.gmra.mxu0 %v450
      %v529 = vpop.f32.mrf.mxu0
      %v530 = vadd.f32 0.0, %v529
      %v531 = vpop.f32.mrf.mxu0
      %v532 = vadd.f32 0.0, %v531
      %533 = vmatmul.bf16.gmra.mxu0 %v453
      %v534 = vpop.f32.mrf.mxu0
      %v535 = vadd.f32 0.0, %v534
      %v536 = vpop.f32.mrf.mxu0
      %v537 = vadd.f32 0.0, %v536
      %538 = vmatmul.bf16.gmra.mxu0 %v456
      %v539 = vpop.f32.mrf.mxu0
      %v540 = vadd.f32 0.0, %v539
      %v541 = vpop.f32.mrf.mxu0
      %v542 = vadd.f32 0.0, %v541
      %543 = vmatmul.bf16.gmra.mxu0 %v459
      %v544 = vpop.f32.mrf.mxu0
      %v545 = vadd.f32 0.0, %v544
      %v546 = vpop.f32.mrf.mxu0
      %v547 = vadd.f32 0.0, %v546
      %548 = vmatmul.bf16.gmra.mxu0 %v462
      %v549 = vpop.f32.mrf.mxu0
      %v550 = vadd.f32 0.0, %v549
      %v551 = vpop.f32.mrf.mxu0
      %v552 = vadd.f32 0.0, %v551
      %553 = vmatmul.bf16.gmra.mxu0 %v465
      %v554 = vpop.f32.mrf.mxu0
      %v555 = vadd.f32 0.0, %v554
      %v556 = vpop.f32.mrf.mxu0
      %v557 = vadd.f32 0.0, %v556
      %558 = vmatmul.bf16.gmra.mxu0 %v468
      %v559 = vpop.f32.mrf.mxu0
      %v560 = vadd.f32 0.0, %v559
      %v561 = vpop.f32.mrf.mxu0
      %v562 = vadd.f32 0.0, %v561
      %563 = vmatmul.bf16.gmra.mxu0 %v471
      %v564 = vpop.f32.mrf.mxu0
      %v565 = vadd.f32 0.0, %v564
      %v566 = vpop.f32.mrf.mxu0
      %v567 = vadd.f32 0.0, %v566
      %568 = vdwg.mxu0
      %v570 = vsel %vm424, %v228, 0
      %v573 = vsel %vm424, %v229, 0
      %v576 = vsel %vm424, %v230, 0
      %v579 = vsel %vm424, %v231, 0
      %v582 = vsel %vm424, %v232, 0
      %v585 = vsel %vm424, %v233, 0
      %v588 = vsel %vm424, %v234, 0
      %v591 = vsel %vm424, %v235, 0
      %v594 = vsel %vm424, %v236, 0
      %v597 = vsel %vm424, %v237, 0
      %v600 = vsel %vm424, %v238, 0
      %v603 = vsel %vm424, %v239, 0
      %v606 = vsel %vm424, %v240, 0
      %v609 = vsel %vm424, %v241, 0
      %v612 = vsel %vm424, %v242, 0
      %v615 = vsel %vm424, %v243, 0
      %v618 = vand.u32 %v244, %v476
      %620 = vmatpush.bf16.msra.mxu0 0
      %621 = vmatpush.bf16.msra.mxu0 0
      %622 = vmatpush.bf16.msra.mxu0 0
      %623 = vmatpush.bf16.msra.mxu0 0
      %624 = vmatpush.bf16.msra.mxu0 0
      %625 = vmatpush.bf16.msra.mxu0 0
      %626 = vmatpush.bf16.msra.mxu0 0
      %627 = vmatpush.bf16.msra.mxu0 %v618
      %628 = vmatmul.bf16.gmra.mxu0 %v570
      %v629 = vpop.f32.mrf.mxu0
      %v630 = vadd.f32 %v490, %v629
      %v631 = vpop.f32.mrf.mxu0
      %v632 = vadd.f32 %v492, %v631
      %633 = vmatmul.bf16.gmra.mxu0 %v573
      %v634 = vpop.f32.mrf.mxu0
      %v635 = vadd.f32 %v495, %v634
      %v636 = vpop.f32.mrf.mxu0
      %v637 = vadd.f32 %v497, %v636
      %638 = vmatmul.bf16.gmra.mxu0 %v576
      %v639 = vpop.f32.mrf.mxu0
      %v640 = vadd.f32 %v500, %v639
      %v641 = vpop.f32.mrf.mxu0
      %v642 = vadd.f32 %v502, %v641
      %643 = vmatmul.bf16.gmra.mxu0 %v579
      %v644 = vpop.f32.mrf.mxu0
      %v645 = vadd.f32 %v505, %v644
      %v646 = vpop.f32.mrf.mxu0
      %v647 = vadd.f32 %v507, %v646
      %648 = vmatmul.bf16.gmra.mxu0 %v582
      %v649 = vpop.f32.mrf.mxu0
      %v650 = vadd.f32 %v510, %v649
      %v651 = vpop.f32.mrf.mxu0
      %v652 = vadd.f32 %v512, %v651
      %653 = vmatmul.bf16.gmra.mxu0 %v585
      %v654 = vpop.f32.mrf.mxu0
      %v655 = vadd.f32 %v515, %v654
      %v656 = vpop.f32.mrf.mxu0
      %v657 = vadd.f32 %v517, %v656
      %658 = vmatmul.bf16.gmra.mxu0 %v588
      %v659 = vpop.f32.mrf.mxu0
      %v660 = vadd.f32 %v520, %v659
      %v661 = vpop.f32.mrf.mxu0
      %v662 = vadd.f32 %v522, %v661
      %663 = vmatmul.bf16.gmra.mxu0 %v591
      %v664 = vpop.f32.mrf.mxu0
      %v665 = vadd.f32 %v525, %v664
      %v666 = vpop.f32.mrf.mxu0
      %v667 = vadd.f32 %v527, %v666
      %668 = vmatmul.bf16.gmra.mxu0 %v594
      %v669 = vpop.f32.mrf.mxu0
      %v670 = vadd.f32 %v530, %v669
      %v671 = vpop.f32.mrf.mxu0
      %v672 = vadd.f32 %v532, %v671
      %673 = vmatmul.bf16.gmra.mxu0 %v597
      %v674 = vpop.f32.mrf.mxu0
      %v675 = vadd.f32 %v535, %v674
      %v676 = vpop.f32.mrf.mxu0
      %v677 = vadd.f32 %v537, %v676
      %678 = vmatmul.bf16.gmra.mxu0 %v600
      %v679 = vpop.f32.mrf.mxu0
      %v680 = vadd.f32 %v540, %v679
      %v681 = vpop.f32.mrf.mxu0
      %v682 = vadd.f32 %v542, %v681
      %683 = vmatmul.bf16.gmra.mxu0 %v603
      %v684 = vpop.f32.mrf.mxu0
      %v685 = vadd.f32 %v545, %v684
      %v686 = vpop.f32.mrf.mxu0
      %v687 = vadd.f32 %v547, %v686
      %688 = vmatmul.bf16.gmra.mxu0 %v606
      %v689 = vpop.f32.mrf.mxu0
      %v690 = vadd.f32 %v550, %v689
      %v691 = vpop.f32.mrf.mxu0
      %v692 = vadd.f32 %v552, %v691
      %693 = vmatmul.bf16.gmra.mxu0 %v609
      %v694 = vpop.f32.mrf.mxu0
      %v695 = vadd.f32 %v555, %v694
      %v696 = vpop.f32.mrf.mxu0
      %v697 = vadd.f32 %v557, %v696
      %698 = vmatmul.bf16.gmra.mxu0 %v612
      %v699 = vpop.f32.mrf.mxu0
      %v700 = vadd.f32 %v560, %v699
      %v701 = vpop.f32.mrf.mxu0
      %v702 = vadd.f32 %v562, %v701
      %703 = vmatmul.bf16.gmra.mxu0 %v615
      %v704 = vpop.f32.mrf.mxu0
      %v705 = vadd.f32 %v565, %v704
      %v706 = vpop.f32.mrf.mxu0
      %v707 = vadd.f32 %v567, %v706
      %708 = vdwg.mxu0
      %v709 = vpack.c.bf16 %v226, %v225
      %s710 = scalar_lea.vmem %s1, 12
      %v711 = vld [vmem:[%s710] sm:$0x3]
      %v713 = vsel %vm424, %v709, 0
      %v716 = vand.u32 %v711, %v476
      %718 = vmatpush.bf16.msra.mxu0 0
      %719 = vmatpush.bf16.msra.mxu0 0
      %720 = vmatpush.bf16.msra.mxu0 0
      %721 = vmatpush.bf16.msra.mxu0 0
      %722 = vmatpush.bf16.msra.mxu0 0
      %723 = vmatpush.bf16.msra.mxu0 0
      %724 = vmatpush.bf16.msra.mxu0 0
      %725 = vmatpush.bf16.msra.mxu0 %v716
      %726 = vmatmul.bf16.gmra.mxu0 %v573
      %v727 = vpop.f32.mrf.mxu0
      %v728 = vadd.f32 0.0, %v727
      %v729 = vpop.f32.mrf.mxu0
      %v730 = vadd.f32 0.0, %v729
      %731 = vmatmul.bf16.gmra.mxu0 %v576
      %v732 = vpop.f32.mrf.mxu0
      %v733 = vadd.f32 0.0, %v732
      %v734 = vpop.f32.mrf.mxu0
      %v735 = vadd.f32 0.0, %v734
      %736 = vmatmul.bf16.gmra.mxu0 %v579
      %v737 = vpop.f32.mrf.mxu0
      %v738 = vadd.f32 0.0, %v737
      %v739 = vpop.f32.mrf.mxu0
      %v740 = vadd.f32 0.0, %v739
      %741 = vmatmul.bf16.gmra.mxu0 %v582
      %v742 = vpop.f32.mrf.mxu0
      %v743 = vadd.f32 0.0, %v742
      %v744 = vpop.f32.mrf.mxu0
      %v745 = vadd.f32 0.0, %v744
      %746 = vmatmul.bf16.gmra.mxu0 %v585
      %v747 = vpop.f32.mrf.mxu0
      %v748 = vadd.f32 0.0, %v747
      %v749 = vpop.f32.mrf.mxu0
      %v750 = vadd.f32 0.0, %v749
      %751 = vmatmul.bf16.gmra.mxu0 %v588
      %v752 = vpop.f32.mrf.mxu0
      %v753 = vadd.f32 0.0, %v752
      %v754 = vpop.f32.mrf.mxu0
      %v755 = vadd.f32 0.0, %v754
      %756 = vmatmul.bf16.gmra.mxu0 %v591
      %v757 = vpop.f32.mrf.mxu0
      %v758 = vadd.f32 0.0, %v757
      %v759 = vpop.f32.mrf.mxu0
      %v760 = vadd.f32 0.0, %v759
      %761 = vmatmul.bf16.gmra.mxu0 %v594
      %v762 = vpop.f32.mrf.mxu0
      %v763 = vadd.f32 0.0, %v762
      %v764 = vpop.f32.mrf.mxu0
      %v765 = vadd.f32 0.0, %v764
      %766 = vmatmul.bf16.gmra.mxu0 %v597
      %v767 = vpop.f32.mrf.mxu0
      %v768 = vadd.f32 0.0, %v767
      %v769 = vpop.f32.mrf.mxu0
      %v770 = vadd.f32 0.0, %v769
      %771 = vmatmul.bf16.gmra.mxu0 %v600
      %v772 = vpop.f32.mrf.mxu0
      %v773 = vadd.f32 0.0, %v772
      %v774 = vpop.f32.mrf.mxu0
      %v775 = vadd.f32 0.0, %v774
      %776 = vmatmul.bf16.gmra.mxu0 %v603
      %v777 = vpop.f32.mrf.mxu0
      %v778 = vadd.f32 0.0, %v777
      %v779 = vpop.f32.mrf.mxu0
      %v780 = vadd.f32 0.0, %v779
      %781 = vmatmul.bf16.gmra.mxu0 %v606
      %v782 = vpop.f32.mrf.mxu0
      %v783 = vadd.f32 0.0, %v782
      %v784 = vpop.f32.mrf.mxu0
      %v785 = vadd.f32 0.0, %v784
      %786 = vmatmul.bf16.gmra.mxu0 %v609
      %v787 = vpop.f32.mrf.mxu0
      %v788 = vadd.f32 0.0, %v787
      %v789 = vpop.f32.mrf.mxu0
      %v790 = vadd.f32 0.0, %v789
      %791 = vmatmul.bf16.gmra.mxu0 %v612
      %v792 = vpop.f32.mrf.mxu0
      %v793 = vadd.f32 0.0, %v792
      %v794 = vpop.f32.mrf.mxu0
      %v795 = vadd.f32 0.0, %v794
      %796 = vmatmul.bf16.gmra.mxu0 %v615
      %v797 = vpop.f32.mrf.mxu0
      %v798 = vadd.f32 0.0, %v797
      %v799 = vpop.f32.mrf.mxu0
      %v800 = vadd.f32 0.0, %v799
      %801 = vmatmul.bf16.gmra.mxu0 %v713
      %v802 = vpop.f32.mrf.mxu0
      %v803 = vadd.f32 0.0, %v802
      %v804 = vpop.f32.mrf.mxu0
      %v805 = vadd.f32 0.0, %v804
      %806 = vdwg.mxu0
      %v807 = vadd.f32 %v630, %v728
      %v808 = vadd.f32 %v632, %v730
      %v809 = vadd.f32 %v635, %v733
      %v810 = vadd.f32 %v637, %v735
      %v811 = vadd.f32 %v640, %v738
      %v812 = vadd.f32 %v642, %v740
      %v813 = vadd.f32 %v645, %v743
      %v814 = vadd.f32 %v647, %v745
      %v815 = vadd.f32 %v650, %v748
      %v816 = vadd.f32 %v652, %v750
      %v817 = vadd.f32 %v655, %v753
      %v818 = vadd.f32 %v657, %v755
      %v819 = vadd.f32 %v660, %v758
      %v820 = vadd.f32 %v662, %v760
      %v821 = vadd.f32 %v665, %v763
      %v822 = vadd.f32 %v667, %v765
      %v823 = vadd.f32 %v670, %v768
      %v824 = vadd.f32 %v672, %v770
      %v825 = vadd.f32 %v675, %v773
      %v826 = vadd.f32 %v677, %v775
      %v827 = vadd.f32 %v680, %v778
      %v828 = vadd.f32 %v682, %v780
      %v829 = vadd.f32 %v685, %v783
      %v830 = vadd.f32 %v687, %v785
      %v831 = vadd.f32 %v690, %v788
      %v832 = vadd.f32 %v692, %v790
      %v833 = vadd.f32 %v695, %v793
      %v834 = vadd.f32 %v697, %v795
      %v835 = vadd.f32 %v700, %v798
      %v836 = vadd.f32 %v702, %v800
      %v837 = vadd.f32 %v705, %v803
      %v838 = vadd.f32 %v707, %v805
      %v842 = vrot.slane %v225, 1
      %v843 = vrot.slane %v226, 1
      %v844 = vsel %vm293, %v842, %v843
      %v845 = vrot.slane %v227, 1
      %v846 = vsel %vm293, %v843, %v845
      %v849 = vpack.c.bf16 %v846, %v844
      %s850 = scalar_lea.vmem %s1, 16
      %v851 = vld [vmem:[%s850] sm:$0x3]
      %v853 = vsel %vm424, %v849, 0
      %v856 = vand.u32 %v851, %v476
      %858 = vmatpush.bf16.msra.mxu0 0
      %859 = vmatpush.bf16.msra.mxu0 0
      %860 = vmatpush.bf16.msra.mxu0 0
      %861 = vmatpush.bf16.msra.mxu0 0
      %862 = vmatpush.bf16.msra.mxu0 0
      %863 = vmatpush.bf16.msra.mxu0 0
      %864 = vmatpush.bf16.msra.mxu0 0
      %865 = vmatpush.bf16.msra.mxu0 %v856
      %866 = vmatmul.bf16.gmra.mxu0 %v429
      %v867 = vpop.f32.mrf.mxu0
      %v868 = vadd.f32 0.0, %v867
      %v869 = vpop.f32.mrf.mxu0
      %v870 = vadd.f32 0.0, %v869
      %871 = vmatmul.bf16.gmra.mxu0 %v432
      %v872 = vpop.f32.mrf.mxu0
      %v873 = vadd.f32 0.0, %v872
      %v874 = vpop.f32.mrf.mxu0
      %v875 = vadd.f32 0.0, %v874
      %876 = vmatmul.bf16.gmra.mxu0 %v435
      %v877 = vpop.f32.mrf.mxu0
      %v878 = vadd.f32 0.0, %v877
      %v879 = vpop.f32.mrf.mxu0
      %v880 = vadd.f32 0.0, %v879
      %881 = vmatmul.bf16.gmra.mxu0 %v438
      %v882 = vpop.f32.mrf.mxu0
      %v883 = vadd.f32 0.0, %v882
      %v884 = vpop.f32.mrf.mxu0
      %v885 = vadd.f32 0.0, %v884
      %886 = vmatmul.bf16.gmra.mxu0 %v441
      %v887 = vpop.f32.mrf.mxu0
      %v888 = vadd.f32 0.0, %v887
      %v889 = vpop.f32.mrf.mxu0
      %v890 = vadd.f32 0.0, %v889
      %891 = vmatmul.bf16.gmra.mxu0 %v444
      %v892 = vpop.f32.mrf.mxu0
      %v893 = vadd.f32 0.0, %v892
      %v894 = vpop.f32.mrf.mxu0
      %v895 = vadd.f32 0.0, %v894
      %896 = vmatmul.bf16.gmra.mxu0 %v447
      %v897 = vpop.f32.mrf.mxu0
      %v898 = vadd.f32 0.0, %v897
      %v899 = vpop.f32.mrf.mxu0
      %v900 = vadd.f32 0.0, %v899
      %901 = vmatmul.bf16.gmra.mxu0 %v450
      %v902 = vpop.f32.mrf.mxu0
      %v903 = vadd.f32 0.0, %v902
      %v904 = vpop.f32.mrf.mxu0
      %v905 = vadd.f32 0.0, %v904
      %906 = vmatmul.bf16.gmra.mxu0 %v453
      %v907 = vpop.f32.mrf.mxu0
      %v908 = vadd.f32 0.0, %v907
      %v909 = vpop.f32.mrf.mxu0
      %v910 = vadd.f32 0.0, %v909
      %911 = vmatmul.bf16.gmra.mxu0 %v456
      %v912 = vpop.f32.mrf.mxu0
      %v913 = vadd.f32 0.0, %v912
      %v914 = vpop.f32.mrf.mxu0
      %v915 = vadd.f32 0.0, %v914
      %916 = vmatmul.bf16.gmra.mxu0 %v459
      %v917 = vpop.f32.mrf.mxu0
      %v918 = vadd.f32 0.0, %v917
      %v919 = vpop.f32.mrf.mxu0
      %v920 = vadd.f32 0.0, %v919
      %921 = vmatmul.bf16.gmra.mxu0 %v462
      %v922 = vpop.f32.mrf.mxu0
      %v923 = vadd.f32 0.0, %v922
      %v924 = vpop.f32.mrf.mxu0
      %v925 = vadd.f32 0.0, %v924
      %926 = vmatmul.bf16.gmra.mxu0 %v465
      %v927 = vpop.f32.mrf.mxu0
      %v928 = vadd.f32 0.0, %v927
      %v929 = vpop.f32.mrf.mxu0
      %v930 = vadd.f32 0.0, %v929
      %931 = vmatmul.bf16.gmra.mxu0 %v468
      %v932 = vpop.f32.mrf.mxu0
      %v933 = vadd.f32 0.0, %v932
      %v934 = vpop.f32.mrf.mxu0
      %v935 = vadd.f32 0.0, %v934
      %936 = vmatmul.bf16.gmra.mxu0 %v471
      %v937 = vpop.f32.mrf.mxu0
      %v938 = vadd.f32 0.0, %v937
      %v939 = vpop.f32.mrf.mxu0
      %v940 = vadd.f32 0.0, %v939
      %941 = vmatmul.bf16.gmra.mxu0 %v853
      %v942 = vpop.f32.mrf.mxu0
      %v943 = vadd.f32 0.0, %v942
      %v944 = vpop.f32.mrf.mxu0
      %v945 = vadd.f32 0.0, %v944
      %946 = vdwg.mxu0
      %v947 = vadd.f32 %v807, %v868
      %v948 = vadd.f32 %v808, %v870
      %v949 = vadd.f32 %v809, %v873
      %v950 = vadd.f32 %v810, %v875
      %v951 = vadd.f32 %v811, %v878
      %v952 = vadd.f32 %v812, %v880
      %v953 = vadd.f32 %v813, %v883
      %v954 = vadd.f32 %v814, %v885
      %v955 = vadd.f32 %v815, %v888
      %v956 = vadd.f32 %v816, %v890
      %v957 = vadd.f32 %v817, %v893
      %v958 = vadd.f32 %v818, %v895
      %v959 = vadd.f32 %v819, %v898
      %v960 = vadd.f32 %v820, %v900
      %v961 = vadd.f32 %v821, %v903
      %v962 = vadd.f32 %v822, %v905
      %v963 = vadd.f32 %v823, %v908
      %v964 = vadd.f32 %v824, %v910
      %v965 = vadd.f32 %v825, %v913
      %v966 = vadd.f32 %v826, %v915
      %v967 = vadd.f32 %v827, %v918
      %v968 = vadd.f32 %v828, %v920
      %v969 = vadd.f32 %v829, %v923
      %v970 = vadd.f32 %v830, %v925
      %v971 = vadd.f32 %v831, %v928
      %v972 = vadd.f32 %v832, %v930
      %v973 = vadd.f32 %v833, %v933
      %v974 = vadd.f32 %v834, %v935
      %v975 = vadd.f32 %v835, %v938
      %v976 = vadd.f32 %v836, %v940
      %v977 = vadd.f32 %v837, %v943
      %v978 = vadd.f32 %v838, %v945
      %s979 = scalar_lea.vmem %s169, 408
      %v980 = vld [vmem:[%s979] sm:$0xff]
      %v981 = vld [vmem:[%s979 + $0x8] sm:$0xff]
      %v982 = vld [vmem:[%s979 + $0x18] sm:$0xff]
      %v983 = vld [vmem:[%s979 + $0x20] sm:$0xff]
      %v984 = vld [vmem:[%s979 + $0x30] sm:$0xff]
      %v985 = vld [vmem:[%s979 + $0x38] sm:$0xff]
      %v986 = vld [vmem:[%s979 + $0x48] sm:$0xff]
      %v987 = vld [vmem:[%s979 + $0x50] sm:$0xff]
      %v988 = vld [vmem:[%s979 + $0x60] sm:$0xff]
      %v989 = vld [vmem:[%s979 + $0x68] sm:$0xff]
      %v990 = vld [vmem:[%s979 + $0x78] sm:$0xff]
      %v991 = vld [vmem:[%s979 + $0x80] sm:$0xff]
      %v992 = vld [vmem:[%s979 + $0x90] sm:$0xff]
      %v993 = vld [vmem:[%s979 + $0x98] sm:$0xff]
      %v994 = vld [vmem:[%s979 + $0xa8] sm:$0xff]
      %v995 = vld [vmem:[%s979 + $0xb0] sm:$0xff]
      %v996 = vld [vmem:[%s979 + $0xc0] sm:$0xff]
      %v997 = vld [vmem:[%s979 + $0xc8] sm:$0xff]
      %v998 = vld [vmem:[%s979 + $0xd8] sm:$0xff]
      %v999 = vld [vmem:[%s979 + $0xe0] sm:$0xff]
      %v1000 = vld [vmem:[%s979 + $0xf0] sm:$0xff]
      %v1001 = vld [vmem:[%s979 + $0xf8] sm:$0xff]
      %v1002 = vld [vmem:[%s979 + $0x108] sm:$0xff]
      %v1003 = vld [vmem:[%s979 + $0x110] sm:$0xff]
      %v1004 = vld [vmem:[%s979 + $0x120] sm:$0xff]
      %v1005 = vld [vmem:[%s979 + $0x128] sm:$0xff]
      %v1006 = vld [vmem:[%s979 + $0x138] sm:$0xff]
      %v1007 = vld [vmem:[%s979 + $0x140] sm:$0xff]
      %v1008 = vld [vmem:[%s979 + $0x150] sm:$0xff]
      %v1009 = vld [vmem:[%s979 + $0x158] sm:$0xff]
      %v1010 = vld [vmem:[%s979 + $0x168] sm:$0xff]
      %v1011 = vld [vmem:[%s979 + $0x170] sm:$0xff]
      %v1012 = vld [vmem:[%s979 + $0x180] sm:$0xff]
      %v1013 = vld [vmem:[%s979 + $0x188] sm:$0xff]
      %v1014 = vpack.c.bf16 %v981, %v980
      %v1015 = vpack.c.bf16 %v983, %v982
      %v1016 = vpack.c.bf16 %v985, %v984
      %v1017 = vpack.c.bf16 %v987, %v986
      %v1018 = vpack.c.bf16 %v989, %v988
      %v1019 = vpack.c.bf16 %v991, %v990
      %v1020 = vpack.c.bf16 %v993, %v992
      %v1021 = vpack.c.bf16 %v995, %v994
      %v1022 = vpack.c.bf16 %v997, %v996
      %v1023 = vpack.c.bf16 %v999, %v998
      %v1024 = vpack.c.bf16 %v1001, %v1000
      %v1025 = vpack.c.bf16 %v1003, %v1002
      %v1026 = vpack.c.bf16 %v1005, %v1004
      %v1027 = vpack.c.bf16 %v1007, %v1006
      %v1028 = vpack.c.bf16 %v1009, %v1008
      %v1029 = vpack.c.bf16 %v1011, %v1010
      %s1030 = scalar_lea.vmem %s1, 2
      %v1031 = vld [vmem:[%s1030] sm:$0x3]
      %v1033 = vsel %vm424, %v1014, 0
      %v1036 = vsel %vm424, %v1015, 0
      %v1039 = vsel %vm424, %v1016, 0
      %v1042 = vsel %vm424, %v1017, 0
      %v1045 = vsel %vm424, %v1018, 0
      %v1048 = vsel %vm424, %v1019, 0
      %v1051 = vsel %vm424, %v1020, 0
      %v1054 = vsel %vm424, %v1021, 0
      %v1057 = vsel %vm424, %v1022, 0
      %v1060 = vsel %vm424, %v1023, 0
      %v1063 = vsel %vm424, %v1024, 0
      %v1066 = vsel %vm424, %v1025, 0
      %v1069 = vsel %vm424, %v1026, 0
      %v1072 = vsel %vm424, %v1027, 0
      %v1075 = vsel %vm424, %v1028, 0
      %v1078 = vsel %vm424, %v1029, 0
      %v1081 = vand.u32 %v1031, %v476
      %1083 = vmatpush.bf16.msra.mxu0 0
      %1084 = vmatpush.bf16.msra.mxu0 0
      %1085 = vmatpush.bf16.msra.mxu0 0
      %1086 = vmatpush.bf16.msra.mxu0 0
      %1087 = vmatpush.bf16.msra.mxu0 0
      %1088 = vmatpush.bf16.msra.mxu0 0
      %1089 = vmatpush.bf16.msra.mxu0 0
      %1090 = vmatpush.bf16.msra.mxu0 %v1081
      %1091 = vmatmul.bf16.gmra.mxu0 %v1033
      %v1092 = vpop.f32.mrf.mxu0
      %v1093 = vadd.f32 0.0, %v1092
      %v1094 = vpop.f32.mrf.mxu0
      %v1095 = vadd.f32 0.0, %v1094
      %1096 = vmatmul.bf16.gmra.mxu0 %v1036
      %v1097 = vpop.f32.mrf.mxu0
      %v1098 = vadd.f32 0.0, %v1097
      %v1099 = vpop.f32.mrf.mxu0
      %v1100 = vadd.f32 0.0, %v1099
      %1101 = vmatmul.bf16.gmra.mxu0 %v1039
      %v1102 = vpop.f32.mrf.mxu0
      %v1103 = vadd.f32 0.0, %v1102
      %v1104 = vpop.f32.mrf.mxu0
      %v1105 = vadd.f32 0.0, %v1104
      %1106 = vmatmul.bf16.gmra.mxu0 %v1042
      %v1107 = vpop.f32.mrf.mxu0
      %v1108 = vadd.f32 0.0, %v1107
      %v1109 = vpop.f32.mrf.mxu0
      %v1110 = vadd.f32 0.0, %v1109
      %1111 = vmatmul.bf16.gmra.mxu0 %v1045
      %v1112 = vpop.f32.mrf.mxu0
      %v1113 = vadd.f32 0.0, %v1112
      %v1114 = vpop.f32.mrf.mxu0
      %v1115 = vadd.f32 0.0, %v1114
      %1116 = vmatmul.bf16.gmra.mxu0 %v1048
      %v1117 = vpop.f32.mrf.mxu0
      %v1118 = vadd.f32 0.0, %v1117
      %v1119 = vpop.f32.mrf.mxu0
      %v1120 = vadd.f32 0.0, %v1119
      %1121 = vmatmul.bf16.gmra.mxu0 %v1051
      %v1122 = vpop.f32.mrf.mxu0
      %v1123 = vadd.f32 0.0, %v1122
      %v1124 = vpop.f32.mrf.mxu0
      %v1125 = vadd.f32 0.0, %v1124
      %1126 = vmatmul.bf16.gmra.mxu0 %v1054
      %v1127 = vpop.f32.mrf.mxu0
      %v1128 = vadd.f32 0.0, %v1127
      %v1129 = vpop.f32.mrf.mxu0
      %v1130 = vadd.f32 0.0, %v1129
      %1131 = vmatmul.bf16.gmra.mxu0 %v1057
      %v1132 = vpop.f32.mrf.mxu0
      %v1133 = vadd.f32 0.0, %v1132
      %v1134 = vpop.f32.mrf.mxu0
      %v1135 = vadd.f32 0.0, %v1134
      %1136 = vmatmul.bf16.gmra.mxu0 %v1060
      %v1137 = vpop.f32.mrf.mxu0
      %v1138 = vadd.f32 0.0, %v1137
      %v1139 = vpop.f32.mrf.mxu0
      %v1140 = vadd.f32 0.0, %v1139
      %1141 = vmatmul.bf16.gmra.mxu0 %v1063
      %v1142 = vpop.f32.mrf.mxu0
      %v1143 = vadd.f32 0.0, %v1142
      %v1144 = vpop.f32.mrf.mxu0
      %v1145 = vadd.f32 0.0, %v1144
      %1146 = vmatmul.bf16.gmra.mxu0 %v1066
      %v1147 = vpop.f32.mrf.mxu0
      %v1148 = vadd.f32 0.0, %v1147
      %v1149 = vpop.f32.mrf.mxu0
      %v1150 = vadd.f32 0.0, %v1149
      %1151 = vmatmul.bf16.gmra.mxu0 %v1069
      %v1152 = vpop.f32.mrf.mxu0
      %v1153 = vadd.f32 0.0, %v1152
      %v1154 = vpop.f32.mrf.mxu0
      %v1155 = vadd.f32 0.0, %v1154
      %1156 = vmatmul.bf16.gmra.mxu0 %v1072
      %v1157 = vpop.f32.mrf.mxu0
      %v1158 = vadd.f32 0.0, %v1157
      %v1159 = vpop.f32.mrf.mxu0
      %v1160 = vadd.f32 0.0, %v1159
      %1161 = vmatmul.bf16.gmra.mxu0 %v1075
      %v1162 = vpop.f32.mrf.mxu0
      %v1163 = vadd.f32 0.0, %v1162
      %v1164 = vpop.f32.mrf.mxu0
      %v1165 = vadd.f32 0.0, %v1164
      %1166 = vmatmul.bf16.gmra.mxu0 %v1078
      %v1167 = vpop.f32.mrf.mxu0
      %v1168 = vadd.f32 0.0, %v1167
      %v1169 = vpop.f32.mrf.mxu0
      %v1170 = vadd.f32 0.0, %v1169
      %1171 = vdwg.mxu0
      %v1172 = vadd.f32 %v947, %v1093
      %v1173 = vadd.f32 %v948, %v1095
      %v1174 = vadd.f32 %v949, %v1098
      %v1175 = vadd.f32 %v950, %v1100
      %v1176 = vadd.f32 %v951, %v1103
      %v1177 = vadd.f32 %v952, %v1105
      %v1178 = vadd.f32 %v953, %v1108
      %v1179 = vadd.f32 %v954, %v1110
      %v1180 = vadd.f32 %v955, %v1113
      %v1181 = vadd.f32 %v956, %v1115
      %v1182 = vadd.f32 %v957, %v1118
      %v1183 = vadd.f32 %v958, %v1120
      %v1184 = vadd.f32 %v959, %v1123
      %v1185 = vadd.f32 %v960, %v1125
      %v1186 = vadd.f32 %v961, %v1128
      %v1187 = vadd.f32 %v962, %v1130
      %v1188 = vadd.f32 %v963, %v1133
      %v1189 = vadd.f32 %v964, %v1135
      %v1190 = vadd.f32 %v965, %v1138
      %v1191 = vadd.f32 %v966, %v1140
      %v1192 = vadd.f32 %v967, %v1143
      %v1193 = vadd.f32 %v968, %v1145
      %v1194 = vadd.f32 %v969, %v1148
      %v1195 = vadd.f32 %v970, %v1150
      %v1196 = vadd.f32 %v971, %v1153
      %v1197 = vadd.f32 %v972, %v1155
      %v1198 = vadd.f32 %v973, %v1158
      %v1199 = vadd.f32 %v974, %v1160
      %v1200 = vadd.f32 %v975, %v1163
      %v1201 = vadd.f32 %v976, %v1165
      %v1202 = vadd.f32 %v977, %v1168
      %v1203 = vadd.f32 %v978, %v1170
      %v1204 = vpack.c.bf16 %v1013, %v1012
      %s1205 = scalar_lea.vmem %s1, 14
      %v1206 = vld [vmem:[%s1205] sm:$0x3]
      %v1208 = vsel %vm424, %v1204, 0
      %v1211 = vand.u32 %v1206, %v476
      %1213 = vmatpush.bf16.msra.mxu0 0
      %1214 = vmatpush.bf16.msra.mxu0 0
      %1215 = vmatpush.bf16.msra.mxu0 0
      %1216 = vmatpush.bf16.msra.mxu0 0
      %1217 = vmatpush.bf16.msra.mxu0 0
      %1218 = vmatpush.bf16.msra.mxu0 0
      %1219 = vmatpush.bf16.msra.mxu0 0
      %1220 = vmatpush.bf16.msra.mxu0 %v1211
      %1221 = vmatmul.bf16.gmra.mxu0 %v1036
      %v1222 = vpop.f32.mrf.mxu0
      %v1223 = vadd.f32 0.0, %v1222
      %v1224 = vpop.f32.mrf.mxu0
      %v1225 = vadd.f32 0.0, %v1224
      %1226 = vmatmul.bf16.gmra.mxu0 %v1039
      %v1227 = vpop.f32.mrf.mxu0
      %v1228 = vadd.f32 0.0, %v1227
      %v1229 = vpop.f32.mrf.mxu0
      %v1230 = vadd.f32 0.0, %v1229
      %1231 = vmatmul.bf16.gmra.mxu0 %v1042
      %v1232 = vpop.f32.mrf.mxu0
      %v1233 = vadd.f32 0.0, %v1232
      %v1234 = vpop.f32.mrf.mxu0
      %v1235 = vadd.f32 0.0, %v1234
      %1236 = vmatmul.bf16.gmra.mxu0 %v1045
      %v1237 = vpop.f32.mrf.mxu0
      %v1238 = vadd.f32 0.0, %v1237
      %v1239 = vpop.f32.mrf.mxu0
      %v1240 = vadd.f32 0.0, %v1239
      %1241 = vmatmul.bf16.gmra.mxu0 %v1048
      %v1242 = vpop.f32.mrf.mxu0
      %v1243 = vadd.f32 0.0, %v1242
      %v1244 = vpop.f32.mrf.mxu0
      %v1245 = vadd.f32 0.0, %v1244
      %1246 = vmatmul.bf16.gmra.mxu0 %v1051
      %v1247 = vpop.f32.mrf.mxu0
      %v1248 = vadd.f32 0.0, %v1247
      %v1249 = vpop.f32.mrf.mxu0
      %v1250 = vadd.f32 0.0, %v1249
      %1251 = vmatmul.bf16.gmra.mxu0 %v1054
      %v1252 = vpop.f32.mrf.mxu0
      %v1253 = vadd.f32 0.0, %v1252
      %v1254 = vpop.f32.mrf.mxu0
      %v1255 = vadd.f32 0.0, %v1254
      %1256 = vmatmul.bf16.gmra.mxu0 %v1057
      %v1257 = vpop.f32.mrf.mxu0
      %v1258 = vadd.f32 0.0, %v1257
      %v1259 = vpop.f32.mrf.mxu0
      %v1260 = vadd.f32 0.0, %v1259
      %1261 = vmatmul.bf16.gmra.mxu0 %v1060
      %v1262 = vpop.f32.mrf.mxu0
      %v1263 = vadd.f32 0.0, %v1262
      %v1264 = vpop.f32.mrf.mxu0
      %v1265 = vadd.f32 0.0, %v1264
      %1266 = vmatmul.bf16.gmra.mxu0 %v1063
      %v1267 = vpop.f32.mrf.mxu0
      %v1268 = vadd.f32 0.0, %v1267
      %v1269 = vpop.f32.mrf.mxu0
      %v1270 = vadd.f32 0.0, %v1269
      %1271 = vmatmul.bf16.gmra.mxu0 %v1066
      %v1272 = vpop.f32.mrf.mxu0
      %v1273 = vadd.f32 0.0, %v1272
      %v1274 = vpop.f32.mrf.mxu0
      %v1275 = vadd.f32 0.0, %v1274
      %1276 = vmatmul.bf16.gmra.mxu0 %v1069
      %v1277 = vpop.f32.mrf.mxu0
      %v1278 = vadd.f32 0.0, %v1277
      %v1279 = vpop.f32.mrf.mxu0
      %v1280 = vadd.f32 0.0, %v1279
      %1281 = vmatmul.bf16.gmra.mxu0 %v1072
      %v1282 = vpop.f32.mrf.mxu0
      %v1283 = vadd.f32 0.0, %v1282
      %v1284 = vpop.f32.mrf.mxu0
      %v1285 = vadd.f32 0.0, %v1284
      %1286 = vmatmul.bf16.gmra.mxu0 %v1075
      %v1287 = vpop.f32.mrf.mxu0
      %v1288 = vadd.f32 0.0, %v1287
      %v1289 = vpop.f32.mrf.mxu0
      %v1290 = vadd.f32 0.0, %v1289
      %1291 = vmatmul.bf16.gmra.mxu0 %v1078
      %v1292 = vpop.f32.mrf.mxu0
      %v1293 = vadd.f32 0.0, %v1292
      %v1294 = vpop.f32.mrf.mxu0
      %v1295 = vadd.f32 0.0, %v1294
      %1296 = vmatmul.bf16.gmra.mxu0 %v1208
      %v1297 = vpop.f32.mrf.mxu0
      %v1298 = vadd.f32 0.0, %v1297
      %v1299 = vpop.f32.mrf.mxu0
      %v1300 = vadd.f32 0.0, %v1299
      %1301 = vdwg.mxu0
      %v1302 = vadd.f32 %v1172, %v1223
      %v1303 = vadd.f32 %v1173, %v1225
      %v1304 = vadd.f32 %v1174, %v1228
      %v1305 = vadd.f32 %v1175, %v1230
      %v1306 = vadd.f32 %v1176, %v1233
      %v1307 = vadd.f32 %v1177, %v1235
      %v1308 = vadd.f32 %v1178, %v1238
      %v1309 = vadd.f32 %v1179, %v1240
      %v1310 = vadd.f32 %v1180, %v1243
      %v1311 = vadd.f32 %v1181, %v1245
      %v1312 = vadd.f32 %v1182, %v1248
      %v1313 = vadd.f32 %v1183, %v1250
      %v1314 = vadd.f32 %v1184, %v1253
      %v1315 = vadd.f32 %v1185, %v1255
      %v1316 = vadd.f32 %v1186, %v1258
      %v1317 = vadd.f32 %v1187, %v1260
      %v1318 = vadd.f32 %v1188, %v1263
      %v1319 = vadd.f32 %v1189, %v1265
      %v1320 = vadd.f32 %v1190, %v1268
      %v1321 = vadd.f32 %v1191, %v1270
      %v1322 = vadd.f32 %v1192, %v1273
      %v1323 = vadd.f32 %v1193, %v1275
      %v1324 = vadd.f32 %v1194, %v1278
      %v1325 = vadd.f32 %v1195, %v1280
      %v1326 = vadd.f32 %v1196, %v1283
      %v1327 = vadd.f32 %v1197, %v1285
      %v1328 = vadd.f32 %v1198, %v1288
      %v1329 = vadd.f32 %v1199, %v1290
      %v1330 = vadd.f32 %v1200, %v1293
      %v1331 = vadd.f32 %v1201, %v1295
      %v1332 = vadd.f32 %v1202, %v1298
      %v1333 = vadd.f32 %v1203, %v1300
      %s1334 = scalar_lea.vmem %s169, 816
      %v1335 = vld [vmem:[%s1334] sm:$0xff]
      %v1336 = vld [vmem:[%s1334 + $0x8] sm:$0xff]
      %v1337 = vld [vmem:[%s1334 + $0x10] sm:$0x1]
      %v1338 = vld [vmem:[%s1334 + $0x18] sm:$0xff]
      %v1339 = vld [vmem:[%s1334 + $0x20] sm:$0xff]
      %v1340 = vld [vmem:[%s1334 + $0x28] sm:$0x1]
      %v1341 = vld [vmem:[%s1334 + $0x30] sm:$0xff]
      %v1342 = vld [vmem:[%s1334 + $0x38] sm:$0xff]
      %v1343 = vld [vmem:[%s1334 + $0x40] sm:$0x1]
      %v1344 = vld [vmem:[%s1334 + $0x48] sm:$0xff]
      %v1345 = vld [vmem:[%s1334 + $0x50] sm:$0xff]
      %v1346 = vld [vmem:[%s1334 + $0x58] sm:$0x1]
      %v1347 = vld [vmem:[%s1334 + $0x60] sm:$0xff]
      %v1348 = vld [vmem:[%s1334 + $0x68] sm:$0xff]
      %v1349 = vld [vmem:[%s1334 + $0x70] sm:$0x1]
      %v1350 = vld [vmem:[%s1334 + $0x78] sm:$0xff]
      %v1351 = vld [vmem:[%s1334 + $0x80] sm:$0xff]
      %v1352 = vld [vmem:[%s1334 + $0x88] sm:$0x1]
      %v1353 = vld [vmem:[%s1334 + $0x90] sm:$0xff]
      %v1354 = vld [vmem:[%s1334 + $0x98] sm:$0xff]
      %v1355 = vld [vmem:[%s1334 + $0xa0] sm:$0x1]
      %v1356 = vld [vmem:[%s1334 + $0xa8] sm:$0xff]
      %v1357 = vld [vmem:[%s1334 + $0xb0] sm:$0xff]
      %v1358 = vld [vmem:[%s1334 + $0xb8] sm:$0x1]
      %v1359 = vld [vmem:[%s1334 + $0xc0] sm:$0xff]
      %v1360 = vld [vmem:[%s1334 + $0xc8] sm:$0xff]
      %v1361 = vld [vmem:[%s1334 + $0xd0] sm:$0x1]
      %v1362 = vld [vmem:[%s1334 + $0xd8] sm:$0xff]
      %v1363 = vld [vmem:[%s1334 + $0xe0] sm:$0xff]
      %v1364 = vld [vmem:[%s1334 + $0xe8] sm:$0x1]
      %v1365 = vld [vmem:[%s1334 + $0xf0] sm:$0xff]
      %v1366 = vld [vmem:[%s1334 + $0xf8] sm:$0xff]
      %v1367 = vld [vmem:[%s1334 + $0x100] sm:$0x1]
      %v1368 = vld [vmem:[%s1334 + $0x108] sm:$0xff]
      %v1369 = vld [vmem:[%s1334 + $0x110] sm:$0xff]
      %v1370 = vld [vmem:[%s1334 + $0x118] sm:$0x1]
      %v1371 = vld [vmem:[%s1334 + $0x120] sm:$0xff]
      %v1372 = vld [vmem:[%s1334 + $0x128] sm:$0xff]
      %v1373 = vld [vmem:[%s1334 + $0x130] sm:$0x1]
      %v1374 = vld [vmem:[%s1334 + $0x138] sm:$0xff]
      %v1375 = vld [vmem:[%s1334 + $0x140] sm:$0xff]
      %v1376 = vld [vmem:[%s1334 + $0x148] sm:$0x1]
      %v1377 = vld [vmem:[%s1334 + $0x150] sm:$0xff]
      %v1378 = vld [vmem:[%s1334 + $0x158] sm:$0xff]
      %v1379 = vld [vmem:[%s1334 + $0x160] sm:$0x1]
      %v1380 = vld [vmem:[%s1334 + $0x168] sm:$0xff]
      %v1381 = vld [vmem:[%s1334 + $0x170] sm:$0xff]
      %v1382 = vld [vmem:[%s1334 + $0x178] sm:$0x1]
      %v1383 = vpack.c.bf16 %v1336, %v1335
      %v1384 = vpack.c.bf16 %v1339, %v1338
      %v1385 = vpack.c.bf16 %v1342, %v1341
      %v1386 = vpack.c.bf16 %v1345, %v1344
      %v1387 = vpack.c.bf16 %v1348, %v1347
      %v1388 = vpack.c.bf16 %v1351, %v1350
      %v1389 = vpack.c.bf16 %v1354, %v1353
      %v1390 = vpack.c.bf16 %v1357, %v1356
      %v1391 = vpack.c.bf16 %v1360, %v1359
      %v1392 = vpack.c.bf16 %v1363, %v1362
      %v1393 = vpack.c.bf16 %v1366, %v1365
      %v1394 = vpack.c.bf16 %v1369, %v1368
      %v1395 = vpack.c.bf16 %v1372, %v1371
      %v1396 = vpack.c.bf16 %v1375, %v1374
      %v1397 = vpack.c.bf16 %v1378, %v1377
      %v1398 = vpack.c.bf16 %v1381, %v1380
      %s1399 = scalar_lea.vmem %s1, 6
      %v1400 = vld [vmem:[%s1399] sm:$0x3]
      %v1402 = vsel %vm424, %v1383, 0
      %v1405 = vsel %vm424, %v1384, 0
      %v1408 = vsel %vm424, %v1385, 0
      %v1411 = vsel %vm424, %v1386, 0
      %v1414 = vsel %vm424, %v1387, 0
      %v1417 = vsel %vm424, %v1388, 0
      %v1420 = vsel %vm424, %v1389, 0
      %v1423 = vsel %vm424, %v1390, 0
      %v1426 = vsel %vm424, %v1391, 0
      %v1429 = vsel %vm424, %v1392, 0
      %v1432 = vsel %vm424, %v1393, 0
      %v1435 = vsel %vm424, %v1394, 0
      %v1438 = vsel %vm424, %v1395, 0
      %v1441 = vsel %vm424, %v1396, 0
      %v1444 = vsel %vm424, %v1397, 0
      %v1447 = vsel %vm424, %v1398, 0
      %v1450 = vand.u32 %v1400, %v476
      %1452 = vmatpush.bf16.msra.mxu0 0
      %1453 = vmatpush.bf16.msra.mxu0 0
      %1454 = vmatpush.bf16.msra.mxu0 0
      %1455 = vmatpush.bf16.msra.mxu0 0
      %1456 = vmatpush.bf16.msra.mxu0 0
      %1457 = vmatpush.bf16.msra.mxu0 0
      %1458 = vmatpush.bf16.msra.mxu0 0
      %1459 = vmatpush.bf16.msra.mxu0 %v1450
      %1460 = vmatmul.bf16.gmra.mxu0 %v1402
      %v1461 = vpop.f32.mrf.mxu0
      %v1462 = vadd.f32 0.0, %v1461
      %v1463 = vpop.f32.mrf.mxu0
      %v1464 = vadd.f32 0.0, %v1463
      %1465 = vmatmul.bf16.gmra.mxu0 %v1405
      %v1466 = vpop.f32.mrf.mxu0
      %v1467 = vadd.f32 0.0, %v1466
      %v1468 = vpop.f32.mrf.mxu0
      %v1469 = vadd.f32 0.0, %v1468
      %1470 = vmatmul.bf16.gmra.mxu0 %v1408
      %v1471 = vpop.f32.mrf.mxu0
      %v1472 = vadd.f32 0.0, %v1471
      %v1473 = vpop.f32.mrf.mxu0
      %v1474 = vadd.f32 0.0, %v1473
      %1475 = vmatmul.bf16.gmra.mxu0 %v1411
      %v1476 = vpop.f32.mrf.mxu0
      %v1477 = vadd.f32 0.0, %v1476
      %v1478 = vpop.f32.mrf.mxu0
      %v1479 = vadd.f32 0.0, %v1478
      %1480 = vmatmul.bf16.gmra.mxu0 %v1414
      %v1481 = vpop.f32.mrf.mxu0
      %v1482 = vadd.f32 0.0, %v1481
      %v1483 = vpop.f32.mrf.mxu0
      %v1484 = vadd.f32 0.0, %v1483
      %1485 = vmatmul.bf16.gmra.mxu0 %v1417
      %v1486 = vpop.f32.mrf.mxu0
      %v1487 = vadd.f32 0.0, %v1486
      %v1488 = vpop.f32.mrf.mxu0
      %v1489 = vadd.f32 0.0, %v1488
      %1490 = vmatmul.bf16.gmra.mxu0 %v1420
      %v1491 = vpop.f32.mrf.mxu0
      %v1492 = vadd.f32 0.0, %v1491
      %v1493 = vpop.f32.mrf.mxu0
      %v1494 = vadd.f32 0.0, %v1493
      %1495 = vmatmul.bf16.gmra.mxu0 %v1423
      %v1496 = vpop.f32.mrf.mxu0
      %v1497 = vadd.f32 0.0, %v1496
      %v1498 = vpop.f32.mrf.mxu0
      %v1499 = vadd.f32 0.0, %v1498
      %1500 = vmatmul.bf16.gmra.mxu0 %v1426
      %v1501 = vpop.f32.mrf.mxu0
      %v1502 = vadd.f32 0.0, %v1501
      %v1503 = vpop.f32.mrf.mxu0
      %v1504 = vadd.f32 0.0, %v1503
      %1505 = vmatmul.bf16.gmra.mxu0 %v1429
      %v1506 = vpop.f32.mrf.mxu0
      %v1507 = vadd.f32 0.0, %v1506
      %v1508 = vpop.f32.mrf.mxu0
      %v1509 = vadd.f32 0.0, %v1508
      %1510 = vmatmul.bf16.gmra.mxu0 %v1432
      %v1511 = vpop.f32.mrf.mxu0
      %v1512 = vadd.f32 0.0, %v1511
      %v1513 = vpop.f32.mrf.mxu0
      %v1514 = vadd.f32 0.0, %v1513
      %1515 = vmatmul.bf16.gmra.mxu0 %v1435
      %v1516 = vpop.f32.mrf.mxu0
      %v1517 = vadd.f32 0.0, %v1516
      %v1518 = vpop.f32.mrf.mxu0
      %v1519 = vadd.f32 0.0, %v1518
      %1520 = vmatmul.bf16.gmra.mxu0 %v1438
      %v1521 = vpop.f32.mrf.mxu0
      %v1522 = vadd.f32 0.0, %v1521
      %v1523 = vpop.f32.mrf.mxu0
      %v1524 = vadd.f32 0.0, %v1523
      %1525 = vmatmul.bf16.gmra.mxu0 %v1441
      %v1526 = vpop.f32.mrf.mxu0
      %v1527 = vadd.f32 0.0, %v1526
      %v1528 = vpop.f32.mrf.mxu0
      %v1529 = vadd.f32 0.0, %v1528
      %1530 = vmatmul.bf16.gmra.mxu0 %v1444
      %v1531 = vpop.f32.mrf.mxu0
      %v1532 = vadd.f32 0.0, %v1531
      %v1533 = vpop.f32.mrf.mxu0
      %v1534 = vadd.f32 0.0, %v1533
      %1535 = vmatmul.bf16.gmra.mxu0 %v1447
      %v1536 = vpop.f32.mrf.mxu0
      %v1537 = vadd.f32 0.0, %v1536
      %v1538 = vpop.f32.mrf.mxu0
      %v1539 = vadd.f32 0.0, %v1538
      %1540 = vdwg.mxu0
      %v1541 = vadd.f32 %v1302, %v1462
      %v1542 = vadd.f32 %v1303, %v1464
      %v1543 = vadd.f32 %v1304, %v1467
      %v1544 = vadd.f32 %v1305, %v1469
      %v1545 = vadd.f32 %v1306, %v1472
      %v1546 = vadd.f32 %v1307, %v1474
      %v1547 = vadd.f32 %v1308, %v1477
      %v1548 = vadd.f32 %v1309, %v1479
      %v1549 = vadd.f32 %v1310, %v1482
      %v1550 = vadd.f32 %v1311, %v1484
      %v1551 = vadd.f32 %v1312, %v1487
      %v1552 = vadd.f32 %v1313, %v1489
      %v1553 = vadd.f32 %v1314, %v1492
      %v1554 = vadd.f32 %v1315, %v1494
      %v1555 = vadd.f32 %v1316, %v1497
      %v1556 = vadd.f32 %v1317, %v1499
      %v1557 = vadd.f32 %v1318, %v1502
      %v1558 = vadd.f32 %v1319, %v1504
      %v1559 = vadd.f32 %v1320, %v1507
      %v1560 = vadd.f32 %v1321, %v1509
      %v1561 = vadd.f32 %v1322, %v1512
      %v1562 = vadd.f32 %v1323, %v1514
      %v1563 = vadd.f32 %v1324, %v1517
      %v1564 = vadd.f32 %v1325, %v1519
      %v1565 = vadd.f32 %v1326, %v1522
      %v1566 = vadd.f32 %v1327, %v1524
      %v1567 = vadd.f32 %v1328, %v1527
      %v1568 = vadd.f32 %v1329, %v1529
      %v1569 = vadd.f32 %v1330, %v1532
      %v1570 = vadd.f32 %v1331, %v1534
      %v1571 = vadd.f32 %v1332, %v1537
      %v1572 = vadd.f32 %v1333, %v1539
      %v1621 = vrot.slane %v1335, 1
      %v1622 = vrot.slane %v1336, 1
      %v1623 = vsel %vm293, %v1621, %v1622
      %v1624 = vrot.slane %v1337, 1
      %v1625 = vsel %vm293, %v1622, %v1624
      %v1626 = vrot.slane %v1338, 1
      %v1627 = vrot.slane %v1339, 1
      %v1628 = vsel %vm293, %v1626, %v1627
      %v1629 = vrot.slane %v1340, 1
      %v1630 = vsel %vm293, %v1627, %v1629
      %v1631 = vrot.slane %v1341, 1
      %v1632 = vrot.slane %v1342, 1
      %v1633 = vsel %vm293, %v1631, %v1632
      %v1634 = vrot.slane %v1343, 1
      %v1635 = vsel %vm293, %v1632, %v1634
      %v1636 = vrot.slane %v1344, 1
      %v1637 = vrot.slane %v1345, 1
      %v1638 = vsel %vm293, %v1636, %v1637
      %v1639 = vrot.slane %v1346, 1
      %v1640 = vsel %vm293, %v1637, %v1639
      %v1641 = vrot.slane %v1347, 1
      %v1642 = vrot.slane %v1348, 1
      %v1643 = vsel %vm293, %v1641, %v1642
      %v1644 = vrot.slane %v1349, 1
      %v1645 = vsel %vm293, %v1642, %v1644
      %v1646 = vrot.slane %v1350, 1
      %v1647 = vrot.slane %v1351, 1
      %v1648 = vsel %vm293, %v1646, %v1647
      %v1649 = vrot.slane %v1352, 1
      %v1650 = vsel %vm293, %v1647, %v1649
      %v1651 = vrot.slane %v1353, 1
      %v1652 = vrot.slane %v1354, 1
      %v1653 = vsel %vm293, %v1651, %v1652
      %v1654 = vrot.slane %v1355, 1
      %v1655 = vsel %vm293, %v1652, %v1654
      %v1656 = vrot.slane %v1356, 1
      %v1657 = vrot.slane %v1357, 1
      %v1658 = vsel %vm293, %v1656, %v1657
      %v1659 = vrot.slane %v1358, 1
      %v1660 = vsel %vm293, %v1657, %v1659
      %v1661 = vrot.slane %v1359, 1
      %v1662 = vrot.slane %v1360, 1
      %v1663 = vsel %vm293, %v1661, %v1662
      %v1664 = vrot.slane %v1361, 1
      %v1665 = vsel %vm293, %v1662, %v1664
      %v1666 = vrot.slane %v1362, 1
      %v1667 = vrot.slane %v1363, 1
      %v1668 = vsel %vm293, %v1666, %v1667
      %v1669 = vrot.slane %v1364, 1
      %v1670 = vsel %vm293, %v1667, %v1669
      %v1671 = vrot.slane %v1365, 1
      %v1672 = vrot.slane %v1366, 1
      %v1673 = vsel %vm293, %v1671, %v1672
      %v1674 = vrot.slane %v1367, 1
      %v1675 = vsel %vm293, %v1672, %v1674
      %v1676 = vrot.slane %v1368, 1
      %v1677 = vrot.slane %v1369, 1
      %v1678 = vsel %vm293, %v1676, %v1677
      %v1679 = vrot.slane %v1370, 1
      %v1680 = vsel %vm293, %v1677, %v1679
      %v1681 = vrot.slane %v1371, 1
      %v1682 = vrot.slane %v1372, 1
      %v1683 = vsel %vm293, %v1681, %v1682
      %v1684 = vrot.slane %v1373, 1
      %v1685 = vsel %vm293, %v1682, %v1684
      %v1686 = vrot.slane %v1374, 1
      %v1687 = vrot.slane %v1375, 1
      %v1688 = vsel %vm293, %v1686, %v1687
      %v1689 = vrot.slane %v1376, 1
      %v1690 = vsel %vm293, %v1687, %v1689
      %v1691 = vrot.slane %v1377, 1
      %v1692 = vrot.slane %v1378, 1
      %v1693 = vsel %vm293, %v1691, %v1692
      %v1694 = vrot.slane %v1379, 1
      %v1695 = vsel %vm293, %v1692, %v1694
      %v1696 = vrot.slane %v1380, 1
      %v1697 = vrot.slane %v1381, 1
      %v1698 = vsel %vm293, %v1696, %v1697
      %v1699 = vrot.slane %v1382, 1
      %v1700 = vsel %vm293, %v1697, %v1699
      %v1733 = vpack.c.bf16 %v1625, %v1623
      %v1734 = vpack.c.bf16 %v1630, %v1628
      %v1735 = vpack.c.bf16 %v1635, %v1633
      %v1736 = vpack.c.bf16 %v1640, %v1638
      %v1737 = vpack.c.bf16 %v1645, %v1643
      %v1738 = vpack.c.bf16 %v1650, %v1648
      %v1739 = vpack.c.bf16 %v1655, %v1653
      %v1740 = vpack.c.bf16 %v1660, %v1658
      %v1741 = vpack.c.bf16 %v1665, %v1663
      %v1742 = vpack.c.bf16 %v1670, %v1668
      %v1743 = vpack.c.bf16 %v1675, %v1673
      %v1744 = vpack.c.bf16 %v1680, %v1678
      %v1745 = vpack.c.bf16 %v1685, %v1683
      %v1746 = vpack.c.bf16 %v1690, %v1688
      %v1747 = vpack.c.bf16 %v1695, %v1693
      %v1748 = vpack.c.bf16 %v1700, %v1698
      %s1749 = scalar_lea.vmem %s1, 10
      %v1750 = vld [vmem:[%s1749] sm:$0x3]
      %v1752 = vsel %vm424, %v1733, 0
      %v1755 = vsel %vm424, %v1734, 0
      %v1758 = vsel %vm424, %v1735, 0
      %v1761 = vsel %vm424, %v1736, 0
      %v1764 = vsel %vm424, %v1737, 0
      %v1767 = vsel %vm424, %v1738, 0
      %v1770 = vsel %vm424, %v1739, 0
      %v1773 = vsel %vm424, %v1740, 0
      %v1776 = vsel %vm424, %v1741, 0
      %v1779 = vsel %vm424, %v1742, 0
      %v1782 = vsel %vm424, %v1743, 0
      %v1785 = vsel %vm424, %v1744, 0
      %v1788 = vsel %vm424, %v1745, 0
      %v1791 = vsel %vm424, %v1746, 0
      %v1794 = vsel %vm424, %v1747, 0
      %v1797 = vsel %vm424, %v1748, 0
      %v1800 = vand.u32 %v1750, %v476
      %1802 = vmatpush.bf16.msra.mxu0 0
      %1803 = vmatpush.bf16.msra.mxu0 0
      %1804 = vmatpush.bf16.msra.mxu0 0
      %1805 = vmatpush.bf16.msra.mxu0 0
      %1806 = vmatpush.bf16.msra.mxu0 0
      %1807 = vmatpush.bf16.msra.mxu0 0
      %1808 = vmatpush.bf16.msra.mxu0 0
      %1809 = vmatpush.bf16.msra.mxu0 %v1800
      %1810 = vmatmul.bf16.gmra.mxu0 %v1752
      %v1811 = vpop.f32.mrf.mxu0
      %v1812 = vadd.f32 0.0, %v1811
      %v1813 = vpop.f32.mrf.mxu0
      %v1814 = vadd.f32 0.0, %v1813
      %1815 = vmatmul.bf16.gmra.mxu0 %v1755
      %v1816 = vpop.f32.mrf.mxu0
      %v1817 = vadd.f32 0.0, %v1816
      %v1818 = vpop.f32.mrf.mxu0
      %v1819 = vadd.f32 0.0, %v1818
      %1820 = vmatmul.bf16.gmra.mxu0 %v1758
      %v1821 = vpop.f32.mrf.mxu0
      %v1822 = vadd.f32 0.0, %v1821
      %v1823 = vpop.f32.mrf.mxu0
      %v1824 = vadd.f32 0.0, %v1823
      %1825 = vmatmul.bf16.gmra.mxu0 %v1761
      %v1826 = vpop.f32.mrf.mxu0
      %v1827 = vadd.f32 0.0, %v1826
      %v1828 = vpop.f32.mrf.mxu0
      %v1829 = vadd.f32 0.0, %v1828
      %1830 = vmatmul.bf16.gmra.mxu0 %v1764
      %v1831 = vpop.f32.mrf.mxu0
      %v1832 = vadd.f32 0.0, %v1831
      %v1833 = vpop.f32.mrf.mxu0
      %v1834 = vadd.f32 0.0, %v1833
      %1835 = vmatmul.bf16.gmra.mxu0 %v1767
      %v1836 = vpop.f32.mrf.mxu0
      %v1837 = vadd.f32 0.0, %v1836
      %v1838 = vpop.f32.mrf.mxu0
      %v1839 = vadd.f32 0.0, %v1838
      %1840 = vmatmul.bf16.gmra.mxu0 %v1770
      %v1841 = vpop.f32.mrf.mxu0
      %v1842 = vadd.f32 0.0, %v1841
      %v1843 = vpop.f32.mrf.mxu0
      %v1844 = vadd.f32 0.0, %v1843
      %1845 = vmatmul.bf16.gmra.mxu0 %v1773
      %v1846 = vpop.f32.mrf.mxu0
      %v1847 = vadd.f32 0.0, %v1846
      %v1848 = vpop.f32.mrf.mxu0
      %v1849 = vadd.f32 0.0, %v1848
      %1850 = vmatmul.bf16.gmra.mxu0 %v1776
      %v1851 = vpop.f32.mrf.mxu0
      %v1852 = vadd.f32 0.0, %v1851
      %v1853 = vpop.f32.mrf.mxu0
      %v1854 = vadd.f32 0.0, %v1853
      %1855 = vmatmul.bf16.gmra.mxu0 %v1779
      %v1856 = vpop.f32.mrf.mxu0
      %v1857 = vadd.f32 0.0, %v1856
      %v1858 = vpop.f32.mrf.mxu0
      %v1859 = vadd.f32 0.0, %v1858
      %1860 = vmatmul.bf16.gmra.mxu0 %v1782
      %v1861 = vpop.f32.mrf.mxu0
      %v1862 = vadd.f32 0.0, %v1861
      %v1863 = vpop.f32.mrf.mxu0
      %v1864 = vadd.f32 0.0, %v1863
      %1865 = vmatmul.bf16.gmra.mxu0 %v1785
      %v1866 = vpop.f32.mrf.mxu0
      %v1867 = vadd.f32 0.0, %v1866
      %v1868 = vpop.f32.mrf.mxu0
      %v1869 = vadd.f32 0.0, %v1868
      %1870 = vmatmul.bf16.gmra.mxu0 %v1788
      %v1871 = vpop.f32.mrf.mxu0
      %v1872 = vadd.f32 0.0, %v1871
      %v1873 = vpop.f32.mrf.mxu0
      %v1874 = vadd.f32 0.0, %v1873
      %1875 = vmatmul.bf16.gmra.mxu0 %v1791
      %v1876 = vpop.f32.mrf.mxu0
      %v1877 = vadd.f32 0.0, %v1876
      %v1878 = vpop.f32.mrf.mxu0
      %v1879 = vadd.f32 0.0, %v1878
      %1880 = vmatmul.bf16.gmra.mxu0 %v1794
      %v1881 = vpop.f32.mrf.mxu0
      %v1882 = vadd.f32 0.0, %v1881
      %v1883 = vpop.f32.mrf.mxu0
      %v1884 = vadd.f32 0.0, %v1883
      %1885 = vmatmul.bf16.gmra.mxu0 %v1797
      %v1886 = vpop.f32.mrf.mxu0
      %v1887 = vadd.f32 0.0, %v1886
      %v1888 = vpop.f32.mrf.mxu0
      %v1889 = vadd.f32 0.0, %v1888
      %1890 = vdwg.mxu0
      %v1891 = vadd.f32 %v1541, %v1812
      %v1892 = vadd.f32 %v1542, %v1814
      %v1893 = vadd.f32 %v1543, %v1817
      %v1894 = vadd.f32 %v1544, %v1819
      %v1895 = vadd.f32 %v1545, %v1822
      %v1896 = vadd.f32 %v1546, %v1824
      %v1897 = vadd.f32 %v1547, %v1827
      %v1898 = vadd.f32 %v1548, %v1829
      %v1899 = vadd.f32 %v1549, %v1832
      %v1900 = vadd.f32 %v1550, %v1834
      %v1901 = vadd.f32 %v1551, %v1837
      %v1902 = vadd.f32 %v1552, %v1839
      %v1903 = vadd.f32 %v1553, %v1842
      %v1904 = vadd.f32 %v1554, %v1844
      %v1905 = vadd.f32 %v1555, %v1847
      %v1906 = vadd.f32 %v1556, %v1849
      %v1907 = vadd.f32 %v1557, %v1852
      %v1908 = vadd.f32 %v1558, %v1854
      %v1909 = vadd.f32 %v1559, %v1857
      %v1910 = vadd.f32 %v1560, %v1859
      %v1911 = vadd.f32 %v1561, %v1862
      %v1912 = vadd.f32 %v1562, %v1864
      %v1913 = vadd.f32 %v1563, %v1867
      %v1914 = vadd.f32 %v1564, %v1869
      %v1915 = vadd.f32 %v1565, %v1872
      %v1916 = vadd.f32 %v1566, %v1874
      %v1917 = vadd.f32 %v1567, %v1877
      %v1918 = vadd.f32 %v1568, %v1879
      %v1919 = vadd.f32 %v1569, %v1882
      %v1920 = vadd.f32 %v1570, %v1884
      %v1921 = vadd.f32 %v1571, %v1887
      %v1922 = vadd.f32 %v1572, %v1889
      %s1923 = scalar_lea.vmem %s169, 1224
      %v1924 = vld [vmem:[%s1923] sm:$0xff]
      %v1925 = vld [vmem:[%s1923 + $0x8] sm:$0xff]
      %v1926 = vld [vmem:[%s1923 + $0x18] sm:$0xff]
      %v1927 = vld [vmem:[%s1923 + $0x20] sm:$0xff]
      %v1928 = vld [vmem:[%s1923 + $0x30] sm:$0xff]
      %v1929 = vld [vmem:[%s1923 + $0x38] sm:$0xff]
      %v1930 = vld [vmem:[%s1923 + $0x48] sm:$0xff]
      %v1931 = vld [vmem:[%s1923 + $0x50] sm:$0xff]
      %v1932 = vld [vmem:[%s1923 + $0x60] sm:$0xff]
      %v1933 = vld [vmem:[%s1923 + $0x68] sm:$0xff]
      %v1934 = vld [vmem:[%s1923 + $0x78] sm:$0xff]
      %v1935 = vld [vmem:[%s1923 + $0x80] sm:$0xff]
      %v1936 = vld [vmem:[%s1923 + $0x90] sm:$0xff]
      %v1937 = vld [vmem:[%s1923 + $0x98] sm:$0xff]
      %v1938 = vld [vmem:[%s1923 + $0xa8] sm:$0xff]
      %v1939 = vld [vmem:[%s1923 + $0xb0] sm:$0xff]
      %v1940 = vld [vmem:[%s1923 + $0xc0] sm:$0xff]
      %v1941 = vld [vmem:[%s1923 + $0xc8] sm:$0xff]
      %v1942 = vld [vmem:[%s1923 + $0xd8] sm:$0xff]
      %v1943 = vld [vmem:[%s1923 + $0xe0] sm:$0xff]
      %v1944 = vld [vmem:[%s1923 + $0xf0] sm:$0xff]
      %v1945 = vld [vmem:[%s1923 + $0xf8] sm:$0xff]
      %v1946 = vld [vmem:[%s1923 + $0x108] sm:$0xff]
      %v1947 = vld [vmem:[%s1923 + $0x110] sm:$0xff]
      %v1948 = vld [vmem:[%s1923 + $0x120] sm:$0xff]
      %v1949 = vld [vmem:[%s1923 + $0x128] sm:$0xff]
      %v1950 = vld [vmem:[%s1923 + $0x138] sm:$0xff]
      %v1951 = vld [vmem:[%s1923 + $0x140] sm:$0xff]
      %v1952 = vld [vmem:[%s1923 + $0x150] sm:$0xff]
      %v1953 = vld [vmem:[%s1923 + $0x158] sm:$0xff]
      %v1954 = vld [vmem:[%s1923 + $0x168] sm:$0xff]
      %v1955 = vld [vmem:[%s1923 + $0x170] sm:$0xff]
      %v1956 = vpack.c.bf16 %v1925, %v1924
      %v1957 = vpack.c.bf16 %v1927, %v1926
      %v1958 = vpack.c.bf16 %v1929, %v1928
      %v1959 = vpack.c.bf16 %v1931, %v1930
      %v1960 = vpack.c.bf16 %v1933, %v1932
      %v1961 = vpack.c.bf16 %v1935, %v1934
      %v1962 = vpack.c.bf16 %v1937, %v1936
      %v1963 = vpack.c.bf16 %v1939, %v1938
      %v1964 = vpack.c.bf16 %v1941, %v1940
      %v1965 = vpack.c.bf16 %v1943, %v1942
      %v1966 = vpack.c.bf16 %v1945, %v1944
      %v1967 = vpack.c.bf16 %v1947, %v1946
      %v1968 = vpack.c.bf16 %v1949, %v1948
      %v1969 = vpack.c.bf16 %v1951, %v1950
      %v1970 = vpack.c.bf16 %v1953, %v1952
      %v1971 = vpack.c.bf16 %v1955, %v1954
      %s1972 = scalar_lea.vmem %s1, 8
      %v1973 = vld [vmem:[%s1972] sm:$0x3]
      %v1975 = vsel %vm424, %v1956, 0
      %v1978 = vsel %vm424, %v1957, 0
      %v1981 = vsel %vm424, %v1958, 0
      %v1984 = vsel %vm424, %v1959, 0
      %v1987 = vsel %vm424, %v1960, 0
      %v1990 = vsel %vm424, %v1961, 0
      %v1993 = vsel %vm424, %v1962, 0
      %v1996 = vsel %vm424, %v1963, 0
      %v1999 = vsel %vm424, %v1964, 0
      %v2002 = vsel %vm424, %v1965, 0
      %v2005 = vsel %vm424, %v1966, 0
      %v2008 = vsel %vm424, %v1967, 0
      %v2011 = vsel %vm424, %v1968, 0
      %v2014 = vsel %vm424, %v1969, 0
      %v2017 = vsel %vm424, %v1970, 0
      %v2020 = vsel %vm424, %v1971, 0
      %v2023 = vand.u32 %v1973, %v476
      %2025 = vmatpush.bf16.msra.mxu0 0
      %2026 = vmatpush.bf16.msra.mxu0 0
      %2027 = vmatpush.bf16.msra.mxu0 0
      %2028 = vmatpush.bf16.msra.mxu0 0
      %2029 = vmatpush.bf16.msra.mxu0 0
      %2030 = vmatpush.bf16.msra.mxu0 0
      %2031 = vmatpush.bf16.msra.mxu0 0
      %2032 = vmatpush.bf16.msra.mxu0 %v2023
      %2033 = vmatmul.bf16.gmra.mxu0 %v1975
      %v2034 = vpop.f32.mrf.mxu0
      %v2035 = vadd.f32 0.0, %v2034
      %v2036 = vpop.f32.mrf.mxu0
      %v2037 = vadd.f32 0.0, %v2036
      %2038 = vmatmul.bf16.gmra.mxu0 %v1978
      %v2039 = vpop.f32.mrf.mxu0
      %v2040 = vadd.f32 0.0, %v2039
      %v2041 = vpop.f32.mrf.mxu0
      %v2042 = vadd.f32 0.0, %v2041
      %2043 = vmatmul.bf16.gmra.mxu0 %v1981
      %v2044 = vpop.f32.mrf.mxu0
      %v2045 = vadd.f32 0.0, %v2044
      %v2046 = vpop.f32.mrf.mxu0
      %v2047 = vadd.f32 0.0, %v2046
      %2048 = vmatmul.bf16.gmra.mxu0 %v1984
      %v2049 = vpop.f32.mrf.mxu0
      %v2050 = vadd.f32 0.0, %v2049
      %v2051 = vpop.f32.mrf.mxu0
      %v2052 = vadd.f32 0.0, %v2051
      %2053 = vmatmul.bf16.gmra.mxu0 %v1987
      %v2054 = vpop.f32.mrf.mxu0
      %v2055 = vadd.f32 0.0, %v2054
      %v2056 = vpop.f32.mrf.mxu0
      %v2057 = vadd.f32 0.0, %v2056
      %2058 = vmatmul.bf16.gmra.mxu0 %v1990
      %v2059 = vpop.f32.mrf.mxu0
      %v2060 = vadd.f32 0.0, %v2059
      %v2061 = vpop.f32.mrf.mxu0
      %v2062 = vadd.f32 0.0, %v2061
      %2063 = vmatmul.bf16.gmra.mxu0 %v1993
      %v2064 = vpop.f32.mrf.mxu0
      %v2065 = vadd.f32 0.0, %v2064
      %v2066 = vpop.f32.mrf.mxu0
      %v2067 = vadd.f32 0.0, %v2066
      %2068 = vmatmul.bf16.gmra.mxu0 %v1996
      %v2069 = vpop.f32.mrf.mxu0
      %v2070 = vadd.f32 0.0, %v2069
      %v2071 = vpop.f32.mrf.mxu0
      %v2072 = vadd.f32 0.0, %v2071
      %2073 = vmatmul.bf16.gmra.mxu0 %v1999
      %v2074 = vpop.f32.mrf.mxu0
      %v2075 = vadd.f32 0.0, %v2074
      %v2076 = vpop.f32.mrf.mxu0
      %v2077 = vadd.f32 0.0, %v2076
      %2078 = vmatmul.bf16.gmra.mxu0 %v2002
      %v2079 = vpop.f32.mrf.mxu0
      %v2080 = vadd.f32 0.0, %v2079
      %v2081 = vpop.f32.mrf.mxu0
      %v2082 = vadd.f32 0.0, %v2081
      %2083 = vmatmul.bf16.gmra.mxu0 %v2005
      %v2084 = vpop.f32.mrf.mxu0
      %v2085 = vadd.f32 0.0, %v2084
      %v2086 = vpop.f32.mrf.mxu0
      %v2087 = vadd.f32 0.0, %v2086
      %2088 = vmatmul.bf16.gmra.mxu0 %v2008
      %v2089 = vpop.f32.mrf.mxu0
      %v2090 = vadd.f32 0.0, %v2089
      %v2091 = vpop.f32.mrf.mxu0
      %v2092 = vadd.f32 0.0, %v2091
      %2093 = vmatmul.bf16.gmra.mxu0 %v2011
      %v2094 = vpop.f32.mrf.mxu0
      %v2095 = vadd.f32 0.0, %v2094
      %v2096 = vpop.f32.mrf.mxu0
      %v2097 = vadd.f32 0.0, %v2096
      %2098 = vmatmul.bf16.gmra.mxu0 %v2014
      %v2099 = vpop.f32.mrf.mxu0
      %v2100 = vadd.f32 0.0, %v2099
      %v2101 = vpop.f32.mrf.mxu0
      %v2102 = vadd.f32 0.0, %v2101
      %2103 = vmatmul.bf16.gmra.mxu0 %v2017
      %v2104 = vpop.f32.mrf.mxu0
      %v2105 = vadd.f32 0.0, %v2104
      %v2106 = vpop.f32.mrf.mxu0
      %v2107 = vadd.f32 0.0, %v2106
      %2108 = vmatmul.bf16.gmra.mxu0 %v2020
      %v2109 = vpop.f32.mrf.mxu0
      %v2110 = vadd.f32 0.0, %v2109
      %v2111 = vpop.f32.mrf.mxu0
      %v2112 = vadd.f32 0.0, %v2111
      %2113 = vdwg.mxu0
      %v2114 = vadd.f32 %v1891, %v2035
      %v2115 = vadd.f32 %v1892, %v2037
      %v2116 = vadd.f32 %v1893, %v2040
      %v2117 = vadd.f32 %v1894, %v2042
      %v2118 = vadd.f32 %v1895, %v2045
      %v2119 = vadd.f32 %v1896, %v2047
      %v2120 = vadd.f32 %v1897, %v2050
      %v2121 = vadd.f32 %v1898, %v2052
      %v2122 = vadd.f32 %v1899, %v2055
      %v2123 = vadd.f32 %v1900, %v2057
      %v2124 = vadd.f32 %v1901, %v2060
      %v2125 = vadd.f32 %v1902, %v2062
      %v2126 = vadd.f32 %v1903, %v2065
      %v2127 = vadd.f32 %v1904, %v2067
      %v2128 = vadd.f32 %v1905, %v2070
      %v2129 = vadd.f32 %v1906, %v2072
      %v2130 = vadd.f32 %v1907, %v2075
      %v2131 = vadd.f32 %v1908, %v2077
      %v2132 = vadd.f32 %v1909, %v2080
      %v2133 = vadd.f32 %v1910, %v2082
      %v2134 = vadd.f32 %v1911, %v2085
      %v2135 = vadd.f32 %v1912, %v2087
      %v2136 = vadd.f32 %v1913, %v2090
      %v2137 = vadd.f32 %v1914, %v2092
      %v2138 = vadd.f32 %v1915, %v2095
      %v2139 = vadd.f32 %v1916, %v2097
      %v2140 = vadd.f32 %v1917, %v2100
      %v2141 = vadd.f32 %v1918, %v2102
      %v2142 = vadd.f32 %v1919, %v2105
      %v2143 = vadd.f32 %v1920, %v2107
      %v2144 = vadd.f32 %v1921, %v2110
      %v2145 = vadd.f32 %v1922, %v2112
      %v2146 = vld [vmem:[%s2] sm:$0x1f]
      %v2147 = vperm.slane %v2146, 0
      %v2148 = vadd.f32 %v2114, %v2147
      %v2149 = vadd.f32 %v2115, %v2147
      %v2150 = vadd.f32 %v2116, %v2147
      %v2151 = vadd.f32 %v2117, %v2147
      %v2152 = vadd.f32 %v2118, %v2147
      %v2153 = vadd.f32 %v2119, %v2147
      %v2154 = vadd.f32 %v2120, %v2147
      %v2155 = vadd.f32 %v2121, %v2147
      %v2156 = vadd.f32 %v2122, %v2147
      %v2157 = vadd.f32 %v2123, %v2147
      %v2158 = vadd.f32 %v2124, %v2147
      %v2159 = vadd.f32 %v2125, %v2147
      %v2160 = vadd.f32 %v2126, %v2147
      %v2161 = vadd.f32 %v2127, %v2147
      %v2162 = vadd.f32 %v2128, %v2147
      %v2163 = vadd.f32 %v2129, %v2147
      %v2164 = vadd.f32 %v2130, %v2147
      %v2165 = vadd.f32 %v2131, %v2147
      %v2166 = vadd.f32 %v2132, %v2147
      %v2167 = vadd.f32 %v2133, %v2147
      %v2168 = vadd.f32 %v2134, %v2147
      %v2169 = vadd.f32 %v2135, %v2147
      %v2170 = vadd.f32 %v2136, %v2147
      %v2171 = vadd.f32 %v2137, %v2147
      %v2172 = vadd.f32 %v2138, %v2147
      %v2173 = vadd.f32 %v2139, %v2147
      %v2174 = vadd.f32 %v2140, %v2147
      %v2175 = vadd.f32 %v2141, %v2147
      %v2176 = vadd.f32 %v2142, %v2147
      %v2177 = vadd.f32 %v2143, %v2147
      %v2178 = vadd.f32 %v2144, %v2147
      %v2179 = vadd.f32 %v2145, %v2147
      %vm2180 = vcmask 31744
      %v2181 = vsel %vm2180, %v2148, 0.0
      %2182 = vadd.xlane.f32.xlu0 %v2181
      %v2183 = vpop.xlane.xlu0 %2182
      %v2184 = vsel %vm2180, %v2149, 0.0
      %2185 = vadd.xlane.f32.xlu0 %v2184
      %v2186 = vpop.xlane.xlu0 %2185
      %v2187 = vsel %vm2180, %v2150, 0.0
      %2188 = vadd.xlane.f32.xlu0 %v2187
      %v2189 = vpop.xlane.xlu0 %2188
      %v2190 = vsel %vm2180, %v2151, 0.0
      %2191 = vadd.xlane.f32.xlu0 %v2190
      %v2192 = vpop.xlane.xlu0 %2191
      %v2193 = vsel %vm2180, %v2152, 0.0
      %2194 = vadd.xlane.f32.xlu0 %v2193
      %v2195 = vpop.xlane.xlu0 %2194
      %v2196 = vsel %vm2180, %v2153, 0.0
      %2197 = vadd.xlane.f32.xlu0 %v2196
      %v2198 = vpop.xlane.xlu0 %2197
      %v2199 = vsel %vm2180, %v2154, 0.0
      %2200 = vadd.xlane.f32.xlu0 %v2199
      %v2201 = vpop.xlane.xlu0 %2200
      %v2202 = vsel %vm2180, %v2155, 0.0
      %2203 = vadd.xlane.f32.xlu0 %v2202
      %v2204 = vpop.xlane.xlu0 %2203
      %v2205 = vsel %vm2180, %v2156, 0.0
      %2206 = vadd.xlane.f32.xlu0 %v2205
      %v2207 = vpop.xlane.xlu0 %2206
      %v2208 = vsel %vm2180, %v2157, 0.0
      %2209 = vadd.xlane.f32.xlu0 %v2208
      %v2210 = vpop.xlane.xlu0 %2209
      %v2211 = vsel %vm2180, %v2158, 0.0
      %2212 = vadd.xlane.f32.xlu0 %v2211
      %v2213 = vpop.xlane.xlu0 %2212
      %v2214 = vsel %vm2180, %v2159, 0.0
      %2215 = vadd.xlane.f32.xlu0 %v2214
      %v2216 = vpop.xlane.xlu0 %2215
      %v2217 = vsel %vm2180, %v2160, 0.0
      %2218 = vadd.xlane.f32.xlu0 %v2217
      %v2219 = vpop.xlane.xlu0 %2218
      %v2220 = vsel %vm2180, %v2161, 0.0
      %2221 = vadd.xlane.f32.xlu0 %v2220
      %v2222 = vpop.xlane.xlu0 %2221
      %v2223 = vsel %vm2180, %v2162, 0.0
      %2224 = vadd.xlane.f32.xlu0 %v2223
      %v2225 = vpop.xlane.xlu0 %2224
      %v2226 = vsel %vm2180, %v2163, 0.0
      %2227 = vadd.xlane.f32.xlu0 %v2226
      %v2228 = vpop.xlane.xlu0 %2227
      %v2229 = vsel %vm2180, %v2164, 0.0
      %2230 = vadd.xlane.f32.xlu0 %v2229
      %v2231 = vpop.xlane.xlu0 %2230
      %v2232 = vsel %vm2180, %v2165, 0.0
      %2233 = vadd.xlane.f32.xlu0 %v2232
      %v2234 = vpop.xlane.xlu0 %2233
      %v2235 = vsel %vm2180, %v2166, 0.0
      %2236 = vadd.xlane.f32.xlu0 %v2235
      %v2237 = vpop.xlane.xlu0 %2236
      %v2238 = vsel %vm2180, %v2167, 0.0
      %2239 = vadd.xlane.f32.xlu0 %v2238
      %v2240 = vpop.xlane.xlu0 %2239
      %v2241 = vsel %vm2180, %v2168, 0.0
      %2242 = vadd.xlane.f32.xlu0 %v2241
      %v2243 = vpop.xlane.xlu0 %2242
      %v2244 = vsel %vm2180, %v2169, 0.0
      %2245 = vadd.xlane.f32.xlu0 %v2244
      %v2246 = vpop.xlane.xlu0 %2245
      %v2247 = vsel %vm2180, %v2170, 0.0
      %2248 = vadd.xlane.f32.xlu0 %v2247
      %v2249 = vpop.xlane.xlu0 %2248
      %v2250 = vsel %vm2180, %v2171, 0.0
      %2251 = vadd.xlane.f32.xlu0 %v2250
      %v2252 = vpop.xlane.xlu0 %2251
      %v2253 = vsel %vm2180, %v2172, 0.0
      %2254 = vadd.xlane.f32.xlu0 %v2253
      %v2255 = vpop.xlane.xlu0 %2254
      %v2256 = vsel %vm2180, %v2173, 0.0
      %2257 = vadd.xlane.f32.xlu0 %v2256
      %v2258 = vpop.xlane.xlu0 %2257
      %v2259 = vsel %vm2180, %v2174, 0.0
      %2260 = vadd.xlane.f32.xlu0 %v2259
      %v2261 = vpop.xlane.xlu0 %2260
      %v2262 = vsel %vm2180, %v2175, 0.0
      %2263 = vadd.xlane.f32.xlu0 %v2262
      %v2264 = vpop.xlane.xlu0 %2263
      %v2265 = vsel %vm2180, %v2176, 0.0
      %2266 = vadd.xlane.f32.xlu0 %v2265
      %v2267 = vpop.xlane.xlu0 %2266
      %v2268 = vsel %vm2180, %v2177, 0.0
      %2269 = vadd.xlane.f32.xlu0 %v2268
      %v2270 = vpop.xlane.xlu0 %2269
      %v2271 = vsel %vm2180, %v2178, 0.0
      %2272 = vadd.xlane.f32.xlu0 %v2271
      %v2273 = vpop.xlane.xlu0 %2272
      %v2274 = vsel %vm2180, %v2179, 0.0
      %2275 = vadd.xlane.f32.xlu0 %v2274
      %v2276 = vpop.xlane.xlu0 %2275
      %v2277 = vmul.f32 %v2148, %v2148
      %v2278 = vmul.f32 %v2149, %v2149
      %v2279 = vmul.f32 %v2150, %v2150
      %v2280 = vmul.f32 %v2151, %v2151
      %v2281 = vmul.f32 %v2152, %v2152
      %v2282 = vmul.f32 %v2153, %v2153
      %v2283 = vmul.f32 %v2154, %v2154
      %v2284 = vmul.f32 %v2155, %v2155
      %v2285 = vmul.f32 %v2156, %v2156
      %v2286 = vmul.f32 %v2157, %v2157
      %v2287 = vmul.f32 %v2158, %v2158
      %v2288 = vmul.f32 %v2159, %v2159
      %v2289 = vmul.f32 %v2160, %v2160
      %v2290 = vmul.f32 %v2161, %v2161
      %v2291 = vmul.f32 %v2162, %v2162
      %v2292 = vmul.f32 %v2163, %v2163
      %v2293 = vmul.f32 %v2164, %v2164
      %v2294 = vmul.f32 %v2165, %v2165
      %v2295 = vmul.f32 %v2166, %v2166
      %v2296 = vmul.f32 %v2167, %v2167
      %v2297 = vmul.f32 %v2168, %v2168
      %v2298 = vmul.f32 %v2169, %v2169
      %v2299 = vmul.f32 %v2170, %v2170
      %v2300 = vmul.f32 %v2171, %v2171
      %v2301 = vmul.f32 %v2172, %v2172
      %v2302 = vmul.f32 %v2173, %v2173
      %v2303 = vmul.f32 %v2174, %v2174
      %v2304 = vmul.f32 %v2175, %v2175
      %v2305 = vmul.f32 %v2176, %v2176
      %v2306 = vmul.f32 %v2177, %v2177
      %v2307 = vmul.f32 %v2178, %v2178
      %v2308 = vmul.f32 %v2179, %v2179
      %v2309 = vsel %vm2180, %v2277, 0.0
      %2310 = vadd.xlane.f32.xlu0 %v2309
      %v2311 = vpop.xlane.xlu0 %2310
      %v2312 = vsel %vm2180, %v2278, 0.0
      %2313 = vadd.xlane.f32.xlu0 %v2312
      %v2314 = vpop.xlane.xlu0 %2313
      %v2315 = vsel %vm2180, %v2279, 0.0
      %2316 = vadd.xlane.f32.xlu0 %v2315
      %v2317 = vpop.xlane.xlu0 %2316
      %v2318 = vsel %vm2180, %v2280, 0.0
      %2319 = vadd.xlane.f32.xlu0 %v2318
      %v2320 = vpop.xlane.xlu0 %2319
      %v2321 = vsel %vm2180, %v2281, 0.0
      %2322 = vadd.xlane.f32.xlu0 %v2321
      %v2323 = vpop.xlane.xlu0 %2322
      %v2324 = vsel %vm2180, %v2282, 0.0
      %2325 = vadd.xlane.f32.xlu0 %v2324
      %v2326 = vpop.xlane.xlu0 %2325
      %v2327 = vsel %vm2180, %v2283, 0.0
      %2328 = vadd.xlane.f32.xlu0 %v2327
      %v2329 = vpop.xlane.xlu0 %2328
      %v2330 = vsel %vm2180, %v2284, 0.0
      %2331 = vadd.xlane.f32.xlu0 %v2330
      %v2332 = vpop.xlane.xlu0 %2331
      %v2333 = vsel %vm2180, %v2285, 0.0
      %2334 = vadd.xlane.f32.xlu0 %v2333
      %v2335 = vpop.xlane.xlu0 %2334
      %v2336 = vsel %vm2180, %v2286, 0.0
      %2337 = vadd.xlane.f32.xlu0 %v2336
      %v2338 = vpop.xlane.xlu0 %2337
      %v2339 = vsel %vm2180, %v2287, 0.0
      %2340 = vadd.xlane.f32.xlu0 %v2339
      %v2341 = vpop.xlane.xlu0 %2340
      %v2342 = vsel %vm2180, %v2288, 0.0
      %2343 = vadd.xlane.f32.xlu0 %v2342
      %v2344 = vpop.xlane.xlu0 %2343
      %v2345 = vsel %vm2180, %v2289, 0.0
      %2346 = vadd.xlane.f32.xlu0 %v2345
      %v2347 = vpop.xlane.xlu0 %2346
      %v2348 = vsel %vm2180, %v2290, 0.0
      %2349 = vadd.xlane.f32.xlu0 %v2348
      %v2350 = vpop.xlane.xlu0 %2349
      %v2351 = vsel %vm2180, %v2291, 0.0
      %2352 = vadd.xlane.f32.xlu0 %v2351
      %v2353 = vpop.xlane.xlu0 %2352
      %v2354 = vsel %vm2180, %v2292, 0.0
      %2355 = vadd.xlane.f32.xlu0 %v2354
      %v2356 = vpop.xlane.xlu0 %2355
      %v2357 = vsel %vm2180, %v2293, 0.0
      %2358 = vadd.xlane.f32.xlu0 %v2357
      %v2359 = vpop.xlane.xlu0 %2358
      %v2360 = vsel %vm2180, %v2294, 0.0
      %2361 = vadd.xlane.f32.xlu0 %v2360
      %v2362 = vpop.xlane.xlu0 %2361
      %v2363 = vsel %vm2180, %v2295, 0.0
      %2364 = vadd.xlane.f32.xlu0 %v2363
      %v2365 = vpop.xlane.xlu0 %2364
      %v2366 = vsel %vm2180, %v2296, 0.0
      %2367 = vadd.xlane.f32.xlu0 %v2366
      %v2368 = vpop.xlane.xlu0 %2367
      %v2369 = vsel %vm2180, %v2297, 0.0
      %2370 = vadd.xlane.f32.xlu0 %v2369
      %v2371 = vpop.xlane.xlu0 %2370
      %v2372 = vsel %vm2180, %v2298, 0.0
      %2373 = vadd.xlane.f32.xlu0 %v2372
      %v2374 = vpop.xlane.xlu0 %2373
      %v2375 = vsel %vm2180, %v2299, 0.0
      %2376 = vadd.xlane.f32.xlu0 %v2375
      %v2377 = vpop.xlane.xlu0 %2376
      %v2378 = vsel %vm2180, %v2300, 0.0
      %2379 = vadd.xlane.f32.xlu0 %v2378
      %v2380 = vpop.xlane.xlu0 %2379
      %v2381 = vsel %vm2180, %v2301, 0.0
      %2382 = vadd.xlane.f32.xlu0 %v2381
      %v2383 = vpop.xlane.xlu0 %2382
      %v2384 = vsel %vm2180, %v2302, 0.0
      %2385 = vadd.xlane.f32.xlu0 %v2384
      %v2386 = vpop.xlane.xlu0 %2385
      %v2387 = vsel %vm2180, %v2303, 0.0
      %2388 = vadd.xlane.f32.xlu0 %v2387
      %v2389 = vpop.xlane.xlu0 %2388
      %v2390 = vsel %vm2180, %v2304, 0.0
      %2391 = vadd.xlane.f32.xlu0 %v2390
      %v2392 = vpop.xlane.xlu0 %2391
      %v2393 = vsel %vm2180, %v2305, 0.0
      %2394 = vadd.xlane.f32.xlu0 %v2393
      %v2395 = vpop.xlane.xlu0 %2394
      %v2396 = vsel %vm2180, %v2306, 0.0
      %2397 = vadd.xlane.f32.xlu0 %v2396
      %v2398 = vpop.xlane.xlu0 %2397
      %v2399 = vsel %vm2180, %v2307, 0.0
      %2400 = vadd.xlane.f32.xlu0 %v2399
      %v2401 = vpop.xlane.xlu0 %2400
      %v2402 = vsel %vm2180, %v2308, 0.0
      %2403 = vadd.xlane.f32.xlu0 %v2402
      %v2404 = vpop.xlane.xlu0 %2403
      %v2405 = vmul.f32 %v2183, 0.25
      %v2406 = vmul.f32 %v2186, 0.25
      %v2407 = vmul.f32 %v2189, 0.25
      %v2408 = vmul.f32 %v2192, 0.25
      %v2409 = vmul.f32 %v2195, 0.25
      %v2410 = vmul.f32 %v2198, 0.25
      %v2411 = vmul.f32 %v2201, 0.25
      %v2412 = vmul.f32 %v2204, 0.25
      %v2413 = vmul.f32 %v2207, 0.25
      %v2414 = vmul.f32 %v2210, 0.25
      %v2415 = vmul.f32 %v2213, 0.25
      %v2416 = vmul.f32 %v2216, 0.25
      %v2417 = vmul.f32 %v2219, 0.25
      %v2418 = vmul.f32 %v2222, 0.25
      %v2419 = vmul.f32 %v2225, 0.25
      %v2420 = vmul.f32 %v2228, 0.25
      %v2421 = vmul.f32 %v2231, 0.25
      %v2422 = vmul.f32 %v2234, 0.25
      %v2423 = vmul.f32 %v2237, 0.25
      %v2424 = vmul.f32 %v2240, 0.25
      %v2425 = vmul.f32 %v2243, 0.25
      %v2426 = vmul.f32 %v2246, 0.25
      %v2427 = vmul.f32 %v2249, 0.25
      %v2428 = vmul.f32 %v2252, 0.25
      %v2429 = vmul.f32 %v2255, 0.25
      %v2430 = vmul.f32 %v2258, 0.25
      %v2431 = vmul.f32 %v2261, 0.25
      %v2432 = vmul.f32 %v2264, 0.25
      %v2433 = vmul.f32 %v2267, 0.25
      %v2434 = vmul.f32 %v2270, 0.25
      %v2435 = vmul.f32 %v2273, 0.25
      %v2436 = vmul.f32 %v2276, 0.25
      %v2437 = vmul.f32 %v2311, 0.25
      %v2438 = vmul.f32 %v2314, 0.25
      %v2439 = vmul.f32 %v2317, 0.25
      %v2440 = vmul.f32 %v2320, 0.25
      %v2441 = vmul.f32 %v2323, 0.25
      %v2442 = vmul.f32 %v2326, 0.25
      %v2443 = vmul.f32 %v2329, 0.25
      %v2444 = vmul.f32 %v2332, 0.25
      %v2445 = vmul.f32 %v2335, 0.25
      %v2446 = vmul.f32 %v2338, 0.25
      %v2447 = vmul.f32 %v2341, 0.25
      %v2448 = vmul.f32 %v2344, 0.25
      %v2449 = vmul.f32 %v2347, 0.25
      %v2450 = vmul.f32 %v2350, 0.25
      %v2451 = vmul.f32 %v2353, 0.25
      %v2452 = vmul.f32 %v2356, 0.25
      %v2453 = vmul.f32 %v2359, 0.25
      %v2454 = vmul.f32 %v2362, 0.25
      %v2455 = vmul.f32 %v2365, 0.25
      %v2456 = vmul.f32 %v2368, 0.25
      %v2457 = vmul.f32 %v2371, 0.25
      %v2458 = vmul.f32 %v2374, 0.25
      %v2459 = vmul.f32 %v2377, 0.25
      %v2460 = vmul.f32 %v2380, 0.25
      %v2461 = vmul.f32 %v2383, 0.25
      %v2462 = vmul.f32 %v2386, 0.25
      %v2463 = vmul.f32 %v2389, 0.25
      %v2464 = vmul.f32 %v2392, 0.25
      %v2465 = vmul.f32 %v2395, 0.25
      %v2466 = vmul.f32 %v2398, 0.25
      %v2467 = vmul.f32 %v2401, 0.25
      %v2468 = vmul.f32 %v2404, 0.25
      %v2469 = vmul.f32 %v2405, %v2405
      %v2470 = vmul.f32 %v2406, %v2406
      %v2471 = vmul.f32 %v2407, %v2407
      %v2472 = vmul.f32 %v2408, %v2408
      %v2473 = vmul.f32 %v2409, %v2409
      %v2474 = vmul.f32 %v2410, %v2410
      %v2475 = vmul.f32 %v2411, %v2411
      %v2476 = vmul.f32 %v2412, %v2412
      %v2477 = vmul.f32 %v2413, %v2413
      %v2478 = vmul.f32 %v2414, %v2414
      %v2479 = vmul.f32 %v2415, %v2415
      %v2480 = vmul.f32 %v2416, %v2416
      %v2481 = vmul.f32 %v2417, %v2417
      %v2482 = vmul.f32 %v2418, %v2418
      %v2483 = vmul.f32 %v2419, %v2419
      %v2484 = vmul.f32 %v2420, %v2420
      %v2485 = vmul.f32 %v2421, %v2421
      %v2486 = vmul.f32 %v2422, %v2422
      %v2487 = vmul.f32 %v2423, %v2423
      %v2488 = vmul.f32 %v2424, %v2424
      %v2489 = vmul.f32 %v2425, %v2425
      %v2490 = vmul.f32 %v2426, %v2426
      %v2491 = vmul.f32 %v2427, %v2427
      %v2492 = vmul.f32 %v2428, %v2428
      %v2493 = vmul.f32 %v2429, %v2429
      %v2494 = vmul.f32 %v2430, %v2430
      %v2495 = vmul.f32 %v2431, %v2431
      %v2496 = vmul.f32 %v2432, %v2432
      %v2497 = vmul.f32 %v2433, %v2433
      %v2498 = vmul.f32 %v2434, %v2434
      %v2499 = vmul.f32 %v2435, %v2435
      %v2500 = vmul.f32 %v2436, %v2436
      %v2501 = vsub.f32 %v2437, %v2469
      %v2502 = vsub.f32 %v2438, %v2470
      %v2503 = vsub.f32 %v2439, %v2471
      %v2504 = vsub.f32 %v2440, %v2472
      %v2505 = vsub.f32 %v2441, %v2473
      %v2506 = vsub.f32 %v2442, %v2474
      %v2507 = vsub.f32 %v2443, %v2475
      %v2508 = vsub.f32 %v2444, %v2476
      %v2509 = vsub.f32 %v2445, %v2477
      %v2510 = vsub.f32 %v2446, %v2478
      %v2511 = vsub.f32 %v2447, %v2479
      %v2512 = vsub.f32 %v2448, %v2480
      %v2513 = vsub.f32 %v2449, %v2481
      %v2514 = vsub.f32 %v2450, %v2482
      %v2515 = vsub.f32 %v2451, %v2483
      %v2516 = vsub.f32 %v2452, %v2484
      %v2517 = vsub.f32 %v2453, %v2485
      %v2518 = vsub.f32 %v2454, %v2486
      %v2519 = vsub.f32 %v2455, %v2487
      %v2520 = vsub.f32 %v2456, %v2488
      %v2521 = vsub.f32 %v2457, %v2489
      %v2522 = vsub.f32 %v2458, %v2490
      %v2523 = vsub.f32 %v2459, %v2491
      %v2524 = vsub.f32 %v2460, %v2492
      %v2525 = vsub.f32 %v2461, %v2493
      %v2526 = vsub.f32 %v2462, %v2494
      %v2527 = vsub.f32 %v2463, %v2495
      %v2528 = vsub.f32 %v2464, %v2496
      %v2529 = vsub.f32 %v2465, %v2497
      %v2530 = vsub.f32 %v2466, %v2498
      %v2531 = vsub.f32 %v2467, %v2499
      %v2532 = vsub.f32 %v2468, %v2500
      %v2533 = vmax.f32 %v2501, 0.0
      %v2534 = vmax.f32 %v2502, 0.0
      %v2535 = vmax.f32 %v2503, 0.0
      %v2536 = vmax.f32 %v2504, 0.0
      %v2537 = vmax.f32 %v2505, 0.0
      %v2538 = vmax.f32 %v2506, 0.0
      %v2539 = vmax.f32 %v2507, 0.0
      %v2540 = vmax.f32 %v2508, 0.0
      %v2541 = vmax.f32 %v2509, 0.0
      %v2542 = vmax.f32 %v2510, 0.0
      %v2543 = vmax.f32 %v2511, 0.0
      %v2544 = vmax.f32 %v2512, 0.0
      %v2545 = vmax.f32 %v2513, 0.0
      %v2546 = vmax.f32 %v2514, 0.0
      %v2547 = vmax.f32 %v2515, 0.0
      %v2548 = vmax.f32 %v2516, 0.0
      %v2549 = vmax.f32 %v2517, 0.0
      %v2550 = vmax.f32 %v2518, 0.0
      %v2551 = vmax.f32 %v2519, 0.0
      %v2552 = vmax.f32 %v2520, 0.0
      %v2553 = vmax.f32 %v2521, 0.0
      %v2554 = vmax.f32 %v2522, 0.0
      %v2555 = vmax.f32 %v2523, 0.0
      %v2556 = vmax.f32 %v2524, 0.0
      %v2557 = vmax.f32 %v2525, 0.0
      %v2558 = vmax.f32 %v2526, 0.0
      %v2559 = vmax.f32 %v2527, 0.0
      %v2560 = vmax.f32 %v2528, 0.0
      %v2561 = vmax.f32 %v2529, 0.0
      %v2562 = vmax.f32 %v2530, 0.0
      %v2563 = vmax.f32 %v2531, 0.0
      %v2564 = vmax.f32 %v2532, 0.0
      %v2565 = vsub.f32 %v2148, %v2405
      %v2566 = vsub.f32 %v2149, %v2406
      %v2567 = vsub.f32 %v2150, %v2407
      %v2568 = vsub.f32 %v2151, %v2408
      %v2569 = vsub.f32 %v2152, %v2409
      %v2570 = vsub.f32 %v2153, %v2410
      %v2571 = vsub.f32 %v2154, %v2411
      %v2572 = vsub.f32 %v2155, %v2412
      %v2573 = vsub.f32 %v2156, %v2413
      %v2574 = vsub.f32 %v2157, %v2414
      %v2575 = vsub.f32 %v2158, %v2415
      %v2576 = vsub.f32 %v2159, %v2416
      %v2577 = vsub.f32 %v2160, %v2417
      %v2578 = vsub.f32 %v2161, %v2418
      %v2579 = vsub.f32 %v2162, %v2419
      %v2580 = vsub.f32 %v2163, %v2420
      %v2581 = vsub.f32 %v2164, %v2421
      %v2582 = vsub.f32 %v2165, %v2422
      %v2583 = vsub.f32 %v2166, %v2423
      %v2584 = vsub.f32 %v2167, %v2424
      %v2585 = vsub.f32 %v2168, %v2425
      %v2586 = vsub.f32 %v2169, %v2426
      %v2587 = vsub.f32 %v2170, %v2427
      %v2588 = vsub.f32 %v2171, %v2428
      %v2589 = vsub.f32 %v2172, %v2429
      %v2590 = vsub.f32 %v2173, %v2430
      %v2591 = vsub.f32 %v2174, %v2431
      %v2592 = vsub.f32 %v2175, %v2432
      %v2593 = vsub.f32 %v2176, %v2433
      %v2594 = vsub.f32 %v2177, %v2434
      %v2595 = vsub.f32 %v2178, %v2435
      %v2596 = vsub.f32 %v2179, %v2436
      %v2597 = vadd.f32 %v2533, 1e-06
      %v2598 = vadd.f32 %v2534, 1e-06
      %v2599 = vadd.f32 %v2535, 1e-06
      %v2600 = vadd.f32 %v2536, 1e-06
      %v2601 = vadd.f32 %v2537, 1e-06
      %v2602 = vadd.f32 %v2538, 1e-06
      %v2603 = vadd.f32 %v2539, 1e-06
      %v2604 = vadd.f32 %v2540, 1e-06
      %v2605 = vadd.f32 %v2541, 1e-06
      %v2606 = vadd.f32 %v2542, 1e-06
      %v2607 = vadd.f32 %v2543, 1e-06
      %v2608 = vadd.f32 %v2544, 1e-06
      %v2609 = vadd.f32 %v2545, 1e-06
      %v2610 = vadd.f32 %v2546, 1e-06
      %v2611 = vadd.f32 %v2547, 1e-06
      %v2612 = vadd.f32 %v2548, 1e-06
      %v2613 = vadd.f32 %v2549, 1e-06
      %v2614 = vadd.f32 %v2550, 1e-06
      %v2615 = vadd.f32 %v2551, 1e-06
      %v2616 = vadd.f32 %v2552, 1e-06
      %v2617 = vadd.f32 %v2553, 1e-06
      %v2618 = vadd.f32 %v2554, 1e-06
      %v2619 = vadd.f32 %v2555, 1e-06
      %v2620 = vadd.f32 %v2556, 1e-06
      %v2621 = vadd.f32 %v2557, 1e-06
      %v2622 = vadd.f32 %v2558, 1e-06
      %v2623 = vadd.f32 %v2559, 1e-06
      %v2624 = vadd.f32 %v2560, 1e-06
      %v2625 = vadd.f32 %v2561, 1e-06
      %v2626 = vadd.f32 %v2562, 1e-06
      %v2627 = vadd.f32 %v2563, 1e-06
      %v2628 = vadd.f32 %v2564, 1e-06
      %v2629 = vrsqrt.pop %v2597
      %v2630 = vmul.f32 %v2629, %v2597
      %v2631 = vmul.f32 %v2630, %v2629
      %v2632 = vmul.f32 0.5, %v2631
      %v2633 = vsub.f32 1.5, %v2632
      %v2634 = vmul.f32 %v2629, %v2633
      %vm2635 = vweird.f32 %v2597
      %vm2636 = vweird.f32 %v2629
      %vm2637 = vmor %vm2635, %vm2636
      %v2638 = vsel %vm2637, %v2629, %v2634
      %v2639 = vrsqrt.pop %v2598
      %v2640 = vmul.f32 %v2639, %v2598
      %v2641 = vmul.f32 %v2640, %v2639
      %v2642 = vmul.f32 0.5, %v2641
      %v2643 = vsub.f32 1.5, %v2642
      %v2644 = vmul.f32 %v2639, %v2643
      %vm2645 = vweird.f32 %v2598
      %vm2646 = vweird.f32 %v2639
      %vm2647 = vmor %vm2645, %vm2646
      %v2648 = vsel %vm2647, %v2639, %v2644
      %v2649 = vrsqrt.pop %v2599
      %v2650 = vmul.f32 %v2649, %v2599
      %v2651 = vmul.f32 %v2650, %v2649
      %v2652 = vmul.f32 0.5, %v2651
      %v2653 = vsub.f32 1.5, %v2652
      %v2654 = vmul.f32 %v2649, %v2653
      %vm2655 = vweird.f32 %v2599
      %vm2656 = vweird.f32 %v2649
      %vm2657 = vmor %vm2655, %vm2656
      %v2658 = vsel %vm2657, %v2649, %v2654
      %v2659 = vrsqrt.pop %v2600
      %v2660 = vmul.f32 %v2659, %v2600
      %v2661 = vmul.f32 %v2660, %v2659
      %v2662 = vmul.f32 0.5, %v2661
      %v2663 = vsub.f32 1.5, %v2662
      %v2664 = vmul.f32 %v2659, %v2663
      %vm2665 = vweird.f32 %v2600
      %vm2666 = vweird.f32 %v2659
      %vm2667 = vmor %vm2665, %vm2666
      %v2668 = vsel %vm2667, %v2659, %v2664
      %v2669 = vrsqrt.pop %v2601
      %v2670 = vmul.f32 %v2669, %v2601
      %v2671 = vmul.f32 %v2670, %v2669
      %v2672 = vmul.f32 0.5, %v2671
      %v2673 = vsub.f32 1.5, %v2672
      %v2674 = vmul.f32 %v2669, %v2673
      %vm2675 = vweird.f32 %v2601
      %vm2676 = vweird.f32 %v2669
      %vm2677 = vmor %vm2675, %vm2676
      %v2678 = vsel %vm2677, %v2669, %v2674
      %v2679 = vrsqrt.pop %v2602
      %v2680 = vmul.f32 %v2679, %v2602
      %v2681 = vmul.f32 %v2680, %v2679
      %v2682 = vmul.f32 0.5, %v2681
      %v2683 = vsub.f32 1.5, %v2682
      %v2684 = vmul.f32 %v2679, %v2683
      %vm2685 = vweird.f32 %v2602
      %vm2686 = vweird.f32 %v2679
      %vm2687 = vmor %vm2685, %vm2686
      %v2688 = vsel %vm2687, %v2679, %v2684
      %v2689 = vrsqrt.pop %v2603
      %v2690 = vmul.f32 %v2689, %v2603
      %v2691 = vmul.f32 %v2690, %v2689
      %v2692 = vmul.f32 0.5, %v2691
      %v2693 = vsub.f32 1.5, %v2692
      %v2694 = vmul.f32 %v2689, %v2693
      %vm2695 = vweird.f32 %v2603
      %vm2696 = vweird.f32 %v2689
      %vm2697 = vmor %vm2695, %vm2696
      %v2698 = vsel %vm2697, %v2689, %v2694
      %v2699 = vrsqrt.pop %v2604
      %v2700 = vmul.f32 %v2699, %v2604
      %v2701 = vmul.f32 %v2700, %v2699
      %v2702 = vmul.f32 0.5, %v2701
      %v2703 = vsub.f32 1.5, %v2702
      %v2704 = vmul.f32 %v2699, %v2703
      %vm2705 = vweird.f32 %v2604
      %vm2706 = vweird.f32 %v2699
      %vm2707 = vmor %vm2705, %vm2706
      %v2708 = vsel %vm2707, %v2699, %v2704
      %v2709 = vrsqrt.pop %v2605
      %v2710 = vmul.f32 %v2709, %v2605
      %v2711 = vmul.f32 %v2710, %v2709
      %v2712 = vmul.f32 0.5, %v2711
      %v2713 = vsub.f32 1.5, %v2712
      %v2714 = vmul.f32 %v2709, %v2713
      %vm2715 = vweird.f32 %v2605
      %vm2716 = vweird.f32 %v2709
      %vm2717 = vmor %vm2715, %vm2716
      %v2718 = vsel %vm2717, %v2709, %v2714
      %v2719 = vrsqrt.pop %v2606
      %v2720 = vmul.f32 %v2719, %v2606
      %v2721 = vmul.f32 %v2720, %v2719
      %v2722 = vmul.f32 0.5, %v2721
      %v2723 = vsub.f32 1.5, %v2722
      %v2724 = vmul.f32 %v2719, %v2723
      %vm2725 = vweird.f32 %v2606
      %vm2726 = vweird.f32 %v2719
      %vm2727 = vmor %vm2725, %vm2726
      %v2728 = vsel %vm2727, %v2719, %v2724
      %v2729 = vrsqrt.pop %v2607
      %v2730 = vmul.f32 %v2729, %v2607
      %v2731 = vmul.f32 %v2730, %v2729
      %v2732 = vmul.f32 0.5, %v2731
      %v2733 = vsub.f32 1.5, %v2732
      %v2734 = vmul.f32 %v2729, %v2733
      %vm2735 = vweird.f32 %v2607
      %vm2736 = vweird.f32 %v2729
      %vm2737 = vmor %vm2735, %vm2736
      %v2738 = vsel %vm2737, %v2729, %v2734
      %v2739 = vrsqrt.pop %v2608
      %v2740 = vmul.f32 %v2739, %v2608
      %v2741 = vmul.f32 %v2740, %v2739
      %v2742 = vmul.f32 0.5, %v2741
      %v2743 = vsub.f32 1.5, %v2742
      %v2744 = vmul.f32 %v2739, %v2743
      %vm2745 = vweird.f32 %v2608
      %vm2746 = vweird.f32 %v2739
      %vm2747 = vmor %vm2745, %vm2746
      %v2748 = vsel %vm2747, %v2739, %v2744
      %v2749 = vrsqrt.pop %v2609
      %v2750 = vmul.f32 %v2749, %v2609
      %v2751 = vmul.f32 %v2750, %v2749
      %v2752 = vmul.f32 0.5, %v2751
      %v2753 = vsub.f32 1.5, %v2752
      %v2754 = vmul.f32 %v2749, %v2753
      %vm2755 = vweird.f32 %v2609
      %vm2756 = vweird.f32 %v2749
      %vm2757 = vmor %vm2755, %vm2756
      %v2758 = vsel %vm2757, %v2749, %v2754
      %v2759 = vrsqrt.pop %v2610
      %v2760 = vmul.f32 %v2759, %v2610
      %v2761 = vmul.f32 %v2760, %v2759
      %v2762 = vmul.f32 0.5, %v2761
      %v2763 = vsub.f32 1.5, %v2762
      %v2764 = vmul.f32 %v2759, %v2763
      %vm2765 = vweird.f32 %v2610
      %vm2766 = vweird.f32 %v2759
      %vm2767 = vmor %vm2765, %vm2766
      %v2768 = vsel %vm2767, %v2759, %v2764
      %v2769 = vrsqrt.pop %v2611
      %v2770 = vmul.f32 %v2769, %v2611
      %v2771 = vmul.f32 %v2770, %v2769
      %v2772 = vmul.f32 0.5, %v2771
      %v2773 = vsub.f32 1.5, %v2772
      %v2774 = vmul.f32 %v2769, %v2773
      %vm2775 = vweird.f32 %v2611
      %vm2776 = vweird.f32 %v2769
      %vm2777 = vmor %vm2775, %vm2776
      %v2778 = vsel %vm2777, %v2769, %v2774
      %v2779 = vrsqrt.pop %v2612
      %v2780 = vmul.f32 %v2779, %v2612
      %v2781 = vmul.f32 %v2780, %v2779
      %v2782 = vmul.f32 0.5, %v2781
      %v2783 = vsub.f32 1.5, %v2782
      %v2784 = vmul.f32 %v2779, %v2783
      %vm2785 = vweird.f32 %v2612
      %vm2786 = vweird.f32 %v2779
      %vm2787 = vmor %vm2785, %vm2786
      %v2788 = vsel %vm2787, %v2779, %v2784
      %v2789 = vrsqrt.pop %v2613
      %v2790 = vmul.f32 %v2789, %v2613
      %v2791 = vmul.f32 %v2790, %v2789
      %v2792 = vmul.f32 0.5, %v2791
      %v2793 = vsub.f32 1.5, %v2792
      %v2794 = vmul.f32 %v2789, %v2793
      %vm2795 = vweird.f32 %v2613
      %vm2796 = vweird.f32 %v2789
      %vm2797 = vmor %vm2795, %vm2796
      %v2798 = vsel %vm2797, %v2789, %v2794
      %v2799 = vrsqrt.pop %v2614
      %v2800 = vmul.f32 %v2799, %v2614
      %v2801 = vmul.f32 %v2800, %v2799
      %v2802 = vmul.f32 0.5, %v2801
      %v2803 = vsub.f32 1.5, %v2802
      %v2804 = vmul.f32 %v2799, %v2803
      %vm2805 = vweird.f32 %v2614
      %vm2806 = vweird.f32 %v2799
      %vm2807 = vmor %vm2805, %vm2806
      %v2808 = vsel %vm2807, %v2799, %v2804
      %v2809 = vrsqrt.pop %v2615
      %v2810 = vmul.f32 %v2809, %v2615
      %v2811 = vmul.f32 %v2810, %v2809
      %v2812 = vmul.f32 0.5, %v2811
      %v2813 = vsub.f32 1.5, %v2812
      %v2814 = vmul.f32 %v2809, %v2813
      %vm2815 = vweird.f32 %v2615
      %vm2816 = vweird.f32 %v2809
      %vm2817 = vmor %vm2815, %vm2816
      %v2818 = vsel %vm2817, %v2809, %v2814
      %v2819 = vrsqrt.pop %v2616
      %v2820 = vmul.f32 %v2819, %v2616
      %v2821 = vmul.f32 %v2820, %v2819
      %v2822 = vmul.f32 0.5, %v2821
      %v2823 = vsub.f32 1.5, %v2822
      %v2824 = vmul.f32 %v2819, %v2823
      %vm2825 = vweird.f32 %v2616
      %vm2826 = vweird.f32 %v2819
      %vm2827 = vmor %vm2825, %vm2826
      %v2828 = vsel %vm2827, %v2819, %v2824
      %v2829 = vrsqrt.pop %v2617
      %v2830 = vmul.f32 %v2829, %v2617
      %v2831 = vmul.f32 %v2830, %v2829
      %v2832 = vmul.f32 0.5, %v2831
      %v2833 = vsub.f32 1.5, %v2832
      %v2834 = vmul.f32 %v2829, %v2833
      %vm2835 = vweird.f32 %v2617
      %vm2836 = vweird.f32 %v2829
      %vm2837 = vmor %vm2835, %vm2836
      %v2838 = vsel %vm2837, %v2829, %v2834
      %v2839 = vrsqrt.pop %v2618
      %v2840 = vmul.f32 %v2839, %v2618
      %v2841 = vmul.f32 %v2840, %v2839
      %v2842 = vmul.f32 0.5, %v2841
      %v2843 = vsub.f32 1.5, %v2842
      %v2844 = vmul.f32 %v2839, %v2843
      %vm2845 = vweird.f32 %v2618
      %vm2846 = vweird.f32 %v2839
      %vm2847 = vmor %vm2845, %vm2846
      %v2848 = vsel %vm2847, %v2839, %v2844
      %v2849 = vrsqrt.pop %v2619
      %v2850 = vmul.f32 %v2849, %v2619
      %v2851 = vmul.f32 %v2850, %v2849
      %v2852 = vmul.f32 0.5, %v2851
      %v2853 = vsub.f32 1.5, %v2852
      %v2854 = vmul.f32 %v2849, %v2853
      %vm2855 = vweird.f32 %v2619
      %vm2856 = vweird.f32 %v2849
      %vm2857 = vmor %vm2855, %vm2856
      %v2858 = vsel %vm2857, %v2849, %v2854
      %v2859 = vrsqrt.pop %v2620
      %v2860 = vmul.f32 %v2859, %v2620
      %v2861 = vmul.f32 %v2860, %v2859
      %v2862 = vmul.f32 0.5, %v2861
      %v2863 = vsub.f32 1.5, %v2862
      %v2864 = vmul.f32 %v2859, %v2863
      %vm2865 = vweird.f32 %v2620
      %vm2866 = vweird.f32 %v2859
      %vm2867 = vmor %vm2865, %vm2866
      %v2868 = vsel %vm2867, %v2859, %v2864
      %v2869 = vrsqrt.pop %v2621
      %v2870 = vmul.f32 %v2869, %v2621
      %v2871 = vmul.f32 %v2870, %v2869
      %v2872 = vmul.f32 0.5, %v2871
      %v2873 = vsub.f32 1.5, %v2872
      %v2874 = vmul.f32 %v2869, %v2873
      %vm2875 = vweird.f32 %v2621
      %vm2876 = vweird.f32 %v2869
      %vm2877 = vmor %vm2875, %vm2876
      %v2878 = vsel %vm2877, %v2869, %v2874
      %v2879 = vrsqrt.pop %v2622
      %v2880 = vmul.f32 %v2879, %v2622
      %v2881 = vmul.f32 %v2880, %v2879
      %v2882 = vmul.f32 0.5, %v2881
      %v2883 = vsub.f32 1.5, %v2882
      %v2884 = vmul.f32 %v2879, %v2883
      %vm2885 = vweird.f32 %v2622
      %vm2886 = vweird.f32 %v2879
      %vm2887 = vmor %vm2885, %vm2886
      %v2888 = vsel %vm2887, %v2879, %v2884
      %v2889 = vrsqrt.pop %v2623
      %v2890 = vmul.f32 %v2889, %v2623
      %v2891 = vmul.f32 %v2890, %v2889
      %v2892 = vmul.f32 0.5, %v2891
      %v2893 = vsub.f32 1.5, %v2892
      %v2894 = vmul.f32 %v2889, %v2893
      %vm2895 = vweird.f32 %v2623
      %vm2896 = vweird.f32 %v2889
      %vm2897 = vmor %vm2895, %vm2896
      %v2898 = vsel %vm2897, %v2889, %v2894
      %v2899 = vrsqrt.pop %v2624
      %v2900 = vmul.f32 %v2899, %v2624
      %v2901 = vmul.f32 %v2900, %v2899
      %v2902 = vmul.f32 0.5, %v2901
      %v2903 = vsub.f32 1.5, %v2902
      %v2904 = vmul.f32 %v2899, %v2903
      %vm2905 = vweird.f32 %v2624
      %vm2906 = vweird.f32 %v2899
      %vm2907 = vmor %vm2905, %vm2906
      %v2908 = vsel %vm2907, %v2899, %v2904
      %v2909 = vrsqrt.pop %v2625
      %v2910 = vmul.f32 %v2909, %v2625
      %v2911 = vmul.f32 %v2910, %v2909
      %v2912 = vmul.f32 0.5, %v2911
      %v2913 = vsub.f32 1.5, %v2912
      %v2914 = vmul.f32 %v2909, %v2913
      %vm2915 = vweird.f32 %v2625
      %vm2916 = vweird.f32 %v2909
      %vm2917 = vmor %vm2915, %vm2916
      %v2918 = vsel %vm2917, %v2909, %v2914
      %v2919 = vrsqrt.pop %v2626
      %v2920 = vmul.f32 %v2919, %v2626
      %v2921 = vmul.f32 %v2920, %v2919
      %v2922 = vmul.f32 0.5, %v2921
      %v2923 = vsub.f32 1.5, %v2922
      %v2924 = vmul.f32 %v2919, %v2923
      %vm2925 = vweird.f32 %v2626
      %vm2926 = vweird.f32 %v2919
      %vm2927 = vmor %vm2925, %vm2926
      %v2928 = vsel %vm2927, %v2919, %v2924
      %v2929 = vrsqrt.pop %v2627
      %v2930 = vmul.f32 %v2929, %v2627
      %v2931 = vmul.f32 %v2930, %v2929
      %v2932 = vmul.f32 0.5, %v2931
      %v2933 = vsub.f32 1.5, %v2932
      %v2934 = vmul.f32 %v2929, %v2933
      %vm2935 = vweird.f32 %v2627
      %vm2936 = vweird.f32 %v2929
      %vm2937 = vmor %vm2935, %vm2936
      %v2938 = vsel %vm2937, %v2929, %v2934
      %v2939 = vrsqrt.pop %v2628
      %v2940 = vmul.f32 %v2939, %v2628
      %v2941 = vmul.f32 %v2940, %v2939
      %v2942 = vmul.f32 0.5, %v2941
      %v2943 = vsub.f32 1.5, %v2942
      %v2944 = vmul.f32 %v2939, %v2943
      %vm2945 = vweird.f32 %v2628
      %vm2946 = vweird.f32 %v2939
      %vm2947 = vmor %vm2945, %vm2946
      %v2948 = vsel %vm2947, %v2939, %v2944
      %v2949 = vmul.f32 %v2565, %v2638
      %v2950 = vmul.f32 %v2566, %v2648
      %v2951 = vmul.f32 %v2567, %v2658
      %v2952 = vmul.f32 %v2568, %v2668
      %v2953 = vmul.f32 %v2569, %v2678
      %v2954 = vmul.f32 %v2570, %v2688
      %v2955 = vmul.f32 %v2571, %v2698
      %v2956 = vmul.f32 %v2572, %v2708
      %v2957 = vmul.f32 %v2573, %v2718
      %v2958 = vmul.f32 %v2574, %v2728
      %v2959 = vmul.f32 %v2575, %v2738
      %v2960 = vmul.f32 %v2576, %v2748
      %v2961 = vmul.f32 %v2577, %v2758
      %v2962 = vmul.f32 %v2578, %v2768
      %v2963 = vmul.f32 %v2579, %v2778
      %v2964 = vmul.f32 %v2580, %v2788
      %v2965 = vmul.f32 %v2581, %v2798
      %v2966 = vmul.f32 %v2582, %v2808
      %v2967 = vmul.f32 %v2583, %v2818
      %v2968 = vmul.f32 %v2584, %v2828
      %v2969 = vmul.f32 %v2585, %v2838
      %v2970 = vmul.f32 %v2586, %v2848
      %v2971 = vmul.f32 %v2587, %v2858
      %v2972 = vmul.f32 %v2588, %v2868
      %v2973 = vmul.f32 %v2589, %v2878
      %v2974 = vmul.f32 %v2590, %v2888
      %v2975 = vmul.f32 %v2591, %v2898
      %v2976 = vmul.f32 %v2592, %v2908
      %v2977 = vmul.f32 %v2593, %v2918
      %v2978 = vmul.f32 %v2594, %v2928
      %v2979 = vmul.f32 %v2595, %v2938
      %v2980 = vmul.f32 %v2596, %v2948
      %v2981 = vperm.slane %v2146, 1
      %v2982 = vmul.f32 %v2949, %v2981
      %v2983 = vmul.f32 %v2950, %v2981
      %v2984 = vmul.f32 %v2951, %v2981
      %v2985 = vmul.f32 %v2952, %v2981
      %v2986 = vmul.f32 %v2953, %v2981
      %v2987 = vmul.f32 %v2954, %v2981
      %v2988 = vmul.f32 %v2955, %v2981
      %v2989 = vmul.f32 %v2956, %v2981
      %v2990 = vmul.f32 %v2957, %v2981
      %v2991 = vmul.f32 %v2958, %v2981
      %v2992 = vmul.f32 %v2959, %v2981
      %v2993 = vmul.f32 %v2960, %v2981
      %v2994 = vmul.f32 %v2961, %v2981
      %v2995 = vmul.f32 %v2962, %v2981
      %v2996 = vmul.f32 %v2963, %v2981
      %v2997 = vmul.f32 %v2964, %v2981
      %v2998 = vmul.f32 %v2965, %v2981
      %v2999 = vmul.f32 %v2966, %v2981
      %v3000 = vmul.f32 %v2967, %v2981
      %v3001 = vmul.f32 %v2968, %v2981
      %v3002 = vmul.f32 %v2969, %v2981
      %v3003 = vmul.f32 %v2970, %v2981
      %v3004 = vmul.f32 %v2971, %v2981
      %v3005 = vmul.f32 %v2972, %v2981
      %v3006 = vmul.f32 %v2973, %v2981
      %v3007 = vmul.f32 %v2974, %v2981
      %v3008 = vmul.f32 %v2975, %v2981
      %v3009 = vmul.f32 %v2976, %v2981
      %v3010 = vmul.f32 %v2977, %v2981
      %v3011 = vmul.f32 %v2978, %v2981
      %v3012 = vmul.f32 %v2979, %v2981
      %v3013 = vmul.f32 %v2980, %v2981
      %v3014 = vperm.slane %v2146, 2
      %v3015 = vadd.f32 %v2982, %v3014
      %v3016 = vadd.f32 %v2983, %v3014
      %v3017 = vadd.f32 %v2984, %v3014
      %v3018 = vadd.f32 %v2985, %v3014
      %v3019 = vadd.f32 %v2986, %v3014
      %v3020 = vadd.f32 %v2987, %v3014
      %v3021 = vadd.f32 %v2988, %v3014
      %v3022 = vadd.f32 %v2989, %v3014
      %v3023 = vadd.f32 %v2990, %v3014
      %v3024 = vadd.f32 %v2991, %v3014
      %v3025 = vadd.f32 %v2992, %v3014
      %v3026 = vadd.f32 %v2993, %v3014
      %v3027 = vadd.f32 %v2994, %v3014
      %v3028 = vadd.f32 %v2995, %v3014
      %v3029 = vadd.f32 %v2996, %v3014
      %v3030 = vadd.f32 %v2997, %v3014
      %v3031 = vadd.f32 %v2998, %v3014
      %v3032 = vadd.f32 %v2999, %v3014
      %v3033 = vadd.f32 %v3000, %v3014
      %v3034 = vadd.f32 %v3001, %v3014
      %v3035 = vadd.f32 %v3002, %v3014
      %v3036 = vadd.f32 %v3003, %v3014
      %v3037 = vadd.f32 %v3004, %v3014
      %v3038 = vadd.f32 %v3005, %v3014
      %v3039 = vadd.f32 %v3006, %v3014
      %v3040 = vadd.f32 %v3007, %v3014
      %v3041 = vadd.f32 %v3008, %v3014
      %v3042 = vadd.f32 %v3009, %v3014
      %v3043 = vadd.f32 %v3010, %v3014
      %v3044 = vadd.f32 %v3011, %v3014
      %v3045 = vadd.f32 %v3012, %v3014
      %v3046 = vadd.f32 %v3013, %v3014
      %v3047 = vmul.f32 %v3015, 0.5
      %v3048 = vmul.f32 %v3016, 0.5
      %v3049 = vmul.f32 %v3017, 0.5
      %v3050 = vmul.f32 %v3018, 0.5
      %v3051 = vmul.f32 %v3019, 0.5
      %v3052 = vmul.f32 %v3020, 0.5
      %v3053 = vmul.f32 %v3021, 0.5
      %v3054 = vmul.f32 %v3022, 0.5
      %v3055 = vmul.f32 %v3023, 0.5
      %v3056 = vmul.f32 %v3024, 0.5
      %v3057 = vmul.f32 %v3025, 0.5
      %v3058 = vmul.f32 %v3026, 0.5
      %v3059 = vmul.f32 %v3027, 0.5
      %v3060 = vmul.f32 %v3028, 0.5
      %v3061 = vmul.f32 %v3029, 0.5
      %v3062 = vmul.f32 %v3030, 0.5
      %v3063 = vmul.f32 %v3031, 0.5
      %v3064 = vmul.f32 %v3032, 0.5
      %v3065 = vmul.f32 %v3033, 0.5
      %v3066 = vmul.f32 %v3034, 0.5
      %v3067 = vmul.f32 %v3035, 0.5
      %v3068 = vmul.f32 %v3036, 0.5
      %v3069 = vmul.f32 %v3037, 0.5
      %v3070 = vmul.f32 %v3038, 0.5
      %v3071 = vmul.f32 %v3039, 0.5
      %v3072 = vmul.f32 %v3040, 0.5
      %v3073 = vmul.f32 %v3041, 0.5
      %v3074 = vmul.f32 %v3042, 0.5
      %v3075 = vmul.f32 %v3043, 0.5
      %v3076 = vmul.f32 %v3044, 0.5
      %v3077 = vmul.f32 %v3045, 0.5
      %v3078 = vmul.f32 %v3046, 0.5
      %v3079 = vmul.f32 %v3015, 0.044715
      %v3080 = vmul.f32 %v3016, 0.044715
      %v3081 = vmul.f32 %v3017, 0.044715
      %v3082 = vmul.f32 %v3018, 0.044715
      %v3083 = vmul.f32 %v3019, 0.044715
      %v3084 = vmul.f32 %v3020, 0.044715
      %v3085 = vmul.f32 %v3021, 0.044715
      %v3086 = vmul.f32 %v3022, 0.044715
      %v3087 = vmul.f32 %v3023, 0.044715
      %v3088 = vmul.f32 %v3024, 0.044715
      %v3089 = vmul.f32 %v3025, 0.044715
      %v3090 = vmul.f32 %v3026, 0.044715
      %v3091 = vmul.f32 %v3027, 0.044715
      %v3092 = vmul.f32 %v3028, 0.044715
      %v3093 = vmul.f32 %v3029, 0.044715
      %v3094 = vmul.f32 %v3030, 0.044715
      %v3095 = vmul.f32 %v3031, 0.044715
      %v3096 = vmul.f32 %v3032, 0.044715
      %v3097 = vmul.f32 %v3033, 0.044715
      %v3098 = vmul.f32 %v3034, 0.044715
      %v3099 = vmul.f32 %v3035, 0.044715
      %v3100 = vmul.f32 %v3036, 0.044715
      %v3101 = vmul.f32 %v3037, 0.044715
      %v3102 = vmul.f32 %v3038, 0.044715
      %v3103 = vmul.f32 %v3039, 0.044715
      %v3104 = vmul.f32 %v3040, 0.044715
      %v3105 = vmul.f32 %v3041, 0.044715
      %v3106 = vmul.f32 %v3042, 0.044715
      %v3107 = vmul.f32 %v3043, 0.044715
      %v3108 = vmul.f32 %v3044, 0.044715
      %v3109 = vmul.f32 %v3045, 0.044715
      %v3110 = vmul.f32 %v3046, 0.044715
      %v3111 = vmul.f32 %v3079, %v3015
      %v3112 = vmul.f32 %v3080, %v3016
      %v3113 = vmul.f32 %v3081, %v3017
      %v3114 = vmul.f32 %v3082, %v3018
      %v3115 = vmul.f32 %v3083, %v3019
      %v3116 = vmul.f32 %v3084, %v3020
      %v3117 = vmul.f32 %v3085, %v3021
      %v3118 = vmul.f32 %v3086, %v3022
      %v3119 = vmul.f32 %v3087, %v3023
      %v3120 = vmul.f32 %v3088, %v3024
      %v3121 = vmul.f32 %v3089, %v3025
      %v3122 = vmul.f32 %v3090, %v3026
      %v3123 = vmul.f32 %v3091, %v3027
      %v3124 = vmul.f32 %v3092, %v3028
      %v3125 = vmul.f32 %v3093, %v3029
      %v3126 = vmul.f32 %v3094, %v3030
      %v3127 = vmul.f32 %v3095, %v3031
      %v3128 = vmul.f32 %v3096, %v3032
      %v3129 = vmul.f32 %v3097, %v3033
      %v3130 = vmul.f32 %v3098, %v3034
      %v3131 = vmul.f32 %v3099, %v3035
      %v3132 = vmul.f32 %v3100, %v3036
      %v3133 = vmul.f32 %v3101, %v3037
      %v3134 = vmul.f32 %v3102, %v3038
      %v3135 = vmul.f32 %v3103, %v3039
      %v3136 = vmul.f32 %v3104, %v3040
      %v3137 = vmul.f32 %v3105, %v3041
      %v3138 = vmul.f32 %v3106, %v3042
      %v3139 = vmul.f32 %v3107, %v3043
      %v3140 = vmul.f32 %v3108, %v3044
      %v3141 = vmul.f32 %v3109, %v3045
      %v3142 = vmul.f32 %v3110, %v3046
      %v3143 = vmul.f32 %v3111, %v3015
      %v3144 = vmul.f32 %v3112, %v3016
      %v3145 = vmul.f32 %v3113, %v3017
      %v3146 = vmul.f32 %v3114, %v3018
      %v3147 = vmul.f32 %v3115, %v3019
      %v3148 = vmul.f32 %v3116, %v3020
      %v3149 = vmul.f32 %v3117, %v3021
      %v3150 = vmul.f32 %v3118, %v3022
      %v3151 = vmul.f32 %v3119, %v3023
      %v3152 = vmul.f32 %v3120, %v3024
      %v3153 = vmul.f32 %v3121, %v3025
      %v3154 = vmul.f32 %v3122, %v3026
      %v3155 = vmul.f32 %v3123, %v3027
      %v3156 = vmul.f32 %v3124, %v3028
      %v3157 = vmul.f32 %v3125, %v3029
      %v3158 = vmul.f32 %v3126, %v3030
      %v3159 = vmul.f32 %v3127, %v3031
      %v3160 = vmul.f32 %v3128, %v3032
      %v3161 = vmul.f32 %v3129, %v3033
      %v3162 = vmul.f32 %v3130, %v3034
      %v3163 = vmul.f32 %v3131, %v3035
      %v3164 = vmul.f32 %v3132, %v3036
      %v3165 = vmul.f32 %v3133, %v3037
      %v3166 = vmul.f32 %v3134, %v3038
      %v3167 = vmul.f32 %v3135, %v3039
      %v3168 = vmul.f32 %v3136, %v3040
      %v3169 = vmul.f32 %v3137, %v3041
      %v3170 = vmul.f32 %v3138, %v3042
      %v3171 = vmul.f32 %v3139, %v3043
      %v3172 = vmul.f32 %v3140, %v3044
      %v3173 = vmul.f32 %v3141, %v3045
      %v3174 = vmul.f32 %v3142, %v3046
      %v3175 = vadd.f32 %v3015, %v3143
      %v3176 = vadd.f32 %v3016, %v3144
      %v3177 = vadd.f32 %v3017, %v3145
      %v3178 = vadd.f32 %v3018, %v3146
      %v3179 = vadd.f32 %v3019, %v3147
      %v3180 = vadd.f32 %v3020, %v3148
      %v3181 = vadd.f32 %v3021, %v3149
      %v3182 = vadd.f32 %v3022, %v3150
      %v3183 = vadd.f32 %v3023, %v3151
      %v3184 = vadd.f32 %v3024, %v3152
      %v3185 = vadd.f32 %v3025, %v3153
      %v3186 = vadd.f32 %v3026, %v3154
      %v3187 = vadd.f32 %v3027, %v3155
      %v3188 = vadd.f32 %v3028, %v3156
      %v3189 = vadd.f32 %v3029, %v3157
      %v3190 = vadd.f32 %v3030, %v3158
      %v3191 = vadd.f32 %v3031, %v3159
      %v3192 = vadd.f32 %v3032, %v3160
      %v3193 = vadd.f32 %v3033, %v3161
      %v3194 = vadd.f32 %v3034, %v3162
      %v3195 = vadd.f32 %v3035, %v3163
      %v3196 = vadd.f32 %v3036, %v3164
      %v3197 = vadd.f32 %v3037, %v3165
      %v3198 = vadd.f32 %v3038, %v3166
      %v3199 = vadd.f32 %v3039, %v3167
      %v3200 = vadd.f32 %v3040, %v3168
      %v3201 = vadd.f32 %v3041, %v3169
      %v3202 = vadd.f32 %v3042, %v3170
      %v3203 = vadd.f32 %v3043, %v3171
      %v3204 = vadd.f32 %v3044, %v3172
      %v3205 = vadd.f32 %v3045, %v3173
      %v3206 = vadd.f32 %v3046, %v3174
      %v3207 = vmul.f32 %v3175, 0.7978846
      %v3208 = vmul.f32 %v3176, 0.7978846
      %v3209 = vmul.f32 %v3177, 0.7978846
      %v3210 = vmul.f32 %v3178, 0.7978846
      %v3211 = vmul.f32 %v3179, 0.7978846
      %v3212 = vmul.f32 %v3180, 0.7978846
      %v3213 = vmul.f32 %v3181, 0.7978846
      %v3214 = vmul.f32 %v3182, 0.7978846
      %v3215 = vmul.f32 %v3183, 0.7978846
      %v3216 = vmul.f32 %v3184, 0.7978846
      %v3217 = vmul.f32 %v3185, 0.7978846
      %v3218 = vmul.f32 %v3186, 0.7978846
      %v3219 = vmul.f32 %v3187, 0.7978846
      %v3220 = vmul.f32 %v3188, 0.7978846
      %v3221 = vmul.f32 %v3189, 0.7978846
      %v3222 = vmul.f32 %v3190, 0.7978846
      %v3223 = vmul.f32 %v3191, 0.7978846
      %v3224 = vmul.f32 %v3192, 0.7978846
      %v3225 = vmul.f32 %v3193, 0.7978846
      %v3226 = vmul.f32 %v3194, 0.7978846
      %v3227 = vmul.f32 %v3195, 0.7978846
      %v3228 = vmul.f32 %v3196, 0.7978846
      %v3229 = vmul.f32 %v3197, 0.7978846
      %v3230 = vmul.f32 %v3198, 0.7978846
      %v3231 = vmul.f32 %v3199, 0.7978846
      %v3232 = vmul.f32 %v3200, 0.7978846
      %v3233 = vmul.f32 %v3201, 0.7978846
      %v3234 = vmul.f32 %v3202, 0.7978846
      %v3235 = vmul.f32 %v3203, 0.7978846
      %v3236 = vmul.f32 %v3204, 0.7978846
      %v3237 = vmul.f32 %v3205, 0.7978846
      %v3238 = vmul.f32 %v3206, 0.7978846
      %v3239 = vtanh.pop %v3207
      %v3240 = vtanh.pop %v3208
      %v3241 = vtanh.pop %v3209
      %v3242 = vtanh.pop %v3210
      %v3243 = vtanh.pop %v3211
      %v3244 = vtanh.pop %v3212
      %v3245 = vtanh.pop %v3213
      %v3246 = vtanh.pop %v3214
      %v3247 = vtanh.pop %v3215
      %v3248 = vtanh.pop %v3216
      %v3249 = vtanh.pop %v3217
      %v3250 = vtanh.pop %v3218
      %v3251 = vtanh.pop %v3219
      %v3252 = vtanh.pop %v3220
      %v3253 = vtanh.pop %v3221
      %v3254 = vtanh.pop %v3222
      %v3255 = vtanh.pop %v3223
      %v3256 = vtanh.pop %v3224
      %v3257 = vtanh.pop %v3225
      %v3258 = vtanh.pop %v3226
      %v3259 = vtanh.pop %v3227
      %v3260 = vtanh.pop %v3228
      %v3261 = vtanh.pop %v3229
      %v3262 = vtanh.pop %v3230
      %v3263 = vtanh.pop %v3231
      %v3264 = vtanh.pop %v3232
      %v3265 = vtanh.pop %v3233
      %v3266 = vtanh.pop %v3234
      %v3267 = vtanh.pop %v3235
      %v3268 = vtanh.pop %v3236
      %v3269 = vtanh.pop %v3237
      %v3270 = vtanh.pop %v3238
      %v3271 = vadd.f32 %v3239, 1.0
      %v3272 = vadd.f32 %v3240, 1.0
      %v3273 = vadd.f32 %v3241, 1.0
      %v3274 = vadd.f32 %v3242, 1.0
      %v3275 = vadd.f32 %v3243, 1.0
      %v3276 = vadd.f32 %v3244, 1.0
      %v3277 = vadd.f32 %v3245, 1.0
      %v3278 = vadd.f32 %v3246, 1.0
      %v3279 = vadd.f32 %v3247, 1.0
      %v3280 = vadd.f32 %v3248, 1.0
      %v3281 = vadd.f32 %v3249, 1.0
      %v3282 = vadd.f32 %v3250, 1.0
      %v3283 = vadd.f32 %v3251, 1.0
      %v3284 = vadd.f32 %v3252, 1.0
      %v3285 = vadd.f32 %v3253, 1.0
      %v3286 = vadd.f32 %v3254, 1.0
      %v3287 = vadd.f32 %v3255, 1.0
      %v3288 = vadd.f32 %v3256, 1.0
      %v3289 = vadd.f32 %v3257, 1.0
      %v3290 = vadd.f32 %v3258, 1.0
      %v3291 = vadd.f32 %v3259, 1.0
      %v3292 = vadd.f32 %v3260, 1.0
      %v3293 = vadd.f32 %v3261, 1.0
      %v3294 = vadd.f32 %v3262, 1.0
      %v3295 = vadd.f32 %v3263, 1.0
      %v3296 = vadd.f32 %v3264, 1.0
      %v3297 = vadd.f32 %v3265, 1.0
      %v3298 = vadd.f32 %v3266, 1.0
      %v3299 = vadd.f32 %v3267, 1.0
      %v3300 = vadd.f32 %v3268, 1.0
      %v3301 = vadd.f32 %v3269, 1.0
      %v3302 = vadd.f32 %v3270, 1.0
      %v3303 = vmul.f32 %v3047, %v3271
      %v3304 = vmul.f32 %v3048, %v3272
      %v3305 = vmul.f32 %v3049, %v3273
      %v3306 = vmul.f32 %v3050, %v3274
      %v3307 = vmul.f32 %v3051, %v3275
      %v3308 = vmul.f32 %v3052, %v3276
      %v3309 = vmul.f32 %v3053, %v3277
      %v3310 = vmul.f32 %v3054, %v3278
      %v3311 = vmul.f32 %v3055, %v3279
      %v3312 = vmul.f32 %v3056, %v3280
      %v3313 = vmul.f32 %v3057, %v3281
      %v3314 = vmul.f32 %v3058, %v3282
      %v3315 = vmul.f32 %v3059, %v3283
      %v3316 = vmul.f32 %v3060, %v3284
      %v3317 = vmul.f32 %v3061, %v3285
      %v3318 = vmul.f32 %v3062, %v3286
      %v3319 = vmul.f32 %v3063, %v3287
      %v3320 = vmul.f32 %v3064, %v3288
      %v3321 = vmul.f32 %v3065, %v3289
      %v3322 = vmul.f32 %v3066, %v3290
      %v3323 = vmul.f32 %v3067, %v3291
      %v3324 = vmul.f32 %v3068, %v3292
      %v3325 = vmul.f32 %v3069, %v3293
      %v3326 = vmul.f32 %v3070, %v3294
      %v3327 = vmul.f32 %v3071, %v3295
      %v3328 = vmul.f32 %v3072, %v3296
      %v3329 = vmul.f32 %v3073, %v3297
      %v3330 = vmul.f32 %v3074, %v3298
      %v3331 = vmul.f32 %v3075, %v3299
      %v3332 = vmul.f32 %v3076, %v3300
      %v3333 = vmul.f32 %v3077, %v3301
      %v3334 = vmul.f32 %v3078, %v3302
      %3335 = vst.msk [vmem:[%s175] sm:$0xff] %vm2180, %v3303
      %3336 = vst.msk [vmem:[%s175 + $0x8] sm:$0xff] %vm2180, %v3304
      %3337 = vst.msk [vmem:[%s175 + $0x10] sm:$0xff] %vm2180, %v3305
      %3338 = vst.msk [vmem:[%s175 + $0x18] sm:$0xff] %vm2180, %v3306
      %3339 = vst.msk [vmem:[%s175 + $0x20] sm:$0xff] %vm2180, %v3307
      %3340 = vst.msk [vmem:[%s175 + $0x28] sm:$0xff] %vm2180, %v3308
      %3341 = vst.msk [vmem:[%s175 + $0x30] sm:$0xff] %vm2180, %v3309
      %3342 = vst.msk [vmem:[%s175 + $0x38] sm:$0xff] %vm2180, %v3310
      %3343 = vst.msk [vmem:[%s175 + $0x40] sm:$0xff] %vm2180, %v3311
      %3344 = vst.msk [vmem:[%s175 + $0x48] sm:$0xff] %vm2180, %v3312
      %3345 = vst.msk [vmem:[%s175 + $0x50] sm:$0xff] %vm2180, %v3313
      %3346 = vst.msk [vmem:[%s175 + $0x58] sm:$0xff] %vm2180, %v3314
      %3347 = vst.msk [vmem:[%s175 + $0x60] sm:$0xff] %vm2180, %v3315
      %3348 = vst.msk [vmem:[%s175 + $0x68] sm:$0xff] %vm2180, %v3316
      %3349 = vst.msk [vmem:[%s175 + $0x70] sm:$0xff] %vm2180, %v3317
      %3350 = vst.msk [vmem:[%s175 + $0x78] sm:$0xff] %vm2180, %v3318
      %3351 = vst.msk [vmem:[%s175 + $0x80] sm:$0xff] %vm2180, %v3319
      %3352 = vst.msk [vmem:[%s175 + $0x88] sm:$0xff] %vm2180, %v3320
      %3353 = vst.msk [vmem:[%s175 + $0x90] sm:$0xff] %vm2180, %v3321
      %3354 = vst.msk [vmem:[%s175 + $0x98] sm:$0xff] %vm2180, %v3322
      %3355 = vst.msk [vmem:[%s175 + $0xa0] sm:$0xff] %vm2180, %v3323
      %3356 = vst.msk [vmem:[%s175 + $0xa8] sm:$0xff] %vm2180, %v3324
      %3357 = vst.msk [vmem:[%s175 + $0xb0] sm:$0xff] %vm2180, %v3325
      %3358 = vst.msk [vmem:[%s175 + $0xb8] sm:$0xff] %vm2180, %v3326
      %3359 = vst.msk [vmem:[%s175 + $0xc0] sm:$0xff] %vm2180, %v3327
      %3360 = vst.msk [vmem:[%s175 + $0xc8] sm:$0xff] %vm2180, %v3328
      %3361 = vst.msk [vmem:[%s175 + $0xd0] sm:$0xff] %vm2180, %v3329
      %3362 = vst.msk [vmem:[%s175 + $0xd8] sm:$0xff] %vm2180, %v3330
      %3363 = vst.msk [vmem:[%s175 + $0xe0] sm:$0xff] %vm2180, %v3331
      %3364 = vst.msk [vmem:[%s175 + $0xe8] sm:$0xff] %vm2180, %v3332
      %3365 = vst.msk [vmem:[%s175 + $0xf0] sm:$0xff] %vm2180, %v3333
      %3366 = vst.msk [vmem:[%s175 + $0xf8] sm:$0xff] %vm2180, %v3334
      %p3367 = scmp.lt.s32.totalorder %s14, 1
      %s3368 = scalar_select %p3367, %s14, 1
      %s3369 = smul.addr %s3368, 32
      %s3370 = smul.addr %s3369, 8
      %s3371 = scalar_lea.vmem %s3, %s3370
      // Predicated region
      $region33: #{meta_arch_forward.5} parent=31 // pred_check
        %p3372 = pneg %p100
      $region34: #{meta_arch_forward.5} parent=31 // pred_check_branch
        %3374 = sbr.rel (%p3372) target = $region36
      $region35: #{meta_arch_forward.5} parent=31 // pred_region
        _
      $region36: #{meta_arch_forward.5} parent=31 // pred_fallthru
        _
    $region32: #{meta_arch_forward.5} parent=5 // pred_fallthru
      _
    %p3375 = scmp.le.s32.totalorder 2, %s9
    // Predicated region
    $region37: #{meta_arch_forward.5} parent=5 // pred_check
      %p3376 = pneg %p3375
    $region38: #{meta_arch_forward.5} parent=5 // pred_check_branch
      %3378 = sbr.rel (%p3376) target = $region40
    $region39: #{meta_arch_forward.5} parent=5 // pred_region
      %s3379 = ssub.s32 %s9, 2
      // Predicated region
      $region41: #{meta_arch_forward.5} parent=39 // pred_check
        %p3380 = pneg %p106
      $region42: #{meta_arch_forward.5} parent=39 // pred_check_branch
        %3382 = sbr.rel (%p3380) target = $region44
      $region43: #{meta_arch_forward.5} parent=39 // pred_region
        %p3383 = scmp.lt.s32.totalorder %s15, 1
        %s3384 = scalar_select %p3383, %s15, 1
        %s3385 = smul.addr %s3384, 32
        %s3386 = smul.addr %s3385, 8
        %s3387 = scalar_lea.vmem %s3, %s3386
      $region44: #{meta_arch_forward.5} parent=39 // pred_fallthru
        _
    $region40: #{meta_arch_forward.5} parent=5 // pred_fallthru
      _
  $region6: #{meta_arch_forward.5} parent=0 // loop_footer
    %s13 = sadd.s32 1, %s9
  $region7: #{meta_arch_forward.5} parent=0 // loop_footer_branch
    %8 = sbr.rel target = $region3
  $region8: #{meta_arch_forward.5} parent=0 // loop_exit
    _

// kernel: meta_arch_forward.7
$region0: #{meta_arch_forward.7}
  #allocation0 [shape = 'u32[]', space=smem, size = 0x4, offset = 0x4, fixed_abs, tag = 'smem constant byte address 0x4 - core index']
  #allocation1 [shape = 'u32[72,128]{1,0:T(1,128)}', space=vmem, size = 0x9000, scoped, tag = 'internal scratch']
  %s0 = inlined_call_operand.vmem [shape: f32[8,5,5,8], index: 0, kind: input, shape index: {}]
  %s1 = inlined_call_operand.vmem [shape: bf16[9,8,16], index: 1, kind: input, shape index: {}]
  %s2 = inlined_call_operand.vmem [shape: f32[5,16], index: 2, kind: input, shape index: {}]
  %s3 = inlined_call_operand.vmem [shape: f32[2,16,16], index: 3, kind: output, shape index: {}]
  %s4 = sld [smem:[#allocation0]]
  $region45: #{meta_arch_forward.7} parent=0
    _
  %s6 = ssub.s32 1, %s4
  %s7 = scalar_select 0, %s6, %s4
  loop: start=0, step=1, limit=4
  $region2: #{meta_arch_forward.7} parent=0 // loop_pre_header
    _
  $region3: #{meta_arch_forward.7} parent=0 // loop_header
    %s9 = sphi 0, %s13
    %p10 = scmp.ge.s32.totalorder %s9, 4
    %s19 = sphi 0, %s21
    %s22 = sphi 0, %s19
    %s23 = sphi 0, %s22
    %s39 = sphi 0, %s23
    %s43 = sphi 0, %s43
    %s45 = sphi 0, %s43
    %s46 = sphi 0, %s45
    %s60 = sphi 0, %s46
    %s64 = sphi 0, %s64
    %s66 = sphi 0, %s64
    %s67 = sphi 0, %s66
    %s81 = sphi 0, %s67
    %s87 = sphi 0, %s89
    %s90 = sphi 0, %s87
    %s91 = sphi 0, %s90
    %s107 = sphi 0, %s91
  $region4: #{meta_arch_forward.7} parent=0 // loop_header_branch
    %12 = sbr.rel (%p10) target = $region8
  $region5: #{meta_arch_forward.7} parent=0 // loop_body
    %s14 = ssub.s32 %s9, 1
    %s15 = ssub.s32 %s9, 2
    %s16 = sadd.s32 %s9, 1
    %s17 = ssub.s32 %s9, %s16
    %p18 = scmp.eq.s32.totalorder %s17, 0
    %s20 = sadd.s32 %s19, 1
    %s21 = scalar_select %p18, %s19, %s20
    %p24 = pneg %p18
    %p25 = scmp.eq.s32.totalorder %s9, 1
    %p26 = por %p24, %p25
    %p27 = scmp.ne.s32.totalorder %s19, %s22
    %p28 = scmp.eq.s32.totalorder %s9, 0
    %p29 = por %p27, %p28
    %p30 = scmp.ne.s32.totalorder %s19, %s22
    %p31 = scmp.eq.s32.totalorder %s14, 1
    %p32 = por %p30, %p31
    %p33 = scmp.ne.s32.totalorder %s22, %s23
    %p34 = scmp.eq.s32.totalorder %s14, 0
    %p35 = por %p33, %p34
    %p36 = scmp.ne.s32.totalorder %s22, %s23
    %p37 = scmp.eq.s32.totalorder %s15, 1
    %p38 = por %p36, %p37
    %p40 = scmp.ne.s32.totalorder %s23, %s39
    %p41 = scmp.eq.s32.totalorder %s15, 0
    %p42 = por %p40, %p41
    %s44 = sadd.s32 %s43, 1
    %p47 = scmp.eq.s32.totalorder %s9, 1
    %p48 = scmp.ne.s32.totalorder %s43, %s45
    %p49 = scmp.eq.s32.totalorder %s9, 0
    %p50 = por %p48, %p49
    %p51 = scmp.ne.s32.totalorder %s43, %s45
    %p52 = scmp.eq.s32.totalorder %s14, 1
    %p53 = por %p51, %p52
    %p54 = scmp.ne.s32.totalorder %s45, %s46
    %p55 = scmp.eq.s32.totalorder %s14, 0
    %p56 = por %p54, %p55
    %p57 = scmp.ne.s32.totalorder %s45, %s46
    %p58 = scmp.eq.s32.totalorder %s15, 1
    %p59 = por %p57, %p58
    %p61 = scmp.ne.s32.totalorder %s46, %s60
    %p62 = scmp.eq.s32.totalorder %s15, 0
    %p63 = por %p61, %p62
    %s65 = sadd.s32 %s64, 1
    %p68 = scmp.eq.s32.totalorder %s9, 1
    %p69 = scmp.ne.s32.totalorder %s64, %s66
    %p70 = scmp.eq.s32.totalorder %s9, 0
    %p71 = por %p69, %p70
    %p72 = scmp.ne.s32.totalorder %s64, %s66
    %p73 = scmp.eq.s32.totalorder %s14, 1
    %p74 = por %p72, %p73
    %p75 = scmp.ne.s32.totalorder %s66, %s67
    %p76 = scmp.eq.s32.totalorder %s14, 0
    %p77 = por %p75, %p76
    %p78 = scmp.ne.s32.totalorder %s66, %s67
    %p79 = scmp.eq.s32.totalorder %s15, 1
    %p80 = por %p78, %p79
    %p82 = scmp.ne.s32.totalorder %s67, %s81
    %p83 = scmp.eq.s32.totalorder %s15, 0
    %p84 = por %p82, %p83
    %s85 = ssub.s32 %s9, %s16
    %p86 = scmp.eq.s32.totalorder %s85, 0
    %s88 = sadd.s32 %s87, 1
    %s89 = scalar_select %p86, %s87, %s88
    %p92 = pneg %p86
    %p93 = scmp.eq.s32.totalorder %s9, 1
    %p94 = por %p92, %p93
    %p95 = scmp.ne.s32.totalorder %s87, %s90
    %p96 = scmp.eq.s32.totalorder %s9, 0
    %p97 = por %p95, %p96
    %p98 = scmp.ne.s32.totalorder %s87, %s90
    %p99 = scmp.eq.s32.totalorder %s14, 1
    %p100 = por %p98, %p99
    %p101 = scmp.ne.s32.totalorder %s90, %s91
    %p102 = scmp.eq.s32.totalorder %s14, 0
    %p103 = por %p101, %p102
    %p104 = scmp.ne.s32.totalorder %s90, %s91
    %p105 = scmp.eq.s32.totalorder %s15, 1
    %p106 = por %p104, %p105
    %p108 = scmp.ne.s32.totalorder %s91, %s107
    %p109 = scmp.eq.s32.totalorder %s15, 0
    %p110 = por %p108, %p109
    %p111 = scmp.le.s32.totalorder 1, %s9
    %p112 = scmp.lt.s32.totalorder %s9, 3
    %p113 = pnand %p111, %p112
    %p114 = pneg %p113
    // Predicated region
    $region9: #{meta_arch_forward.7} parent=5 // pred_check
      _
    $region10: #{meta_arch_forward.7} parent=5 // pred_check_branch
      %116 = sbr.rel (%p113) target = $region12
    $region11: #{meta_arch_forward.7} parent=5 // pred_region
      %s117 = ssub.s32 %s9, 1
      // Predicated region
      $region13: #{meta_arch_forward.7} parent=11 // pred_check
        %p118 = pneg %p56
      $region14: #{meta_arch_forward.7} parent=11 // pred_check_branch
        %120 = sbr.rel (%p118) target = $region16
      $region15: #{meta_arch_forward.7} parent=11 // pred_region
        _
      $region16: #{meta_arch_forward.7} parent=11 // pred_fallthru
        _
      // Predicated region
      $region17: #{meta_arch_forward.7} parent=11 // pred_check
        %p121 = pneg %p77
      $region18: #{meta_arch_forward.7} parent=11 // pred_check_branch
        %123 = sbr.rel (%p121) target = $region20
      $region19: #{meta_arch_forward.7} parent=11 // pred_region
        _
      $region20: #{meta_arch_forward.7} parent=11 // pred_fallthru
        _
    $region12: #{meta_arch_forward.7} parent=5 // pred_fallthru
      _
    %p124 = scmp.lt.s32.totalorder %s9, 2
    // Predicated region
    $region21: #{meta_arch_forward.7} parent=5 // pred_check
      %p125 = pneg %p124
    $region22: #{meta_arch_forward.7} parent=5 // pred_check_branch
      %127 = sbr.rel (%p125) target = $region24
    $region23: #{meta_arch_forward.7} parent=5 // pred_region
      // Predicated region
      $region25: #{meta_arch_forward.7} parent=23 // pred_check
        %p128 = pneg %p29
      $region26: #{meta_arch_forward.7} parent=23 // pred_check_branch
        %130 = sbr.rel (%p128) target = $region28
      $region27: #{meta_arch_forward.7} parent=23 // pred_region
        %s131 = smul.u32 4, %s9
        %p132 = scmp.lt.s32.totalorder %s131, 7
        %s133 = scalar_select %p132, %s131, 7
        %s134 = smul.addr %s133, 5
        %s135 = smul.addr %s134, 8
        %s136 = scalar_lea.vmem %s0, %s135
        %s137 = smul.u32 4, %s9
      $region28: #{meta_arch_forward.7} parent=23 // pred_fallthru
        _
    $region24: #{meta_arch_forward.7} parent=5 // pred_fallthru
      _
    %p138 = scmp.le.s32.totalorder 1, %s9
    %p139 = scmp.lt.s32.totalorder %s9, 3
    %p140 = pnand %p138, %p139
    %p141 = pneg %p140
    // Predicated region
    $region29: #{meta_arch_forward.7} parent=5 // pred_check
      _
    $region30: #{meta_arch_forward.7} parent=5 // pred_check_branch
      %143 = sbr.rel (%p140) target = $region32
    $region31: #{meta_arch_forward.7} parent=5 // pred_region
      %s144 = ssub.s32 %s9, 1
      %s145 = smul.u32 4, %s14
      %p146 = scmp.lt.s32.totalorder %s145, 7
      %s147 = scalar_select %p146, %s145, 7
      %s148 = smul.addr %s147, 5
      %s149 = smul.addr %s148, 8
      %s150 = scalar_lea.vmem %s0, %s149
      %p151 = pneg %p35
      %p152 = pneg %p32
      %p153 = pneg %p56
      %p154 = pneg %p53
      %p155 = pneg %p77
      %p156 = pneg %p74
      %p157 = pneg %p103
      %p158 = pneg %p100
      %p159 = scmp.lt.s32.totalorder %s14, 1
      %s160 = scalar_select %p159, %s14, 1
      %s161 = smul.addr %s160, 2
      %s162 = smul.addr %s161, 8
      %s163 = scalar_lea.vmem %s3, %s162
      %s164 = smul.u32 4, %s14
      %p165 = scmp.lt.s32.totalorder %s164, 7
      %s166 = scalar_select %p165, %s164, 7
      %s167 = smul.addr %s166, 5
      %s168 = smul.addr %s167, 8
      %s169 = scalar_lea.vmem %s0, %s168
      %s170 = smul.u32 4, %s14
      %p171 = scmp.lt.s32.totalorder %s14, 1
      %s172 = scalar_select %p171, %s14, 1
      %s173 = smul.addr %s172, 2
      %s174 = smul.addr %s173, 8
      %s175 = scalar_lea.vmem %s3, %s174
      %v177 = vld [vmem:[%s169] sm:$0x1f]
      %v178 = vld [vmem:[%s169 + $0x8] sm:$0x1f]
      %v179 = vld [vmem:[%s169 + $0x10] sm:$0x1f]
      %v180 = vld [vmem:[%s169 + $0x18] sm:$0x1f]
      %v181 = vld [vmem:[%s169 + $0x20] sm:$0x1f]
      %186 = vst [vmem:[#allocation1] ss:$2 sm:$0xff] %v177
      %s187 = scalar_lea.vmem [#allocation1], 1
      %188 = vst [vmem:[%s187] ss:$2 sm:$0xff] %v178
      %s189 = scalar_lea.vmem [#allocation1], 16
      %190 = vst [vmem:[%s189] ss:$2 sm:$0xff] %v179
      %s191 = scalar_lea.vmem [#allocation1], 17
      %192 = vst [vmem:[%s191] ss:$2 sm:$0xff] %v180
      %v193 = vld.sshfl [vmem:[#allocation1] sm:$0xff pattern:$0x75316420]
      %v194 = vld.sshfl [vmem:[#allocation1 + $0x10] sm:$0xff pattern:$0x75316420]
      %v197 = vpack.c.bf16 %v194, %v193
      %v198 = vld [vmem:[%s1] sm:$0xf]
      %v199 = vrot.slane %v177, 4
      %v200 = vrot.slane %v178, 4
      %v201 = vrot.slane %v179, 4
      %v202 = vrot.slane %v180, 4
      %vm203 = vcmask 1042432
      %vm204 = vcmask 1046532
      %vm205 = vmor %vm203, %vm204
      %v206 = vrot.slane %v177, 5
      %v207 = vrot.slane %v206, 4
      %v208 = vrot.slane %v199, 5
      %v209 = vsel %vm205, %v207, %v208
      %v210 = vrot.slane %v178, 5
      %v211 = vrot.slane %v210, 4
      %v212 = vrot.slane %v200, 5
      %v213 = vsel %vm205, %v211, %v212
      %v214 = vrot.slane %v179, 5
      %v215 = vrot.slane %v214, 4
      %v216 = vrot.slane %v201, 5
      %v217 = vsel %vm205, %v215, %v216
      %v218 = vrot.slane %v180, 5
      %v219 = vrot.slane %v218, 4
      %v220 = vrot.slane %v202, 5
      %v221 = vsel %vm205, %v219, %v220
      %222 = vst [vmem:[#allocation1] ss:$2 sm:$0xff] %v209
      %s223 = scalar_lea.vmem [#allocation1], 1
      %224 = vst [vmem:[%s223] ss:$2 sm:$0xff] %v213
      %s225 = scalar_lea.vmem [#allocation1], 16
      %226 = vst [vmem:[%s225] ss:$2 sm:$0xff] %v217
      %s227 = scalar_lea.vmem [#allocation1], 17
      %228 = vst [vmem:[%s227] ss:$2 sm:$0xff] %v221
      %v229 = vld.sshfl [vmem:[#allocation1] sm:$0xff pattern:$0x75316420]
      %v230 = vld.sshfl [vmem:[#allocation1 + $0x10] sm:$0xff pattern:$0x75316420]
      %v233 = vpack.c.bf16 %v230, %v229
      %s234 = scalar_lea.vmem %s1, 8
      %v235 = vld [vmem:[%s234] sm:$0xf]
      %vm236 = vcmask 64512
      %v238 = vsel %vm236, %v233, 0
      %vm240 = vcmask 1043456
      %v242 = vsel %vm240, %v235, 0
      %244 = vmatpush.bf16.msra.mxu0 0
      %245 = vmatpush.bf16.msra.mxu0 0
      %246 = vmatpush.bf16.msra.mxu0 0
      %247 = vmatpush.bf16.msra.mxu0 0
      %248 = vmatpush.bf16.msra.mxu0 0
      %249 = vmatpush.bf16.msra.mxu0 0
      %250 = vmatpush.bf16.msra.mxu0 0
      %251 = vmatpush.bf16.msra.mxu0 %v242
      %252 = vmatmul.bf16.gmra.mxu0 %v238
      %v253 = vpop.f32.mrf.mxu0
      %v254 = vadd.f32 0.0, %v253
      %v255 = vpop.f32.mrf.mxu0
      %v256 = vadd.f32 0.0, %v255
      %257 = vdwg.mxu0
      %v259 = vsel %vm236, %v197, 0
      %v262 = vsel %vm240, %v198, 0
      %264 = vmatpush.bf16.msra.mxu0 0
      %265 = vmatpush.bf16.msra.mxu0 0
      %266 = vmatpush.bf16.msra.mxu0 0
      %267 = vmatpush.bf16.msra.mxu0 0
      %268 = vmatpush.bf16.msra.mxu0 0
      %269 = vmatpush.bf16.msra.mxu0 0
      %270 = vmatpush.bf16.msra.mxu0 0
      %271 = vmatpush.bf16.msra.mxu0 %v262
      %272 = vmatmul.bf16.gmra.mxu0 %v259
      %v273 = vpop.f32.mrf.mxu0
      %v274 = vadd.f32 %v254, %v273
      %v275 = vpop.f32.mrf.mxu0
      %v276 = vadd.f32 %v256, %v275
      %277 = vdwg.mxu0
      %279 = vst [vmem:[#allocation1] ss:$2 sm:$0xff] %v178
      %s280 = scalar_lea.vmem [#allocation1], 1
      %281 = vst [vmem:[%s280] ss:$2 sm:$0xff] %v179
      %s282 = scalar_lea.vmem [#allocation1], 16
      %283 = vst [vmem:[%s282] ss:$2 sm:$0xff] %v180
      %s284 = scalar_lea.vmem [#allocation1], 17
      %285 = vst [vmem:[%s284] ss:$2 sm:$0xff] %v181
      %v286 = vld.sshfl [vmem:[#allocation1] sm:$0xff pattern:$0x75316420]
      %v287 = vld.sshfl [vmem:[#allocation1 + $0x10] sm:$0xff pattern:$0x75316420]
      %v290 = vpack.c.bf16 %v287, %v286
      %s291 = scalar_lea.vmem %s1, 24
      %v292 = vld [vmem:[%s291] sm:$0xf]
      %v294 = vsel %vm236, %v290, 0
      %v297 = vsel %vm240, %v292, 0
      %299 = vmatpush.bf16.msra.mxu0 0
      %300 = vmatpush.bf16.msra.mxu0 0
      %301 = vmatpush.bf16.msra.mxu0 0
      %302 = vmatpush.bf16.msra.mxu0 0
      %303 = vmatpush.bf16.msra.mxu0 0
      %304 = vmatpush.bf16.msra.mxu0 0
      %305 = vmatpush.bf16.msra.mxu0 0
      %306 = vmatpush.bf16.msra.mxu0 %v297
      %307 = vmatmul.bf16.gmra.mxu0 %v294
      %v308 = vpop.f32.mrf.mxu0
      %v309 = vadd.f32 0.0, %v308
      %v310 = vpop.f32.mrf.mxu0
      %v311 = vadd.f32 0.0, %v310
      %312 = vdwg.mxu0
      %v313 = vadd.f32 %v274, %v309
      %v314 = vadd.f32 %v276, %v311
      %v315 = vrot.slane %v181, 4
      %v316 = vrot.slane %v181, 5
      %v317 = vrot.slane %v316, 4
      %v318 = vrot.slane %v315, 5
      %v319 = vsel %vm205, %v317, %v318
      %320 = vst [vmem:[#allocation1] ss:$2 sm:$0xff] %v213
      %s321 = scalar_lea.vmem [#allocation1], 1
      %322 = vst [vmem:[%s321] ss:$2 sm:$0xff] %v217
      %s323 = scalar_lea.vmem [#allocation1], 16
      %324 = vst [vmem:[%s323] ss:$2 sm:$0xff] %v221
      %s325 = scalar_lea.vmem [#allocation1], 17
      %326 = vst [vmem:[%s325] ss:$2 sm:$0xff] %v319
      %v327 = vld.sshfl [vmem:[#allocation1] sm:$0xff pattern:$0x75316420]
      %v328 = vld.sshfl [vmem:[#allocation1 + $0x10] sm:$0xff pattern:$0x75316420]
      %v331 = vpack.c.bf16 %v328, %v327
      %s332 = scalar_lea.vmem %s1, 32
      %v333 = vld [vmem:[%s332] sm:$0xf]
      %v335 = vsel %vm236, %v331, 0
      %v338 = vsel %vm240, %v333, 0
      %340 = vmatpush.bf16.msra.mxu0 0
      %341 = vmatpush.bf16.msra.mxu0 0
      %342 = vmatpush.bf16.msra.mxu0 0
      %343 = vmatpush.bf16.msra.mxu0 0
      %344 = vmatpush.bf16.msra.mxu0 0
      %345 = vmatpush.bf16.msra.mxu0 0
      %346 = vmatpush.bf16.msra.mxu0 0
      %347 = vmatpush.bf16.msra.mxu0 %v338
      %348 = vmatmul.bf16.gmra.mxu0 %v335
      %v349 = vpop.f32.mrf.mxu0
      %v350 = vadd.f32 0.0, %v349
      %v351 = vpop.f32.mrf.mxu0
      %v352 = vadd.f32 0.0, %v351
      %353 = vdwg.mxu0
      %v354 = vadd.f32 %v313, %v350
      %v355 = vadd.f32 %v314, %v352
      %s356 = scalar_lea.vmem %s169, 40
      %v357 = vld [vmem:[%s356] sm:$0x1f]
      %v358 = vld [vmem:[%s356 + $0x8] sm:$0x1f]
      %v359 = vld [vmem:[%s356 + $0x10] sm:$0x1f]
      %v360 = vld [vmem:[%s356 + $0x18] sm:$0x1f]
      %v361 = vld [vmem:[%s356 + $0x20] sm:$0x1f]
      %366 = vst [vmem:[#allocation1] ss:$2 sm:$0xff] %v357
      %s367 = scalar_lea.vmem [#allocation1], 1
      %368 = vst [vmem:[%s367] ss:$2 sm:$0xff] %v358
      %s369 = scalar_lea.vmem [#allocation1], 16
      %370 = vst [vmem:[%s369] ss:$2 sm:$0xff] %v359
      %s371 = scalar_lea.vmem [#allocation1], 17
      %372 = vst [vmem:[%s371] ss:$2 sm:$0xff] %v360
      %v373 = vld.sshfl [vmem:[#allocation1] sm:$0xff pattern:$0x75316420]
      %v374 = vld.sshfl [vmem:[#allocation1 + $0x10] sm:$0xff pattern:$0x75316420]
      %v377 = vpack.c.bf16 %v374, %v373
      %s378 = scalar_lea.vmem %s1, 4
      %v379 = vld [vmem:[%s378] sm:$0xf]
      %v381 = vsel %vm236, %v377, 0
      %v384 = vsel %vm240, %v379, 0
      %386 = vmatpush.bf16.msra.mxu0 0
      %387 = vmatpush.bf16.msra.mxu0 0
      %388 = vmatpush.bf16.msra.mxu0 0
      %389 = vmatpush.bf16.msra.mxu0 0
      %390 = vmatpush.bf16.msra.mxu0 0
      %391 = vmatpush.bf16.msra.mxu0 0
      %392 = vmatpush.bf16.msra.mxu0 0
      %393 = vmatpush.bf16.msra.mxu0 %v384
      %394 = vmatmul.bf16.gmra.mxu0 %v381
      %v395 = vpop.f32.mrf.mxu0
      %v396 = vadd.f32 0.0, %v395
      %v397 = vpop.f32.mrf.mxu0
      %v398 = vadd.f32 0.0, %v397
      %399 = vdwg.mxu0
      %v400 = vadd.f32 %v354, %v396
      %v401 = vadd.f32 %v355, %v398
      %403 = vst [vmem:[#allocation1] ss:$2 sm:$0xff] %v358
      %s404 = scalar_lea.vmem [#allocation1], 1
      %405 = vst [vmem:[%s404] ss:$2 sm:$0xff] %v359
      %s406 = scalar_lea.vmem [#allocation1], 16
      %407 = vst [vmem:[%s406] ss:$2 sm:$0xff] %v360
      %s408 = scalar_lea.vmem [#allocation1], 17
      %409 = vst [vmem:[%s408] ss:$2 sm:$0xff] %v361
      %v410 = vld.sshfl [vmem:[#allocation1] sm:$0xff pattern:$0x75316420]
      %v411 = vld.sshfl [vmem:[#allocation1 + $0x10] sm:$0xff pattern:$0x75316420]
      %v414 = vpack.c.bf16 %v411, %v410
      %s415 = scalar_lea.vmem %s1, 28
      %v416 = vld [vmem:[%s415] sm:$0xf]
      %v418 = vsel %vm236, %v414, 0
      %v421 = vsel %vm240, %v416, 0
      %423 = vmatpush.bf16.msra.mxu0 0
      %424 = vmatpush.bf16.msra.mxu0 0
      %425 = vmatpush.bf16.msra.mxu0 0
      %426 = vmatpush.bf16.msra.mxu0 0
      %427 = vmatpush.bf16.msra.mxu0 0
      %428 = vmatpush.bf16.msra.mxu0 0
      %429 = vmatpush.bf16.msra.mxu0 0
      %430 = vmatpush.bf16.msra.mxu0 %v421
      %431 = vmatmul.bf16.gmra.mxu0 %v418
      %v432 = vpop.f32.mrf.mxu0
      %v433 = vadd.f32 0.0, %v432
      %v434 = vpop.f32.mrf.mxu0
      %v435 = vadd.f32 0.0, %v434
      %436 = vdwg.mxu0
      %v437 = vadd.f32 %v400, %v433
      %v438 = vadd.f32 %v401, %v435
      %s439 = scalar_lea.vmem %s169, 80
      %v440 = vld [vmem:[%s439] sm:$0x1f]
      %v441 = vld [vmem:[%s439 + $0x8] sm:$0x1f]
      %v442 = vld [vmem:[%s439 + $0x10] sm:$0x1f]
      %v443 = vld [vmem:[%s439 + $0x18] sm:$0x1f]
      %448 = vst [vmem:[#allocation1] ss:$2 sm:$0xff] %v440
      %s449 = scalar_lea.vmem [#allocation1], 1
      %450 = vst [vmem:[%s449] ss:$2 sm:$0xff] %v441
      %s451 = scalar_lea.vmem [#allocation1], 16
      %452 = vst [vmem:[%s451] ss:$2 sm:$0xff] %v442
      %s453 = scalar_lea.vmem [#allocation1], 17
      %454 = vst [vmem:[%s453] ss:$2 sm:$0xff] %v443
      %v455 = vld.sshfl [vmem:[#allocation1] sm:$0xff pattern:$0x75316420]
      %v456 = vld.sshfl [vmem:[#allocation1 + $0x10] sm:$0xff pattern:$0x75316420]
      %v459 = vpack.c.bf16 %v456, %v455
      %s460 = scalar_lea.vmem %s1, 12
      %v461 = vld [vmem:[%s460] sm:$0xf]
      %v463 = vsel %vm236, %v459, 0
      %v466 = vsel %vm240, %v461, 0
      %468 = vmatpush.bf16.msra.mxu0 0
      %469 = vmatpush.bf16.msra.mxu0 0
      %470 = vmatpush.bf16.msra.mxu0 0
      %471 = vmatpush.bf16.msra.mxu0 0
      %472 = vmatpush.bf16.msra.mxu0 0
      %473 = vmatpush.bf16.msra.mxu0 0
      %474 = vmatpush.bf16.msra.mxu0 0
      %475 = vmatpush.bf16.msra.mxu0 %v466
      %476 = vmatmul.bf16.gmra.mxu0 %v463
      %v477 = vpop.f32.mrf.mxu0
      %v478 = vadd.f32 0.0, %v477
      %v479 = vpop.f32.mrf.mxu0
      %v480 = vadd.f32 0.0, %v479
      %481 = vdwg.mxu0
      %v482 = vadd.f32 %v437, %v478
      %v483 = vadd.f32 %v438, %v480
      %v484 = vrot.slane %v440, 4
      %v485 = vrot.slane %v441, 4
      %v486 = vrot.slane %v442, 4
      %v487 = vrot.slane %v443, 4
      %v488 = vrot.slane %v440, 5
      %v489 = vrot.slane %v488, 4
      %v490 = vrot.slane %v484, 5
      %v491 = vsel %vm205, %v489, %v490
      %v492 = vrot.slane %v441, 5
      %v493 = vrot.slane %v492, 4
      %v494 = vrot.slane %v485, 5
      %v495 = vsel %vm205, %v493, %v494
      %v496 = vrot.slane %v442, 5
      %v497 = vrot.slane %v496, 4
      %v498 = vrot.slane %v486, 5
      %v499 = vsel %vm205, %v497, %v498
      %v500 = vrot.slane %v443, 5
      %v501 = vrot.slane %v500, 4
      %v502 = vrot.slane %v487, 5
      %v503 = vsel %vm205, %v501, %v502
      %504 = vst [vmem:[#allocation1] ss:$2 sm:$0xff] %v491
      %s505 = scalar_lea.vmem [#allocation1], 1
      %506 = vst [vmem:[%s505] ss:$2 sm:$0xff] %v495
      %s507 = scalar_lea.vmem [#allocation1], 16
      %508 = vst [vmem:[%s507] ss:$2 sm:$0xff] %v499
      %s509 = scalar_lea.vmem [#allocation1], 17
      %510 = vst [vmem:[%s509] ss:$2 sm:$0xff] %v503
      %v511 = vld.sshfl [vmem:[#allocation1] sm:$0xff pattern:$0x75316420]
      %v512 = vld.sshfl [vmem:[#allocation1 + $0x10] sm:$0xff pattern:$0x75316420]
      %v515 = vpack.c.bf16 %v512, %v511
      %s516 = scalar_lea.vmem %s1, 20
      %v517 = vld [vmem:[%s516] sm:$0xf]
      %v519 = vsel %vm236, %v515, 0
      %v522 = vsel %vm240, %v517, 0
      %524 = vmatpush.bf16.msra.mxu0 0
      %525 = vmatpush.bf16.msra.mxu0 0
      %526 = vmatpush.bf16.msra.mxu0 0
      %527 = vmatpush.bf16.msra.mxu0 0
      %528 = vmatpush.bf16.msra.mxu0 0
      %529 = vmatpush.bf16.msra.mxu0 0
      %530 = vmatpush.bf16.msra.mxu0 0
      %531 = vmatpush.bf16.msra.mxu0 %v522
      %532 = vmatmul.bf16.gmra.mxu0 %v519
      %v533 = vpop.f32.mrf.mxu0
      %v534 = vadd.f32 0.0, %v533
      %v535 = vpop.f32.mrf.mxu0
      %v536 = vadd.f32 0.0, %v535
      %537 = vdwg.mxu0
      %v538 = vadd.f32 %v482, %v534
      %v539 = vadd.f32 %v483, %v536
      %s540 = scalar_lea.vmem %s169, 120
      %v541 = vld [vmem:[%s540] sm:$0x1f]
      %v542 = vld [vmem:[%s540 + $0x8] sm:$0x1f]
      %v543 = vld [vmem:[%s540 + $0x10] sm:$0x1f]
      %v544 = vld [vmem:[%s540 + $0x18] sm:$0x1f]
      %549 = vst [vmem:[#allocation1] ss:$2 sm:$0xff] %v541
      %s550 = scalar_lea.vmem [#allocation1], 1
      %551 = vst [vmem:[%s550] ss:$2 sm:$0xff] %v542
      %s552 = scalar_lea.vmem [#allocation1], 16
      %553 = vst [vmem:[%s552] ss:$2 sm:$0xff] %v543
      %s554 = scalar_lea.vmem [#allocation1], 17
      %555 = vst [vmem:[%s554] ss:$2 sm:$0xff] %v544
      %v556 = vld.sshfl [vmem:[#allocation1] sm:$0xff pattern:$0x75316420]
      %v557 = vld.sshfl [vmem:[#allocation1 + $0x10] sm:$0xff pattern:$0x75316420]
      %v560 = vpack.c.bf16 %v557, %v556
      %s561 = scalar_lea.vmem %s1, 16
      %v562 = vld [vmem:[%s561] sm:$0xf]
      %v564 = vsel %vm236, %v560, 0
      %v567 = vsel %vm240, %v562, 0
      %569 = vmatpush.bf16.msra.mxu0 0
      %570 = vmatpush.bf16.msra.mxu0 0
      %571 = vmatpush.bf16.msra.mxu0 0
      %572 = vmatpush.bf16.msra.mxu0 0
      %573 = vmatpush.bf16.msra.mxu0 0
      %574 = vmatpush.bf16.msra.mxu0 0
      %575 = vmatpush.bf16.msra.mxu0 0
      %576 = vmatpush.bf16.msra.mxu0 %v567
      %577 = vmatmul.bf16.gmra.mxu0 %v564
      %v578 = vpop.f32.mrf.mxu0
      %v579 = vadd.f32 0.0, %v578
      %v580 = vpop.f32.mrf.mxu0
      %v581 = vadd.f32 0.0, %v580
      %582 = vdwg.mxu0
      %v583 = vadd.f32 %v538, %v579
      %v584 = vadd.f32 %v539, %v581
      %v585 = vld [vmem:[%s2] sm:$0x1f]
      %v586 = vperm.slane %v585, 0
      %v587 = vadd.f32 %v583, %v586
      %v588 = vadd.f32 %v584, %v586
      %vm589 = vcmask 130048
      %v590 = vsel %vm589, %v587, 0.0
      %591 = vadd.xlane.f32.xlu0 %v590
      %v592 = vpop.xlane.xlu0 %591
      %v593 = vsel %vm589, %v588, 0.0
      %594 = vadd.xlane.f32.xlu0 %v593
      %v595 = vpop.xlane.xlu0 %594
      %v596 = vmul.f32 %v587, %v587
      %v597 = vmul.f32 %v588, %v588
      %v598 = vsel %vm589, %v596, 0.0
      %599 = vadd.xlane.f32.xlu0 %v598
      %v600 = vpop.xlane.xlu0 %599
      %v601 = vsel %vm589, %v597, 0.0
      %602 = vadd.xlane.f32.xlu0 %v601
      %v603 = vpop.xlane.xlu0 %602
      %v604 = vmul.f32 %v592, 0.0625
      %v605 = vmul.f32 %v595, 0.0625
      %v606 = vmul.f32 %v600, 0.0625
      %v607 = vmul.f32 %v603, 0.0625
      %v608 = vmul.f32 %v604, %v604
      %v609 = vmul.f32 %v605, %v605
      %v610 = vsub.f32 %v606, %v608
      %v611 = vsub.f32 %v607, %v609
      %v612 = vmax.f32 %v610, 0.0
      %v613 = vmax.f32 %v611, 0.0
      %v614 = vsub.f32 %v587, %v604
      %v615 = vsub.f32 %v588, %v605
      %v616 = vadd.f32 %v612, 1e-06
      %v617 = vadd.f32 %v613, 1e-06
      %v618 = vrsqrt.pop %v616
      %v619 = vmul.f32 %v618, %v616
      %v620 = vmul.f32 %v619, %v618
      %v621 = vmul.f32 0.5, %v620
      %v622 = vsub.f32 1.5, %v621
      %v623 = vmul.f32 %v618, %v622
      %vm624 = vweird.f32 %v616
      %vm625 = vweird.f32 %v618
      %vm626 = vmor %vm624, %vm625
      %v627 = vsel %vm626, %v618, %v623
      %v628 = vrsqrt.pop %v617
      %v629 = vmul.f32 %v628, %v617
      %v630 = vmul.f32 %v629, %v628
      %v631 = vmul.f32 0.5, %v630
      %v632 = vsub.f32 1.5, %v631
      %v633 = vmul.f32 %v628, %v632
      %vm634 = vweird.f32 %v617
      %vm635 = vweird.f32 %v628
      %vm636 = vmor %vm634, %vm635
      %v637 = vsel %vm636, %v628, %v633
      %v638 = vmul.f32 %v614, %v627
      %v639 = vmul.f32 %v615, %v637
      %v640 = vperm.slane %v585, 1
      %v641 = vmul.f32 %v638, %v640
      %v642 = vmul.f32 %v639, %v640
      %v643 = vperm.slane %v585, 2
      %v644 = vadd.f32 %v641, %v643
      %v645 = vadd.f32 %v642, %v643
      %v646 = vsel %vm589, %v644, 0.0
      %647 = vadd.xlane.f32.xlu0 %v646
      %v648 = vpop.xlane.xlu0 %647
      %v649 = vsel %vm589, %v645, 0.0
      %650 = vadd.xlane.f32.xlu0 %v649
      %v651 = vpop.xlane.xlu0 %650
      %v652 = vmul.f32 %v644, %v644
      %v653 = vmul.f32 %v645, %v645
      %v654 = vsel %vm589, %v652, 0.0
      %655 = vadd.xlane.f32.xlu0 %v654
      %v656 = vpop.xlane.xlu0 %655
      %v657 = vsel %vm589, %v653, 0.0
      %658 = vadd.xlane.f32.xlu0 %v657
      %v659 = vpop.xlane.xlu0 %658
      %v660 = vmul.f32 %v648, 0.0625
      %v661 = vmul.f32 %v651, 0.0625
      %v662 = vmul.f32 %v656, 0.0625
      %v663 = vmul.f32 %v659, 0.0625
      %v664 = vmul.f32 %v660, %v660
      %v665 = vmul.f32 %v661, %v661
      %v666 = vsub.f32 %v662, %v664
      %v667 = vsub.f32 %v663, %v665
      %v668 = vmax.f32 %v666, 0.0
      %v669 = vmax.f32 %v667, 0.0
      %v670 = vsub.f32 %v644, %v660
      %v671 = vsub.f32 %v645, %v661
      %v672 = vadd.f32 %v668, 1e-06
      %v673 = vadd.f32 %v669, 1e-06
      %v674 = vrsqrt.pop %v672
      %v675 = vmul.f32 %v674, %v672
      %v676 = vmul.f32 %v675, %v674
      %v677 = vmul.f32 0.5, %v676
      %v678 = vsub.f32 1.5, %v677
      %v679 = vmul.f32 %v674, %v678
      %vm680 = vweird.f32 %v672
      %vm681 = vweird.f32 %v674
      %vm682 = vmor %vm680, %vm681
      %v683 = vsel %vm682, %v674, %v679
      %v684 = vrsqrt.pop %v673
      %v685 = vmul.f32 %v684, %v673
      %v686 = vmul.f32 %v685, %v684
      %v687 = vmul.f32 0.5, %v686
      %v688 = vsub.f32 1.5, %v687
      %v689 = vmul.f32 %v684, %v688
      %vm690 = vweird.f32 %v673
      %vm691 = vweird.f32 %v684
      %vm692 = vmor %vm690, %vm691
      %v693 = vsel %vm692, %v684, %v689
      %v694 = vmul.f32 %v670, %v683
      %v695 = vmul.f32 %v671, %v693
      %v696 = vperm.slane %v585, 3
      %v697 = vmul.f32 %v694, %v696
      %v698 = vmul.f32 %v695, %v696
      %v699 = vperm.slane %v585, 4
      %v700 = vadd.f32 %v697, %v699
      %v701 = vadd.f32 %v698, %v699
      %702 = vst.msk [vmem:[%s175] sm:$0xff] %vm589, %v700
      %703 = vst.msk [vmem:[%s175 + $0x8] sm:$0xff] %vm589, %v701
      %p704 = scmp.lt.s32.totalorder %s14, 1
      %s705 = scalar_select %p704, %s14, 1
      %s706 = smul.addr %s705, 2
      %s707 = smul.addr %s706, 8
      %s708 = scalar_lea.vmem %s3, %s707
      // Predicated region
      $region33: #{meta_arch_forward.7} parent=31 // pred_check
        %p709 = pneg %p100
      $region34: #{meta_arch_forward.7} parent=31 // pred_check_branch
        %711 = sbr.rel (%p709) target = $region36
      $region35: #{meta_arch_forward.7} parent=31 // pred_region
        _
      $region36: #{meta_arch_forward.7} parent=31 // pred_fallthru
        _
    $region32: #{meta_arch_forward.7} parent=5 // pred_fallthru
      _
    %p712 = scmp.le.s32.totalorder 2, %s9
    // Predicated region
    $region37: #{meta_arch_forward.7} parent=5 // pred_check
      %p713 = pneg %p712
    $region38: #{meta_arch_forward.7} parent=5 // pred_check_branch
      %715 = sbr.rel (%p713) target = $region40
    $region39: #{meta_arch_forward.7} parent=5 // pred_region
      %s716 = ssub.s32 %s9, 2
      // Predicated region
      $region41: #{meta_arch_forward.7} parent=39 // pred_check
        %p717 = pneg %p106
      $region42: #{meta_arch_forward.7} parent=39 // pred_check_branch
        %719 = sbr.rel (%p717) target = $region44
      $region43: #{meta_arch_forward.7} parent=39 // pred_region
        %p720 = scmp.lt.s32.totalorder %s15, 1
        %s721 = scalar_select %p720, %s15, 1
        %s722 = smul.addr %s721, 2
        %s723 = smul.addr %s722, 8
        %s724 = scalar_lea.vmem %s3, %s723
      $region44: #{meta_arch_forward.7} parent=39 // pred_fallthru
        _
    $region40: #{meta_arch_forward.7} parent=5 // pred_fallthru
      _
  $region6: #{meta_arch_forward.7} parent=0 // loop_footer
    %s13 = sadd.s32 1, %s9
  $region7: #{meta_arch_forward.7} parent=0 // loop_footer_branch
    %8 = sbr.rel target = $region3
  $region8: #{meta_arch_forward.7} parent=0 // loop_exit
    _

// kernel: meta_arch_forward.8
$region0: #{meta_arch_forward.8}
  #allocation0 [shape = 'u32[]', space=smem, size = 0x4, offset = 0x4, fixed_abs, tag = 'smem constant byte address 0x4 - core index']
  #allocation1 [shape = 'u32[72,128]{1,0:T(1,128)}', space=vmem, size = 0x9000, scoped, tag = 'internal scratch']
  %s0 = inlined_call_operand.vmem [shape: f32[8,3,3,16], index: 0, kind: input, shape index: {}]
  %s1 = inlined_call_operand.vmem [shape: bf16[9,16,32], index: 1, kind: input, shape index: {}]
  %s2 = inlined_call_operand.vmem [shape: f32[5,32], index: 2, kind: input, shape index: {}]
  %s3 = inlined_call_operand.vmem [shape: f32[2,4,32], index: 3, kind: output, shape index: {}]
  %s4 = sld [smem:[#allocation0]]
  $region45: #{meta_arch_forward.8} parent=0
    _
  %s6 = ssub.s32 1, %s4
  %s7 = scalar_select 0, %s6, %s4
  loop: start=0, step=1, limit=4
  $region2: #{meta_arch_forward.8} parent=0 // loop_pre_header
    _
  $region3: #{meta_arch_forward.8} parent=0 // loop_header
    %s9 = sphi 0, %s13
    %p10 = scmp.ge.s32.totalorder %s9, 4
    %s19 = sphi 0, %s21
    %s22 = sphi 0, %s19
    %s23 = sphi 0, %s22
    %s39 = sphi 0, %s23
    %s43 = sphi 0, %s43
    %s45 = sphi 0, %s43
    %s46 = sphi 0, %s45
    %s60 = sphi 0, %s46
    %s64 = sphi 0, %s64
    %s66 = sphi 0, %s64
    %s67 = sphi 0, %s66
    %s81 = sphi 0, %s67
    %s87 = sphi 0, %s89
    %s90 = sphi 0, %s87
    %s91 = sphi 0, %s90
    %s107 = sphi 0, %s91
  $region4: #{meta_arch_forward.8} parent=0 // loop_header_branch
    %12 = sbr.rel (%p10) target = $region8
  $region5: #{meta_arch_forward.8} parent=0 // loop_body
    %s14 = ssub.s32 %s9, 1
    %s15 = ssub.s32 %s9, 2
    %s16 = sadd.s32 %s9, 1
    %s17 = ssub.s32 %s9, %s16
    %p18 = scmp.eq.s32.totalorder %s17, 0
    %s20 = sadd.s32 %s19, 1
    %s21 = scalar_select %p18, %s19, %s20
    %p24 = pneg %p18
    %p25 = scmp.eq.s32.totalorder %s9, 1
    %p26 = por %p24, %p25
    %p27 = scmp.ne.s32.totalorder %s19, %s22
    %p28 = scmp.eq.s32.totalorder %s9, 0
    %p29 = por %p27, %p28
    %p30 = scmp.ne.s32.totalorder %s19, %s22
    %p31 = scmp.eq.s32.totalorder %s14, 1
    %p32 = por %p30, %p31
    %p33 = scmp.ne.s32.totalorder %s22, %s23
    %p34 = scmp.eq.s32.totalorder %s14, 0
    %p35 = por %p33, %p34
    %p36 = scmp.ne.s32.totalorder %s22, %s23
    %p37 = scmp.eq.s32.totalorder %s15, 1
    %p38 = por %p36, %p37
    %p40 = scmp.ne.s32.totalorder %s23, %s39
    %p41 = scmp.eq.s32.totalorder %s15, 0
    %p42 = por %p40, %p41
    %s44 = sadd.s32 %s43, 1
    %p47 = scmp.eq.s32.totalorder %s9, 1
    %p48 = scmp.ne.s32.totalorder %s43, %s45
    %p49 = scmp.eq.s32.totalorder %s9, 0
    %p50 = por %p48, %p49
    %p51 = scmp.ne.s32.totalorder %s43, %s45
    %p52 = scmp.eq.s32.totalorder %s14, 1
    %p53 = por %p51, %p52
    %p54 = scmp.ne.s32.totalorder %s45, %s46
    %p55 = scmp.eq.s32.totalorder %s14, 0
    %p56 = por %p54, %p55
    %p57 = scmp.ne.s32.totalorder %s45, %s46
    %p58 = scmp.eq.s32.totalorder %s15, 1
    %p59 = por %p57, %p58
    %p61 = scmp.ne.s32.totalorder %s46, %s60
    %p62 = scmp.eq.s32.totalorder %s15, 0
    %p63 = por %p61, %p62
    %s65 = sadd.s32 %s64, 1
    %p68 = scmp.eq.s32.totalorder %s9, 1
    %p69 = scmp.ne.s32.totalorder %s64, %s66
    %p70 = scmp.eq.s32.totalorder %s9, 0
    %p71 = por %p69, %p70
    %p72 = scmp.ne.s32.totalorder %s64, %s66
    %p73 = scmp.eq.s32.totalorder %s14, 1
    %p74 = por %p72, %p73
    %p75 = scmp.ne.s32.totalorder %s66, %s67
    %p76 = scmp.eq.s32.totalorder %s14, 0
    %p77 = por %p75, %p76
    %p78 = scmp.ne.s32.totalorder %s66, %s67
    %p79 = scmp.eq.s32.totalorder %s15, 1
    %p80 = por %p78, %p79
    %p82 = scmp.ne.s32.totalorder %s67, %s81
    %p83 = scmp.eq.s32.totalorder %s15, 0
    %p84 = por %p82, %p83
    %s85 = ssub.s32 %s9, %s16
    %p86 = scmp.eq.s32.totalorder %s85, 0
    %s88 = sadd.s32 %s87, 1
    %s89 = scalar_select %p86, %s87, %s88
    %p92 = pneg %p86
    %p93 = scmp.eq.s32.totalorder %s9, 1
    %p94 = por %p92, %p93
    %p95 = scmp.ne.s32.totalorder %s87, %s90
    %p96 = scmp.eq.s32.totalorder %s9, 0
    %p97 = por %p95, %p96
    %p98 = scmp.ne.s32.totalorder %s87, %s90
    %p99 = scmp.eq.s32.totalorder %s14, 1
    %p100 = por %p98, %p99
    %p101 = scmp.ne.s32.totalorder %s90, %s91
    %p102 = scmp.eq.s32.totalorder %s14, 0
    %p103 = por %p101, %p102
    %p104 = scmp.ne.s32.totalorder %s90, %s91
    %p105 = scmp.eq.s32.totalorder %s15, 1
    %p106 = por %p104, %p105
    %p108 = scmp.ne.s32.totalorder %s91, %s107
    %p109 = scmp.eq.s32.totalorder %s15, 0
    %p110 = por %p108, %p109
    %p111 = scmp.le.s32.totalorder 1, %s9
    %p112 = scmp.lt.s32.totalorder %s9, 3
    %p113 = pnand %p111, %p112
    %p114 = pneg %p113
    // Predicated region
    $region9: #{meta_arch_forward.8} parent=5 // pred_check
      _
    $region10: #{meta_arch_forward.8} parent=5 // pred_check_branch
      %116 = sbr.rel (%p113) target = $region12
    $region11: #{meta_arch_forward.8} parent=5 // pred_region
      %s117 = ssub.s32 %s9, 1
      // Predicated region
      $region13: #{meta_arch_forward.8} parent=11 // pred_check
        %p118 = pneg %p56
      $region14: #{meta_arch_forward.8} parent=11 // pred_check_branch
        %120 = sbr.rel (%p118) target = $region16
      $region15: #{meta_arch_forward.8} parent=11 // pred_region
        _
      $region16: #{meta_arch_forward.8} parent=11 // pred_fallthru
        _
      // Predicated region
      $region17: #{meta_arch_forward.8} parent=11 // pred_check
        %p121 = pneg %p77
      $region18: #{meta_arch_forward.8} parent=11 // pred_check_branch
        %123 = sbr.rel (%p121) target = $region20
      $region19: #{meta_arch_forward.8} parent=11 // pred_region
        _
      $region20: #{meta_arch_forward.8} parent=11 // pred_fallthru
        _
    $region12: #{meta_arch_forward.8} parent=5 // pred_fallthru
      _
    %p124 = scmp.lt.s32.totalorder %s9, 2
    // Predicated region
    $region21: #{meta_arch_forward.8} parent=5 // pred_check
      %p125 = pneg %p124
    $region22: #{meta_arch_forward.8} parent=5 // pred_check_branch
      %127 = sbr.rel (%p125) target = $region24
    $region23: #{meta_arch_forward.8} parent=5 // pred_region
      // Predicated region
      $region25: #{meta_arch_forward.8} parent=23 // pred_check
        %p128 = pneg %p29
      $region26: #{meta_arch_forward.8} parent=23 // pred_check_branch
        %130 = sbr.rel (%p128) target = $region28
      $region27: #{meta_arch_forward.8} parent=23 // pred_region
        %s131 = smul.u32 4, %s9
        %p132 = scmp.lt.s32.totalorder %s131, 7
        %s133 = scalar_select %p132, %s131, 7
        %s134 = smul.addr %s133, 3
        %s135 = smul.addr %s134, 4
        %s136 = scalar_lea.vmem %s0, %s135
        %s137 = smul.u32 4, %s9
      $region28: #{meta_arch_forward.8} parent=23 // pred_fallthru
        _
    $region24: #{meta_arch_forward.8} parent=5 // pred_fallthru
      _
    %p138 = scmp.le.s32.totalorder 1, %s9
    %p139 = scmp.lt.s32.totalorder %s9, 3
    %p140 = pnand %p138, %p139
    %p141 = pneg %p140
    // Predicated region
    $region29: #{meta_arch_forward.8} parent=5 // pred_check
      _
    $region30: #{meta_arch_forward.8} parent=5 // pred_check_branch
      %143 = sbr.rel (%p140) target = $region32
    $region31: #{meta_arch_forward.8} parent=5 // pred_region
      %s144 = ssub.s32 %s9, 1
      %s145 = smul.u32 4, %s14
      %p146 = scmp.lt.s32.totalorder %s145, 7
      %s147 = scalar_select %p146, %s145, 7
      %s148 = smul.addr %s147, 3
      %s149 = smul.addr %s148, 4
      %s150 = scalar_lea.vmem %s0, %s149
      %p151 = pneg %p35
      %p152 = pneg %p32
      %p153 = pneg %p56
      %p154 = pneg %p53
      %p155 = pneg %p77
      %p156 = pneg %p74
      %p157 = pneg %p103
      %p158 = pneg %p100
      %p159 = scmp.lt.s32.totalorder %s14, 1
      %s160 = scalar_select %p159, %s14, 1
      %s161 = smul.addr %s160, 4
      %s162 = scalar_lea.vmem %s3, %s161
      %s163 = smul.u32 4, %s14
      %p164 = scmp.lt.s32.totalorder %s163, 7
      %s165 = scalar_select %p164, %s163, 7
      %s166 = smul.addr %s165, 3
      %s167 = smul.addr %s166, 4
      %s168 = scalar_lea.vmem %s0, %s167
      %s169 = smul.u32 4, %s14
      %p170 = scmp.lt.s32.totalorder %s14, 1
      %s171 = scalar_select %p170, %s14, 1
      %s172 = smul.addr %s171, 4
      %s173 = scalar_lea.vmem %s3, %s172
      %v175 = vld [vmem:[%s168] sm:$0x7]
      %v176 = vld [vmem:[%s168 + $0x4] sm:$0x7]
      %v177 = vld [vmem:[%s168 + $0x8] sm:$0x7]
      %180 = vst [vmem:[#allocation1] ss:$4 sm:$0xff] %v175
      %s181 = scalar_lea.vmem [#allocation1], 1
      %182 = vst [vmem:[%s181] ss:$4 sm:$0xff] %v176
      %v183 = vld.sshfl [vmem:[#allocation1] sm:$0xff pattern:$0x73625140]
      %v185 = vpack.c.bf16 %v183, %v183
      %v186 = vld [vmem:[%s1] sm:$0xf]
      %v187 = vld [vmem:[%s1 + $0x4] sm:$0xf]
      %v188 = vrot.slane %v175, 2
      %v189 = vrot.slane %v176, 2
      %vm190 = vcmask 1040384
      %vm191 = vcmask 1042434
      %vm192 = vmor %vm190, %vm191
      %vm193 = vcmask 1044484
      %vm194 = vmor %vm192, %vm193
      %vm195 = vcmask 1046534
      %vm196 = vmor %vm194, %vm195
      %v197 = vrot.slane %v175, 7
      %v198 = vrot.slane %v197, 2
      %v199 = vrot.slane %v188, 7
      %v200 = vsel %vm196, %v198, %v199
      %v201 = vrot.slane %v176, 7
      %v202 = vrot.slane %v201, 2
      %v203 = vrot.slane %v189, 7
      %v204 = vsel %vm196, %v202, %v203
      %205 = vst [vmem:[#allocation1] ss:$4 sm:$0xff] %v200
      %s206 = scalar_lea.vmem [#allocation1], 1
      %207 = vst [vmem:[%s206] ss:$4 sm:$0xff] %v204
      %v208 = vld.sshfl [vmem:[#allocation1] sm:$0xff pattern:$0x73625140]
      %v210 = vpack.c.bf16 %v208, %v208
      %s211 = scalar_lea.vmem %s1, 16
      %v212 = vld [vmem:[%s211] sm:$0xf]
      %v213 = vld [vmem:[%s211 + $0x4] sm:$0xf]
      %v216 = vunpack.c.l.b16 %v212
      %v217 = vunpack.c.l.b16 %v213
      %v218 = vpack.c.b16 %v217, %v216
      %vm220 = vcmask 130048
      %v222 = vsel %vm220, %v210, 0
      %224 = vmatpush.bf16.msra.mxu0 0
      %225 = vmatpush.bf16.msra.mxu0 0
      %226 = vmatpush.bf16.msra.mxu0 0
      %227 = vmatpush.bf16.msra.mxu0 0
      %228 = vmatpush.bf16.msra.mxu0 0
      %229 = vmatpush.bf16.msra.mxu0 0
      %230 = vmatpush.bf16.msra.mxu0 0
      %231 = vmatpush.bf16.msra.mxu0 %v218
      %232 = vmatmul.bf16.gmra.mxu0 %v222
      %v233 = vpop.f32.mrf.mxu0
      %v234 = vadd.f32 0.0, %v233
      %v235 = vpop.f32.mrf.mxu0
      %236 = vdwg.mxu0
      %v239 = vunpack.c.l.b16 %v186
      %v240 = vunpack.c.l.b16 %v187
      %v241 = vpack.c.b16 %v240, %v239
      %v244 = vsel %vm220, %v185, 0
      %246 = vmatpush.bf16.msra.mxu0 0
      %247 = vmatpush.bf16.msra.mxu0 0
      %248 = vmatpush.bf16.msra.mxu0 0
      %249 = vmatpush.bf16.msra.mxu0 0
      %250 = vmatpush.bf16.msra.mxu0 0
      %251 = vmatpush.bf16.msra.mxu0 0
      %252 = vmatpush.bf16.msra.mxu0 0
      %253 = vmatpush.bf16.msra.mxu0 %v241
      %254 = vmatmul.bf16.gmra.mxu0 %v244
      %v255 = vpop.f32.mrf.mxu0
      %v256 = vadd.f32 %v234, %v255
      %v257 = vpop.f32.mrf.mxu0
      %258 = vdwg.mxu0
      %260 = vst [vmem:[#allocation1] ss:$4 sm:$0xff] %v176
      %s261 = scalar_lea.vmem [#allocation1], 1
      %262 = vst [vmem:[%s261] ss:$4 sm:$0xff] %v177
      %v263 = vld.sshfl [vmem:[#allocation1] sm:$0xff pattern:$0x73625140]
      %v265 = vpack.c.bf16 %v263, %v263
      %s266 = scalar_lea.vmem %s1, 48
      %v267 = vld [vmem:[%s266] sm:$0xf]
      %v268 = vld [vmem:[%s266 + $0x4] sm:$0xf]
      %v271 = vunpack.c.l.b16 %v267
      %v272 = vunpack.c.l.b16 %v268
      %v273 = vpack.c.b16 %v272, %v271
      %v276 = vsel %vm220, %v265, 0
      %278 = vmatpush.bf16.msra.mxu0 0
      %279 = vmatpush.bf16.msra.mxu0 0
      %280 = vmatpush.bf16.msra.mxu0 0
      %281 = vmatpush.bf16.msra.mxu0 0
      %282 = vmatpush.bf16.msra.mxu0 0
      %283 = vmatpush.bf16.msra.mxu0 0
      %284 = vmatpush.bf16.msra.mxu0 0
      %285 = vmatpush.bf16.msra.mxu0 %v273
      %286 = vmatmul.bf16.gmra.mxu0 %v276
      %v287 = vpop.f32.mrf.mxu0
      %v288 = vadd.f32 0.0, %v287
      %v289 = vpop.f32.mrf.mxu0
      %290 = vdwg.mxu0
      %v291 = vadd.f32 %v256, %v288
      %v292 = vrot.slane %v177, 2
      %v293 = vrot.slane %v177, 7
      %v294 = vrot.slane %v293, 2
      %v295 = vrot.slane %v292, 7
      %v296 = vsel %vm196, %v294, %v295
      %297 = vst [vmem:[#allocation1] ss:$4 sm:$0xff] %v204
      %s298 = scalar_lea.vmem [#allocation1], 1
      %299 = vst [vmem:[%s298] ss:$4 sm:$0xff] %v296
      %v300 = vld.sshfl [vmem:[#allocation1] sm:$0xff pattern:$0x73625140]
      %v302 = vpack.c.bf16 %v300, %v300
      %s303 = scalar_lea.vmem %s1, 64
      %v304 = vld [vmem:[%s303] sm:$0xf]
      %v305 = vld [vmem:[%s303 + $0x4] sm:$0xf]
      %v308 = vunpack.c.l.b16 %v304
      %v309 = vunpack.c.l.b16 %v305
      %v310 = vpack.c.b16 %v309, %v308
      %v313 = vsel %vm220, %v302, 0
      %315 = vmatpush.bf16.msra.mxu0 0
      %316 = vmatpush.bf16.msra.mxu0 0
      %317 = vmatpush.bf16.msra.mxu0 0
      %318 = vmatpush.bf16.msra.mxu0 0
      %319 = vmatpush.bf16.msra.mxu0 0
      %320 = vmatpush.bf16.msra.mxu0 0
      %321 = vmatpush.bf16.msra.mxu0 0
      %322 = vmatpush.bf16.msra.mxu0 %v310
      %323 = vmatmul.bf16.gmra.mxu0 %v313
      %v324 = vpop.f32.mrf.mxu0
      %v325 = vadd.f32 0.0, %v324
      %v326 = vpop.f32.mrf.mxu0
      %327 = vdwg.mxu0
      %v328 = vadd.f32 %v291, %v325
      %s329 = scalar_lea.vmem %s168, 12
      %v330 = vld [vmem:[%s329] sm:$0x7]
      %v331 = vld [vmem:[%s329 + $0x4] sm:$0x7]
      %v332 = vld [vmem:[%s329 + $0x8] sm:$0x7]
      %335 = vst [vmem:[#allocation1] ss:$4 sm:$0xff] %v330
      %s336 = scalar_lea.vmem [#allocation1], 1
      %337 = vst [vmem:[%s336] ss:$4 sm:$0xff] %v331
      %v338 = vld.sshfl [vmem:[#allocation1] sm:$0xff pattern:$0x73625140]
      %v340 = vpack.c.bf16 %v338, %v338
      %s341 = scalar_lea.vmem %s1, 8
      %v342 = vld [vmem:[%s341] sm:$0xf]
      %v343 = vld [vmem:[%s341 + $0x4] sm:$0xf]
      %v346 = vunpack.c.l.b16 %v342
      %v347 = vunpack.c.l.b16 %v343
      %v348 = vpack.c.b16 %v347, %v346
      %v351 = vsel %vm220, %v340, 0
      %353 = vmatpush.bf16.msra.mxu0 0
      %354 = vmatpush.bf16.msra.mxu0 0
      %355 = vmatpush.bf16.msra.mxu0 0
      %356 = vmatpush.bf16.msra.mxu0 0
      %357 = vmatpush.bf16.msra.mxu0 0
      %358 = vmatpush.bf16.msra.mxu0 0
      %359 = vmatpush.bf16.msra.mxu0 0
      %360 = vmatpush.bf16.msra.mxu0 %v348
      %361 = vmatmul.bf16.gmra.mxu0 %v351
      %v362 = vpop.f32.mrf.mxu0
      %v363 = vadd.f32 0.0, %v362
      %v364 = vpop.f32.mrf.mxu0
      %365 = vdwg.mxu0
      %v366 = vadd.f32 %v328, %v363
      %368 = vst [vmem:[#allocation1] ss:$4 sm:$0xff] %v331
      %s369 = scalar_lea.vmem [#allocation1], 1
      %370 = vst [vmem:[%s369] ss:$4 sm:$0xff] %v332
      %v371 = vld.sshfl [vmem:[#allocation1] sm:$0xff pattern:$0x73625140]
      %v373 = vpack.c.bf16 %v371, %v371
      %s374 = scalar_lea.vmem %s1, 56
      %v375 = vld [vmem:[%s374] sm:$0xf]
      %v376 = vld [vmem:[%s374 + $0x4] sm:$0xf]
      %v379 = vunpack.c.l.b16 %v375
      %v380 = vunpack.c.l.b16 %v376
      %v381 = vpack.c.b16 %v380, %v379
      %v384 = vsel %vm220, %v373, 0
      %386 = vmatpush.bf16.msra.mxu0 0
      %387 = vmatpush.bf16.msra.mxu0 0
      %388 = vmatpush.bf16.msra.mxu0 0
      %389 = vmatpush.bf16.msra.mxu0 0
      %390 = vmatpush.bf16.msra.mxu0 0
      %391 = vmatpush.bf16.msra.mxu0 0
      %392 = vmatpush.bf16.msra.mxu0 0
      %393 = vmatpush.bf16.msra.mxu0 %v381
      %394 = vmatmul.bf16.gmra.mxu0 %v384
      %v395 = vpop.f32.mrf.mxu0
      %v396 = vadd.f32 0.0, %v395
      %v397 = vpop.f32.mrf.mxu0
      %398 = vdwg.mxu0
      %v399 = vadd.f32 %v366, %v396
      %s400 = scalar_lea.vmem %s168, 24
      %v401 = vld [vmem:[%s400] sm:$0x7]
      %v402 = vld [vmem:[%s400 + $0x4] sm:$0x7]
      %405 = vst [vmem:[#allocation1] ss:$4 sm:$0xff] %v401
      %s406 = scalar_lea.vmem [#allocation1], 1
      %407 = vst [vmem:[%s406] ss:$4 sm:$0xff] %v402
      %v408 = vld.sshfl [vmem:[#allocation1] sm:$0xff pattern:$0x73625140]
      %v410 = vpack.c.bf16 %v408, %v408
      %s411 = scalar_lea.vmem %s1, 24
      %v412 = vld [vmem:[%s411] sm:$0xf]
      %v413 = vld [vmem:[%s411 + $0x4] sm:$0xf]
      %v416 = vunpack.c.l.b16 %v412
      %v417 = vunpack.c.l.b16 %v413
      %v418 = vpack.c.b16 %v417, %v416
      %v421 = vsel %vm220, %v410, 0
      %423 = vmatpush.bf16.msra.mxu0 0
      %424 = vmatpush.bf16.msra.mxu0 0
      %425 = vmatpush.bf16.msra.mxu0 0
      %426 = vmatpush.bf16.msra.mxu0 0
      %427 = vmatpush.bf16.msra.mxu0 0
      %428 = vmatpush.bf16.msra.mxu0 0
      %429 = vmatpush.bf16.msra.mxu0 0
      %430 = vmatpush.bf16.msra.mxu0 %v418
      %431 = vmatmul.bf16.gmra.mxu0 %v421
      %v432 = vpop.f32.mrf.mxu0
      %v433 = vadd.f32 0.0, %v432
      %v434 = vpop.f32.mrf.mxu0
      %435 = vdwg.mxu0
      %v436 = vadd.f32 %v399, %v433
      %v437 = vrot.slane %v401, 2
      %v438 = vrot.slane %v402, 2
      %v439 = vrot.slane %v401, 7
      %v440 = vrot.slane %v439, 2
      %v441 = vrot.slane %v437, 7
      %v442 = vsel %vm196, %v440, %v441
      %v443 = vrot.slane %v402, 7
      %v444 = vrot.slane %v443, 2
      %v445 = vrot.slane %v438, 7
      %v446 = vsel %vm196, %v444, %v445
      %447 = vst [vmem:[#allocation1] ss:$4 sm:$0xff] %v442
      %s448 = scalar_lea.vmem [#allocation1], 1
      %449 = vst [vmem:[%s448] ss:$4 sm:$0xff] %v446
      %v450 = vld.sshfl [vmem:[#allocation1] sm:$0xff pattern:$0x73625140]
      %v452 = vpack.c.bf16 %v450, %v450
      %s453 = scalar_lea.vmem %s1, 40
      %v454 = vld [vmem:[%s453] sm:$0xf]
      %v455 = vld [vmem:[%s453 + $0x4] sm:$0xf]
      %v458 = vunpack.c.l.b16 %v454
      %v459 = vunpack.c.l.b16 %v455
      %v460 = vpack.c.b16 %v459, %v458
      %v463 = vsel %vm220, %v452, 0
      %465 = vmatpush.bf16.msra.mxu0 0
      %466 = vmatpush.bf16.msra.mxu0 0
      %467 = vmatpush.bf16.msra.mxu0 0
      %468 = vmatpush.bf16.msra.mxu0 0
      %469 = vmatpush.bf16.msra.mxu0 0
      %470 = vmatpush.bf16.msra.mxu0 0
      %471 = vmatpush.bf16.msra.mxu0 0
      %472 = vmatpush.bf16.msra.mxu0 %v460
      %473 = vmatmul.bf16.gmra.mxu0 %v463
      %v474 = vpop.f32.mrf.mxu0
      %v475 = vadd.f32 0.0, %v474
      %v476 = vpop.f32.mrf.mxu0
      %477 = vdwg.mxu0
      %v478 = vadd.f32 %v436, %v475
      %s479 = scalar_lea.vmem %s168, 36
      %v480 = vld [vmem:[%s479] sm:$0x7]
      %v481 = vld [vmem:[%s479 + $0x4] sm:$0x7]
      %484 = vst [vmem:[#allocation1] ss:$4 sm:$0xff] %v480
      %s485 = scalar_lea.vmem [#allocation1], 1
      %486 = vst [vmem:[%s485] ss:$4 sm:$0xff] %v481
      %v487 = vld.sshfl [vmem:[#allocation1] sm:$0xff pattern:$0x73625140]
      %v489 = vpack.c.bf16 %v487, %v487
      %s490 = scalar_lea.vmem %s1, 32
      %v491 = vld [vmem:[%s490] sm:$0xf]
      %v492 = vld [vmem:[%s490 + $0x4] sm:$0xf]
      %v495 = vunpack.c.l.b16 %v491
      %v496 = vunpack.c.l.b16 %v492
      %v497 = vpack.c.b16 %v496, %v495
      %v500 = vsel %vm220, %v489, 0
      %502 = vmatpush.bf16.msra.mxu0 0
      %503 = vmatpush.bf16.msra.mxu0 0
      %504 = vmatpush.bf16.msra.mxu0 0
      %505 = vmatpush.bf16.msra.mxu0 0
      %506 = vmatpush.bf16.msra.mxu0 0
      %507 = vmatpush.bf16.msra.mxu0 0
      %508 = vmatpush.bf16.msra.mxu0 0
      %509 = vmatpush.bf16.msra.mxu0 %v497
      %510 = vmatmul.bf16.gmra.mxu0 %v500
      %v511 = vpop.f32.mrf.mxu0
      %v512 = vadd.f32 0.0, %v511
      %v513 = vpop.f32.mrf.mxu0
      %514 = vdwg.mxu0
      %v515 = vadd.f32 %v478, %v512
      %v516 = vld [vmem:[%s2] sm:$0x1f]
      %v517 = vperm.slane %v516, 0
      %v518 = vadd.f32 %v515, %v517
      %vm519 = vcmask 257024
      %v520 = vsel %vm519, %v518, 0.0
      %521 = vadd.xlane.f32.xlu0 %v520
      %v522 = vpop.xlane.xlu0 %521
      %v523 = vmul.f32 %v518, %v518
      %v524 = vsel %vm519, %v523, 0.0
      %525 = vadd.xlane.f32.xlu0 %v524
      %v526 = vpop.xlane.xlu0 %525
      %v527 = vmul.f32 %v522, 0.03125
      %v528 = vmul.f32 %v526, 0.03125
      %v529 = vmul.f32 %v527, %v527
      %v530 = vsub.f32 %v528, %v529
      %v531 = vmax.f32 %v530, 0.0
      %v532 = vsub.f32 %v518, %v527
      %v533 = vadd.f32 %v531, 1e-06
      %v534 = vrsqrt.pop %v533
      %v535 = vmul.f32 %v534, %v533
      %v536 = vmul.f32 %v535, %v534
      %v537 = vmul.f32 0.5, %v536
      %v538 = vsub.f32 1.5, %v537
      %v539 = vmul.f32 %v534, %v538
      %vm540 = vweird.f32 %v533
      %vm541 = vweird.f32 %v534
      %vm542 = vmor %vm540, %vm541
      %v543 = vsel %vm542, %v534, %v539
      %v544 = vmul.f32 %v532, %v543
      %v545 = vperm.slane %v516, 1
      %v546 = vmul.f32 %v544, %v545
      %v547 = vperm.slane %v516, 2
      %v548 = vadd.f32 %v546, %v547
      %v549 = vsel %vm519, %v548, 0.0
      %550 = vadd.xlane.f32.xlu0 %v549
      %v551 = vpop.xlane.xlu0 %550
      %v552 = vmul.f32 %v548, %v548
      %v553 = vsel %vm519, %v552, 0.0
      %554 = vadd.xlane.f32.xlu0 %v553
      %v555 = vpop.xlane.xlu0 %554
      %v556 = vmul.f32 %v551, 0.03125
      %v557 = vmul.f32 %v555, 0.03125
      %v558 = vmul.f32 %v556, %v556
      %v559 = vsub.f32 %v557, %v558
      %v560 = vmax.f32 %v559, 0.0
      %v561 = vsub.f32 %v548, %v556
      %v562 = vadd.f32 %v560, 1e-06
      %v563 = vrsqrt.pop %v562
      %v564 = vmul.f32 %v563, %v562
      %v565 = vmul.f32 %v564, %v563
      %v566 = vmul.f32 0.5, %v565
      %v567 = vsub.f32 1.5, %v566
      %v568 = vmul.f32 %v563, %v567
      %vm569 = vweird.f32 %v562
      %vm570 = vweird.f32 %v563
      %vm571 = vmor %vm569, %vm570
      %v572 = vsel %vm571, %v563, %v568
      %v573 = vmul.f32 %v561, %v572
      %v574 = vperm.slane %v516, 3
      %v575 = vmul.f32 %v573, %v574
      %v576 = vperm.slane %v516, 4
      %v577 = vadd.f32 %v575, %v576
      %578 = vst.msk [vmem:[%s173] sm:$0xf] %vm519, %v577
      %p579 = scmp.lt.s32.totalorder %s14, 1
      %s580 = scalar_select %p579, %s14, 1
      %s581 = smul.addr %s580, 4
      %s582 = scalar_lea.vmem %s3, %s581
      // Predicated region
      $region33: #{meta_arch_forward.8} parent=31 // pred_check
        %p583 = pneg %p100
      $region34: #{meta_arch_forward.8} parent=31 // pred_check_branch
        %585 = sbr.rel (%p583) target = $region36
      $region35: #{meta_arch_forward.8} parent=31 // pred_region
        _
      $region36: #{meta_arch_forward.8} parent=31 // pred_fallthru
        _
    $region32: #{meta_arch_forward.8} parent=5 // pred_fallthru
      _
    %p586 = scmp.le.s32.totalorder 2, %s9
    // Predicated region
    $region37: #{meta_arch_forward.8} parent=5 // pred_check
      %p587 = pneg %p586
    $region38: #{meta_arch_forward.8} parent=5 // pred_check_branch
      %589 = sbr.rel (%p587) target = $region40
    $region39: #{meta_arch_forward.8} parent=5 // pred_region
      %s590 = ssub.s32 %s9, 2
      // Predicated region
      $region41: #{meta_arch_forward.8} parent=39 // pred_check
        %p591 = pneg %p106
      $region42: #{meta_arch_forward.8} parent=39 // pred_check_branch
        %593 = sbr.rel (%p591) target = $region44
      $region43: #{meta_arch_forward.8} parent=39 // pred_region
        %p594 = scmp.lt.s32.totalorder %s15, 1
        %s595 = scalar_select %p594, %s15, 1
        %s596 = smul.addr %s595, 4
        %s597 = scalar_lea.vmem %s3, %s596
      $region44: #{meta_arch_forward.8} parent=39 // pred_fallthru
        _
    $region40: #{meta_arch_forward.8} parent=5 // pred_fallthru
      _
  $region6: #{meta_arch_forward.8} parent=0 // loop_footer
    %s13 = sadd.s32 1, %s9
  $region7: #{meta_arch_forward.8} parent=0 // loop_footer_branch
    %8 = sbr.rel target = $region3
  $region8: #{meta_arch_forward.8} parent=0 // loop_exit
    _

// kernel: meta_arch_forward.9
$region0: #{meta_arch_forward.9}
  #allocation0 [shape = 'u32[]', space=smem, size = 0x4, offset = 0x4, fixed_abs, tag = 'smem constant byte address 0x4 - core index']
  #allocation1 [shape = 'u32[72,128]{1,0:T(1,128)}', space=vmem, size = 0x9000, scoped, tag = 'internal scratch']
  %s0 = inlined_call_operand.vmem [shape: f32[8,2,2,32], index: 0, kind: input, shape index: {}]
  %s1 = inlined_call_operand.vmem [shape: bf16[9,32,64], index: 1, kind: input, shape index: {}]
  %s2 = inlined_call_operand.vmem [shape: f32[5,64], index: 2, kind: input, shape index: {}]
  %s3 = inlined_call_operand.vmem [shape: bf16[64,96], index: 3, kind: input, shape index: {}]
  %s4 = inlined_call_operand.vmem [shape: f32[1,96], index: 4, kind: input, shape index: {}]
  %s5 = inlined_call_operand.vmem [shape: f32[96,10], index: 5, kind: input, shape index: {}]
  %s6 = inlined_call_operand.vmem [shape: f32[1,10], index: 6, kind: input, shape index: {}]
  %s7 = inlined_call_operand.hbm [shape: f32[2,1,10], index: 7, kind: output, shape index: {}]
  %s8 = sld [smem:[#allocation0]]
  $region61: #{meta_arch_forward.9} parent=0
    _
  %s10 = ssub.s32 1, %s8
  %s11 = scalar_select 0, %s10, %s8
  $region1: #{meta_arch_forward.9} parent=0
    #allocation2 [shape = 'u8[1024]{0}', space=vmem, size = 0x400, scoped, tag = 'output window, operand 0']
    #allocation3 [shape = 's32[2]{0}', space=sflag, size = 0x8, scoped, tag = 'scoped memory for meta_arch_forward.9']
    %12 = vsyncpa [#allocation3], 0
    %s13 = scalar_lea.sflag [#allocation3], 1
    %14 = vsyncpa %s13, 0
    loop: start=0, step=1, limit=4
    $region2: #{meta_arch_forward.9} parent=1 // loop_pre_header
      _
    $region3: #{meta_arch_forward.9} parent=1 // loop_header
      %s16 = sphi 0, %s20
      %p17 = scmp.ge.s32.totalorder %s16, 4
      %s26 = sphi 0, %s28
      %s29 = sphi 0, %s26
      %s30 = sphi 0, %s29
      %s46 = sphi 0, %s30
      %s50 = sphi 0, %s50
      %s52 = sphi 0, %s50
      %s53 = sphi 0, %s52
      %s67 = sphi 0, %s53
      %s71 = sphi 0, %s71
      %s73 = sphi 0, %s71
      %s74 = sphi 0, %s73
      %s88 = sphi 0, %s74
      %s92 = sphi 0, %s92
      %s94 = sphi 0, %s92
      %s95 = sphi 0, %s94
      %s109 = sphi 0, %s95
      %s113 = sphi 0, %s113
      %s115 = sphi 0, %s113
      %s116 = sphi 0, %s115
      %s130 = sphi 0, %s116
      %s134 = sphi 0, %s134
      %s136 = sphi 0, %s134
      %s137 = sphi 0, %s136
      %s151 = sphi 0, %s137
      %s155 = sphi 0, %s155
      %s157 = sphi 0, %s155
      %s158 = sphi 0, %s157
      %s172 = sphi 0, %s158
      %s178 = sphi 0, %s180
      %s181 = sphi 0, %s178
      %s182 = sphi 0, %s181
      %s198 = sphi 0, %s182
    $region4: #{meta_arch_forward.9} parent=1 // loop_header_branch
      %19 = sbr.rel (%p17) target = $region8
    $region5: #{meta_arch_forward.9} parent=1 // loop_body
      %s21 = ssub.s32 %s16, 1
      %s22 = ssub.s32 %s16, 2
      %s23 = sadd.s32 %s16, 1
      %s24 = ssub.s32 %s16, %s23
      %p25 = scmp.eq.s32.totalorder %s24, 0
      %s27 = sadd.s32 %s26, 1
      %s28 = scalar_select %p25, %s26, %s27
      %p31 = pneg %p25
      %p32 = scmp.eq.s32.totalorder %s16, 1
      %p33 = por %p31, %p32
      %p34 = scmp.ne.s32.totalorder %s26, %s29
      %p35 = scmp.eq.s32.totalorder %s16, 0
      %p36 = por %p34, %p35
      %p37 = scmp.ne.s32.totalorder %s26, %s29
      %p38 = scmp.eq.s32.totalorder %s21, 1
      %p39 = por %p37, %p38
      %p40 = scmp.ne.s32.totalorder %s29, %s30
      %p41 = scmp.eq.s32.totalorder %s21, 0
      %p42 = por %p40, %p41
      %p43 = scmp.ne.s32.totalorder %s29, %s30
      %p44 = scmp.eq.s32.totalorder %s22, 1
      %p45 = por %p43, %p44
      %p47 = scmp.ne.s32.totalorder %s30, %s46
      %p48 = scmp.eq.s32.totalorder %s22, 0
      %p49 = por %p47, %p48
      %s51 = sadd.s32 %s50, 1
      %p54 = scmp.eq.s32.totalorder %s16, 1
      %p55 = scmp.ne.s32.totalorder %s50, %s52
      %p56 = scmp.eq.s32.totalorder %s16, 0
      %p57 = por %p55, %p56
      %p58 = scmp.ne.s32.totalorder %s50, %s52
      %p59 = scmp.eq.s32.totalorder %s21, 1
      %p60 = por %p58, %p59
      %p61 = scmp.ne.s32.totalorder %s52, %s53
      %p62 = scmp.eq.s32.totalorder %s21, 0
      %p63 = por %p61, %p62
      %p64 = scmp.ne.s32.totalorder %s52, %s53
      %p65 = scmp.eq.s32.totalorder %s22, 1
      %p66 = por %p64, %p65
      %p68 = scmp.ne.s32.totalorder %s53, %s67
      %p69 = scmp.eq.s32.totalorder %s22, 0
      %p70 = por %p68, %p69
      %s72 = sadd.s32 %s71, 1
      %p75 = scmp.eq.s32.totalorder %s16, 1
      %p76 = scmp.ne.s32.totalorder %s71, %s73
      %p77 = scmp.eq.s32.totalorder %s16, 0
      %p78 = por %p76, %p77
      %p79 = scmp.ne.s32.totalorder %s71, %s73
      %p80 = scmp.eq.s32.totalorder %s21, 1
      %p81 = por %p79, %p80
      %p82 = scmp.ne.s32.totalorder %s73, %s74
      %p83 = scmp.eq.s32.totalorder %s21, 0
      %p84 = por %p82, %p83
      %p85 = scmp.ne.s32.totalorder %s73, %s74
      %p86 = scmp.eq.s32.totalorder %s22, 1
      %p87 = por %p85, %p86
      %p89 = scmp.ne.s32.totalorder %s74, %s88
      %p90 = scmp.eq.s32.totalorder %s22, 0
      %p91 = por %p89, %p90
      %s93 = sadd.s32 %s92, 1
      %p96 = scmp.eq.s32.totalorder %s16, 1
      %p97 = scmp.ne.s32.totalorder %s92, %s94
      %p98 = scmp.eq.s32.totalorder %s16, 0
      %p99 = por %p97, %p98
      %p100 = scmp.ne.s32.totalorder %s92, %s94
      %p101 = scmp.eq.s32.totalorder %s21, 1
      %p102 = por %p100, %p101
      %p103 = scmp.ne.s32.totalorder %s94, %s95
      %p104 = scmp.eq.s32.totalorder %s21, 0
      %p105 = por %p103, %p104
      %p106 = scmp.ne.s32.totalorder %s94, %s95
      %p107 = scmp.eq.s32.totalorder %s22, 1
      %p108 = por %p106, %p107
      %p110 = scmp.ne.s32.totalorder %s95, %s109
      %p111 = scmp.eq.s32.totalorder %s22, 0
      %p112 = por %p110, %p111
      %s114 = sadd.s32 %s113, 1
      %p117 = scmp.eq.s32.totalorder %s16, 1
      %p118 = scmp.ne.s32.totalorder %s113, %s115
      %p119 = scmp.eq.s32.totalorder %s16, 0
      %p120 = por %p118, %p119
      %p121 = scmp.ne.s32.totalorder %s113, %s115
      %p122 = scmp.eq.s32.totalorder %s21, 1
      %p123 = por %p121, %p122
      %p124 = scmp.ne.s32.totalorder %s115, %s116
      %p125 = scmp.eq.s32.totalorder %s21, 0
      %p126 = por %p124, %p125
      %p127 = scmp.ne.s32.totalorder %s115, %s116
      %p128 = scmp.eq.s32.totalorder %s22, 1
      %p129 = por %p127, %p128
      %p131 = scmp.ne.s32.totalorder %s116, %s130
      %p132 = scmp.eq.s32.totalorder %s22, 0
      %p133 = por %p131, %p132
      %s135 = sadd.s32 %s134, 1
      %p138 = scmp.eq.s32.totalorder %s16, 1
      %p139 = scmp.ne.s32.totalorder %s134, %s136
      %p140 = scmp.eq.s32.totalorder %s16, 0
      %p141 = por %p139, %p140
      %p142 = scmp.ne.s32.totalorder %s134, %s136
      %p143 = scmp.eq.s32.totalorder %s21, 1
      %p144 = por %p142, %p143
      %p145 = scmp.ne.s32.totalorder %s136, %s137
      %p146 = scmp.eq.s32.totalorder %s21, 0
      %p147 = por %p145, %p146
      %p148 = scmp.ne.s32.totalorder %s136, %s137
      %p149 = scmp.eq.s32.totalorder %s22, 1
      %p150 = por %p148, %p149
      %p152 = scmp.ne.s32.totalorder %s137, %s151
      %p153 = scmp.eq.s32.totalorder %s22, 0
      %p154 = por %p152, %p153
      %s156 = sadd.s32 %s155, 1
      %p159 = scmp.eq.s32.totalorder %s16, 1
      %p160 = scmp.ne.s32.totalorder %s155, %s157
      %p161 = scmp.eq.s32.totalorder %s16, 0
      %p162 = por %p160, %p161
      %p163 = scmp.ne.s32.totalorder %s155, %s157
      %p164 = scmp.eq.s32.totalorder %s21, 1
      %p165 = por %p163, %p164
      %p166 = scmp.ne.s32.totalorder %s157, %s158
      %p167 = scmp.eq.s32.totalorder %s21, 0
      %p168 = por %p166, %p167
      %p169 = scmp.ne.s32.totalorder %s157, %s158
      %p170 = scmp.eq.s32.totalorder %s22, 1
      %p171 = por %p169, %p170
      %p173 = scmp.ne.s32.totalorder %s158, %s172
      %p174 = scmp.eq.s32.totalorder %s22, 0
      %p175 = por %p173, %p174
      %s176 = ssub.s32 %s16, %s23
      %p177 = scmp.eq.s32.totalorder %s176, 0
      %s179 = sadd.s32 %s178, 1
      %s180 = scalar_select %p177, %s178, %s179
      %p183 = pneg %p177
      %p184 = scmp.eq.s32.totalorder %s16, 1
      %p185 = por %p183, %p184
      %p186 = scmp.ne.s32.totalorder %s178, %s181
      %p187 = scmp.eq.s32.totalorder %s16, 0
      %p188 = por %p186, %p187
      %p189 = scmp.ne.s32.totalorder %s178, %s181
      %p190 = scmp.eq.s32.totalorder %s21, 1
      %p191 = por %p189, %p190
      %p192 = scmp.ne.s32.totalorder %s181, %s182
      %p193 = scmp.eq.s32.totalorder %s21, 0
      %p194 = por %p192, %p193
      %p195 = scmp.ne.s32.totalorder %s181, %s182
      %p196 = scmp.eq.s32.totalorder %s22, 1
      %p197 = por %p195, %p196
      %p199 = scmp.ne.s32.totalorder %s182, %s198
      %p200 = scmp.eq.s32.totalorder %s22, 0
      %p201 = por %p199, %p200
      %p202 = scmp.le.s32.totalorder 1, %s16
      %p203 = scmp.lt.s32.totalorder %s16, 3
      %p204 = pnand %p202, %p203
      %p205 = pneg %p204
      // Predicated region
      $region9: #{meta_arch_forward.9} parent=5 // pred_check
        _
      $region10: #{meta_arch_forward.9} parent=5 // pred_check_branch
        %207 = sbr.rel (%p204) target = $region12
      $region11: #{meta_arch_forward.9} parent=5 // pred_region
        %s208 = ssub.s32 %s16, 1
        // Predicated region
        $region13: #{meta_arch_forward.9} parent=11 // pred_check
          %p209 = pneg %p63
        $region14: #{meta_arch_forward.9} parent=11 // pred_check_branch
          %211 = sbr.rel (%p209) target = $region16
        $region15: #{meta_arch_forward.9} parent=11 // pred_region
          _
        $region16: #{meta_arch_forward.9} parent=11 // pred_fallthru
          _
        // Predicated region
        $region17: #{meta_arch_forward.9} parent=11 // pred_check
          %p212 = pneg %p84
        $region18: #{meta_arch_forward.9} parent=11 // pred_check_branch
          %214 = sbr.rel (%p212) target = $region20
        $region19: #{meta_arch_forward.9} parent=11 // pred_region
          _
        $region20: #{meta_arch_forward.9} parent=11 // pred_fallthru
          _
        // Predicated region
        $region21: #{meta_arch_forward.9} parent=11 // pred_check
          %p215 = pneg %p105
        $region22: #{meta_arch_forward.9} parent=11 // pred_check_branch
          %217 = sbr.rel (%p215) target = $region24
        $region23: #{meta_arch_forward.9} parent=11 // pred_region
          _
        $region24: #{meta_arch_forward.9} parent=11 // pred_fallthru
          _
        // Predicated region
        $region25: #{meta_arch_forward.9} parent=11 // pred_check
          %p218 = pneg %p126
        $region26: #{meta_arch_forward.9} parent=11 // pred_check_branch
          %220 = sbr.rel (%p218) target = $region28
        $region27: #{meta_arch_forward.9} parent=11 // pred_region
          _
        $region28: #{meta_arch_forward.9} parent=11 // pred_fallthru
          _
        // Predicated region
        $region29: #{meta_arch_forward.9} parent=11 // pred_check
          %p221 = pneg %p147
        $region30: #{meta_arch_forward.9} parent=11 // pred_check_branch
          %223 = sbr.rel (%p221) target = $region32
        $region31: #{meta_arch_forward.9} parent=11 // pred_region
          _
        $region32: #{meta_arch_forward.9} parent=11 // pred_fallthru
          _
        // Predicated region
        $region33: #{meta_arch_forward.9} parent=11 // pred_check
          %p224 = pneg %p168
        $region34: #{meta_arch_forward.9} parent=11 // pred_check_branch
          %226 = sbr.rel (%p224) target = $region36
        $region35: #{meta_arch_forward.9} parent=11 // pred_region
          _
        $region36: #{meta_arch_forward.9} parent=11 // pred_fallthru
          _
      $region12: #{meta_arch_forward.9} parent=5 // pred_fallthru
        _
      %p227 = scmp.lt.s32.totalorder %s16, 2
      // Predicated region
      $region37: #{meta_arch_forward.9} parent=5 // pred_check
        %p228 = pneg %p227
      $region38: #{meta_arch_forward.9} parent=5 // pred_check_branch
        %230 = sbr.rel (%p228) target = $region40
      $region39: #{meta_arch_forward.9} parent=5 // pred_region
        // Predicated region
        $region41: #{meta_arch_forward.9} parent=39 // pred_check
          %p231 = pneg %p36
        $region42: #{meta_arch_forward.9} parent=39 // pred_check_branch
          %233 = sbr.rel (%p231) target = $region44
        $region43: #{meta_arch_forward.9} parent=39 // pred_region
          %s234 = smul.u32 4, %s16
          %p235 = scmp.lt.s32.totalorder %s234, 7
          %s236 = scalar_select %p235, %s234, 7
          %s237 = smul.addr %s236, 2
          %s238 = smul.addr %s237, 2
          %s239 = scalar_lea.vmem %s0, %s238
          %s240 = smul.u32 4, %s16
        $region44: #{meta_arch_forward.9} parent=39 // pred_fallthru
          _
      $region40: #{meta_arch_forward.9} parent=5 // pred_fallthru
        _
      %p241 = scmp.le.s32.totalorder 1, %s16
      %p242 = scmp.lt.s32.totalorder %s16, 3
      %p243 = pnand %p241, %p242
      %p244 = pneg %p243
      // Predicated region
      $region45: #{meta_arch_forward.9} parent=5 // pred_check
        _
      $region46: #{meta_arch_forward.9} parent=5 // pred_check_branch
        %246 = sbr.rel (%p243) target = $region48
      $region47: #{meta_arch_forward.9} parent=5 // pred_region
        %s247 = ssub.s32 %s16, 1
        %s248 = smul.u32 4, %s21
        %p249 = scmp.lt.s32.totalorder %s248, 7
        %s250 = scalar_select %p249, %s248, 7
        %s251 = smul.addr %s250, 2
        %s252 = smul.addr %s251, 2
        %s253 = scalar_lea.vmem %s0, %s252
        %p254 = pneg %p42
        %p255 = pneg %p39
        %p256 = pneg %p63
        %p257 = pneg %p60
        %p258 = pneg %p84
        %p259 = pneg %p81
        %p260 = pneg %p105
        %p261 = pneg %p102
        %p262 = pneg %p126
        %p263 = pneg %p123
        %p264 = pneg %p147
        %p265 = pneg %p144
        %p266 = pneg %p168
        %p267 = pneg %p165
        %p268 = pneg %p194
        %p269 = pneg %p191
        %s270 = sand.u32 %s181, 1
        %s271 = scalar_lea.sflag [#allocation3], %s270
        %s272 = sand.u32 %s181, 1
        %s273 = scalar_lea.vmem [#allocation2], %s272
        %s274 = smul.u32 4, %s21
        %p275 = scmp.lt.s32.totalorder %s274, 7
        %s276 = scalar_select %p275, %s274, 7
        %s277 = smul.addr %s276, 2
        %s278 = smul.addr %s277, 2
        %s279 = scalar_lea.vmem %s0, %s278
        %s280 = smul.u32 4, %s21
        %v282 = vld [vmem:[%s279] sm:$0x3]
        %v283 = vld [vmem:[%s279 + $0x2] sm:$0x3]
        %v284 = vpack.c.bf16 %v282, %v282
        %v285 = vld [vmem:[%s1] sm:$0xf]
        %v286 = vld [vmem:[%s1 + $0x4] sm:$0xf]
        %v287 = vld [vmem:[%s1 + $0x8] sm:$0xf]
        %v288 = vld [vmem:[%s1 + $0xc] sm:$0xf]
        %s289 = scalar_lea.vmem %s1, 32
        %v290 = vld [vmem:[%s289] sm:$0xf]
        %v291 = vld [vmem:[%s289 + $0x4] sm:$0xf]
        %v292 = vld [vmem:[%s289 + $0x8] sm:$0xf]
        %v293 = vld [vmem:[%s289 + $0xc] sm:$0xf]
        %v295 = vshrl.u32 %v284, 16
        %v301 = vunpack.c.l.b16 %v290
        %v302 = vunpack.c.l.b16 %v291
        %v303 = vunpack.c.l.b16 %v292
        %v304 = vunpack.c.l.b16 %v293
        %v305 = vpack.c.b16 %v302, %v301
        %v306 = vpack.c.b16 %v304, %v303
        %vm309 = vcmask 261120
        %v311 = vsel %vm309, %v295, 0
        %313 = vmatpush.bf16.msra.mxu0 0
        %314 = vmatpush.bf16.msra.mxu0 0
        %315 = vmatpush.bf16.msra.mxu0 0
        %316 = vmatpush.bf16.msra.mxu0 0
        %317 = vmatpush.bf16.msra.mxu0 0
        %318 = vmatpush.bf16.msra.mxu0 0
        %319 = vmatpush.bf16.msra.mxu0 %v306
        %320 = vmatpush.bf16.msra.mxu0 %v305
        %321 = vmatmul.bf16.gmra.mxu0 %v311
        %v322 = vpop.f32.mrf.mxu0
        %v323 = vadd.f32 0.0, %v322
        %v324 = vpop.f32.mrf.mxu0
        %325 = vdwg.mxu0
        %v330 = vunpack.c.l.b16 %v285
        %v331 = vunpack.c.l.b16 %v286
        %v332 = vunpack.c.l.b16 %v287
        %v333 = vunpack.c.l.b16 %v288
        %v334 = vpack.c.b16 %v331, %v330
        %v335 = vpack.c.b16 %v333, %v332
        %v338 = vsel %vm309, %v284, 0
        %340 = vmatpush.bf16.msra.mxu0 0
        %341 = vmatpush.bf16.msra.mxu0 0
        %342 = vmatpush.bf16.msra.mxu0 0
        %343 = vmatpush.bf16.msra.mxu0 0
        %344 = vmatpush.bf16.msra.mxu0 0
        %345 = vmatpush.bf16.msra.mxu0 0
        %346 = vmatpush.bf16.msra.mxu0 %v335
        %347 = vmatpush.bf16.msra.mxu0 %v334
        %348 = vmatmul.bf16.gmra.mxu0 %v338
        %v349 = vpop.f32.mrf.mxu0
        %v350 = vadd.f32 %v323, %v349
        %v351 = vpop.f32.mrf.mxu0
        %352 = vdwg.mxu0
        %v353 = vpack.c.bf16 %v283, %v283
        %s354 = scalar_lea.vmem %s1, 96
        %v355 = vld [vmem:[%s354] sm:$0xf]
        %v356 = vld [vmem:[%s354 + $0x4] sm:$0xf]
        %v357 = vld [vmem:[%s354 + $0x8] sm:$0xf]
        %v358 = vld [vmem:[%s354 + $0xc] sm:$0xf]
        %v363 = vunpack.c.l.b16 %v355
        %v364 = vunpack.c.l.b16 %v356
        %v365 = vunpack.c.l.b16 %v357
        %v366 = vunpack.c.l.b16 %v358
        %v367 = vpack.c.b16 %v364, %v363
        %v368 = vpack.c.b16 %v366, %v365
        %v372 = vsel %vm309, %v353, 0
        %374 = vmatpush.bf16.msra.mxu0 0
        %375 = vmatpush.bf16.msra.mxu0 0
        %376 = vmatpush.bf16.msra.mxu0 0
        %377 = vmatpush.bf16.msra.mxu0 0
        %378 = vmatpush.bf16.msra.mxu0 0
        %379 = vmatpush.bf16.msra.mxu0 0
        %380 = vmatpush.bf16.msra.mxu0 %v368
        %381 = vmatpush.bf16.msra.mxu0 %v367
        %382 = vmatmul.bf16.gmra.mxu0 %v372
        %v383 = vpop.f32.mrf.mxu0
        %v384 = vadd.f32 0.0, %v383
        %v385 = vpop.f32.mrf.mxu0
        %386 = vdwg.mxu0
        %v387 = vadd.f32 %v350, %v384
        %s388 = scalar_lea.vmem %s1, 128
        %v389 = vld [vmem:[%s388] sm:$0xf]
        %v390 = vld [vmem:[%s388 + $0x4] sm:$0xf]
        %v391 = vld [vmem:[%s388 + $0x8] sm:$0xf]
        %v392 = vld [vmem:[%s388 + $0xc] sm:$0xf]
        %v393 = vshrl.u32 %v353, 16
        %v399 = vunpack.c.l.b16 %v389
        %v400 = vunpack.c.l.b16 %v390
        %v401 = vunpack.c.l.b16 %v391
        %v402 = vunpack.c.l.b16 %v392
        %v403 = vpack.c.b16 %v400, %v399
        %v404 = vpack.c.b16 %v402, %v401
        %v408 = vsel %vm309, %v393, 0
        %410 = vmatpush.bf16.msra.mxu0 0
        %411 = vmatpush.bf16.msra.mxu0 0
        %412 = vmatpush.bf16.msra.mxu0 0
        %413 = vmatpush.bf16.msra.mxu0 0
        %414 = vmatpush.bf16.msra.mxu0 0
        %415 = vmatpush.bf16.msra.mxu0 0
        %416 = vmatpush.bf16.msra.mxu0 %v404
        %417 = vmatpush.bf16.msra.mxu0 %v403
        %418 = vmatmul.bf16.gmra.mxu0 %v408
        %v419 = vpop.f32.mrf.mxu0
        %v420 = vadd.f32 0.0, %v419
        %v421 = vpop.f32.mrf.mxu0
        %422 = vdwg.mxu0
        %v423 = vadd.f32 %v387, %v420
        %s424 = scalar_lea.vmem %s279, 4
        %v425 = vld [vmem:[%s424] sm:$0x3]
        %v426 = vld [vmem:[%s424 + $0x2] sm:$0x3]
        %v427 = vpack.c.bf16 %v425, %v425
        %s428 = scalar_lea.vmem %s1, 16
        %v429 = vld [vmem:[%s428] sm:$0xf]
        %v430 = vld [vmem:[%s428 + $0x4] sm:$0xf]
        %v431 = vld [vmem:[%s428 + $0x8] sm:$0xf]
        %v432 = vld [vmem:[%s428 + $0xc] sm:$0xf]
        %v437 = vunpack.c.l.b16 %v429
        %v438 = vunpack.c.l.b16 %v430
        %v439 = vunpack.c.l.b16 %v431
        %v440 = vunpack.c.l.b16 %v432
        %v441 = vpack.c.b16 %v438, %v437
        %v442 = vpack.c.b16 %v440, %v439
        %v446 = vsel %vm309, %v427, 0
        %448 = vmatpush.bf16.msra.mxu0 0
        %449 = vmatpush.bf16.msra.mxu0 0
        %450 = vmatpush.bf16.msra.mxu0 0
        %451 = vmatpush.bf16.msra.mxu0 0
        %452 = vmatpush.bf16.msra.mxu0 0
        %453 = vmatpush.bf16.msra.mxu0 0
        %454 = vmatpush.bf16.msra.mxu0 %v442
        %455 = vmatpush.bf16.msra.mxu0 %v441
        %456 = vmatmul.bf16.gmra.mxu0 %v446
        %v457 = vpop.f32.mrf.mxu0
        %v458 = vadd.f32 0.0, %v457
        %v459 = vpop.f32.mrf.mxu0
        %460 = vdwg.mxu0
        %v461 = vadd.f32 %v423, %v458
        %v462 = vpack.c.bf16 %v426, %v426
        %s463 = scalar_lea.vmem %s1, 112
        %v464 = vld [vmem:[%s463] sm:$0xf]
        %v465 = vld [vmem:[%s463 + $0x4] sm:$0xf]
        %v466 = vld [vmem:[%s463 + $0x8] sm:$0xf]
        %v467 = vld [vmem:[%s463 + $0xc] sm:$0xf]
        %v472 = vunpack.c.l.b16 %v464
        %v473 = vunpack.c.l.b16 %v465
        %v474 = vunpack.c.l.b16 %v466
        %v475 = vunpack.c.l.b16 %v467
        %v476 = vpack.c.b16 %v473, %v472
        %v477 = vpack.c.b16 %v475, %v474
        %v481 = vsel %vm309, %v462, 0
        %483 = vmatpush.bf16.msra.mxu0 0
        %484 = vmatpush.bf16.msra.mxu0 0
        %485 = vmatpush.bf16.msra.mxu0 0
        %486 = vmatpush.bf16.msra.mxu0 0
        %487 = vmatpush.bf16.msra.mxu0 0
        %488 = vmatpush.bf16.msra.mxu0 0
        %489 = vmatpush.bf16.msra.mxu0 %v477
        %490 = vmatpush.bf16.msra.mxu0 %v476
        %491 = vmatmul.bf16.gmra.mxu0 %v481
        %v492 = vpop.f32.mrf.mxu0
        %v493 = vadd.f32 0.0, %v492
        %v494 = vpop.f32.mrf.mxu0
        %495 = vdwg.mxu0
        %v496 = vadd.f32 %v461, %v493
        %s497 = scalar_lea.vmem %s279, 8
        %v498 = vld [vmem:[%s497] sm:$0x3]
        %v499 = vpack.c.bf16 %v498, %v498
        %s500 = scalar_lea.vmem %s1, 48
        %v501 = vld [vmem:[%s500] sm:$0xf]
        %v502 = vld [vmem:[%s500 + $0x4] sm:$0xf]
        %v503 = vld [vmem:[%s500 + $0x8] sm:$0xf]
        %v504 = vld [vmem:[%s500 + $0xc] sm:$0xf]
        %v509 = vunpack.c.l.b16 %v501
        %v510 = vunpack.c.l.b16 %v502
        %v511 = vunpack.c.l.b16 %v503
        %v512 = vunpack.c.l.b16 %v504
        %v513 = vpack.c.b16 %v510, %v509
        %v514 = vpack.c.b16 %v512, %v511
        %v518 = vsel %vm309, %v499, 0
        %520 = vmatpush.bf16.msra.mxu0 0
        %521 = vmatpush.bf16.msra.mxu0 0
        %522 = vmatpush.bf16.msra.mxu0 0
        %523 = vmatpush.bf16.msra.mxu0 0
        %524 = vmatpush.bf16.msra.mxu0 0
        %525 = vmatpush.bf16.msra.mxu0 0
        %526 = vmatpush.bf16.msra.mxu0 %v514
        %527 = vmatpush.bf16.msra.mxu0 %v513
        %528 = vmatmul.bf16.gmra.mxu0 %v518
        %v529 = vpop.f32.mrf.mxu0
        %v530 = vadd.f32 0.0, %v529
        %v531 = vpop.f32.mrf.mxu0
        %532 = vdwg.mxu0
        %v533 = vadd.f32 %v496, %v530
        %s534 = scalar_lea.vmem %s1, 80
        %v535 = vld [vmem:[%s534] sm:$0xf]
        %v536 = vld [vmem:[%s534 + $0x4] sm:$0xf]
        %v537 = vld [vmem:[%s534 + $0x8] sm:$0xf]
        %v538 = vld [vmem:[%s534 + $0xc] sm:$0xf]
        %v539 = vshrl.u32 %v499, 16
        %v545 = vunpack.c.l.b16 %v535
        %v546 = vunpack.c.l.b16 %v536
        %v547 = vunpack.c.l.b16 %v537
        %v548 = vunpack.c.l.b16 %v538
        %v549 = vpack.c.b16 %v546, %v545
        %v550 = vpack.c.b16 %v548, %v547
        %v554 = vsel %vm309, %v539, 0
        %556 = vmatpush.bf16.msra.mxu0 0
        %557 = vmatpush.bf16.msra.mxu0 0
        %558 = vmatpush.bf16.msra.mxu0 0
        %559 = vmatpush.bf16.msra.mxu0 0
        %560 = vmatpush.bf16.msra.mxu0 0
        %561 = vmatpush.bf16.msra.mxu0 0
        %562 = vmatpush.bf16.msra.mxu0 %v550
        %563 = vmatpush.bf16.msra.mxu0 %v549
        %564 = vmatmul.bf16.gmra.mxu0 %v554
        %v565 = vpop.f32.mrf.mxu0
        %v566 = vadd.f32 0.0, %v565
        %v567 = vpop.f32.mrf.mxu0
        %568 = vdwg.mxu0
        %v569 = vadd.f32 %v533, %v566
        %s570 = scalar_lea.vmem %s279, 12
        %v571 = vld [vmem:[%s570] sm:$0x3]
        %v572 = vpack.c.bf16 %v571, %v571
        %s573 = scalar_lea.vmem %s1, 64
        %v574 = vld [vmem:[%s573] sm:$0xf]
        %v575 = vld [vmem:[%s573 + $0x4] sm:$0xf]
        %v576 = vld [vmem:[%s573 + $0x8] sm:$0xf]
        %v577 = vld [vmem:[%s573 + $0xc] sm:$0xf]
        %v582 = vunpack.c.l.b16 %v574
        %v583 = vunpack.c.l.b16 %v575
        %v584 = vunpack.c.l.b16 %v576
        %v585 = vunpack.c.l.b16 %v577
        %v586 = vpack.c.b16 %v583, %v582
        %v587 = vpack.c.b16 %v585, %v584
        %v591 = vsel %vm309, %v572, 0
        %593 = vmatpush.bf16.msra.mxu0 0
        %594 = vmatpush.bf16.msra.mxu0 0
        %595 = vmatpush.bf16.msra.mxu0 0
        %596 = vmatpush.bf16.msra.mxu0 0
        %597 = vmatpush.bf16.msra.mxu0 0
        %598 = vmatpush.bf16.msra.mxu0 0
        %599 = vmatpush.bf16.msra.mxu0 %v587
        %600 = vmatpush.bf16.msra.mxu0 %v586
        %601 = vmatmul.bf16.gmra.mxu0 %v591
        %v602 = vpop.f32.mrf.mxu0
        %v603 = vadd.f32 0.0, %v602
        %v604 = vpop.f32.mrf.mxu0
        %605 = vdwg.mxu0
        %v606 = vadd.f32 %v569, %v603
        %v607 = vld [vmem:[%s2] sm:$0x1f]
        %v608 = vadd.f32 %v606, %v607
        %vm609 = vcmask 516096
        %v610 = vsel %vm609, %v608, 0.0
        %611 = vadd.xlane.f32.xlu0 %v610
        %v612 = vpop.xlane.xlu0 %611
        %v613 = vmul.f32 %v608, %v608
        %v614 = vsel %vm609, %v613, 0.0
        %615 = vadd.xlane.f32.xlu0 %v614
        %v616 = vpop.xlane.xlu0 %615
        %v617 = vmul.f32 %v612, 0.015625
        %v618 = vmul.f32 %v616, 0.015625
        %v619 = vmul.f32 %v617, %v617
        %v620 = vsub.f32 %v618, %v619
        %v621 = vmax.f32 %v620, 0.0
        %v622 = vsub.f32 %v608, %v617
        %v623 = vadd.f32 %v621, 1e-06
        %v624 = vrsqrt.pop %v623
        %v625 = vmul.f32 %v624, %v623
        %v626 = vmul.f32 %v625, %v624
        %v627 = vmul.f32 0.5, %v626
        %v628 = vsub.f32 1.5, %v627
        %v629 = vmul.f32 %v624, %v628
        %vm630 = vweird.f32 %v623
        %vm631 = vweird.f32 %v624
        %vm632 = vmor %vm630, %vm631
        %v633 = vsel %vm632, %v624, %v629
        %v634 = vmul.f32 %v622, %v633
        %v636 = vrot.slane %v607, 1
        %v638 = vmul.f32 %v634, %v636
        %v639 = vrot.slane %v607, 2
        %v641 = vadd.f32 %v638, %v639
        %v642 = vsel %vm609, %v641, 0.0
        %643 = vadd.xlane.f32.xlu0 %v642
        %v644 = vpop.xlane.xlu0 %643
        %v645 = vmul.f32 %v641, %v641
        %v646 = vsel %vm609, %v645, 0.0
        %647 = vadd.xlane.f32.xlu0 %v646
        %v648 = vpop.xlane.xlu0 %647
        %v649 = vmul.f32 %v644, 0.015625
        %v650 = vmul.f32 %v648, 0.015625
        %v651 = vmul.f32 %v649, %v649
        %v652 = vsub.f32 %v650, %v651
        %v653 = vmax.f32 %v652, 0.0
        %v654 = vsub.f32 %v641, %v649
        %v655 = vadd.f32 %v653, 1e-06
        %v656 = vrsqrt.pop %v655
        %v657 = vmul.f32 %v656, %v655
        %v658 = vmul.f32 %v657, %v656
        %v659 = vmul.f32 0.5, %v658
        %v660 = vsub.f32 1.5, %v659
        %v661 = vmul.f32 %v656, %v660
        %vm662 = vweird.f32 %v655
        %vm663 = vweird.f32 %v656
        %vm664 = vmor %vm662, %vm663
        %v665 = vsel %vm664, %v656, %v661
        %v666 = vmul.f32 %v654, %v665
        %v667 = vrot.slane %v607, 3
        %v669 = vmul.f32 %v666, %v667
        %v670 = vrot.slane %v607, 4
        %v672 = vadd.f32 %v669, %v670
        %v673 = vpack.c.bf16 %v672, %v672
        %v674 = vld [vmem:[%s3] sm:$0xf]
        %v675 = vld [vmem:[%s3 + $0x4] sm:$0xf]
        %v676 = vld [vmem:[%s3 + $0x8] sm:$0xf]
        %v677 = vld [vmem:[%s3 + $0xc] sm:$0xf]
        %v678 = vld [vmem:[%s3 + $0x10] sm:$0xf]
        %v679 = vld [vmem:[%s3 + $0x14] sm:$0xf]
        %v680 = vld [vmem:[%s3 + $0x18] sm:$0xf]
        %v681 = vld [vmem:[%s3 + $0x1c] sm:$0xf]
        %v682 = vld [vmem:[%s4] sm:$0x1]
        %v691 = vunpack.c.l.b16 %v674
        %v692 = vunpack.c.l.b16 %v675
        %v693 = vunpack.c.l.b16 %v676
        %v694 = vunpack.c.l.b16 %v677
        %v695 = vunpack.c.l.b16 %v678
        %v696 = vunpack.c.l.b16 %v679
        %v697 = vunpack.c.l.b16 %v680
        %v698 = vunpack.c.l.b16 %v681
        %v699 = vpack.c.b16 %v692, %v691
        %v700 = vpack.c.b16 %v694, %v693
        %v701 = vpack.c.b16 %v696, %v695
        %v702 = vpack.c.b16 %v698, %v697
        %vm707 = vcmask 523264
        %v709 = vsel %vm707, %v673, 0
        %711 = vmatpush.bf16.msra.mxu0 0
        %712 = vmatpush.bf16.msra.mxu0 0
        %713 = vmatpush.bf16.msra.mxu0 0
        %714 = vmatpush.bf16.msra.mxu0 0
        %715 = vmatpush.bf16.msra.mxu0 %v702
        %716 = vmatpush.bf16.msra.mxu0 %v701
        %717 = vmatpush.bf16.msra.mxu0 %v700
        %718 = vmatpush.bf16.msra.mxu0 %v699
        %719 = vmatmul.bf16.gmra.mxu0 %v709
        %v720 = vpop.f32.mrf.mxu0
        %v721 = vadd.f32 %v682, %v720
        %v722 = vpop.f32.mrf.mxu0
        %723 = vdwg.mxu0
        %v724 = vmul.f32 %v721, 0.5
        %v725 = vmul.f32 %v721, 0.044715
        %v726 = vmul.f32 %v725, %v721
        %v727 = vmul.f32 %v726, %v721
        %v728 = vadd.f32 %v721, %v727
        %v729 = vmul.f32 %v728, 0.7978846
        %v730 = vtanh.pop %v729
        %v731 = vadd.f32 %v730, 1.0
        %v732 = vmul.f32 %v724, %v731
        %v733 = vadd.f32 %v732, 0.0
        %v734 = vld [vmem:[%s5] sm:$0xff]
        %v735 = vld [vmem:[%s5 + $0x8] sm:$0xff]
        %v736 = vld [vmem:[%s5 + $0x10] sm:$0xff]
        %v737 = vld [vmem:[%s5 + $0x18] sm:$0xff]
        %v738 = vld [vmem:[%s5 + $0x20] sm:$0xff]
        %v739 = vld [vmem:[%s5 + $0x28] sm:$0xff]
        %v740 = vld [vmem:[%s5 + $0x30] sm:$0xff]
        %v741 = vld [vmem:[%s5 + $0x38] sm:$0xff]
        %v742 = vld [vmem:[%s5 + $0x40] sm:$0xff]
        %v743 = vld [vmem:[%s5 + $0x48] sm:$0xff]
        %v744 = vld [vmem:[%s5 + $0x50] sm:$0xff]
        %v745 = vld [vmem:[%s5 + $0x58] sm:$0xff]
        %v746 = vld [vmem:[%s6] sm:$0x1]
        %vm747 = vcmask 785408
        %v749 = vsel %vm747, %v733, 0
        %751 = vmatpush.msra.mxu0 0.0
        %752 = vmatpush.msra.mxu0 0.0
        %753 = vmatpush.msra.mxu0 0.0
        %754 = vmatpush.msra.mxu0 0.0
        %755 = vmatpush.msra.mxu0 %v745
        %756 = vmatpush.msra.mxu0 %v744
        %757 = vmatpush.msra.mxu0 %v743
        %758 = vmatpush.msra.mxu0 %v742
        %759 = vmatpush.msra.mxu0 %v741
        %760 = vmatpush.msra.mxu0 %v740
        %761 = vmatpush.msra.mxu0 %v739
        %762 = vmatpush.msra.mxu0 %v738
        %763 = vmatpush.msra.mxu0 %v737
        %764 = vmatpush.msra.mxu0 %v736
        %765 = vmatpush.msra.mxu0 %v735
        %766 = vmatpush.msra.mxu0 %v734
        %767 = vmatmul.f32.gmra.mxu0 %v749
        %v768 = vpop.f32.mrf.mxu0
        %v769 = vadd.f32 %v746, %v768
        %770 = vdwg.mxu0
        %vm771 = vcmask 73728
        %772 = vst.msk [vmem:[%s273] sm:$0x1] %vm771, %v769
        %s773 = sand.u32 %s181, 1
        %s774 = scalar_lea.sflag [#allocation3], %s773
        %s775 = sand.u32 %s181, 1
        %s776 = scalar_lea.vmem [#allocation2], %s775
        // Predicated region
        $region49: #{meta_arch_forward.9} parent=47 // pred_check
          %p777 = pneg %p191
        $region50: #{meta_arch_forward.9} parent=47 // pred_check_branch
          %779 = sbr.rel (%p777) target = $region52
        $region51: #{meta_arch_forward.9} parent=47 // pred_region
          %781 = vsyncadd %s774, 0
          %s782 = scalar_lea.hbm %s7, %s21
          %s784 = sshll.u32 %s776, 4
          %s785 = int_to_ptr.vmem [resolvable:$true] %s784
          %s786 = sshll.u32 %s782, 4
          %s787 = int_to_ptr.hbm [resolvable:$true] %s786
          %789 = dma.vmem_to_hbm [thread:$0]  %s785, 16, %s787, %s774
        $region52: #{meta_arch_forward.9} parent=47 // pred_fallthru
          _
      $region48: #{meta_arch_forward.9} parent=5 // pred_fallthru
        _
      %p790 = scmp.le.s32.totalorder 2, %s16
      // Predicated region
      $region53: #{meta_arch_forward.9} parent=5 // pred_check
        %p791 = pneg %p790
      $region54: #{meta_arch_forward.9} parent=5 // pred_check_branch
        %793 = sbr.rel (%p791) target = $region56
      $region55: #{meta_arch_forward.9} parent=5 // pred_region
        %s794 = ssub.s32 %s16, 2
        // Predicated region
        $region57: #{meta_arch_forward.9} parent=55 // pred_check
          %p795 = pneg %p197
        $region58: #{meta_arch_forward.9} parent=55 // pred_check_branch
          %797 = sbr.rel (%p795) target = $region60
        $region59: #{meta_arch_forward.9} parent=55 // pred_region
          %s798 = sand.u32 %s182, 1
          %s799 = scalar_lea.sflag [#allocation3], %s798
          %s800 = sand.u32 %s182, 1
          %s801 = scalar_lea.vmem [#allocation2], %s800
          %803 = dma.done %s799, 16
        $region60: #{meta_arch_forward.9} parent=55 // pred_fallthru
          _
      $region56: #{meta_arch_forward.9} parent=5 // pred_fallthru
        _
    $region6: #{meta_arch_forward.9} parent=1 // loop_footer
      %s20 = sadd.s32 1, %s16
    $region7: #{meta_arch_forward.9} parent=1 // loop_footer_branch
      %15 = sbr.rel target = $region3
    $region8: #{meta_arch_forward.9} parent=1 // loop_exit
      _
    %804 = vsyncpa [#allocation3], 1
    %s805 = scalar_lea.sflag [#allocation3], 1
    %806 = vsyncpa %s805, 1

</llo_original>
